<compile_context>
chip_gen: v7x
topology: tpu7x:2x2x1
jax: 0.10.0
libtpu: 0.0.40
codegen_flags: <defaults>
</compile_context>

<pallas_src>
import functools

import jax
import jax.numpy as jnp
from jax import lax
from jax.experimental import pallas as pl
from jax.experimental.pallas import tpu as pltpu

_LANE = 128
_SUBLANE = 8
_VMEM = pl.BlockSpec(memory_space=pltpu.MemorySpace.VMEM)

# PyTorch gate order (i, f, g, o) -> kernel order (i, f, o, g): the three sigmoid gates
# become one contiguous (Bp, 3Hp) slab, tanh is one (Bp, Hp) slab.
_GATE_PERM = (0, 1, 3, 2)


def _round_up(x, m):
    return ((x + m - 1) // m) * m


# ----------------------------------------------------------------------------
# Fused Pallas kernel: encoder stack -> decoder stack -> output linear
# ----------------------------------------------------------------------------
def _seq2seq_kernel(src_ref, tgt_ref,
                    enc_wih0_ref, enc_wihR_ref, enc_whh_ref, enc_b_ref,
                    dec_wih0_ref, dec_wihR_ref, dec_whh_ref, dec_b_ref,
                    fc_w_ref, fc_b_ref,
                    out_ref,
                    h_scr, c_scr, xbuf, gbuf):
    """Fused seq2seq forward (all tensors lane/sublane padded, time-major).

    src_ref/tgt_ref: (T, Bp, Ep)       padded embeddings
    *_wih0_ref:      (Ep, 4*Hp)        layer-0 input->gate weights (pre-transposed)
    *_wihR_ref:      (max(L-1,1), Hp, 4*Hp)   layers>0 input->gate weights
    *_whh_ref:       (L, Hp, 4*Hp)     hidden->gate weights (pre-transposed)
    *_b_ref:         (L, 1, 4*Hp)      combined (b_ih + b_hh)
    fc_w_ref:        (Hp, Op)          output projection (pre-transposed)
    fc_b_ref:        (1, Op)
    out_ref:         (Tt, Bp, Op)      padded logits, time-major
    h_scr/c_scr:     (L, Bp, Hp)       per-layer state (carried encoder -> decoder)
    xbuf:            (Tmax, Bp, Hp)    inter-layer activation buffer (VMEM resident)
    gbuf:            (Tmax, Bp, 4*Hp)  hoisted per-timestep input projections
    Gate column order is (i, f, o, g); padded gate columns/rows are zero so padded
    h/c lanes stay exactly zero through the recurrence (requires zero initial c).
    """
    L = enc_whh_ref.shape[0]
    Hp = enc_whh_ref.shape[1]
    Bp = h_scr.shape[1]
    Ep = src_ref.shape[-1]

    def run_stack(x_in_ref, wih0_ref, wihR_ref, whh_ref, b_ref, *, keep_last_layer_seq):
        T = x_in_ref.shape[0]
        unroll = True if T <= 16 else 8
        for l in range(L):
            # Loads hoisted out of the recurrence: whh_l / b_l are loop-invariant.
            whh_l = whh_ref[l]                        # (Hp, 4Hp)
            b_l = b_ref[l]                            # (1, 4Hp)

            if l == 0:
                x2d = x_in_ref[...].reshape(T * Bp, Ep)
                wih_l = wih0_ref[...]                 # (Ep, 4Hp)
            else:
                x2d = xbuf[0:T].reshape(T * Bp, Hp)
                wih_l = wihR_ref[l - 1]               # (Hp, 4Hp)

            # Hoisted input projection: ONE big matmul for all timesteps, bias folded
            # in; the serial per-step chain is only h @ whh.
            g_in = jnp.dot(x2d, wih_l, preferred_element_type=jnp.float32) + b_l
            gbuf[0:T] = g_in.reshape(T, Bp, 4 * Hp)

            # Encoder's last layer: per-step outputs are never consumed -> skip stores.
            store_seq = keep_last_layer_seq or (l < L - 1)

            def step(t, carry):
                h, c = carry
                gates = gbuf[t] + jnp.dot(h, whh_l,
                                          preferred_element_type=jnp.float32)
                sig = jax.nn.sigmoid(gates[:, 0:3 * Hp])      # (i, f, o) in one call
                g_new = jnp.tanh(gates[:, 3 * Hp:4 * Hp])
                i_g = sig[:, 0:Hp]
                f_g = sig[:, Hp:2 * Hp]
                o_g = sig[:, 2 * Hp:3 * Hp]
                c_new = f_g * c + i_g * g_new
                h_new = o_g * jnp.tanh(c_new)
                if store_seq:
                    xbuf[t] = h_new        # next layer's input / decoder output
                return h_new, c_new

            h_fin, c_fin = lax.fori_loop(0, T, step, (h_scr[l], c_scr[l]),
                                         unroll=unroll)
            h_scr[l] = h_fin
            c_scr[l] = c_fin

    # ---- encoder: zero initial state; keep only final (h, c) per layer ----
    h_scr[...] = jnp.zeros_like(h_scr)
    c_scr[...] = jnp.zeros_like(c_scr)
    run_stack(src_ref, enc_wih0_ref, enc_wihR_ref, enc_whh_ref, enc_b_ref,
              keep_last_layer_seq=False)

    # ---- decoder: initial state = encoder final state (never leaves VMEM) ----
    run_stack(tgt_ref, dec_wih0_ref, dec_wihR_ref, dec_whh_ref, dec_b_ref,
              keep_last_layer_seq=True)

    # ---- output projection over the decoder's last-layer hidden states ----
    Tt = tgt_ref.shape[0]
    y2d = xbuf[0:Tt].reshape(Tt * Bp, Hp)
    logits = jnp.dot(y2d, fc_w_ref[...],
                     preferred_element_type=jnp.float32) + fc_b_ref[...]
    out_ref[...] = logits.reshape(Tt, Bp, out_ref.shape[-1])


# ----------------------------------------------------------------------------
# Wrapper
# ----------------------------------------------------------------------------
def _fused_seq2seq_call(src_p, tgt_p, prepped, *, n_layers, Bp, Hp, Ep, Op):
    Ts, Tt = src_p.shape[0], tgt_p.shape[0]
    Tmax = max(Ts, Tt)
    Lr = prepped["enc_wihR"].shape[0]

    # Resident footprint (fp32 words): activations + weights + output + scratch.
    words = ((Ts + Tt) * Bp * Ep
             + 2 * Ep * 4 * Hp                        # layer-0 wih (enc + dec)
             + 2 * Lr * Hp * 4 * Hp                   # layers>0 wih
             + 2 * n_layers * (Hp * 4 * Hp + 4 * Hp)  # whh + bias
             + Hp * Op + Op                           # fc
             + Tt * Bp * Op                           # output
             + 2 * n_layers * Bp * Hp                 # h/c scratch
             + Tmax * Bp * (Hp + 4 * Hp))             # xbuf + gbuf
    # 2x headroom, clamped to stay below v7x's 64 MiB physical VMEM; raise the cap on
    # v5e/v6e (128 MiB) before streaming weights / chunking gbuf at large H / long T.
    vmem_limit = int(min(max(32 << 20, 8 * words), 60 << 20))

    return pl.pallas_call(
        _seq2seq_kernel,
        out_shape=jax.ShapeDtypeStruct((Tt, Bp, Op), jnp.float32),
        in_specs=[_VMEM] * 12,
        out_specs=_VMEM,
        scratch_shapes=[
            pltpu.VMEM((n_layers, Bp, Hp), jnp.float32),   # h state per layer
            pltpu.VMEM((n_layers, Bp, Hp), jnp.float32),   # c state per layer
            pltpu.VMEM((Tmax, Bp, Hp), jnp.float32),       # inter-layer activations
            pltpu.VMEM((Tmax, Bp, 4 * Hp), jnp.float32),   # hoisted input projections
        ],
        compiler_params=pltpu.CompilerParams(vmem_limit_bytes=vmem_limit),
    )(src_p, tgt_p,
      prepped["enc_wih0"], prepped["enc_wihR"], prepped["enc_whh"], prepped["enc_b"],
      prepped["dec_wih0"], prepped["dec_wihR"], prepped["dec_whh"], prepped["dec_b"],
      prepped["fc_w"], prepped["fc_b"])


@functools.partial(jax.jit, static_argnames=("output_dim",))
def lstm_seq2seq_forward(prepped, src, tgt, *, output_dim):
    B = src.shape[0]
    E = prepped["emb_src"].shape[1]
    Ep = prepped["enc_wih0"].shape[0]
    L, Hp, _ = prepped["enc_whh"].shape
    Op = prepped["fc_w"].shape[1]
    Bp = max(_SUBLANE, _round_up(B, _SUBLANE))

    # Embedding lookups (glue: data-dependent gather, done outside the kernel).
    # Gather directly time-major: transpose the tiny int index arrays instead of the
    # embedded activations (no extra padded-activation transpose copy in HBM).
    src_emb = jnp.take(prepped["emb_src"], src.T, axis=0)   # (Ts, B, E)
    tgt_emb = jnp.take(prepped["emb_tgt"], tgt.T, axis=0)   # (Tt, B, E)

    def pad_tm(x_tbe):
        return jnp.pad(x_tbe, ((0, 0), (0, Bp - B), (0, Ep - E)))

    out_p = _fused_seq2seq_call(
        pad_tm(src_emb), pad_tm(tgt_emb), prepped,
        n_layers=L, Bp=Bp, Hp=Hp, Ep=Ep, Op=Op)

    # (Tt, Bp, Op) padded -> (B, Tt, output_dim) batch-first
    return jnp.transpose(out_p[:, :B, :output_dim], (1, 0, 2))


# ----------------------------------------------------------------------------
# Parameters
# ----------------------------------------------------------------------------
def init_params(key, input_dim, output_dim, embed_dim, hidden_dim, n_layers):
    """Raw parameters in PyTorch layout (wih: (4H, in), whh: (4H, H), combined bias)."""
    ks = list(jax.random.split(key, 4 + 8 * n_layers * 2))
    ki = iter(ks)
    p = {}
    p["emb_src"] = jax.random.normal(next(ki), (input_dim, embed_dim), jnp.float32)
    p["emb_tgt"] = jax.random.normal(next(ki), (output_dim, embed_dim), jnp.float32)
    k = 1.0 / jnp.sqrt(hidden_dim)

    def lstm_params(in_dim0):
        layers = []
        for l in range(n_layers):
            in_dim = in_dim0 if l == 0 else hidden_dim
            wih = jax.random.uniform(next(ki), (4 * hidden_dim, in_dim),
                                     jnp.float32, -k, k)
            whh = jax.random.uniform(next(ki), (4 * hidden_dim, hidden_dim),
                                     jnp.float32, -k, k)
            bih = jax.random.uniform(next(ki), (4 * hidden_dim,), jnp.float32, -k, k)
            bhh = jax.random.uniform(next(ki), (4 * hidden_dim,), jnp.float32, -k, k)
            layers.append({"wih": wih, "whh": whh, "b": bih + bhh})
        return layers

    p["encoder"] = lstm_params(embed_dim)
    p["decoder"] = lstm_params(embed_dim)
    p["fc_w"] = jax.random.uniform(next(ki), (output_dim, hidden_dim),
                                   jnp.float32, -k, k)
    p["fc_b"] = jax.random.uniform(next(ki), (output_dim,), jnp.float32, -k, k)
    return p


def prepare_params(raw, embed_dim, hidden_dim, n_layers, output_dim):
    """Pre-transpose / pad / stack / gate-permute weights ONCE (outside the jit).

    Gate blocks are scattered into a lane-padded 4*Hp layout in (i, f, o, g) order so
    each gate slice in the kernel is whole 128-lane vregs and the three sigmoid gates
    are one contiguous slab. Padded rows/cols are zero so padded lanes of h/c stay
    exactly zero through the recurrence (requires zero initial cell state).
    """
    H, E = hidden_dim, embed_dim
    Hp = _round_up(H, _LANE)
    Ep = _round_up(E, _LANE)
    Op = _round_up(output_dim, _LANE)

    def pack_one(p, in_dim, in_dim_p):
        wih_t = p["wih"].T                           # (in_dim, 4H)
        whh_t = p["whh"].T                           # (H, 4H)
        wih_p = jnp.zeros((in_dim_p, 4 * Hp), jnp.float32)
        whh_p = jnp.zeros((Hp, 4 * Hp), jnp.float32)
        b_p = jnp.zeros((4 * Hp,), jnp.float32)
        for dst, g in enumerate(_GATE_PERM):
            wih_p = wih_p.at[:in_dim, dst * Hp:dst * Hp + H].set(
                wih_t[:, g * H:(g + 1) * H])
            whh_p = whh_p.at[:H, dst * Hp:dst * Hp + H].set(
                whh_t[:, g * H:(g + 1) * H])
            b_p = b_p.at[dst * Hp:dst * Hp + H].set(p["b"][g * H:(g + 1) * H])
        return wih_p, whh_p, b_p.reshape(1, -1)

    def pack_stack(layers):
        wih0, whh0, b0 = pack_one(layers[0], E, Ep)
        wihRs, whhs, bs = [], [whh0], [b0]
        for p in layers[1:]:
            wih_p, whh_p, b_p = pack_one(p, H, Hp)
            wihRs.append(wih_p)
            whhs.append(whh_p)
            bs.append(b_p)
        if not wihRs:   # n_layers == 1: dummy, never read by the kernel
            wihRs.append(jnp.zeros((Hp, 4 * Hp), jnp.float32))
        return wih0, jnp.stack(wihRs), jnp.stack(whhs), jnp.stack(bs)

    enc_wih0, enc_wihR, enc_whh, enc_b = pack_stack(raw["encoder"])
    dec_wih0, dec_wihR, dec_whh, dec_b = pack_stack(raw["decoder"])

    fc_w = jnp.zeros((Hp, Op), jnp.float32).at[:H, :output_dim].set(raw["fc_w"].T)
    fc_b = jnp.zeros((1, Op), jnp.float32).at[0, :output_dim].set(raw["fc_b"])

    # TODO(synk): inter-layer dropout (train-mode nn.LSTM) not implemented; eval /
    # dropout=0 semantics only.
    return {
        "emb_src": raw["emb_src"], "emb_tgt": raw["emb_tgt"],
        "enc_wih0": enc_wih0, "enc_wihR": enc_wihR,
        "enc_whh": enc_whh, "enc_b": enc_b,
        "dec_wih0": dec_wih0, "dec_wihR": dec_wihR,
        "dec_whh": dec_whh, "dec_b": dec_b,
        "fc_w": fc_w, "fc_b": fc_b,
    }


# ----------------------------------------------------------------------------
# Pure-JAX reference (for correctness check)
# ----------------------------------------------------------------------------
def _lstm_layer_ref(x_tm, wih, whh, bias, h0, c0):
    H = h0.shape[1]

    def step(carry, x_t):
        h, c = carry
        gates = x_t @ wih.T + h @ whh.T + bias
        i = jax.nn.sigmoid(gates[:, :H])
        f = jax.nn.sigmoid(gates[:, H:2 * H])
        g = jnp.tanh(gates[:, 2 * H:3 * H])
        o = jax.nn.sigmoid(gates[:, 3 * H:])
        c = f * c + i * g
        h = o * jnp.tanh(c)
        return (h, c), h

    (hT, cT), ys = lax.scan(step, (h0, c0), x_tm)
    return ys, hT, cT


def _forward_ref(params, src, tgt, hidden_dim, n_layers):
    B = src.shape[0]
    src_emb = jnp.take(params["emb_src"], src, axis=0)
    tgt_emb = jnp.take(params["emb_tgt"], tgt, axis=0)

    def stack(x_bf, layers, h0, c0):
        x_tm = jnp.transpose(x_bf, (1, 0, 2))
        hs, cs = [], []
        for l, p in enumerate(layers):
            x_tm, hT, cT = _lstm_layer_ref(x_tm, p["wih"], p["whh"], p["b"],
                                           h0[l], c0[l])
            hs.append(hT)
            cs.append(cT)
        return jnp.transpose(x_tm, (1, 0, 2)), jnp.stack(hs), jnp.stack(cs)

    z = jnp.zeros((n_layers, B, hidden_dim), jnp.float32)
    _, hid, cel = stack(src_emb, params["encoder"], z, z)
    outs, _, _ = stack(tgt_emb, params["decoder"], hid, cel)
    return outs @ params["fc_w"].T + params["fc_b"]


# ----------------------------------------------------------------------------
if __name__ == "__main__":
    input_dim, output_dim = 20, 22
    embed_dim, hidden_dim = 32, 32
    n_layers = 2
    batch, src_len, tgt_len = 2, 8, 8

    key = jax.random.PRNGKey(0)
    kp, ks, kt = jax.random.split(key, 3)
    params = init_params(kp, input_dim, output_dim, embed_dim, hidden_dim, n_layers)
    prepped = prepare_params(params, embed_dim, hidden_dim, n_layers, output_dim)

    src = jax.random.randint(ks, (batch, src_len), 0, input_dim, dtype=jnp.int32)
    tgt = jax.random.randint(kt, (batch, tgt_len), 0, output_dim, dtype=jnp.int32)

    out = lstm_seq2seq_forward(prepped, src, tgt, output_dim=output_dim)
    out = jax.block_until_ready(out)
    assert out.shape == (batch, tgt_len, output_dim), out.shape

    ref = jax.block_until_ready(_forward_ref(params, src, tgt, hidden_dim, n_layers))
    err = jnp.max(jnp.abs(out - ref))
    assert jnp.allclose(out, ref, rtol=1e-4, atol=1e-4), f"max abs err {err}"

    print("KERNEL_OK")
</pallas_src>

<mosaic_0001>
module attributes {stable_mosaic.version = 11 : i64} {
  func.func @_seq2seq_kernel(%arg0: memref<8x8x128xf32, #tpu.memory_space<vmem>>, %arg1: memref<8x8x128xf32, #tpu.memory_space<vmem>>, %arg2: memref<128x512xf32, #tpu.memory_space<vmem>>, %arg3: memref<1x128x512xf32, #tpu.memory_space<vmem>>, %arg4: memref<2x128x512xf32, #tpu.memory_space<vmem>>, %arg5: memref<2x1x512xf32, #tpu.memory_space<vmem>>, %arg6: memref<128x512xf32, #tpu.memory_space<vmem>>, %arg7: memref<1x128x512xf32, #tpu.memory_space<vmem>>, %arg8: memref<2x128x512xf32, #tpu.memory_space<vmem>>, %arg9: memref<2x1x512xf32, #tpu.memory_space<vmem>>, %arg10: memref<128x128xf32, #tpu.memory_space<vmem>>, %arg11: memref<1x128xf32, #tpu.memory_space<vmem>>, %arg12: memref<8x8x128xf32, #tpu.memory_space<vmem>>, %arg13: memref<2x8x128xf32, #tpu.memory_space<vmem>>, %arg14: memref<2x8x128xf32, #tpu.memory_space<vmem>>, %arg15: memref<8x8x128xf32, #tpu.memory_space<vmem>>, %arg16: memref<8x8x512xf32, #tpu.memory_space<vmem>>) attributes {dimension_semantics = [], scalar_prefetch = 0 : i64, scratch_operands = 4 : i64, tpu.core_type = #tpu.core_type<tc>} {
    %cst = arith.constant 0.000000e+00 : f32
    %0 = vector.broadcast %cst : f32 to vector<2x8x128xf32>
    %c0 = arith.constant 0 : index
    %c0_0 = arith.constant 0 : index
    %c0_1 = arith.constant 0 : index
    %1 = vector.load %arg13[%c0, %c0_0, %c0_1] : memref<2x8x128xf32, #tpu.memory_space<vmem>>, vector<2x8x128xf32>
    tpu.vector_store %arg13[%c0, %c0_0, %c0_1], %0 {strides = array<i32>} : memref<2x8x128xf32, #tpu.memory_space<vmem>>, vector<2x8x128xf32>,
    %cst_2 = arith.constant 0.000000e+00 : f32
    %2 = vector.broadcast %cst_2 : f32 to vector<2x8x128xf32>
    %c0_3 = arith.constant 0 : index
    %c0_4 = arith.constant 0 : index
    %c0_5 = arith.constant 0 : index
    %3 = vector.load %arg14[%c0_3, %c0_4, %c0_5] : memref<2x8x128xf32, #tpu.memory_space<vmem>>, vector<2x8x128xf32>
    tpu.vector_store %arg14[%c0_3, %c0_4, %c0_5], %2 {strides = array<i32>} : memref<2x8x128xf32, #tpu.memory_space<vmem>>, vector<2x8x128xf32>,
    %c0_6 = arith.constant 0 : index
    %c0_7 = arith.constant 0 : index
    %c0_8 = arith.constant 0 : index
    %4 = vector.load %arg4[%c0_6, %c0_7, %c0_8] : memref<2x128x512xf32, #tpu.memory_space<vmem>>, vector<1x128x512xf32>
    %5 = vector.shape_cast %4 : vector<1x128x512xf32> to vector<128x512xf32>
    %c0_9 = arith.constant 0 : index
    %c0_10 = arith.constant 0 : index
    %c0_11 = arith.constant 0 : index
    %6 = vector.load %arg5[%c0_9, %c0_10, %c0_11] : memref<2x1x512xf32, #tpu.memory_space<vmem>>, vector<1x1x512xf32>
    %7 = vector.shape_cast %6 : vector<1x1x512xf32> to vector<1x512xf32>
    %c0_12 = arith.constant 0 : index
    %c0_13 = arith.constant 0 : index
    %c0_14 = arith.constant 0 : index
    %8 = vector.load %arg0[%c0_12, %c0_13, %c0_14] : memref<8x8x128xf32, #tpu.memory_space<vmem>>, vector<8x8x128xf32>
    %9 = vector.shape_cast %8 : vector<8x8x128xf32> to vector<64x128xf32>
    %c0_15 = arith.constant 0 : index
    %c0_16 = arith.constant 0 : index
    %10 = vector.load %arg2[%c0_15, %c0_16] : memref<128x512xf32, #tpu.memory_space<vmem>>, vector<128x512xf32>
    %cst_17 = arith.constant dense<0.000000e+00> : vector<64x512xf32>
    %11 = tpu.matmul %9, %10, %cst_17 {dimension_numbers = #tpu.dot_dimension_numbers<[1], [0], [0], [1], [0, 0, 1, 1], [], []>} : vector<64x128xf32>, vector<128x512xf32>, vector<64x512xf32> -> vector<64x512xf32>
    %12 = vector.broadcast %7 : vector<1x512xf32> to vector<64x512xf32>
    %13 = arith.addf %11, %12 : vector<64x512xf32>
    %14 = vector.shape_cast %13 : vector<64x512xf32> to vector<8x8x512xf32>
    %c0_18 = arith.constant 0 : index
    %c0_19 = arith.constant 0 : index
    %c0_20 = arith.constant 0 : index
    %15 = vector.load %arg16[%c0_18, %c0_19, %c0_20] : memref<8x8x512xf32, #tpu.memory_space<vmem>>, vector<8x8x512xf32>
    tpu.vector_store %arg16[%c0_18, %c0_19, %c0_20], %14 {strides = array<i32>} : memref<8x8x512xf32, #tpu.memory_space<vmem>>, vector<8x8x512xf32>,
    %c0_21 = arith.constant 0 : index
    %c0_22 = arith.constant 0 : index
    %c0_23 = arith.constant 0 : index
    %16 = vector.load %arg13[%c0_21, %c0_22, %c0_23] : memref<2x8x128xf32, #tpu.memory_space<vmem>>, vector<1x8x128xf32>
    %17 = vector.shape_cast %16 : vector<1x8x128xf32> to vector<8x128xf32>
    %c0_24 = arith.constant 0 : index
    %c0_25 = arith.constant 0 : index
    %c0_26 = arith.constant 0 : index
    %18 = vector.load %arg14[%c0_24, %c0_25, %c0_26] : memref<2x8x128xf32, #tpu.memory_space<vmem>>, vector<1x8x128xf32>
    %19 = vector.shape_cast %18 : vector<1x8x128xf32> to vector<8x128xf32>
    %c0_i32 = arith.constant 0 : i32
    %20 = arith.index_cast %c0_i32 : i32 to index
    %c0_27 = arith.constant 0 : index
    %c0_28 = arith.constant 0 : index
    %21 = vector.load %arg16[%20, %c0_27, %c0_28] : memref<8x8x512xf32, #tpu.memory_space<vmem>>, vector<1x8x512xf32>
    %22 = vector.shape_cast %21 : vector<1x8x512xf32> to vector<8x512xf32>
    %cst_29 = arith.constant dense<0.000000e+00> : vector<8x512xf32>
    %23 = tpu.matmul %17, %5, %cst_29 {dimension_numbers = #tpu.dot_dimension_numbers<[1], [0], [0], [1], [0, 0, 1, 1], [], []>} : vector<8x128xf32>, vector<128x512xf32>, vector<8x512xf32> -> vector<8x512xf32>
    %24 = arith.addf %22, %23 : vector<8x512xf32>
    %25 = vector.extract_strided_slice %24 {offsets = [0, 0], sizes = [8, 384], strides = [1, 1]} : vector<8x512xf32> to vector<8x384xf32>
    %26 = arith.negf %25 : vector<8x384xf32>
    %27 = math.exp %26 : vector<8x384xf32>
    %cst_30 = arith.constant 1.000000e+00 : f32
    %28 = vector.broadcast %cst_30 : f32 to vector<8x384xf32>
    %29 = arith.addf %28, %27 : vector<8x384xf32>
    %30 = arith.divf %28, %29 : vector<8x384xf32>
    %31 = vector.extract_strided_slice %24 {offsets = [0, 384], sizes = [8, 128], strides = [1, 1]} : vector<8x512xf32> to vector<8x128xf32>
    %32 = math.tanh %31 : vector<8x128xf32>
    %33 = vector.extract_strided_slice %30 {offsets = [0, 0], sizes = [8, 128], strides = [1, 1]} : vector<8x384xf32> to vector<8x128xf32>
    %34 = vector.extract_strided_slice %30 {offsets = [0, 128], sizes = [8, 128], strides = [1, 1]} : vector<8x384xf32> to vector<8x128xf32>
    %35 = vector.extract_strided_slice %30 {offsets = [0, 256], sizes = [8, 128], strides = [1, 1]} : vector<8x384xf32> to vector<8x128xf32>
    %36 = arith.mulf %34, %19 : vector<8x128xf32>
    %37 = arith.mulf %33, %32 : vector<8x128xf32>
    %38 = arith.addf %36, %37 : vector<8x128xf32>
    %39 = math.tanh %38 : vector<8x128xf32>
    %40 = arith.mulf %35, %39 : vector<8x128xf32>
    %41 = arith.index_cast %c0_i32 : i32 to index
    %c0_31 = arith.constant 0 : index
    %c0_32 = arith.constant 0 : index
    %42 = vector.load %arg15[%41, %c0_31, %c0_32] : memref<8x8x128xf32, #tpu.memory_space<vmem>>, vector<1x8x128xf32>
    %43 = vector.shape_cast %42 : vector<1x8x128xf32> to vector<8x128xf32>
    %44 = vector.shape_cast %40 : vector<8x128xf32> to vector<1x8x128xf32>
    tpu.vector_store %arg15[%41, %c0_31, %c0_32], %44 {strides = array<i32>} : memref<8x8x128xf32, #tpu.memory_space<vmem>>, vector<1x8x128xf32>,
    %c1_i32 = arith.constant 1 : i32
    %45 = arith.index_cast %c1_i32 : i32 to index
    %c0_33 = arith.constant 0 : index
    %c0_34 = arith.constant 0 : index
    %46 = vector.load %arg16[%45, %c0_33, %c0_34] : memref<8x8x512xf32, #tpu.memory_space<vmem>>, vector<1x8x512xf32>
    %47 = vector.shape_cast %46 : vector<1x8x512xf32> to vector<8x512xf32>
    %cst_35 = arith.constant dense<0.000000e+00> : vector<8x512xf32>
    %48 = tpu.matmul %40, %5, %cst_35 {dimension_numbers = #tpu.dot_dimension_numbers<[1], [0], [0], [1], [0, 0, 1, 1], [], []>} : vector<8x128xf32>, vector<128x512xf32>, vector<8x512xf32> -> vector<8x512xf32>
    %49 = arith.addf %47, %48 : vector<8x512xf32>
    %50 = vector.extract_strided_slice %49 {offsets = [0, 0], sizes = [8, 384], strides = [1, 1]} : vector<8x512xf32> to vector<8x384xf32>
    %51 = arith.negf %50 : vector<8x384xf32>
    %52 = math.exp %51 : vector<8x384xf32>
    %cst_36 = arith.constant 1.000000e+00 : f32
    %53 = vector.broadcast %cst_36 : f32 to vector<8x384xf32>
    %54 = arith.addf %53, %52 : vector<8x384xf32>
    %55 = arith.divf %53, %54 : vector<8x384xf32>
    %56 = vector.extract_strided_slice %49 {offsets = [0, 384], sizes = [8, 128], strides = [1, 1]} : vector<8x512xf32> to vector<8x128xf32>
    %57 = math.tanh %56 : vector<8x128xf32>
    %58 = vector.extract_strided_slice %55 {offsets = [0, 0], sizes = [8, 128], strides = [1, 1]} : vector<8x384xf32> to vector<8x128xf32>
    %59 = vector.extract_strided_slice %55 {offsets = [0, 128], sizes = [8, 128], strides = [1, 1]} : vector<8x384xf32> to vector<8x128xf32>
    %60 = vector.extract_strided_slice %55 {offsets = [0, 256], sizes = [8, 128], strides = [1, 1]} : vector<8x384xf32> to vector<8x128xf32>
    %61 = arith.mulf %59, %38 : vector<8x128xf32>
    %62 = arith.mulf %58, %57 : vector<8x128xf32>
    %63 = arith.addf %61, %62 : vector<8x128xf32>
    %64 = math.tanh %63 : vector<8x128xf32>
    %65 = arith.mulf %60, %64 : vector<8x128xf32>
    %66 = arith.index_cast %c1_i32 : i32 to index
    %c0_37 = arith.constant 0 : index
    %c0_38 = arith.constant 0 : index
    %67 = vector.load %arg15[%66, %c0_37, %c0_38] : memref<8x8x128xf32, #tpu.memory_space<vmem>>, vector<1x8x128xf32>
    %68 = vector.shape_cast %67 : vector<1x8x128xf32> to vector<8x128xf32>
    %69 = vector.shape_cast %65 : vector<8x128xf32> to vector<1x8x128xf32>
    tpu.vector_store %arg15[%66, %c0_37, %c0_38], %69 {strides = array<i32>} : memref<8x8x128xf32, #tpu.memory_space<vmem>>, vector<1x8x128xf32>,
    %c2_i32 = arith.constant 2 : i32
    %70 = arith.index_cast %c2_i32 : i32 to index
    %c0_39 = arith.constant 0 : index
    %c0_40 = arith.constant 0 : index
    %71 = vector.load %arg16[%70, %c0_39, %c0_40] : memref<8x8x512xf32, #tpu.memory_space<vmem>>, vector<1x8x512xf32>
    %72 = vector.shape_cast %71 : vector<1x8x512xf32> to vector<8x512xf32>
    %cst_41 = arith.constant dense<0.000000e+00> : vector<8x512xf32>
    %73 = tpu.matmul %65, %5, %cst_41 {dimension_numbers = #tpu.dot_dimension_numbers<[1], [0], [0], [1], [0, 0, 1, 1], [], []>} : vector<8x128xf32>, vector<128x512xf32>, vector<8x512xf32> -> vector<8x512xf32>
    %74 = arith.addf %72, %73 : vector<8x512xf32>
    %75 = vector.extract_strided_slice %74 {offsets = [0, 0], sizes = [8, 384], strides = [1, 1]} : vector<8x512xf32> to vector<8x384xf32>
    %76 = arith.negf %75 : vector<8x384xf32>
    %77 = math.exp %76 : vector<8x384xf32>
    %cst_42 = arith.constant 1.000000e+00 : f32
    %78 = vector.broadcast %cst_42 : f32 to vector<8x384xf32>
    %79 = arith.addf %78, %77 : vector<8x384xf32>
    %80 = arith.divf %78, %79 : vector<8x384xf32>
    %81 = vector.extract_strided_slice %74 {offsets = [0, 384], sizes = [8, 128], strides = [1, 1]} : vector<8x512xf32> to vector<8x128xf32>
    %82 = math.tanh %81 : vector<8x128xf32>
    %83 = vector.extract_strided_slice %80 {offsets = [0, 0], sizes = [8, 128], strides = [1, 1]} : vector<8x384xf32> to vector<8x128xf32>
    %84 = vector.extract_strided_slice %80 {offsets = [0, 128], sizes = [8, 128], strides = [1, 1]} : vector<8x384xf32> to vector<8x128xf32>
    %85 = vector.extract_strided_slice %80 {offsets = [0, 256], sizes = [8, 128], strides = [1, 1]} : vector<8x384xf32> to vector<8x128xf32>
    %86 = arith.mulf %84, %63 : vector<8x128xf32>
    %87 = arith.mulf %83, %82 : vector<8x128xf32>
    %88 = arith.addf %86, %87 : vector<8x128xf32>
    %89 = math.tanh %88 : vector<8x128xf32>
    %90 = arith.mulf %85, %89 : vector<8x128xf32>
    %91 = arith.index_cast %c2_i32 : i32 to index
    %c0_43 = arith.constant 0 : index
    %c0_44 = arith.constant 0 : index
    %92 = vector.load %arg15[%91, %c0_43, %c0_44] : memref<8x8x128xf32, #tpu.memory_space<vmem>>, vector<1x8x128xf32>
    %93 = vector.shape_cast %92 : vector<1x8x128xf32> to vector<8x128xf32>
    %94 = vector.shape_cast %90 : vector<8x128xf32> to vector<1x8x128xf32>
    tpu.vector_store %arg15[%91, %c0_43, %c0_44], %94 {strides = array<i32>} : memref<8x8x128xf32, #tpu.memory_space<vmem>>, vector<1x8x128xf32>,
    %c3_i32 = arith.constant 3 : i32
    %95 = arith.index_cast %c3_i32 : i32 to index
    %c0_45 = arith.constant 0 : index
    %c0_46 = arith.constant 0 : index
    %96 = vector.load %arg16[%95, %c0_45, %c0_46] : memref<8x8x512xf32, #tpu.memory_space<vmem>>, vector<1x8x512xf32>
    %97 = vector.shape_cast %96 : vector<1x8x512xf32> to vector<8x512xf32>
    %cst_47 = arith.constant dense<0.000000e+00> : vector<8x512xf32>
    %98 = tpu.matmul %90, %5, %cst_47 {dimension_numbers = #tpu.dot_dimension_numbers<[1], [0], [0], [1], [0, 0, 1, 1], [], []>} : vector<8x128xf32>, vector<128x512xf32>, vector<8x512xf32> -> vector<8x512xf32>
    %99 = arith.addf %97, %98 : vector<8x512xf32>
    %100 = vector.extract_strided_slice %99 {offsets = [0, 0], sizes = [8, 384], strides = [1, 1]} : vector<8x512xf32> to vector<8x384xf32>
    %101 = arith.negf %100 : vector<8x384xf32>
    %102 = math.exp %101 : vector<8x384xf32>
    %cst_48 = arith.constant 1.000000e+00 : f32
    %103 = vector.broadcast %cst_48 : f32 to vector<8x384xf32>
    %104 = arith.addf %103, %102 : vector<8x384xf32>
    %105 = arith.divf %103, %104 : vector<8x384xf32>
    %106 = vector.extract_strided_slice %99 {offsets = [0, 384], sizes = [8, 128], strides = [1, 1]} : vector<8x512xf32> to vector<8x128xf32>
    %107 = math.tanh %106 : vector<8x128xf32>
    %108 = vector.extract_strided_slice %105 {offsets = [0, 0], sizes = [8, 128], strides = [1, 1]} : vector<8x384xf32> to vector<8x128xf32>
    %109 = vector.extract_strided_slice %105 {offsets = [0, 128], sizes = [8, 128], strides = [1, 1]} : vector<8x384xf32> to vector<8x128xf32>
    %110 = vector.extract_strided_slice %105 {offsets = [0, 256], sizes = [8, 128], strides = [1, 1]} : vector<8x384xf32> to vector<8x128xf32>
    %111 = arith.mulf %109, %88 : vector<8x128xf32>
    %112 = arith.mulf %108, %107 : vector<8x128xf32>
    %113 = arith.addf %111, %112 : vector<8x128xf32>
    %114 = math.tanh %113 : vector<8x128xf32>
    %115 = arith.mulf %110, %114 : vector<8x128xf32>
    %116 = arith.index_cast %c3_i32 : i32 to index
    %c0_49 = arith.constant 0 : index
    %c0_50 = arith.constant 0 : index
    %117 = vector.load %arg15[%116, %c0_49, %c0_50] : memref<8x8x128xf32, #tpu.memory_space<vmem>>, vector<1x8x128xf32>
    %118 = vector.shape_cast %117 : vector<1x8x128xf32> to vector<8x128xf32>
    %119 = vector.shape_cast %115 : vector<8x128xf32> to vector<1x8x128xf32>
    tpu.vector_store %arg15[%116, %c0_49, %c0_50], %119 {strides = array<i32>} : memref<8x8x128xf32, #tpu.memory_space<vmem>>, vector<1x8x128xf32>,
    %c4_i32 = arith.constant 4 : i32
    %120 = arith.index_cast %c4_i32 : i32 to index
    %c0_51 = arith.constant 0 : index
    %c0_52 = arith.constant 0 : index
    %121 = vector.load %arg16[%120, %c0_51, %c0_52] : memref<8x8x512xf32, #tpu.memory_space<vmem>>, vector<1x8x512xf32>
    %122 = vector.shape_cast %121 : vector<1x8x512xf32> to vector<8x512xf32>
    %cst_53 = arith.constant dense<0.000000e+00> : vector<8x512xf32>
    %123 = tpu.matmul %115, %5, %cst_53 {dimension_numbers = #tpu.dot_dimension_numbers<[1], [0], [0], [1], [0, 0, 1, 1], [], []>} : vector<8x128xf32>, vector<128x512xf32>, vector<8x512xf32> -> vector<8x512xf32>
    %124 = arith.addf %122, %123 : vector<8x512xf32>
    %125 = vector.extract_strided_slice %124 {offsets = [0, 0], sizes = [8, 384], strides = [1, 1]} : vector<8x512xf32> to vector<8x384xf32>
    %126 = arith.negf %125 : vector<8x384xf32>
    %127 = math.exp %126 : vector<8x384xf32>
    %cst_54 = arith.constant 1.000000e+00 : f32
    %128 = vector.broadcast %cst_54 : f32 to vector<8x384xf32>
    %129 = arith.addf %128, %127 : vector<8x384xf32>
    %130 = arith.divf %128, %129 : vector<8x384xf32>
    %131 = vector.extract_strided_slice %124 {offsets = [0, 384], sizes = [8, 128], strides = [1, 1]} : vector<8x512xf32> to vector<8x128xf32>
    %132 = math.tanh %131 : vector<8x128xf32>
    %133 = vector.extract_strided_slice %130 {offsets = [0, 0], sizes = [8, 128], strides = [1, 1]} : vector<8x384xf32> to vector<8x128xf32>
    %134 = vector.extract_strided_slice %130 {offsets = [0, 128], sizes = [8, 128], strides = [1, 1]} : vector<8x384xf32> to vector<8x128xf32>
    %135 = vector.extract_strided_slice %130 {offsets = [0, 256], sizes = [8, 128], strides = [1, 1]} : vector<8x384xf32> to vector<8x128xf32>
    %136 = arith.mulf %134, %113 : vector<8x128xf32>
    %137 = arith.mulf %133, %132 : vector<8x128xf32>
    %138 = arith.addf %136, %137 : vector<8x128xf32>
    %139 = math.tanh %138 : vector<8x128xf32>
    %140 = arith.mulf %135, %139 : vector<8x128xf32>
    %141 = arith.index_cast %c4_i32 : i32 to index
    %c0_55 = arith.constant 0 : index
    %c0_56 = arith.constant 0 : index
    %142 = vector.load %arg15[%141, %c0_55, %c0_56] : memref<8x8x128xf32, #tpu.memory_space<vmem>>, vector<1x8x128xf32>
    %143 = vector.shape_cast %142 : vector<1x8x128xf32> to vector<8x128xf32>
    %144 = vector.shape_cast %140 : vector<8x128xf32> to vector<1x8x128xf32>
    tpu.vector_store %arg15[%141, %c0_55, %c0_56], %144 {strides = array<i32>} : memref<8x8x128xf32, #tpu.memory_space<vmem>>, vector<1x8x128xf32>,
    %c5_i32 = arith.constant 5 : i32
    %145 = arith.index_cast %c5_i32 : i32 to index
    %c0_57 = arith.constant 0 : index
    %c0_58 = arith.constant 0 : index
    %146 = vector.load %arg16[%145, %c0_57, %c0_58] : memref<8x8x512xf32, #tpu.memory_space<vmem>>, vector<1x8x512xf32>
    %147 = vector.shape_cast %146 : vector<1x8x512xf32> to vector<8x512xf32>
    %cst_59 = arith.constant dense<0.000000e+00> : vector<8x512xf32>
    %148 = tpu.matmul %140, %5, %cst_59 {dimension_numbers = #tpu.dot_dimension_numbers<[1], [0], [0], [1], [0, 0, 1, 1], [], []>} : vector<8x128xf32>, vector<128x512xf32>, vector<8x512xf32> -> vector<8x512xf32>
    %149 = arith.addf %147, %148 : vector<8x512xf32>
    %150 = vector.extract_strided_slice %149 {offsets = [0, 0], sizes = [8, 384], strides = [1, 1]} : vector<8x512xf32> to vector<8x384xf32>
    %151 = arith.negf %150 : vector<8x384xf32>
    %152 = math.exp %151 : vector<8x384xf32>
    %cst_60 = arith.constant 1.000000e+00 : f32
    %153 = vector.broadcast %cst_60 : f32 to vector<8x384xf32>
    %154 = arith.addf %153, %152 : vector<8x384xf32>
    %155 = arith.divf %153, %154 : vector<8x384xf32>
    %156 = vector.extract_strided_slice %149 {offsets = [0, 384], sizes = [8, 128], strides = [1, 1]} : vector<8x512xf32> to vector<8x128xf32>
    %157 = math.tanh %156 : vector<8x128xf32>
    %158 = vector.extract_strided_slice %155 {offsets = [0, 0], sizes = [8, 128], strides = [1, 1]} : vector<8x384xf32> to vector<8x128xf32>
    %159 = vector.extract_strided_slice %155 {offsets = [0, 128], sizes = [8, 128], strides = [1, 1]} : vector<8x384xf32> to vector<8x128xf32>
    %160 = vector.extract_strided_slice %155 {offsets = [0, 256], sizes = [8, 128], strides = [1, 1]} : vector<8x384xf32> to vector<8x128xf32>
    %161 = arith.mulf %159, %138 : vector<8x128xf32>
    %162 = arith.mulf %158, %157 : vector<8x128xf32>
    %163 = arith.addf %161, %162 : vector<8x128xf32>
    %164 = math.tanh %163 : vector<8x128xf32>
    %165 = arith.mulf %160, %164 : vector<8x128xf32>
    %166 = arith.index_cast %c5_i32 : i32 to index
    %c0_61 = arith.constant 0 : index
    %c0_62 = arith.constant 0 : index
    %167 = vector.load %arg15[%166, %c0_61, %c0_62] : memref<8x8x128xf32, #tpu.memory_space<vmem>>, vector<1x8x128xf32>
    %168 = vector.shape_cast %167 : vector<1x8x128xf32> to vector<8x128xf32>
    %169 = vector.shape_cast %165 : vector<8x128xf32> to vector<1x8x128xf32>
    tpu.vector_store %arg15[%166, %c0_61, %c0_62], %169 {strides = array<i32>} : memref<8x8x128xf32, #tpu.memory_space<vmem>>, vector<1x8x128xf32>,
    %c6_i32 = arith.constant 6 : i32
    %170 = arith.index_cast %c6_i32 : i32 to index
    %c0_63 = arith.constant 0 : index
    %c0_64 = arith.constant 0 : index
    %171 = vector.load %arg16[%170, %c0_63, %c0_64] : memref<8x8x512xf32, #tpu.memory_space<vmem>>, vector<1x8x512xf32>
    %172 = vector.shape_cast %171 : vector<1x8x512xf32> to vector<8x512xf32>
    %cst_65 = arith.constant dense<0.000000e+00> : vector<8x512xf32>
    %173 = tpu.matmul %165, %5, %cst_65 {dimension_numbers = #tpu.dot_dimension_numbers<[1], [0], [0], [1], [0, 0, 1, 1], [], []>} : vector<8x128xf32>, vector<128x512xf32>, vector<8x512xf32> -> vector<8x512xf32>
    %174 = arith.addf %172, %173 : vector<8x512xf32>
    %175 = vector.extract_strided_slice %174 {offsets = [0, 0], sizes = [8, 384], strides = [1, 1]} : vector<8x512xf32> to vector<8x384xf32>
    %176 = arith.negf %175 : vector<8x384xf32>
    %177 = math.exp %176 : vector<8x384xf32>
    %cst_66 = arith.constant 1.000000e+00 : f32
    %178 = vector.broadcast %cst_66 : f32 to vector<8x384xf32>
    %179 = arith.addf %178, %177 : vector<8x384xf32>
    %180 = arith.divf %178, %179 : vector<8x384xf32>
    %181 = vector.extract_strided_slice %174 {offsets = [0, 384], sizes = [8, 128], strides = [1, 1]} : vector<8x512xf32> to vector<8x128xf32>
    %182 = math.tanh %181 : vector<8x128xf32>
    %183 = vector.extract_strided_slice %180 {offsets = [0, 0], sizes = [8, 128], strides = [1, 1]} : vector<8x384xf32> to vector<8x128xf32>
    %184 = vector.extract_strided_slice %180 {offsets = [0, 128], sizes = [8, 128], strides = [1, 1]} : vector<8x384xf32> to vector<8x128xf32>
    %185 = vector.extract_strided_slice %180 {offsets = [0, 256], sizes = [8, 128], strides = [1, 1]} : vector<8x384xf32> to vector<8x128xf32>
    %186 = arith.mulf %184, %163 : vector<8x128xf32>
    %187 = arith.mulf %183, %182 : vector<8x128xf32>
    %188 = arith.addf %186, %187 : vector<8x128xf32>
    %189 = math.tanh %188 : vector<8x128xf32>
    %190 = arith.mulf %185, %189 : vector<8x128xf32>
    %191 = arith.index_cast %c6_i32 : i32 to index
    %c0_67 = arith.constant 0 : index
    %c0_68 = arith.constant 0 : index
    %192 = vector.load %arg15[%191, %c0_67, %c0_68] : memref<8x8x128xf32, #tpu.memory_space<vmem>>, vector<1x8x128xf32>
    %193 = vector.shape_cast %192 : vector<1x8x128xf32> to vector<8x128xf32>
    %194 = vector.shape_cast %190 : vector<8x128xf32> to vector<1x8x128xf32>
    tpu.vector_store %arg15[%191, %c0_67, %c0_68], %194 {strides = array<i32>} : memref<8x8x128xf32, #tpu.memory_space<vmem>>, vector<1x8x128xf32>,
    %c7_i32 = arith.constant 7 : i32
    %195 = arith.index_cast %c7_i32 : i32 to index
    %c0_69 = arith.constant 0 : index
    %c0_70 = arith.constant 0 : index
    %196 = vector.load %arg16[%195, %c0_69, %c0_70] : memref<8x8x512xf32, #tpu.memory_space<vmem>>, vector<1x8x512xf32>
    %197 = vector.shape_cast %196 : vector<1x8x512xf32> to vector<8x512xf32>
    %cst_71 = arith.constant dense<0.000000e+00> : vector<8x512xf32>
    %198 = tpu.matmul %190, %5, %cst_71 {dimension_numbers = #tpu.dot_dimension_numbers<[1], [0], [0], [1], [0, 0, 1, 1], [], []>} : vector<8x128xf32>, vector<128x512xf32>, vector<8x512xf32> -> vector<8x512xf32>
    %199 = arith.addf %197, %198 : vector<8x512xf32>
    %200 = vector.extract_strided_slice %199 {offsets = [0, 0], sizes = [8, 384], strides = [1, 1]} : vector<8x512xf32> to vector<8x384xf32>
    %201 = arith.negf %200 : vector<8x384xf32>
    %202 = math.exp %201 : vector<8x384xf32>
    %cst_72 = arith.constant 1.000000e+00 : f32
    %203 = vector.broadcast %cst_72 : f32 to vector<8x384xf32>
    %204 = arith.addf %203, %202 : vector<8x384xf32>
    %205 = arith.divf %203, %204 : vector<8x384xf32>
    %206 = vector.extract_strided_slice %199 {offsets = [0, 384], sizes = [8, 128], strides = [1, 1]} : vector<8x512xf32> to vector<8x128xf32>
    %207 = math.tanh %206 : vector<8x128xf32>
    %208 = vector.extract_strided_slice %205 {offsets = [0, 0], sizes = [8, 128], strides = [1, 1]} : vector<8x384xf32> to vector<8x128xf32>
    %209 = vector.extract_strided_slice %205 {offsets = [0, 128], sizes = [8, 128], strides = [1, 1]} : vector<8x384xf32> to vector<8x128xf32>
    %210 = vector.extract_strided_slice %205 {offsets = [0, 256], sizes = [8, 128], strides = [1, 1]} : vector<8x384xf32> to vector<8x128xf32>
    %211 = arith.mulf %209, %188 : vector<8x128xf32>
    %212 = arith.mulf %208, %207 : vector<8x128xf32>
    %213 = arith.addf %211, %212 : vector<8x128xf32>
    %214 = math.tanh %213 : vector<8x128xf32>
    %215 = arith.mulf %210, %214 : vector<8x128xf32>
    %216 = arith.index_cast %c7_i32 : i32 to index
    %c0_73 = arith.constant 0 : index
    %c0_74 = arith.constant 0 : index
    %217 = vector.load %arg15[%216, %c0_73, %c0_74] : memref<8x8x128xf32, #tpu.memory_space<vmem>>, vector<1x8x128xf32>
    %218 = vector.shape_cast %217 : vector<1x8x128xf32> to vector<8x128xf32>
    %219 = vector.shape_cast %215 : vector<8x128xf32> to vector<1x8x128xf32>
    tpu.vector_store %arg15[%216, %c0_73, %c0_74], %219 {strides = array<i32>} : memref<8x8x128xf32, #tpu.memory_space<vmem>>, vector<1x8x128xf32>,
    %c8_i32 = arith.constant 8 : i32
    %c0_75 = arith.constant 0 : index
    %c0_76 = arith.constant 0 : index
    %c0_77 = arith.constant 0 : index
    %220 = vector.load %arg13[%c0_75, %c0_76, %c0_77] : memref<2x8x128xf32, #tpu.memory_space<vmem>>, vector<1x8x128xf32>
    %221 = vector.shape_cast %220 : vector<1x8x128xf32> to vector<8x128xf32>
    %222 = vector.shape_cast %215 : vector<8x128xf32> to vector<1x8x128xf32>
    tpu.vector_store %arg13[%c0_75, %c0_76, %c0_77], %222 {strides = array<i32>} : memref<2x8x128xf32, #tpu.memory_space<vmem>>, vector<1x8x128xf32>,
    %c0_78 = arith.constant 0 : index
    %c0_79 = arith.constant 0 : index
    %c0_80 = arith.constant 0 : index
    %223 = vector.load %arg14[%c0_78, %c0_79, %c0_80] : memref<2x8x128xf32, #tpu.memory_space<vmem>>, vector<1x8x128xf32>
    %224 = vector.shape_cast %223 : vector<1x8x128xf32> to vector<8x128xf32>
    %225 = vector.shape_cast %213 : vector<8x128xf32> to vector<1x8x128xf32>
    tpu.vector_store %arg14[%c0_78, %c0_79, %c0_80], %225 {strides = array<i32>} : memref<2x8x128xf32, #tpu.memory_space<vmem>>, vector<1x8x128xf32>,
    %c1 = arith.constant 1 : index
    %c0_81 = arith.constant 0 : index
    %c0_82 = arith.constant 0 : index
    %226 = vector.load %arg4[%c1, %c0_81, %c0_82] : memref<2x128x512xf32, #tpu.memory_space<vmem>>, vector<1x128x512xf32>
    %227 = vector.shape_cast %226 : vector<1x128x512xf32> to vector<128x512xf32>
    %c1_83 = arith.constant 1 : index
    %c0_84 = arith.constant 0 : index
    %c0_85 = arith.constant 0 : index
    %228 = vector.load %arg5[%c1_83, %c0_84, %c0_85] : memref<2x1x512xf32, #tpu.memory_space<vmem>>, vector<1x1x512xf32>
    %229 = vector.shape_cast %228 : vector<1x1x512xf32> to vector<1x512xf32>
    %c0_86 = arith.constant 0 : index
    %c0_87 = arith.constant 0 : index
    %c0_88 = arith.constant 0 : index
    %230 = vector.load %arg15[%c0_86, %c0_87, %c0_88] : memref<8x8x128xf32, #tpu.memory_space<vmem>>, vector<8x8x128xf32>
    %231 = vector.shape_cast %230 : vector<8x8x128xf32> to vector<64x128xf32>
    %c0_89 = arith.constant 0 : index
    %c0_90 = arith.constant 0 : index
    %c0_91 = arith.constant 0 : index
    %232 = vector.load %arg3[%c0_89, %c0_90, %c0_91] : memref<1x128x512xf32, #tpu.memory_space<vmem>>, vector<1x128x512xf32>
    %233 = vector.shape_cast %232 : vector<1x128x512xf32> to vector<128x512xf32>
    %cst_92 = arith.constant dense<0.000000e+00> : vector<64x512xf32>
    %234 = tpu.matmul %231, %233, %cst_92 {dimension_numbers = #tpu.dot_dimension_numbers<[1], [0], [0], [1], [0, 0, 1, 1], [], []>} : vector<64x128xf32>, vector<128x512xf32>, vector<64x512xf32> -> vector<64x512xf32>
    %235 = vector.broadcast %229 : vector<1x512xf32> to vector<64x512xf32>
    %236 = arith.addf %234, %235 : vector<64x512xf32>
    %237 = vector.shape_cast %236 : vector<64x512xf32> to vector<8x8x512xf32>
    %c0_93 = arith.constant 0 : index
    %c0_94 = arith.constant 0 : index
    %c0_95 = arith.constant 0 : index
    %238 = vector.load %arg16[%c0_93, %c0_94, %c0_95] : memref<8x8x512xf32, #tpu.memory_space<vmem>>, vector<8x8x512xf32>
    tpu.vector_store %arg16[%c0_93, %c0_94, %c0_95], %237 {strides = array<i32>} : memref<8x8x512xf32, #tpu.memory_space<vmem>>, vector<8x8x512xf32>,
    %c1_96 = arith.constant 1 : index
    %c0_97 = arith.constant 0 : index
    %c0_98 = arith.constant 0 : index
    %239 = vector.load %arg13[%c1_96, %c0_97, %c0_98] : memref<2x8x128xf32, #tpu.memory_space<vmem>>, vector<1x8x128xf32>
    %240 = vector.shape_cast %239 : vector<1x8x128xf32> to vector<8x128xf32>
    %c1_99 = arith.constant 1 : index
    %c0_100 = arith.constant 0 : index
    %c0_101 = arith.constant 0 : index
    %241 = vector.load %arg14[%c1_99, %c0_100, %c0_101] : memref<2x8x128xf32, #tpu.memory_space<vmem>>, vector<1x8x128xf32>
    %242 = vector.shape_cast %241 : vector<1x8x128xf32> to vector<8x128xf32>
    %c0_i32_102 = arith.constant 0 : i32
    %243 = arith.index_cast %c0_i32_102 : i32 to index
    %c0_103 = arith.constant 0 : index
    %c0_104 = arith.constant 0 : index
    %244 = vector.load %arg16[%243, %c0_103, %c0_104] : memref<8x8x512xf32, #tpu.memory_space<vmem>>, vector<1x8x512xf32>
    %245 = vector.shape_cast %244 : vector<1x8x512xf32> to vector<8x512xf32>
    %cst_105 = arith.constant dense<0.000000e+00> : vector<8x512xf32>
    %246 = tpu.matmul %240, %227, %cst_105 {dimension_numbers = #tpu.dot_dimension_numbers<[1], [0], [0], [1], [0, 0, 1, 1], [], []>} : vector<8x128xf32>, vector<128x512xf32>, vector<8x512xf32> -> vector<8x512xf32>
    %247 = arith.addf %245, %246 : vector<8x512xf32>
    %248 = vector.extract_strided_slice %247 {offsets = [0, 0], sizes = [8, 384], strides = [1, 1]} : vector<8x512xf32> to vector<8x384xf32>
    %249 = arith.negf %248 : vector<8x384xf32>
    %250 = math.exp %249 : vector<8x384xf32>
    %cst_106 = arith.constant 1.000000e+00 : f32
    %251 = vector.broadcast %cst_106 : f32 to vector<8x384xf32>
    %252 = arith.addf %251, %250 : vector<8x384xf32>
    %253 = arith.divf %251, %252 : vector<8x384xf32>
    %254 = vector.extract_strided_slice %247 {offsets = [0, 384], sizes = [8, 128], strides = [1, 1]} : vector<8x512xf32> to vector<8x128xf32>
    %255 = math.tanh %254 : vector<8x128xf32>
    %256 = vector.extract_strided_slice %253 {offsets = [0, 0], sizes = [8, 128], strides = [1, 1]} : vector<8x384xf32> to vector<8x128xf32>
    %257 = vector.extract_strided_slice %253 {offsets = [0, 128], sizes = [8, 128], strides = [1, 1]} : vector<8x384xf32> to vector<8x128xf32>
    %258 = vector.extract_strided_slice %253 {offsets = [0, 256], sizes = [8, 128], strides = [1, 1]} : vector<8x384xf32> to vector<8x128xf32>
    %259 = arith.mulf %257, %242 : vector<8x128xf32>
    %260 = arith.mulf %256, %255 : vector<8x128xf32>
    %261 = arith.addf %259, %260 : vector<8x128xf32>
    %262 = math.tanh %261 : vector<8x128xf32>
    %263 = arith.mulf %258, %262 : vector<8x128xf32>
    %c1_i32_107 = arith.constant 1 : i32
    %264 = arith.index_cast %c1_i32_107 : i32 to index
    %c0_108 = arith.constant 0 : index
    %c0_109 = arith.constant 0 : index
    %265 = vector.load %arg16[%264, %c0_108, %c0_109] : memref<8x8x512xf32, #tpu.memory_space<vmem>>, vector<1x8x512xf32>
    %266 = vector.shape_cast %265 : vector<1x8x512xf32> to vector<8x512xf32>
    %cst_110 = arith.constant dense<0.000000e+00> : vector<8x512xf32>
    %267 = tpu.matmul %263, %227, %cst_110 {dimension_numbers = #tpu.dot_dimension_numbers<[1], [0], [0], [1], [0, 0, 1, 1], [], []>} : vector<8x128xf32>, vector<128x512xf32>, vector<8x512xf32> -> vector<8x512xf32>
    %268 = arith.addf %266, %267 : vector<8x512xf32>
    %269 = vector.extract_strided_slice %268 {offsets = [0, 0], sizes = [8, 384], strides = [1, 1]} : vector<8x512xf32> to vector<8x384xf32>
    %270 = arith.negf %269 : vector<8x384xf32>
    %271 = math.exp %270 : vector<8x384xf32>
    %cst_111 = arith.constant 1.000000e+00 : f32
    %272 = vector.broadcast %cst_111 : f32 to vector<8x384xf32>
    %273 = arith.addf %272, %271 : vector<8x384xf32>
    %274 = arith.divf %272, %273 : vector<8x384xf32>
    %275 = vector.extract_strided_slice %268 {offsets = [0, 384], sizes = [8, 128], strides = [1, 1]} : vector<8x512xf32> to vector<8x128xf32>
    %276 = math.tanh %275 : vector<8x128xf32>
    %277 = vector.extract_strided_slice %274 {offsets = [0, 0], sizes = [8, 128], strides = [1, 1]} : vector<8x384xf32> to vector<8x128xf32>
    %278 = vector.extract_strided_slice %274 {offsets = [0, 128], sizes = [8, 128], strides = [1, 1]} : vector<8x384xf32> to vector<8x128xf32>
    %279 = vector.extract_strided_slice %274 {offsets = [0, 256], sizes = [8, 128], strides = [1, 1]} : vector<8x384xf32> to vector<8x128xf32>
    %280 = arith.mulf %278, %261 : vector<8x128xf32>
    %281 = arith.mulf %277, %276 : vector<8x128xf32>
    %282 = arith.addf %280, %281 : vector<8x128xf32>
    %283 = math.tanh %282 : vector<8x128xf32>
    %284 = arith.mulf %279, %283 : vector<8x128xf32>
    %c2_i32_112 = arith.constant 2 : i32
    %285 = arith.index_cast %c2_i32_112 : i32 to index
    %c0_113 = arith.constant 0 : index
    %c0_114 = arith.constant 0 : index
    %286 = vector.load %arg16[%285, %c0_113, %c0_114] : memref<8x8x512xf32, #tpu.memory_space<vmem>>, vector<1x8x512xf32>
    %287 = vector.shape_cast %286 : vector<1x8x512xf32> to vector<8x512xf32>
    %cst_115 = arith.constant dense<0.000000e+00> : vector<8x512xf32>
    %288 = tpu.matmul %284, %227, %cst_115 {dimension_numbers = #tpu.dot_dimension_numbers<[1], [0], [0], [1], [0, 0, 1, 1], [], []>} : vector<8x128xf32>, vector<128x512xf32>, vector<8x512xf32> -> vector<8x512xf32>
    %289 = arith.addf %287, %288 : vector<8x512xf32>
    %290 = vector.extract_strided_slice %289 {offsets = [0, 0], sizes = [8, 384], strides = [1, 1]} : vector<8x512xf32> to vector<8x384xf32>
    %291 = arith.negf %290 : vector<8x384xf32>
    %292 = math.exp %291 : vector<8x384xf32>
    %cst_116 = arith.constant 1.000000e+00 : f32
    %293 = vector.broadcast %cst_116 : f32 to vector<8x384xf32>
    %294 = arith.addf %293, %292 : vector<8x384xf32>
    %295 = arith.divf %293, %294 : vector<8x384xf32>
    %296 = vector.extract_strided_slice %289 {offsets = [0, 384], sizes = [8, 128], strides = [1, 1]} : vector<8x512xf32> to vector<8x128xf32>
    %297 = math.tanh %296 : vector<8x128xf32>
    %298 = vector.extract_strided_slice %295 {offsets = [0, 0], sizes = [8, 128], strides = [1, 1]} : vector<8x384xf32> to vector<8x128xf32>
    %299 = vector.extract_strided_slice %295 {offsets = [0, 128], sizes = [8, 128], strides = [1, 1]} : vector<8x384xf32> to vector<8x128xf32>
    %300 = vector.extract_strided_slice %295 {offsets = [0, 256], sizes = [8, 128], strides = [1, 1]} : vector<8x384xf32> to vector<8x128xf32>
    %301 = arith.mulf %299, %282 : vector<8x128xf32>
    %302 = arith.mulf %298, %297 : vector<8x128xf32>
    %303 = arith.addf %301, %302 : vector<8x128xf32>
    %304 = math.tanh %303 : vector<8x128xf32>
    %305 = arith.mulf %300, %304 : vector<8x128xf32>
    %c3_i32_117 = arith.constant 3 : i32
    %306 = arith.index_cast %c3_i32_117 : i32 to index
    %c0_118 = arith.constant 0 : index
    %c0_119 = arith.constant 0 : index
    %307 = vector.load %arg16[%306, %c0_118, %c0_119] : memref<8x8x512xf32, #tpu.memory_space<vmem>>, vector<1x8x512xf32>
    %308 = vector.shape_cast %307 : vector<1x8x512xf32> to vector<8x512xf32>
    %cst_120 = arith.constant dense<0.000000e+00> : vector<8x512xf32>
    %309 = tpu.matmul %305, %227, %cst_120 {dimension_numbers = #tpu.dot_dimension_numbers<[1], [0], [0], [1], [0, 0, 1, 1], [], []>} : vector<8x128xf32>, vector<128x512xf32>, vector<8x512xf32> -> vector<8x512xf32>
    %310 = arith.addf %308, %309 : vector<8x512xf32>
    %311 = vector.extract_strided_slice %310 {offsets = [0, 0], sizes = [8, 384], strides = [1, 1]} : vector<8x512xf32> to vector<8x384xf32>
    %312 = arith.negf %311 : vector<8x384xf32>
    %313 = math.exp %312 : vector<8x384xf32>
    %cst_121 = arith.constant 1.000000e+00 : f32
    %314 = vector.broadcast %cst_121 : f32 to vector<8x384xf32>
    %315 = arith.addf %314, %313 : vector<8x384xf32>
    %316 = arith.divf %314, %315 : vector<8x384xf32>
    %317 = vector.extract_strided_slice %310 {offsets = [0, 384], sizes = [8, 128], strides = [1, 1]} : vector<8x512xf32> to vector<8x128xf32>
    %318 = math.tanh %317 : vector<8x128xf32>
    %319 = vector.extract_strided_slice %316 {offsets = [0, 0], sizes = [8, 128], strides = [1, 1]} : vector<8x384xf32> to vector<8x128xf32>
    %320 = vector.extract_strided_slice %316 {offsets = [0, 128], sizes = [8, 128], strides = [1, 1]} : vector<8x384xf32> to vector<8x128xf32>
    %321 = vector.extract_strided_slice %316 {offsets = [0, 256], sizes = [8, 128], strides = [1, 1]} : vector<8x384xf32> to vector<8x128xf32>
    %322 = arith.mulf %320, %303 : vector<8x128xf32>
    %323 = arith.mulf %319, %318 : vector<8x128xf32>
    %324 = arith.addf %322, %323 : vector<8x128xf32>
    %325 = math.tanh %324 : vector<8x128xf32>
    %326 = arith.mulf %321, %325 : vector<8x128xf32>
    %c4_i32_122 = arith.constant 4 : i32
    %327 = arith.index_cast %c4_i32_122 : i32 to index
    %c0_123 = arith.constant 0 : index
    %c0_124 = arith.constant 0 : index
    %328 = vector.load %arg16[%327, %c0_123, %c0_124] : memref<8x8x512xf32, #tpu.memory_space<vmem>>, vector<1x8x512xf32>
    %329 = vector.shape_cast %328 : vector<1x8x512xf32> to vector<8x512xf32>
    %cst_125 = arith.constant dense<0.000000e+00> : vector<8x512xf32>
    %330 = tpu.matmul %326, %227, %cst_125 {dimension_numbers = #tpu.dot_dimension_numbers<[1], [0], [0], [1], [0, 0, 1, 1], [], []>} : vector<8x128xf32>, vector<128x512xf32>, vector<8x512xf32> -> vector<8x512xf32>
    %331 = arith.addf %329, %330 : vector<8x512xf32>
    %332 = vector.extract_strided_slice %331 {offsets = [0, 0], sizes = [8, 384], strides = [1, 1]} : vector<8x512xf32> to vector<8x384xf32>
    %333 = arith.negf %332 : vector<8x384xf32>
    %334 = math.exp %333 : vector<8x384xf32>
    %cst_126 = arith.constant 1.000000e+00 : f32
    %335 = vector.broadcast %cst_126 : f32 to vector<8x384xf32>
    %336 = arith.addf %335, %334 : vector<8x384xf32>
    %337 = arith.divf %335, %336 : vector<8x384xf32>
    %338 = vector.extract_strided_slice %331 {offsets = [0, 384], sizes = [8, 128], strides = [1, 1]} : vector<8x512xf32> to vector<8x128xf32>
    %339 = math.tanh %338 : vector<8x128xf32>
    %340 = vector.extract_strided_slice %337 {offsets = [0, 0], sizes = [8, 128], strides = [1, 1]} : vector<8x384xf32> to vector<8x128xf32>
    %341 = vector.extract_strided_slice %337 {offsets = [0, 128], sizes = [8, 128], strides = [1, 1]} : vector<8x384xf32> to vector<8x128xf32>
    %342 = vector.extract_strided_slice %337 {offsets = [0, 256], sizes = [8, 128], strides = [1, 1]} : vector<8x384xf32> to vector<8x128xf32>
    %343 = arith.mulf %341, %324 : vector<8x128xf32>
    %344 = arith.mulf %340, %339 : vector<8x128xf32>
    %345 = arith.addf %343, %344 : vector<8x128xf32>
    %346 = math.tanh %345 : vector<8x128xf32>
    %347 = arith.mulf %342, %346 : vector<8x128xf32>
    %c5_i32_127 = arith.constant 5 : i32
    %348 = arith.index_cast %c5_i32_127 : i32 to index
    %c0_128 = arith.constant 0 : index
    %c0_129 = arith.constant 0 : index
    %349 = vector.load %arg16[%348, %c0_128, %c0_129] : memref<8x8x512xf32, #tpu.memory_space<vmem>>, vector<1x8x512xf32>
    %350 = vector.shape_cast %349 : vector<1x8x512xf32> to vector<8x512xf32>
    %cst_130 = arith.constant dense<0.000000e+00> : vector<8x512xf32>
    %351 = tpu.matmul %347, %227, %cst_130 {dimension_numbers = #tpu.dot_dimension_numbers<[1], [0], [0], [1], [0, 0, 1, 1], [], []>} : vector<8x128xf32>, vector<128x512xf32>, vector<8x512xf32> -> vector<8x512xf32>
    %352 = arith.addf %350, %351 : vector<8x512xf32>
    %353 = vector.extract_strided_slice %352 {offsets = [0, 0], sizes = [8, 384], strides = [1, 1]} : vector<8x512xf32> to vector<8x384xf32>
    %354 = arith.negf %353 : vector<8x384xf32>
    %355 = math.exp %354 : vector<8x384xf32>
    %cst_131 = arith.constant 1.000000e+00 : f32
    %356 = vector.broadcast %cst_131 : f32 to vector<8x384xf32>
    %357 = arith.addf %356, %355 : vector<8x384xf32>
    %358 = arith.divf %356, %357 : vector<8x384xf32>
    %359 = vector.extract_strided_slice %352 {offsets = [0, 384], sizes = [8, 128], strides = [1, 1]} : vector<8x512xf32> to vector<8x128xf32>
    %360 = math.tanh %359 : vector<8x128xf32>
    %361 = vector.extract_strided_slice %358 {offsets = [0, 0], sizes = [8, 128], strides = [1, 1]} : vector<8x384xf32> to vector<8x128xf32>
    %362 = vector.extract_strided_slice %358 {offsets = [0, 128], sizes = [8, 128], strides = [1, 1]} : vector<8x384xf32> to vector<8x128xf32>
    %363 = vector.extract_strided_slice %358 {offsets = [0, 256], sizes = [8, 128], strides = [1, 1]} : vector<8x384xf32> to vector<8x128xf32>
    %364 = arith.mulf %362, %345 : vector<8x128xf32>
    %365 = arith.mulf %361, %360 : vector<8x128xf32>
    %366 = arith.addf %364, %365 : vector<8x128xf32>
    %367 = math.tanh %366 : vector<8x128xf32>
    %368 = arith.mulf %363, %367 : vector<8x128xf32>
    %c6_i32_132 = arith.constant 6 : i32
    %369 = arith.index_cast %c6_i32_132 : i32 to index
    %c0_133 = arith.constant 0 : index
    %c0_134 = arith.constant 0 : index
    %370 = vector.load %arg16[%369, %c0_133, %c0_134] : memref<8x8x512xf32, #tpu.memory_space<vmem>>, vector<1x8x512xf32>
    %371 = vector.shape_cast %370 : vector<1x8x512xf32> to vector<8x512xf32>
    %cst_135 = arith.constant dense<0.000000e+00> : vector<8x512xf32>
    %372 = tpu.matmul %368, %227, %cst_135 {dimension_numbers = #tpu.dot_dimension_numbers<[1], [0], [0], [1], [0, 0, 1, 1], [], []>} : vector<8x128xf32>, vector<128x512xf32>, vector<8x512xf32> -> vector<8x512xf32>
    %373 = arith.addf %371, %372 : vector<8x512xf32>
    %374 = vector.extract_strided_slice %373 {offsets = [0, 0], sizes = [8, 384], strides = [1, 1]} : vector<8x512xf32> to vector<8x384xf32>
    %375 = arith.negf %374 : vector<8x384xf32>
    %376 = math.exp %375 : vector<8x384xf32>
    %cst_136 = arith.constant 1.000000e+00 : f32
    %377 = vector.broadcast %cst_136 : f32 to vector<8x384xf32>
    %378 = arith.addf %377, %376 : vector<8x384xf32>
    %379 = arith.divf %377, %378 : vector<8x384xf32>
    %380 = vector.extract_strided_slice %373 {offsets = [0, 384], sizes = [8, 128], strides = [1, 1]} : vector<8x512xf32> to vector<8x128xf32>
    %381 = math.tanh %380 : vector<8x128xf32>
    %382 = vector.extract_strided_slice %379 {offsets = [0, 0], sizes = [8, 128], strides = [1, 1]} : vector<8x384xf32> to vector<8x128xf32>
    %383 = vector.extract_strided_slice %379 {offsets = [0, 128], sizes = [8, 128], strides = [1, 1]} : vector<8x384xf32> to vector<8x128xf32>
    %384 = vector.extract_strided_slice %379 {offsets = [0, 256], sizes = [8, 128], strides = [1, 1]} : vector<8x384xf32> to vector<8x128xf32>
    %385 = arith.mulf %383, %366 : vector<8x128xf32>
    %386 = arith.mulf %382, %381 : vector<8x128xf32>
    %387 = arith.addf %385, %386 : vector<8x128xf32>
    %388 = math.tanh %387 : vector<8x128xf32>
    %389 = arith.mulf %384, %388 : vector<8x128xf32>
    %c7_i32_137 = arith.constant 7 : i32
    %390 = arith.index_cast %c7_i32_137 : i32 to index
    %c0_138 = arith.constant 0 : index
    %c0_139 = arith.constant 0 : index
    %391 = vector.load %arg16[%390, %c0_138, %c0_139] : memref<8x8x512xf32, #tpu.memory_space<vmem>>, vector<1x8x512xf32>
    %392 = vector.shape_cast %391 : vector<1x8x512xf32> to vector<8x512xf32>
    %cst_140 = arith.constant dense<0.000000e+00> : vector<8x512xf32>
    %393 = tpu.matmul %389, %227, %cst_140 {dimension_numbers = #tpu.dot_dimension_numbers<[1], [0], [0], [1], [0, 0, 1, 1], [], []>} : vector<8x128xf32>, vector<128x512xf32>, vector<8x512xf32> -> vector<8x512xf32>
    %394 = arith.addf %392, %393 : vector<8x512xf32>
    %395 = vector.extract_strided_slice %394 {offsets = [0, 0], sizes = [8, 384], strides = [1, 1]} : vector<8x512xf32> to vector<8x384xf32>
    %396 = arith.negf %395 : vector<8x384xf32>
    %397 = math.exp %396 : vector<8x384xf32>
    %cst_141 = arith.constant 1.000000e+00 : f32
    %398 = vector.broadcast %cst_141 : f32 to vector<8x384xf32>
    %399 = arith.addf %398, %397 : vector<8x384xf32>
    %400 = arith.divf %398, %399 : vector<8x384xf32>
    %401 = vector.extract_strided_slice %394 {offsets = [0, 384], sizes = [8, 128], strides = [1, 1]} : vector<8x512xf32> to vector<8x128xf32>
    %402 = math.tanh %401 : vector<8x128xf32>
    %403 = vector.extract_strided_slice %400 {offsets = [0, 0], sizes = [8, 128], strides = [1, 1]} : vector<8x384xf32> to vector<8x128xf32>
    %404 = vector.extract_strided_slice %400 {offsets = [0, 128], sizes = [8, 128], strides = [1, 1]} : vector<8x384xf32> to vector<8x128xf32>
    %405 = vector.extract_strided_slice %400 {offsets = [0, 256], sizes = [8, 128], strides = [1, 1]} : vector<8x384xf32> to vector<8x128xf32>
    %406 = arith.mulf %404, %387 : vector<8x128xf32>
    %407 = arith.mulf %403, %402 : vector<8x128xf32>
    %408 = arith.addf %406, %407 : vector<8x128xf32>
    %409 = math.tanh %408 : vector<8x128xf32>
    %410 = arith.mulf %405, %409 : vector<8x128xf32>
    %c8_i32_142 = arith.constant 8 : i32
    %c1_143 = arith.constant 1 : index
    %c0_144 = arith.constant 0 : index
    %c0_145 = arith.constant 0 : index
    %411 = vector.load %arg13[%c1_143, %c0_144, %c0_145] : memref<2x8x128xf32, #tpu.memory_space<vmem>>, vector<1x8x128xf32>
    %412 = vector.shape_cast %411 : vector<1x8x128xf32> to vector<8x128xf32>
    %413 = vector.shape_cast %410 : vector<8x128xf32> to vector<1x8x128xf32>
    tpu.vector_store %arg13[%c1_143, %c0_144, %c0_145], %413 {strides = array<i32>} : memref<2x8x128xf32, #tpu.memory_space<vmem>>, vector<1x8x128xf32>,
    %c1_146 = arith.constant 1 : index
    %c0_147 = arith.constant 0 : index
    %c0_148 = arith.constant 0 : index
    %414 = vector.load %arg14[%c1_146, %c0_147, %c0_148] : memref<2x8x128xf32, #tpu.memory_space<vmem>>, vector<1x8x128xf32>
    %415 = vector.shape_cast %414 : vector<1x8x128xf32> to vector<8x128xf32>
    %416 = vector.shape_cast %408 : vector<8x128xf32> to vector<1x8x128xf32>
    tpu.vector_store %arg14[%c1_146, %c0_147, %c0_148], %416 {strides = array<i32>} : memref<2x8x128xf32, #tpu.memory_space<vmem>>, vector<1x8x128xf32>,
    %c0_149 = arith.constant 0 : index
    %c0_150 = arith.constant 0 : index
    %c0_151 = arith.constant 0 : index
    %417 = vector.load %arg8[%c0_149, %c0_150, %c0_151] : memref<2x128x512xf32, #tpu.memory_space<vmem>>, vector<1x128x512xf32>
    %418 = vector.shape_cast %417 : vector<1x128x512xf32> to vector<128x512xf32>
    %c0_152 = arith.constant 0 : index
    %c0_153 = arith.constant 0 : index
    %c0_154 = arith.constant 0 : index
    %419 = vector.load %arg9[%c0_152, %c0_153, %c0_154] : memref<2x1x512xf32, #tpu.memory_space<vmem>>, vector<1x1x512xf32>
    %420 = vector.shape_cast %419 : vector<1x1x512xf32> to vector<1x512xf32>
    %c0_155 = arith.constant 0 : index
    %c0_156 = arith.constant 0 : index
    %c0_157 = arith.constant 0 : index
    %421 = vector.load %arg1[%c0_155, %c0_156, %c0_157] : memref<8x8x128xf32, #tpu.memory_space<vmem>>, vector<8x8x128xf32>
    %422 = vector.shape_cast %421 : vector<8x8x128xf32> to vector<64x128xf32>
    %c0_158 = arith.constant 0 : index
    %c0_159 = arith.constant 0 : index
    %423 = vector.load %arg6[%c0_158, %c0_159] : memref<128x512xf32, #tpu.memory_space<vmem>>, vector<128x512xf32>
    %cst_160 = arith.constant dense<0.000000e+00> : vector<64x512xf32>
    %424 = tpu.matmul %422, %423, %cst_160 {dimension_numbers = #tpu.dot_dimension_numbers<[1], [0], [0], [1], [0, 0, 1, 1], [], []>} : vector<64x128xf32>, vector<128x512xf32>, vector<64x512xf32> -> vector<64x512xf32>
    %425 = vector.broadcast %420 : vector<1x512xf32> to vector<64x512xf32>
    %426 = arith.addf %424, %425 : vector<64x512xf32>
    %427 = vector.shape_cast %426 : vector<64x512xf32> to vector<8x8x512xf32>
    %c0_161 = arith.constant 0 : index
    %c0_162 = arith.constant 0 : index
    %c0_163 = arith.constant 0 : index
    %428 = vector.load %arg16[%c0_161, %c0_162, %c0_163] : memref<8x8x512xf32, #tpu.memory_space<vmem>>, vector<8x8x512xf32>
    tpu.vector_store %arg16[%c0_161, %c0_162, %c0_163], %427 {strides = array<i32>} : memref<8x8x512xf32, #tpu.memory_space<vmem>>, vector<8x8x512xf32>,
    %c0_164 = arith.constant 0 : index
    %c0_165 = arith.constant 0 : index
    %c0_166 = arith.constant 0 : index
    %429 = vector.load %arg13[%c0_164, %c0_165, %c0_166] : memref<2x8x128xf32, #tpu.memory_space<vmem>>, vector<1x8x128xf32>
    %430 = vector.shape_cast %429 : vector<1x8x128xf32> to vector<8x128xf32>
    %c0_167 = arith.constant 0 : index
    %c0_168 = arith.constant 0 : index
    %c0_169 = arith.constant 0 : index
    %431 = vector.load %arg14[%c0_167, %c0_168, %c0_169] : memref<2x8x128xf32, #tpu.memory_space<vmem>>, vector<1x8x128xf32>
    %432 = vector.shape_cast %431 : vector<1x8x128xf32> to vector<8x128xf32>
    %c0_i32_170 = arith.constant 0 : i32
    %433 = arith.index_cast %c0_i32_170 : i32 to index
    %c0_171 = arith.constant 0 : index
    %c0_172 = arith.constant 0 : index
    %434 = vector.load %arg16[%433, %c0_171, %c0_172] : memref<8x8x512xf32, #tpu.memory_space<vmem>>, vector<1x8x512xf32>
    %435 = vector.shape_cast %434 : vector<1x8x512xf32> to vector<8x512xf32>
    %cst_173 = arith.constant dense<0.000000e+00> : vector<8x512xf32>
    %436 = tpu.matmul %430, %418, %cst_173 {dimension_numbers = #tpu.dot_dimension_numbers<[1], [0], [0], [1], [0, 0, 1, 1], [], []>} : vector<8x128xf32>, vector<128x512xf32>, vector<8x512xf32> -> vector<8x512xf32>
    %437 = arith.addf %435, %436 : vector<8x512xf32>
    %438 = vector.extract_strided_slice %437 {offsets = [0, 0], sizes = [8, 384], strides = [1, 1]} : vector<8x512xf32> to vector<8x384xf32>
    %439 = arith.negf %438 : vector<8x384xf32>
    %440 = math.exp %439 : vector<8x384xf32>
    %cst_174 = arith.constant 1.000000e+00 : f32
    %441 = vector.broadcast %cst_174 : f32 to vector<8x384xf32>
    %442 = arith.addf %441, %440 : vector<8x384xf32>
    %443 = arith.divf %441, %442 : vector<8x384xf32>
    %444 = vector.extract_strided_slice %437 {offsets = [0, 384], sizes = [8, 128], strides = [1, 1]} : vector<8x512xf32> to vector<8x128xf32>
    %445 = math.tanh %444 : vector<8x128xf32>
    %446 = vector.extract_strided_slice %443 {offsets = [0, 0], sizes = [8, 128], strides = [1, 1]} : vector<8x384xf32> to vector<8x128xf32>
    %447 = vector.extract_strided_slice %443 {offsets = [0, 128], sizes = [8, 128], strides = [1, 1]} : vector<8x384xf32> to vector<8x128xf32>
    %448 = vector.extract_strided_slice %443 {offsets = [0, 256], sizes = [8, 128], strides = [1, 1]} : vector<8x384xf32> to vector<8x128xf32>
    %449 = arith.mulf %447, %432 : vector<8x128xf32>
    %450 = arith.mulf %446, %445 : vector<8x128xf32>
    %451 = arith.addf %449, %450 : vector<8x128xf32>
    %452 = math.tanh %451 : vector<8x128xf32>
    %453 = arith.mulf %448, %452 : vector<8x128xf32>
    %454 = arith.index_cast %c0_i32_170 : i32 to index
    %c0_175 = arith.constant 0 : index
    %c0_176 = arith.constant 0 : index
    %455 = vector.load %arg15[%454, %c0_175, %c0_176] : memref<8x8x128xf32, #tpu.memory_space<vmem>>, vector<1x8x128xf32>
    %456 = vector.shape_cast %455 : vector<1x8x128xf32> to vector<8x128xf32>
    %457 = vector.shape_cast %453 : vector<8x128xf32> to vector<1x8x128xf32>
    tpu.vector_store %arg15[%454, %c0_175, %c0_176], %457 {strides = array<i32>} : memref<8x8x128xf32, #tpu.memory_space<vmem>>, vector<1x8x128xf32>,
    %c1_i32_177 = arith.constant 1 : i32
    %458 = arith.index_cast %c1_i32_177 : i32 to index
    %c0_178 = arith.constant 0 : index
    %c0_179 = arith.constant 0 : index
    %459 = vector.load %arg16[%458, %c0_178, %c0_179] : memref<8x8x512xf32, #tpu.memory_space<vmem>>, vector<1x8x512xf32>
    %460 = vector.shape_cast %459 : vector<1x8x512xf32> to vector<8x512xf32>
    %cst_180 = arith.constant dense<0.000000e+00> : vector<8x512xf32>
    %461 = tpu.matmul %453, %418, %cst_180 {dimension_numbers = #tpu.dot_dimension_numbers<[1], [0], [0], [1], [0, 0, 1, 1], [], []>} : vector<8x128xf32>, vector<128x512xf32>, vector<8x512xf32> -> vector<8x512xf32>
    %462 = arith.addf %460, %461 : vector<8x512xf32>
    %463 = vector.extract_strided_slice %462 {offsets = [0, 0], sizes = [8, 384], strides = [1, 1]} : vector<8x512xf32> to vector<8x384xf32>
    %464 = arith.negf %463 : vector<8x384xf32>
    %465 = math.exp %464 : vector<8x384xf32>
    %cst_181 = arith.constant 1.000000e+00 : f32
    %466 = vector.broadcast %cst_181 : f32 to vector<8x384xf32>
    %467 = arith.addf %466, %465 : vector<8x384xf32>
    %468 = arith.divf %466, %467 : vector<8x384xf32>
    %469 = vector.extract_strided_slice %462 {offsets = [0, 384], sizes = [8, 128], strides = [1, 1]} : vector<8x512xf32> to vector<8x128xf32>
    %470 = math.tanh %469 : vector<8x128xf32>
    %471 = vector.extract_strided_slice %468 {offsets = [0, 0], sizes = [8, 128], strides = [1, 1]} : vector<8x384xf32> to vector<8x128xf32>
    %472 = vector.extract_strided_slice %468 {offsets = [0, 128], sizes = [8, 128], strides = [1, 1]} : vector<8x384xf32> to vector<8x128xf32>
    %473 = vector.extract_strided_slice %468 {offsets = [0, 256], sizes = [8, 128], strides = [1, 1]} : vector<8x384xf32> to vector<8x128xf32>
    %474 = arith.mulf %472, %451 : vector<8x128xf32>
    %475 = arith.mulf %471, %470 : vector<8x128xf32>
    %476 = arith.addf %474, %475 : vector<8x128xf32>
    %477 = math.tanh %476 : vector<8x128xf32>
    %478 = arith.mulf %473, %477 : vector<8x128xf32>
    %479 = arith.index_cast %c1_i32_177 : i32 to index
    %c0_182 = arith.constant 0 : index
    %c0_183 = arith.constant 0 : index
    %480 = vector.load %arg15[%479, %c0_182, %c0_183] : memref<8x8x128xf32, #tpu.memory_space<vmem>>, vector<1x8x128xf32>
    %481 = vector.shape_cast %480 : vector<1x8x128xf32> to vector<8x128xf32>
    %482 = vector.shape_cast %478 : vector<8x128xf32> to vector<1x8x128xf32>
    tpu.vector_store %arg15[%479, %c0_182, %c0_183], %482 {strides = array<i32>} : memref<8x8x128xf32, #tpu.memory_space<vmem>>, vector<1x8x128xf32>,
    %c2_i32_184 = arith.constant 2 : i32
    %483 = arith.index_cast %c2_i32_184 : i32 to index
    %c0_185 = arith.constant 0 : index
    %c0_186 = arith.constant 0 : index
    %484 = vector.load %arg16[%483, %c0_185, %c0_186] : memref<8x8x512xf32, #tpu.memory_space<vmem>>, vector<1x8x512xf32>
    %485 = vector.shape_cast %484 : vector<1x8x512xf32> to vector<8x512xf32>
    %cst_187 = arith.constant dense<0.000000e+00> : vector<8x512xf32>
    %486 = tpu.matmul %478, %418, %cst_187 {dimension_numbers = #tpu.dot_dimension_numbers<[1], [0], [0], [1], [0, 0, 1, 1], [], []>} : vector<8x128xf32>, vector<128x512xf32>, vector<8x512xf32> -> vector<8x512xf32>
    %487 = arith.addf %485, %486 : vector<8x512xf32>
    %488 = vector.extract_strided_slice %487 {offsets = [0, 0], sizes = [8, 384], strides = [1, 1]} : vector<8x512xf32> to vector<8x384xf32>
    %489 = arith.negf %488 : vector<8x384xf32>
    %490 = math.exp %489 : vector<8x384xf32>
    %cst_188 = arith.constant 1.000000e+00 : f32
    %491 = vector.broadcast %cst_188 : f32 to vector<8x384xf32>
    %492 = arith.addf %491, %490 : vector<8x384xf32>
    %493 = arith.divf %491, %492 : vector<8x384xf32>
    %494 = vector.extract_strided_slice %487 {offsets = [0, 384], sizes = [8, 128], strides = [1, 1]} : vector<8x512xf32> to vector<8x128xf32>
    %495 = math.tanh %494 : vector<8x128xf32>
    %496 = vector.extract_strided_slice %493 {offsets = [0, 0], sizes = [8, 128], strides = [1, 1]} : vector<8x384xf32> to vector<8x128xf32>
    %497 = vector.extract_strided_slice %493 {offsets = [0, 128], sizes = [8, 128], strides = [1, 1]} : vector<8x384xf32> to vector<8x128xf32>
    %498 = vector.extract_strided_slice %493 {offsets = [0, 256], sizes = [8, 128], strides = [1, 1]} : vector<8x384xf32> to vector<8x128xf32>
    %499 = arith.mulf %497, %476 : vector<8x128xf32>
    %500 = arith.mulf %496, %495 : vector<8x128xf32>
    %501 = arith.addf %499, %500 : vector<8x128xf32>
    %502 = math.tanh %501 : vector<8x128xf32>
    %503 = arith.mulf %498, %502 : vector<8x128xf32>
    %504 = arith.index_cast %c2_i32_184 : i32 to index
    %c0_189 = arith.constant 0 : index
    %c0_190 = arith.constant 0 : index
    %505 = vector.load %arg15[%504, %c0_189, %c0_190] : memref<8x8x128xf32, #tpu.memory_space<vmem>>, vector<1x8x128xf32>
    %506 = vector.shape_cast %505 : vector<1x8x128xf32> to vector<8x128xf32>
    %507 = vector.shape_cast %503 : vector<8x128xf32> to vector<1x8x128xf32>
    tpu.vector_store %arg15[%504, %c0_189, %c0_190], %507 {strides = array<i32>} : memref<8x8x128xf32, #tpu.memory_space<vmem>>, vector<1x8x128xf32>,
    %c3_i32_191 = arith.constant 3 : i32
    %508 = arith.index_cast %c3_i32_191 : i32 to index
    %c0_192 = arith.constant 0 : index
    %c0_193 = arith.constant 0 : index
    %509 = vector.load %arg16[%508, %c0_192, %c0_193] : memref<8x8x512xf32, #tpu.memory_space<vmem>>, vector<1x8x512xf32>
    %510 = vector.shape_cast %509 : vector<1x8x512xf32> to vector<8x512xf32>
    %cst_194 = arith.constant dense<0.000000e+00> : vector<8x512xf32>
    %511 = tpu.matmul %503, %418, %cst_194 {dimension_numbers = #tpu.dot_dimension_numbers<[1], [0], [0], [1], [0, 0, 1, 1], [], []>} : vector<8x128xf32>, vector<128x512xf32>, vector<8x512xf32> -> vector<8x512xf32>
    %512 = arith.addf %510, %511 : vector<8x512xf32>
    %513 = vector.extract_strided_slice %512 {offsets = [0, 0], sizes = [8, 384], strides = [1, 1]} : vector<8x512xf32> to vector<8x384xf32>
    %514 = arith.negf %513 : vector<8x384xf32>
    %515 = math.exp %514 : vector<8x384xf32>
    %cst_195 = arith.constant 1.000000e+00 : f32
    %516 = vector.broadcast %cst_195 : f32 to vector<8x384xf32>
    %517 = arith.addf %516, %515 : vector<8x384xf32>
    %518 = arith.divf %516, %517 : vector<8x384xf32>
    %519 = vector.extract_strided_slice %512 {offsets = [0, 384], sizes = [8, 128], strides = [1, 1]} : vector<8x512xf32> to vector<8x128xf32>
    %520 = math.tanh %519 : vector<8x128xf32>
    %521 = vector.extract_strided_slice %518 {offsets = [0, 0], sizes = [8, 128], strides = [1, 1]} : vector<8x384xf32> to vector<8x128xf32>
    %522 = vector.extract_strided_slice %518 {offsets = [0, 128], sizes = [8, 128], strides = [1, 1]} : vector<8x384xf32> to vector<8x128xf32>
    %523 = vector.extract_strided_slice %518 {offsets = [0, 256], sizes = [8, 128], strides = [1, 1]} : vector<8x384xf32> to vector<8x128xf32>
    %524 = arith.mulf %522, %501 : vector<8x128xf32>
    %525 = arith.mulf %521, %520 : vector<8x128xf32>
    %526 = arith.addf %524, %525 : vector<8x128xf32>
    %527 = math.tanh %526 : vector<8x128xf32>
    %528 = arith.mulf %523, %527 : vector<8x128xf32>
    %529 = arith.index_cast %c3_i32_191 : i32 to index
    %c0_196 = arith.constant 0 : index
    %c0_197 = arith.constant 0 : index
    %530 = vector.load %arg15[%529, %c0_196, %c0_197] : memref<8x8x128xf32, #tpu.memory_space<vmem>>, vector<1x8x128xf32>
    %531 = vector.shape_cast %530 : vector<1x8x128xf32> to vector<8x128xf32>
    %532 = vector.shape_cast %528 : vector<8x128xf32> to vector<1x8x128xf32>
    tpu.vector_store %arg15[%529, %c0_196, %c0_197], %532 {strides = array<i32>} : memref<8x8x128xf32, #tpu.memory_space<vmem>>, vector<1x8x128xf32>,
    %c4_i32_198 = arith.constant 4 : i32
    %533 = arith.index_cast %c4_i32_198 : i32 to index
    %c0_199 = arith.constant 0 : index
    %c0_200 = arith.constant 0 : index
    %534 = vector.load %arg16[%533, %c0_199, %c0_200] : memref<8x8x512xf32, #tpu.memory_space<vmem>>, vector<1x8x512xf32>
    %535 = vector.shape_cast %534 : vector<1x8x512xf32> to vector<8x512xf32>
    %cst_201 = arith.constant dense<0.000000e+00> : vector<8x512xf32>
    %536 = tpu.matmul %528, %418, %cst_201 {dimension_numbers = #tpu.dot_dimension_numbers<[1], [0], [0], [1], [0, 0, 1, 1], [], []>} : vector<8x128xf32>, vector<128x512xf32>, vector<8x512xf32> -> vector<8x512xf32>
    %537 = arith.addf %535, %536 : vector<8x512xf32>
    %538 = vector.extract_strided_slice %537 {offsets = [0, 0], sizes = [8, 384], strides = [1, 1]} : vector<8x512xf32> to vector<8x384xf32>
    %539 = arith.negf %538 : vector<8x384xf32>
    %540 = math.exp %539 : vector<8x384xf32>
    %cst_202 = arith.constant 1.000000e+00 : f32
    %541 = vector.broadcast %cst_202 : f32 to vector<8x384xf32>
    %542 = arith.addf %541, %540 : vector<8x384xf32>
    %543 = arith.divf %541, %542 : vector<8x384xf32>
    %544 = vector.extract_strided_slice %537 {offsets = [0, 384], sizes = [8, 128], strides = [1, 1]} : vector<8x512xf32> to vector<8x128xf32>
    %545 = math.tanh %544 : vector<8x128xf32>
    %546 = vector.extract_strided_slice %543 {offsets = [0, 0], sizes = [8, 128], strides = [1, 1]} : vector<8x384xf32> to vector<8x128xf32>
    %547 = vector.extract_strided_slice %543 {offsets = [0, 128], sizes = [8, 128], strides = [1, 1]} : vector<8x384xf32> to vector<8x128xf32>
    %548 = vector.extract_strided_slice %543 {offsets = [0, 256], sizes = [8, 128], strides = [1, 1]} : vector<8x384xf32> to vector<8x128xf32>
    %549 = arith.mulf %547, %526 : vector<8x128xf32>
    %550 = arith.mulf %546, %545 : vector<8x128xf32>
    %551 = arith.addf %549, %550 : vector<8x128xf32>
    %552 = math.tanh %551 : vector<8x128xf32>
    %553 = arith.mulf %548, %552 : vector<8x128xf32>
    %554 = arith.index_cast %c4_i32_198 : i32 to index
    %c0_203 = arith.constant 0 : index
    %c0_204 = arith.constant 0 : index
    %555 = vector.load %arg15[%554, %c0_203, %c0_204] : memref<8x8x128xf32, #tpu.memory_space<vmem>>, vector<1x8x128xf32>
    %556 = vector.shape_cast %555 : vector<1x8x128xf32> to vector<8x128xf32>
    %557 = vector.shape_cast %553 : vector<8x128xf32> to vector<1x8x128xf32>
    tpu.vector_store %arg15[%554, %c0_203, %c0_204], %557 {strides = array<i32>} : memref<8x8x128xf32, #tpu.memory_space<vmem>>, vector<1x8x128xf32>,
    %c5_i32_205 = arith.constant 5 : i32
    %558 = arith.index_cast %c5_i32_205 : i32 to index
    %c0_206 = arith.constant 0 : index
    %c0_207 = arith.constant 0 : index
    %559 = vector.load %arg16[%558, %c0_206, %c0_207] : memref<8x8x512xf32, #tpu.memory_space<vmem>>, vector<1x8x512xf32>
    %560 = vector.shape_cast %559 : vector<1x8x512xf32> to vector<8x512xf32>
    %cst_208 = arith.constant dense<0.000000e+00> : vector<8x512xf32>
    %561 = tpu.matmul %553, %418, %cst_208 {dimension_numbers = #tpu.dot_dimension_numbers<[1], [0], [0], [1], [0, 0, 1, 1], [], []>} : vector<8x128xf32>, vector<128x512xf32>, vector<8x512xf32> -> vector<8x512xf32>
    %562 = arith.addf %560, %561 : vector<8x512xf32>
    %563 = vector.extract_strided_slice %562 {offsets = [0, 0], sizes = [8, 384], strides = [1, 1]} : vector<8x512xf32> to vector<8x384xf32>
    %564 = arith.negf %563 : vector<8x384xf32>
    %565 = math.exp %564 : vector<8x384xf32>
    %cst_209 = arith.constant 1.000000e+00 : f32
    %566 = vector.broadcast %cst_209 : f32 to vector<8x384xf32>
    %567 = arith.addf %566, %565 : vector<8x384xf32>
    %568 = arith.divf %566, %567 : vector<8x384xf32>
    %569 = vector.extract_strided_slice %562 {offsets = [0, 384], sizes = [8, 128], strides = [1, 1]} : vector<8x512xf32> to vector<8x128xf32>
    %570 = math.tanh %569 : vector<8x128xf32>
    %571 = vector.extract_strided_slice %568 {offsets = [0, 0], sizes = [8, 128], strides = [1, 1]} : vector<8x384xf32> to vector<8x128xf32>
    %572 = vector.extract_strided_slice %568 {offsets = [0, 128], sizes = [8, 128], strides = [1, 1]} : vector<8x384xf32> to vector<8x128xf32>
    %573 = vector.extract_strided_slice %568 {offsets = [0, 256], sizes = [8, 128], strides = [1, 1]} : vector<8x384xf32> to vector<8x128xf32>
    %574 = arith.mulf %572, %551 : vector<8x128xf32>
    %575 = arith.mulf %571, %570 : vector<8x128xf32>
    %576 = arith.addf %574, %575 : vector<8x128xf32>
    %577 = math.tanh %576 : vector<8x128xf32>
    %578 = arith.mulf %573, %577 : vector<8x128xf32>
    %579 = arith.index_cast %c5_i32_205 : i32 to index
    %c0_210 = arith.constant 0 : index
    %c0_211 = arith.constant 0 : index
    %580 = vector.load %arg15[%579, %c0_210, %c0_211] : memref<8x8x128xf32, #tpu.memory_space<vmem>>, vector<1x8x128xf32>
    %581 = vector.shape_cast %580 : vector<1x8x128xf32> to vector<8x128xf32>
    %582 = vector.shape_cast %578 : vector<8x128xf32> to vector<1x8x128xf32>
    tpu.vector_store %arg15[%579, %c0_210, %c0_211], %582 {strides = array<i32>} : memref<8x8x128xf32, #tpu.memory_space<vmem>>, vector<1x8x128xf32>,
    %c6_i32_212 = arith.constant 6 : i32
    %583 = arith.index_cast %c6_i32_212 : i32 to index
    %c0_213 = arith.constant 0 : index
    %c0_214 = arith.constant 0 : index
    %584 = vector.load %arg16[%583, %c0_213, %c0_214] : memref<8x8x512xf32, #tpu.memory_space<vmem>>, vector<1x8x512xf32>
    %585 = vector.shape_cast %584 : vector<1x8x512xf32> to vector<8x512xf32>
    %cst_215 = arith.constant dense<0.000000e+00> : vector<8x512xf32>
    %586 = tpu.matmul %578, %418, %cst_215 {dimension_numbers = #tpu.dot_dimension_numbers<[1], [0], [0], [1], [0, 0, 1, 1], [], []>} : vector<8x128xf32>, vector<128x512xf32>, vector<8x512xf32> -> vector<8x512xf32>
    %587 = arith.addf %585, %586 : vector<8x512xf32>
    %588 = vector.extract_strided_slice %587 {offsets = [0, 0], sizes = [8, 384], strides = [1, 1]} : vector<8x512xf32> to vector<8x384xf32>
    %589 = arith.negf %588 : vector<8x384xf32>
    %590 = math.exp %589 : vector<8x384xf32>
    %cst_216 = arith.constant 1.000000e+00 : f32
    %591 = vector.broadcast %cst_216 : f32 to vector<8x384xf32>
    %592 = arith.addf %591, %590 : vector<8x384xf32>
    %593 = arith.divf %591, %592 : vector<8x384xf32>
    %594 = vector.extract_strided_slice %587 {offsets = [0, 384], sizes = [8, 128], strides = [1, 1]} : vector<8x512xf32> to vector<8x128xf32>
    %595 = math.tanh %594 : vector<8x128xf32>
    %596 = vector.extract_strided_slice %593 {offsets = [0, 0], sizes = [8, 128], strides = [1, 1]} : vector<8x384xf32> to vector<8x128xf32>
    %597 = vector.extract_strided_slice %593 {offsets = [0, 128], sizes = [8, 128], strides = [1, 1]} : vector<8x384xf32> to vector<8x128xf32>
    %598 = vector.extract_strided_slice %593 {offsets = [0, 256], sizes = [8, 128], strides = [1, 1]} : vector<8x384xf32> to vector<8x128xf32>
    %599 = arith.mulf %597, %576 : vector<8x128xf32>
    %600 = arith.mulf %596, %595 : vector<8x128xf32>
    %601 = arith.addf %599, %600 : vector<8x128xf32>
    %602 = math.tanh %601 : vector<8x128xf32>
    %603 = arith.mulf %598, %602 : vector<8x128xf32>
    %604 = arith.index_cast %c6_i32_212 : i32 to index
    %c0_217 = arith.constant 0 : index
    %c0_218 = arith.constant 0 : index
    %605 = vector.load %arg15[%604, %c0_217, %c0_218] : memref<8x8x128xf32, #tpu.memory_space<vmem>>, vector<1x8x128xf32>
    %606 = vector.shape_cast %605 : vector<1x8x128xf32> to vector<8x128xf32>
    %607 = vector.shape_cast %603 : vector<8x128xf32> to vector<1x8x128xf32>
    tpu.vector_store %arg15[%604, %c0_217, %c0_218], %607 {strides = array<i32>} : memref<8x8x128xf32, #tpu.memory_space<vmem>>, vector<1x8x128xf32>,
    %c7_i32_219 = arith.constant 7 : i32
    %608 = arith.index_cast %c7_i32_219 : i32 to index
    %c0_220 = arith.constant 0 : index
    %c0_221 = arith.constant 0 : index
    %609 = vector.load %arg16[%608, %c0_220, %c0_221] : memref<8x8x512xf32, #tpu.memory_space<vmem>>, vector<1x8x512xf32>
    %610 = vector.shape_cast %609 : vector<1x8x512xf32> to vector<8x512xf32>
    %cst_222 = arith.constant dense<0.000000e+00> : vector<8x512xf32>
    %611 = tpu.matmul %603, %418, %cst_222 {dimension_numbers = #tpu.dot_dimension_numbers<[1], [0], [0], [1], [0, 0, 1, 1], [], []>} : vector<8x128xf32>, vector<128x512xf32>, vector<8x512xf32> -> vector<8x512xf32>
    %612 = arith.addf %610, %611 : vector<8x512xf32>
    %613 = vector.extract_strided_slice %612 {offsets = [0, 0], sizes = [8, 384], strides = [1, 1]} : vector<8x512xf32> to vector<8x384xf32>
    %614 = arith.negf %613 : vector<8x384xf32>
    %615 = math.exp %614 : vector<8x384xf32>
    %cst_223 = arith.constant 1.000000e+00 : f32
    %616 = vector.broadcast %cst_223 : f32 to vector<8x384xf32>
    %617 = arith.addf %616, %615 : vector<8x384xf32>
    %618 = arith.divf %616, %617 : vector<8x384xf32>
    %619 = vector.extract_strided_slice %612 {offsets = [0, 384], sizes = [8, 128], strides = [1, 1]} : vector<8x512xf32> to vector<8x128xf32>
    %620 = math.tanh %619 : vector<8x128xf32>
    %621 = vector.extract_strided_slice %618 {offsets = [0, 0], sizes = [8, 128], strides = [1, 1]} : vector<8x384xf32> to vector<8x128xf32>
    %622 = vector.extract_strided_slice %618 {offsets = [0, 128], sizes = [8, 128], strides = [1, 1]} : vector<8x384xf32> to vector<8x128xf32>
    %623 = vector.extract_strided_slice %618 {offsets = [0, 256], sizes = [8, 128], strides = [1, 1]} : vector<8x384xf32> to vector<8x128xf32>
    %624 = arith.mulf %622, %601 : vector<8x128xf32>
    %625 = arith.mulf %621, %620 : vector<8x128xf32>
    %626 = arith.addf %624, %625 : vector<8x128xf32>
    %627 = math.tanh %626 : vector<8x128xf32>
    %628 = arith.mulf %623, %627 : vector<8x128xf32>
    %629 = arith.index_cast %c7_i32_219 : i32 to index
    %c0_224 = arith.constant 0 : index
    %c0_225 = arith.constant 0 : index
    %630 = vector.load %arg15[%629, %c0_224, %c0_225] : memref<8x8x128xf32, #tpu.memory_space<vmem>>, vector<1x8x128xf32>
    %631 = vector.shape_cast %630 : vector<1x8x128xf32> to vector<8x128xf32>
    %632 = vector.shape_cast %628 : vector<8x128xf32> to vector<1x8x128xf32>
    tpu.vector_store %arg15[%629, %c0_224, %c0_225], %632 {strides = array<i32>} : memref<8x8x128xf32, #tpu.memory_space<vmem>>, vector<1x8x128xf32>,
    %c8_i32_226 = arith.constant 8 : i32
    %c0_227 = arith.constant 0 : index
    %c0_228 = arith.constant 0 : index
    %c0_229 = arith.constant 0 : index
    %633 = vector.load %arg13[%c0_227, %c0_228, %c0_229] : memref<2x8x128xf32, #tpu.memory_space<vmem>>, vector<1x8x128xf32>
    %634 = vector.shape_cast %633 : vector<1x8x128xf32> to vector<8x128xf32>
    %635 = vector.shape_cast %628 : vector<8x128xf32> to vector<1x8x128xf32>
    tpu.vector_store %arg13[%c0_227, %c0_228, %c0_229], %635 {strides = array<i32>} : memref<2x8x128xf32, #tpu.memory_space<vmem>>, vector<1x8x128xf32>,
    %c0_230 = arith.constant 0 : index
    %c0_231 = arith.constant 0 : index
    %c0_232 = arith.constant 0 : index
    %636 = vector.load %arg14[%c0_230, %c0_231, %c0_232] : memref<2x8x128xf32, #tpu.memory_space<vmem>>, vector<1x8x128xf32>
    %637 = vector.shape_cast %636 : vector<1x8x128xf32> to vector<8x128xf32>
    %638 = vector.shape_cast %626 : vector<8x128xf32> to vector<1x8x128xf32>
    tpu.vector_store %arg14[%c0_230, %c0_231, %c0_232], %638 {strides = array<i32>} : memref<2x8x128xf32, #tpu.memory_space<vmem>>, vector<1x8x128xf32>,
    %c1_233 = arith.constant 1 : index
    %c0_234 = arith.constant 0 : index
    %c0_235 = arith.constant 0 : index
    %639 = vector.load %arg8[%c1_233, %c0_234, %c0_235] : memref<2x128x512xf32, #tpu.memory_space<vmem>>, vector<1x128x512xf32>
    %640 = vector.shape_cast %639 : vector<1x128x512xf32> to vector<128x512xf32>
    %c1_236 = arith.constant 1 : index
    %c0_237 = arith.constant 0 : index
    %c0_238 = arith.constant 0 : index
    %641 = vector.load %arg9[%c1_236, %c0_237, %c0_238] : memref<2x1x512xf32, #tpu.memory_space<vmem>>, vector<1x1x512xf32>
    %642 = vector.shape_cast %641 : vector<1x1x512xf32> to vector<1x512xf32>
    %c0_239 = arith.constant 0 : index
    %c0_240 = arith.constant 0 : index
    %c0_241 = arith.constant 0 : index
    %643 = vector.load %arg15[%c0_239, %c0_240, %c0_241] : memref<8x8x128xf32, #tpu.memory_space<vmem>>, vector<8x8x128xf32>
    %644 = vector.shape_cast %643 : vector<8x8x128xf32> to vector<64x128xf32>
    %c0_242 = arith.constant 0 : index
    %c0_243 = arith.constant 0 : index
    %c0_244 = arith.constant 0 : index
    %645 = vector.load %arg7[%c0_242, %c0_243, %c0_244] : memref<1x128x512xf32, #tpu.memory_space<vmem>>, vector<1x128x512xf32>
    %646 = vector.shape_cast %645 : vector<1x128x512xf32> to vector<128x512xf32>
    %cst_245 = arith.constant dense<0.000000e+00> : vector<64x512xf32>
    %647 = tpu.matmul %644, %646, %cst_245 {dimension_numbers = #tpu.dot_dimension_numbers<[1], [0], [0], [1], [0, 0, 1, 1], [], []>} : vector<64x128xf32>, vector<128x512xf32>, vector<64x512xf32> -> vector<64x512xf32>
    %648 = vector.broadcast %642 : vector<1x512xf32> to vector<64x512xf32>
    %649 = arith.addf %647, %648 : vector<64x512xf32>
    %650 = vector.shape_cast %649 : vector<64x512xf32> to vector<8x8x512xf32>
    %c0_246 = arith.constant 0 : index
    %c0_247 = arith.constant 0 : index
    %c0_248 = arith.constant 0 : index
    %651 = vector.load %arg16[%c0_246, %c0_247, %c0_248] : memref<8x8x512xf32, #tpu.memory_space<vmem>>, vector<8x8x512xf32>
    tpu.vector_store %arg16[%c0_246, %c0_247, %c0_248], %650 {strides = array<i32>} : memref<8x8x512xf32, #tpu.memory_space<vmem>>, vector<8x8x512xf32>,
    %c1_249 = arith.constant 1 : index
    %c0_250 = arith.constant 0 : index
    %c0_251 = arith.constant 0 : index
    %652 = vector.load %arg13[%c1_249, %c0_250, %c0_251] : memref<2x8x128xf32, #tpu.memory_space<vmem>>, vector<1x8x128xf32>
    %653 = vector.shape_cast %652 : vector<1x8x128xf32> to vector<8x128xf32>
    %c1_252 = arith.constant 1 : index
    %c0_253 = arith.constant 0 : index
    %c0_254 = arith.constant 0 : index
    %654 = vector.load %arg14[%c1_252, %c0_253, %c0_254] : memref<2x8x128xf32, #tpu.memory_space<vmem>>, vector<1x8x128xf32>
    %655 = vector.shape_cast %654 : vector<1x8x128xf32> to vector<8x128xf32>
    %c0_i32_255 = arith.constant 0 : i32
    %656 = arith.index_cast %c0_i32_255 : i32 to index
    %c0_256 = arith.constant 0 : index
    %c0_257 = arith.constant 0 : index
    %657 = vector.load %arg16[%656, %c0_256, %c0_257] : memref<8x8x512xf32, #tpu.memory_space<vmem>>, vector<1x8x512xf32>
    %658 = vector.shape_cast %657 : vector<1x8x512xf32> to vector<8x512xf32>
    %cst_258 = arith.constant dense<0.000000e+00> : vector<8x512xf32>
    %659 = tpu.matmul %653, %640, %cst_258 {dimension_numbers = #tpu.dot_dimension_numbers<[1], [0], [0], [1], [0, 0, 1, 1], [], []>} : vector<8x128xf32>, vector<128x512xf32>, vector<8x512xf32> -> vector<8x512xf32>
    %660 = arith.addf %658, %659 : vector<8x512xf32>
    %661 = vector.extract_strided_slice %660 {offsets = [0, 0], sizes = [8, 384], strides = [1, 1]} : vector<8x512xf32> to vector<8x384xf32>
    %662 = arith.negf %661 : vector<8x384xf32>
    %663 = math.exp %662 : vector<8x384xf32>
    %cst_259 = arith.constant 1.000000e+00 : f32
    %664 = vector.broadcast %cst_259 : f32 to vector<8x384xf32>
    %665 = arith.addf %664, %663 : vector<8x384xf32>
    %666 = arith.divf %664, %665 : vector<8x384xf32>
    %667 = vector.extract_strided_slice %660 {offsets = [0, 384], sizes = [8, 128], strides = [1, 1]} : vector<8x512xf32> to vector<8x128xf32>
    %668 = math.tanh %667 : vector<8x128xf32>
    %669 = vector.extract_strided_slice %666 {offsets = [0, 0], sizes = [8, 128], strides = [1, 1]} : vector<8x384xf32> to vector<8x128xf32>
    %670 = vector.extract_strided_slice %666 {offsets = [0, 128], sizes = [8, 128], strides = [1, 1]} : vector<8x384xf32> to vector<8x128xf32>
    %671 = vector.extract_strided_slice %666 {offsets = [0, 256], sizes = [8, 128], strides = [1, 1]} : vector<8x384xf32> to vector<8x128xf32>
    %672 = arith.mulf %670, %655 : vector<8x128xf32>
    %673 = arith.mulf %669, %668 : vector<8x128xf32>
    %674 = arith.addf %672, %673 : vector<8x128xf32>
    %675 = math.tanh %674 : vector<8x128xf32>
    %676 = arith.mulf %671, %675 : vector<8x128xf32>
    %677 = arith.index_cast %c0_i32_255 : i32 to index
    %c0_260 = arith.constant 0 : index
    %c0_261 = arith.constant 0 : index
    %678 = vector.load %arg15[%677, %c0_260, %c0_261] : memref<8x8x128xf32, #tpu.memory_space<vmem>>, vector<1x8x128xf32>
    %679 = vector.shape_cast %678 : vector<1x8x128xf32> to vector<8x128xf32>
    %680 = vector.shape_cast %676 : vector<8x128xf32> to vector<1x8x128xf32>
    tpu.vector_store %arg15[%677, %c0_260, %c0_261], %680 {strides = array<i32>} : memref<8x8x128xf32, #tpu.memory_space<vmem>>, vector<1x8x128xf32>,
    %c1_i32_262 = arith.constant 1 : i32
    %681 = arith.index_cast %c1_i32_262 : i32 to index
    %c0_263 = arith.constant 0 : index
    %c0_264 = arith.constant 0 : index
    %682 = vector.load %arg16[%681, %c0_263, %c0_264] : memref<8x8x512xf32, #tpu.memory_space<vmem>>, vector<1x8x512xf32>
    %683 = vector.shape_cast %682 : vector<1x8x512xf32> to vector<8x512xf32>
    %cst_265 = arith.constant dense<0.000000e+00> : vector<8x512xf32>
    %684 = tpu.matmul %676, %640, %cst_265 {dimension_numbers = #tpu.dot_dimension_numbers<[1], [0], [0], [1], [0, 0, 1, 1], [], []>} : vector<8x128xf32>, vector<128x512xf32>, vector<8x512xf32> -> vector<8x512xf32>
    %685 = arith.addf %683, %684 : vector<8x512xf32>
    %686 = vector.extract_strided_slice %685 {offsets = [0, 0], sizes = [8, 384], strides = [1, 1]} : vector<8x512xf32> to vector<8x384xf32>
    %687 = arith.negf %686 : vector<8x384xf32>
    %688 = math.exp %687 : vector<8x384xf32>
    %cst_266 = arith.constant 1.000000e+00 : f32
    %689 = vector.broadcast %cst_266 : f32 to vector<8x384xf32>
    %690 = arith.addf %689, %688 : vector<8x384xf32>
    %691 = arith.divf %689, %690 : vector<8x384xf32>
    %692 = vector.extract_strided_slice %685 {offsets = [0, 384], sizes = [8, 128], strides = [1, 1]} : vector<8x512xf32> to vector<8x128xf32>
    %693 = math.tanh %692 : vector<8x128xf32>
    %694 = vector.extract_strided_slice %691 {offsets = [0, 0], sizes = [8, 128], strides = [1, 1]} : vector<8x384xf32> to vector<8x128xf32>
    %695 = vector.extract_strided_slice %691 {offsets = [0, 128], sizes = [8, 128], strides = [1, 1]} : vector<8x384xf32> to vector<8x128xf32>
    %696 = vector.extract_strided_slice %691 {offsets = [0, 256], sizes = [8, 128], strides = [1, 1]} : vector<8x384xf32> to vector<8x128xf32>
    %697 = arith.mulf %695, %674 : vector<8x128xf32>
    %698 = arith.mulf %694, %693 : vector<8x128xf32>
    %699 = arith.addf %697, %698 : vector<8x128xf32>
    %700 = math.tanh %699 : vector<8x128xf32>
    %701 = arith.mulf %696, %700 : vector<8x128xf32>
    %702 = arith.index_cast %c1_i32_262 : i32 to index
    %c0_267 = arith.constant 0 : index
    %c0_268 = arith.constant 0 : index
    %703 = vector.load %arg15[%702, %c0_267, %c0_268] : memref<8x8x128xf32, #tpu.memory_space<vmem>>, vector<1x8x128xf32>
    %704 = vector.shape_cast %703 : vector<1x8x128xf32> to vector<8x128xf32>
    %705 = vector.shape_cast %701 : vector<8x128xf32> to vector<1x8x128xf32>
    tpu.vector_store %arg15[%702, %c0_267, %c0_268], %705 {strides = array<i32>} : memref<8x8x128xf32, #tpu.memory_space<vmem>>, vector<1x8x128xf32>,
    %c2_i32_269 = arith.constant 2 : i32
    %706 = arith.index_cast %c2_i32_269 : i32 to index
    %c0_270 = arith.constant 0 : index
    %c0_271 = arith.constant 0 : index
    %707 = vector.load %arg16[%706, %c0_270, %c0_271] : memref<8x8x512xf32, #tpu.memory_space<vmem>>, vector<1x8x512xf32>
    %708 = vector.shape_cast %707 : vector<1x8x512xf32> to vector<8x512xf32>
    %cst_272 = arith.constant dense<0.000000e+00> : vector<8x512xf32>
    %709 = tpu.matmul %701, %640, %cst_272 {dimension_numbers = #tpu.dot_dimension_numbers<[1], [0], [0], [1], [0, 0, 1, 1], [], []>} : vector<8x128xf32>, vector<128x512xf32>, vector<8x512xf32> -> vector<8x512xf32>
    %710 = arith.addf %708, %709 : vector<8x512xf32>
    %711 = vector.extract_strided_slice %710 {offsets = [0, 0], sizes = [8, 384], strides = [1, 1]} : vector<8x512xf32> to vector<8x384xf32>
    %712 = arith.negf %711 : vector<8x384xf32>
    %713 = math.exp %712 : vector<8x384xf32>
    %cst_273 = arith.constant 1.000000e+00 : f32
    %714 = vector.broadcast %cst_273 : f32 to vector<8x384xf32>
    %715 = arith.addf %714, %713 : vector<8x384xf32>
    %716 = arith.divf %714, %715 : vector<8x384xf32>
    %717 = vector.extract_strided_slice %710 {offsets = [0, 384], sizes = [8, 128], strides = [1, 1]} : vector<8x512xf32> to vector<8x128xf32>
    %718 = math.tanh %717 : vector<8x128xf32>
    %719 = vector.extract_strided_slice %716 {offsets = [0, 0], sizes = [8, 128], strides = [1, 1]} : vector<8x384xf32> to vector<8x128xf32>
    %720 = vector.extract_strided_slice %716 {offsets = [0, 128], sizes = [8, 128], strides = [1, 1]} : vector<8x384xf32> to vector<8x128xf32>
    %721 = vector.extract_strided_slice %716 {offsets = [0, 256], sizes = [8, 128], strides = [1, 1]} : vector<8x384xf32> to vector<8x128xf32>
    %722 = arith.mulf %720, %699 : vector<8x128xf32>
    %723 = arith.mulf %719, %718 : vector<8x128xf32>
    %724 = arith.addf %722, %723 : vector<8x128xf32>
    %725 = math.tanh %724 : vector<8x128xf32>
    %726 = arith.mulf %721, %725 : vector<8x128xf32>
    %727 = arith.index_cast %c2_i32_269 : i32 to index
    %c0_274 = arith.constant 0 : index
    %c0_275 = arith.constant 0 : index
    %728 = vector.load %arg15[%727, %c0_274, %c0_275] : memref<8x8x128xf32, #tpu.memory_space<vmem>>, vector<1x8x128xf32>
    %729 = vector.shape_cast %728 : vector<1x8x128xf32> to vector<8x128xf32>
    %730 = vector.shape_cast %726 : vector<8x128xf32> to vector<1x8x128xf32>
    tpu.vector_store %arg15[%727, %c0_274, %c0_275], %730 {strides = array<i32>} : memref<8x8x128xf32, #tpu.memory_space<vmem>>, vector<1x8x128xf32>,
    %c3_i32_276 = arith.constant 3 : i32
    %731 = arith.index_cast %c3_i32_276 : i32 to index
    %c0_277 = arith.constant 0 : index
    %c0_278 = arith.constant 0 : index
    %732 = vector.load %arg16[%731, %c0_277, %c0_278] : memref<8x8x512xf32, #tpu.memory_space<vmem>>, vector<1x8x512xf32>
    %733 = vector.shape_cast %732 : vector<1x8x512xf32> to vector<8x512xf32>
    %cst_279 = arith.constant dense<0.000000e+00> : vector<8x512xf32>
    %734 = tpu.matmul %726, %640, %cst_279 {dimension_numbers = #tpu.dot_dimension_numbers<[1], [0], [0], [1], [0, 0, 1, 1], [], []>} : vector<8x128xf32>, vector<128x512xf32>, vector<8x512xf32> -> vector<8x512xf32>
    %735 = arith.addf %733, %734 : vector<8x512xf32>
    %736 = vector.extract_strided_slice %735 {offsets = [0, 0], sizes = [8, 384], strides = [1, 1]} : vector<8x512xf32> to vector<8x384xf32>
    %737 = arith.negf %736 : vector<8x384xf32>
    %738 = math.exp %737 : vector<8x384xf32>
    %cst_280 = arith.constant 1.000000e+00 : f32
    %739 = vector.broadcast %cst_280 : f32 to vector<8x384xf32>
    %740 = arith.addf %739, %738 : vector<8x384xf32>
    %741 = arith.divf %739, %740 : vector<8x384xf32>
    %742 = vector.extract_strided_slice %735 {offsets = [0, 384], sizes = [8, 128], strides = [1, 1]} : vector<8x512xf32> to vector<8x128xf32>
    %743 = math.tanh %742 : vector<8x128xf32>
    %744 = vector.extract_strided_slice %741 {offsets = [0, 0], sizes = [8, 128], strides = [1, 1]} : vector<8x384xf32> to vector<8x128xf32>
    %745 = vector.extract_strided_slice %741 {offsets = [0, 128], sizes = [8, 128], strides = [1, 1]} : vector<8x384xf32> to vector<8x128xf32>
    %746 = vector.extract_strided_slice %741 {offsets = [0, 256], sizes = [8, 128], strides = [1, 1]} : vector<8x384xf32> to vector<8x128xf32>
    %747 = arith.mulf %745, %724 : vector<8x128xf32>
    %748 = arith.mulf %744, %743 : vector<8x128xf32>
    %749 = arith.addf %747, %748 : vector<8x128xf32>
    %750 = math.tanh %749 : vector<8x128xf32>
    %751 = arith.mulf %746, %750 : vector<8x128xf32>
    %752 = arith.index_cast %c3_i32_276 : i32 to index
    %c0_281 = arith.constant 0 : index
    %c0_282 = arith.constant 0 : index
    %753 = vector.load %arg15[%752, %c0_281, %c0_282] : memref<8x8x128xf32, #tpu.memory_space<vmem>>, vector<1x8x128xf32>
    %754 = vector.shape_cast %753 : vector<1x8x128xf32> to vector<8x128xf32>
    %755 = vector.shape_cast %751 : vector<8x128xf32> to vector<1x8x128xf32>
    tpu.vector_store %arg15[%752, %c0_281, %c0_282], %755 {strides = array<i32>} : memref<8x8x128xf32, #tpu.memory_space<vmem>>, vector<1x8x128xf32>,
    %c4_i32_283 = arith.constant 4 : i32
    %756 = arith.index_cast %c4_i32_283 : i32 to index
    %c0_284 = arith.constant 0 : index
    %c0_285 = arith.constant 0 : index
    %757 = vector.load %arg16[%756, %c0_284, %c0_285] : memref<8x8x512xf32, #tpu.memory_space<vmem>>, vector<1x8x512xf32>
    %758 = vector.shape_cast %757 : vector<1x8x512xf32> to vector<8x512xf32>
    %cst_286 = arith.constant dense<0.000000e+00> : vector<8x512xf32>
    %759 = tpu.matmul %751, %640, %cst_286 {dimension_numbers = #tpu.dot_dimension_numbers<[1], [0], [0], [1], [0, 0, 1, 1], [], []>} : vector<8x128xf32>, vector<128x512xf32>, vector<8x512xf32> -> vector<8x512xf32>
    %760 = arith.addf %758, %759 : vector<8x512xf32>
    %761 = vector.extract_strided_slice %760 {offsets = [0, 0], sizes = [8, 384], strides = [1, 1]} : vector<8x512xf32> to vector<8x384xf32>
    %762 = arith.negf %761 : vector<8x384xf32>
    %763 = math.exp %762 : vector<8x384xf32>
    %cst_287 = arith.constant 1.000000e+00 : f32
    %764 = vector.broadcast %cst_287 : f32 to vector<8x384xf32>
    %765 = arith.addf %764, %763 : vector<8x384xf32>
    %766 = arith.divf %764, %765 : vector<8x384xf32>
    %767 = vector.extract_strided_slice %760 {offsets = [0, 384], sizes = [8, 128], strides = [1, 1]} : vector<8x512xf32> to vector<8x128xf32>
    %768 = math.tanh %767 : vector<8x128xf32>
    %769 = vector.extract_strided_slice %766 {offsets = [0, 0], sizes = [8, 128], strides = [1, 1]} : vector<8x384xf32> to vector<8x128xf32>
    %770 = vector.extract_strided_slice %766 {offsets = [0, 128], sizes = [8, 128], strides = [1, 1]} : vector<8x384xf32> to vector<8x128xf32>
    %771 = vector.extract_strided_slice %766 {offsets = [0, 256], sizes = [8, 128], strides = [1, 1]} : vector<8x384xf32> to vector<8x128xf32>
    %772 = arith.mulf %770, %749 : vector<8x128xf32>
    %773 = arith.mulf %769, %768 : vector<8x128xf32>
    %774 = arith.addf %772, %773 : vector<8x128xf32>
    %775 = math.tanh %774 : vector<8x128xf32>
    %776 = arith.mulf %771, %775 : vector<8x128xf32>
    %777 = arith.index_cast %c4_i32_283 : i32 to index
    %c0_288 = arith.constant 0 : index
    %c0_289 = arith.constant 0 : index
    %778 = vector.load %arg15[%777, %c0_288, %c0_289] : memref<8x8x128xf32, #tpu.memory_space<vmem>>, vector<1x8x128xf32>
    %779 = vector.shape_cast %778 : vector<1x8x128xf32> to vector<8x128xf32>
    %780 = vector.shape_cast %776 : vector<8x128xf32> to vector<1x8x128xf32>
    tpu.vector_store %arg15[%777, %c0_288, %c0_289], %780 {strides = array<i32>} : memref<8x8x128xf32, #tpu.memory_space<vmem>>, vector<1x8x128xf32>,
    %c5_i32_290 = arith.constant 5 : i32
    %781 = arith.index_cast %c5_i32_290 : i32 to index
    %c0_291 = arith.constant 0 : index
    %c0_292 = arith.constant 0 : index
    %782 = vector.load %arg16[%781, %c0_291, %c0_292] : memref<8x8x512xf32, #tpu.memory_space<vmem>>, vector<1x8x512xf32>
    %783 = vector.shape_cast %782 : vector<1x8x512xf32> to vector<8x512xf32>
    %cst_293 = arith.constant dense<0.000000e+00> : vector<8x512xf32>
    %784 = tpu.matmul %776, %640, %cst_293 {dimension_numbers = #tpu.dot_dimension_numbers<[1], [0], [0], [1], [0, 0, 1, 1], [], []>} : vector<8x128xf32>, vector<128x512xf32>, vector<8x512xf32> -> vector<8x512xf32>
    %785 = arith.addf %783, %784 : vector<8x512xf32>
    %786 = vector.extract_strided_slice %785 {offsets = [0, 0], sizes = [8, 384], strides = [1, 1]} : vector<8x512xf32> to vector<8x384xf32>
    %787 = arith.negf %786 : vector<8x384xf32>
    %788 = math.exp %787 : vector<8x384xf32>
    %cst_294 = arith.constant 1.000000e+00 : f32
    %789 = vector.broadcast %cst_294 : f32 to vector<8x384xf32>
    %790 = arith.addf %789, %788 : vector<8x384xf32>
    %791 = arith.divf %789, %790 : vector<8x384xf32>
    %792 = vector.extract_strided_slice %785 {offsets = [0, 384], sizes = [8, 128], strides = [1, 1]} : vector<8x512xf32> to vector<8x128xf32>
    %793 = math.tanh %792 : vector<8x128xf32>
    %794 = vector.extract_strided_slice %791 {offsets = [0, 0], sizes = [8, 128], strides = [1, 1]} : vector<8x384xf32> to vector<8x128xf32>
    %795 = vector.extract_strided_slice %791 {offsets = [0, 128], sizes = [8, 128], strides = [1, 1]} : vector<8x384xf32> to vector<8x128xf32>
    %796 = vector.extract_strided_slice %791 {offsets = [0, 256], sizes = [8, 128], strides = [1, 1]} : vector<8x384xf32> to vector<8x128xf32>
    %797 = arith.mulf %795, %774 : vector<8x128xf32>
    %798 = arith.mulf %794, %793 : vector<8x128xf32>
    %799 = arith.addf %797, %798 : vector<8x128xf32>
    %800 = math.tanh %799 : vector<8x128xf32>
    %801 = arith.mulf %796, %800 : vector<8x128xf32>
    %802 = arith.index_cast %c5_i32_290 : i32 to index
    %c0_295 = arith.constant 0 : index
    %c0_296 = arith.constant 0 : index
    %803 = vector.load %arg15[%802, %c0_295, %c0_296] : memref<8x8x128xf32, #tpu.memory_space<vmem>>, vector<1x8x128xf32>
    %804 = vector.shape_cast %803 : vector<1x8x128xf32> to vector<8x128xf32>
    %805 = vector.shape_cast %801 : vector<8x128xf32> to vector<1x8x128xf32>
    tpu.vector_store %arg15[%802, %c0_295, %c0_296], %805 {strides = array<i32>} : memref<8x8x128xf32, #tpu.memory_space<vmem>>, vector<1x8x128xf32>,
    %c6_i32_297 = arith.constant 6 : i32
    %806 = arith.index_cast %c6_i32_297 : i32 to index
    %c0_298 = arith.constant 0 : index
    %c0_299 = arith.constant 0 : index
    %807 = vector.load %arg16[%806, %c0_298, %c0_299] : memref<8x8x512xf32, #tpu.memory_space<vmem>>, vector<1x8x512xf32>
    %808 = vector.shape_cast %807 : vector<1x8x512xf32> to vector<8x512xf32>
    %cst_300 = arith.constant dense<0.000000e+00> : vector<8x512xf32>
    %809 = tpu.matmul %801, %640, %cst_300 {dimension_numbers = #tpu.dot_dimension_numbers<[1], [0], [0], [1], [0, 0, 1, 1], [], []>} : vector<8x128xf32>, vector<128x512xf32>, vector<8x512xf32> -> vector<8x512xf32>
    %810 = arith.addf %808, %809 : vector<8x512xf32>
    %811 = vector.extract_strided_slice %810 {offsets = [0, 0], sizes = [8, 384], strides = [1, 1]} : vector<8x512xf32> to vector<8x384xf32>
    %812 = arith.negf %811 : vector<8x384xf32>
    %813 = math.exp %812 : vector<8x384xf32>
    %cst_301 = arith.constant 1.000000e+00 : f32
    %814 = vector.broadcast %cst_301 : f32 to vector<8x384xf32>
    %815 = arith.addf %814, %813 : vector<8x384xf32>
    %816 = arith.divf %814, %815 : vector<8x384xf32>
    %817 = vector.extract_strided_slice %810 {offsets = [0, 384], sizes = [8, 128], strides = [1, 1]} : vector<8x512xf32> to vector<8x128xf32>
    %818 = math.tanh %817 : vector<8x128xf32>
    %819 = vector.extract_strided_slice %816 {offsets = [0, 0], sizes = [8, 128], strides = [1, 1]} : vector<8x384xf32> to vector<8x128xf32>
    %820 = vector.extract_strided_slice %816 {offsets = [0, 128], sizes = [8, 128], strides = [1, 1]} : vector<8x384xf32> to vector<8x128xf32>
    %821 = vector.extract_strided_slice %816 {offsets = [0, 256], sizes = [8, 128], strides = [1, 1]} : vector<8x384xf32> to vector<8x128xf32>
    %822 = arith.mulf %820, %799 : vector<8x128xf32>
    %823 = arith.mulf %819, %818 : vector<8x128xf32>
    %824 = arith.addf %822, %823 : vector<8x128xf32>
    %825 = math.tanh %824 : vector<8x128xf32>
    %826 = arith.mulf %821, %825 : vector<8x128xf32>
    %827 = arith.index_cast %c6_i32_297 : i32 to index
    %c0_302 = arith.constant 0 : index
    %c0_303 = arith.constant 0 : index
    %828 = vector.load %arg15[%827, %c0_302, %c0_303] : memref<8x8x128xf32, #tpu.memory_space<vmem>>, vector<1x8x128xf32>
    %829 = vector.shape_cast %828 : vector<1x8x128xf32> to vector<8x128xf32>
    %830 = vector.shape_cast %826 : vector<8x128xf32> to vector<1x8x128xf32>
    tpu.vector_store %arg15[%827, %c0_302, %c0_303], %830 {strides = array<i32>} : memref<8x8x128xf32, #tpu.memory_space<vmem>>, vector<1x8x128xf32>,
    %c7_i32_304 = arith.constant 7 : i32
    %831 = arith.index_cast %c7_i32_304 : i32 to index
    %c0_305 = arith.constant 0 : index
    %c0_306 = arith.constant 0 : index
    %832 = vector.load %arg16[%831, %c0_305, %c0_306] : memref<8x8x512xf32, #tpu.memory_space<vmem>>, vector<1x8x512xf32>
    %833 = vector.shape_cast %832 : vector<1x8x512xf32> to vector<8x512xf32>
    %cst_307 = arith.constant dense<0.000000e+00> : vector<8x512xf32>
    %834 = tpu.matmul %826, %640, %cst_307 {dimension_numbers = #tpu.dot_dimension_numbers<[1], [0], [0], [1], [0, 0, 1, 1], [], []>} : vector<8x128xf32>, vector<128x512xf32>, vector<8x512xf32> -> vector<8x512xf32>
    %835 = arith.addf %833, %834 : vector<8x512xf32>
    %836 = vector.extract_strided_slice %835 {offsets = [0, 0], sizes = [8, 384], strides = [1, 1]} : vector<8x512xf32> to vector<8x384xf32>
    %837 = arith.negf %836 : vector<8x384xf32>
    %838 = math.exp %837 : vector<8x384xf32>
    %cst_308 = arith.constant 1.000000e+00 : f32
    %839 = vector.broadcast %cst_308 : f32 to vector<8x384xf32>
    %840 = arith.addf %839, %838 : vector<8x384xf32>
    %841 = arith.divf %839, %840 : vector<8x384xf32>
    %842 = vector.extract_strided_slice %835 {offsets = [0, 384], sizes = [8, 128], strides = [1, 1]} : vector<8x512xf32> to vector<8x128xf32>
    %843 = math.tanh %842 : vector<8x128xf32>
    %844 = vector.extract_strided_slice %841 {offsets = [0, 0], sizes = [8, 128], strides = [1, 1]} : vector<8x384xf32> to vector<8x128xf32>
    %845 = vector.extract_strided_slice %841 {offsets = [0, 128], sizes = [8, 128], strides = [1, 1]} : vector<8x384xf32> to vector<8x128xf32>
    %846 = vector.extract_strided_slice %841 {offsets = [0, 256], sizes = [8, 128], strides = [1, 1]} : vector<8x384xf32> to vector<8x128xf32>
    %847 = arith.mulf %845, %824 : vector<8x128xf32>
    %848 = arith.mulf %844, %843 : vector<8x128xf32>
    %849 = arith.addf %847, %848 : vector<8x128xf32>
    %850 = math.tanh %849 : vector<8x128xf32>
    %851 = arith.mulf %846, %850 : vector<8x128xf32>
    %852 = arith.index_cast %c7_i32_304 : i32 to index
    %c0_309 = arith.constant 0 : index
    %c0_310 = arith.constant 0 : index
    %853 = vector.load %arg15[%852, %c0_309, %c0_310] : memref<8x8x128xf32, #tpu.memory_space<vmem>>, vector<1x8x128xf32>
    %854 = vector.shape_cast %853 : vector<1x8x128xf32> to vector<8x128xf32>
    %855 = vector.shape_cast %851 : vector<8x128xf32> to vector<1x8x128xf32>
    tpu.vector_store %arg15[%852, %c0_309, %c0_310], %855 {strides = array<i32>} : memref<8x8x128xf32, #tpu.memory_space<vmem>>, vector<1x8x128xf32>,
    %c8_i32_311 = arith.constant 8 : i32
    %c1_312 = arith.constant 1 : index
    %c0_313 = arith.constant 0 : index
    %c0_314 = arith.constant 0 : index
    %856 = vector.load %arg13[%c1_312, %c0_313, %c0_314] : memref<2x8x128xf32, #tpu.memory_space<vmem>>, vector<1x8x128xf32>
    %857 = vector.shape_cast %856 : vector<1x8x128xf32> to vector<8x128xf32>
    %858 = vector.shape_cast %851 : vector<8x128xf32> to vector<1x8x128xf32>
    tpu.vector_store %arg13[%c1_312, %c0_313, %c0_314], %858 {strides = array<i32>} : memref<2x8x128xf32, #tpu.memory_space<vmem>>, vector<1x8x128xf32>,
    %c1_315 = arith.constant 1 : index
    %c0_316 = arith.constant 0 : index
    %c0_317 = arith.constant 0 : index
    %859 = vector.load %arg14[%c1_315, %c0_316, %c0_317] : memref<2x8x128xf32, #tpu.memory_space<vmem>>, vector<1x8x128xf32>
    %860 = vector.shape_cast %859 : vector<1x8x128xf32> to vector<8x128xf32>
    %861 = vector.shape_cast %849 : vector<8x128xf32> to vector<1x8x128xf32>
    tpu.vector_store %arg14[%c1_315, %c0_316, %c0_317], %861 {strides = array<i32>} : memref<2x8x128xf32, #tpu.memory_space<vmem>>, vector<1x8x128xf32>,
    %c0_318 = arith.constant 0 : index
    %c0_319 = arith.constant 0 : index
    %c0_320 = arith.constant 0 : index
    %862 = vector.load %arg15[%c0_318, %c0_319, %c0_320] : memref<8x8x128xf32, #tpu.memory_space<vmem>>, vector<8x8x128xf32>
    %863 = vector.shape_cast %862 : vector<8x8x128xf32> to vector<64x128xf32>
    %c0_321 = arith.constant 0 : index
    %c0_322 = arith.constant 0 : index
    %864 = vector.load %arg10[%c0_321, %c0_322] : memref<128x128xf32, #tpu.memory_space<vmem>>, vector<128x128xf32>
    %cst_323 = arith.constant dense<0.000000e+00> : vector<64x128xf32>
    %865 = tpu.matmul %863, %864, %cst_323 {dimension_numbers = #tpu.dot_dimension_numbers<[1], [0], [0], [1], [0, 0, 1, 1], [], []>} : vector<64x128xf32>, vector<128x128xf32>, vector<64x128xf32> -> vector<64x128xf32>
    %c0_324 = arith.constant 0 : index
    %c0_325 = arith.constant 0 : index
    %866 = vector.load %arg11[%c0_324, %c0_325] : memref<1x128xf32, #tpu.memory_space<vmem>>, vector<1x128xf32>
    %867 = vector.broadcast %866 : vector<1x128xf32> to vector<64x128xf32>
    %868 = arith.addf %865, %867 : vector<64x128xf32>
    %869 = vector.shape_cast %868 : vector<64x128xf32> to vector<8x8x128xf32>
    %c0_326 = arith.constant 0 : index
    %c0_327 = arith.constant 0 : index
    %c0_328 = arith.constant 0 : index
    %870 = vector.load %arg12[%c0_326, %c0_327, %c0_328] : memref<8x8x128xf32, #tpu.memory_space<vmem>>, vector<8x8x128xf32>
    tpu.vector_store %arg12[%c0_326, %c0_327, %c0_328], %869 {strides = array<i32>} : memref<8x8x128xf32, #tpu.memory_space<vmem>>, vector<8x8x128xf32>,
    return
  }
}

</mosaic_0001>

<llo_original>
// kernel: lstm_seq2seq_forward.1
$region0: #{lstm_seq2seq_forward.1}
  #allocation0 [shape = 'u32[]', space=smem, size = 0x4, offset = 0x4, fixed_abs, tag = 'smem constant byte address 0x4 - core index']
  #allocation1 [shape = 'u32[144,128]{1,0:T(1,128)}', space=vmem, size = 0x12000, scoped, tag = 'internal scratch']
  #allocation2 [shape = 'f32[2,8,128]{2,1,0:T(8,128)}', space=vmem, size = 0x2000, scoped, tag = 'scratch operand']
  #allocation3 [shape = 'f32[2,8,128]{2,1,0:T(8,128)}', space=vmem, size = 0x2000, scoped, tag = 'scratch operand']
  #allocation4 [shape = 'f32[8,8,128]{2,1,0:T(8,128)}', space=vmem, size = 0x8000, scoped, tag = 'scratch operand']
  #allocation5 [shape = 'f32[8,8,512]{2,1,0:T(8,128)}', space=vmem, size = 0x20000, scoped, tag = 'scratch operand']
  %s0 = inlined_call_operand.vmem [shape: f32[8,8,128], index: 0, kind: input, shape index: {}]
  %s1 = inlined_call_operand.vmem [shape: f32[8,8,128], index: 1, kind: input, shape index: {}]
  %s2 = inlined_call_operand.hbm [shape: f32[128,512], index: 2, kind: input, shape index: {}]
  %s3 = inlined_call_operand.hbm [shape: f32[1,128,512], index: 3, kind: input, shape index: {}]
  %s4 = inlined_call_operand.hbm [shape: f32[2,128,512], index: 4, kind: input, shape index: {}]
  %s5 = inlined_call_operand.vmem [shape: f32[2,1,512], index: 5, kind: input, shape index: {}]
  %s6 = inlined_call_operand.hbm [shape: f32[128,512], index: 6, kind: input, shape index: {}]
  %s7 = inlined_call_operand.hbm [shape: f32[1,128,512], index: 7, kind: input, shape index: {}]
  %s8 = inlined_call_operand.hbm [shape: f32[2,128,512], index: 8, kind: input, shape index: {}]
  %s9 = inlined_call_operand.vmem [shape: f32[2,1,512], index: 9, kind: input, shape index: {}]
  %s10 = inlined_call_operand.vmem [shape: f32[128,128], index: 10, kind: input, shape index: {}]
  %s11 = inlined_call_operand.vmem [shape: f32[1,128], index: 11, kind: input, shape index: {}]
  %s12 = inlined_call_operand.vmem [shape: f32[8,8,128], index: 12, kind: output, shape index: {}]
  %s13 = sld [smem:[#allocation0]]
  $region82: #{lstm_seq2seq_forward.1} parent=0
    _
  %s15 = ssub.s32 1, %s13
  %s16 = scalar_select 0, %s15, %s13
  $region1: #{lstm_seq2seq_forward.1} parent=0
    #allocation6 [shape = 'u8[262144]{0}', space=vmem, size = 0x40000, scoped, tag = 'input window, operand 2, single buffered']
    #allocation7 [shape = 's32[1]{0}', space=sflag, size = 0x4, scoped, tag = 'scoped memory for lstm_seq2seq_forward.1']
    #allocation8 [shape = 'u8[262144]{0}', space=vmem, size = 0x40000, scoped, tag = 'input window, operand 3, single buffered']
    #allocation9 [shape = 's32[1]{0}', space=sflag, size = 0x4, scoped, tag = 'scoped memory for lstm_seq2seq_forward.1']
    #allocation10 [shape = 'u8[524288]{0}', space=vmem, size = 0x80000, scoped, tag = 'input window, operand 4, single buffered']
    #allocation11 [shape = 'u8[262144]{0}', space=vmem, size = 0x40000, scoped, tag = 'input window, operand 6, single buffered']
    #allocation12 [shape = 's32[1]{0}', space=sflag, size = 0x4, scoped, tag = 'scoped memory for lstm_seq2seq_forward.1']
    #allocation13 [shape = 'u8[262144]{0}', space=vmem, size = 0x40000, scoped, tag = 'input window, operand 7, single buffered']
    #allocation14 [shape = 'u8[524288]{0}', space=vmem, size = 0x80000, scoped, tag = 'input window, operand 8, single buffered']
    #allocation15 [shape = 's32[1]{0}', space=sflag, size = 0x4, scoped, tag = 'scoped memory for lstm_seq2seq_forward.1']
    %17 = vsyncpa [#allocation7], 0
    %18 = vsyncpa [#allocation9], 0
    %19 = vsyncpa [#allocation12], 0
    %20 = vsyncpa [#allocation15], 0
    // Predicated region
    $region2: #{lstm_seq2seq_forward.1} parent=1 // pred_check
      _
    $region3: #{lstm_seq2seq_forward.1} parent=1 // pred_check_branch
      %22 = sbr.rel (0) target = $region5
    $region4: #{lstm_seq2seq_forward.1} parent=1 // pred_region
      _
    $region5: #{lstm_seq2seq_forward.1} parent=1 // pred_fallthru
      _
    // Predicated region
    $region6: #{lstm_seq2seq_forward.1} parent=1 // pred_check
      _
    $region7: #{lstm_seq2seq_forward.1} parent=1 // pred_check_branch
      %24 = sbr.rel (0) target = $region9
    $region8: #{lstm_seq2seq_forward.1} parent=1 // pred_region
      _
    $region9: #{lstm_seq2seq_forward.1} parent=1 // pred_fallthru
      _
    // Predicated region
    $region10: #{lstm_seq2seq_forward.1} parent=1 // pred_check
      _
    $region11: #{lstm_seq2seq_forward.1} parent=1 // pred_check_branch
      %26 = sbr.rel (0) target = $region13
    $region12: #{lstm_seq2seq_forward.1} parent=1 // pred_region
      %s28 = ssub.s32 8192, 8192
      %29 = vsyncadd [#allocation7], %s28
      %s30 = sshll.u32 [#allocation6], 4
      %s31 = int_to_ptr.vmem [resolvable:$true] %s30
      %36 = dma.hbm_to_vmem [thread:$0]  %s2, 8192, %s31, [#allocation7], 512, 512, 32
    $region13: #{lstm_seq2seq_forward.1} parent=1 // pred_fallthru
      _
    // Predicated region
    $region14: #{lstm_seq2seq_forward.1} parent=1 // pred_check
      _
    $region15: #{lstm_seq2seq_forward.1} parent=1 // pred_check_branch
      %38 = sbr.rel (0) target = $region17
    $region16: #{lstm_seq2seq_forward.1} parent=1 // pred_region
      %s40 = ssub.s32 8192, 8192
      %41 = vsyncadd [#allocation9], %s40
      %s42 = sshll.u32 [#allocation8], 4
      %s43 = int_to_ptr.vmem [resolvable:$true] %s42
      %48 = dma.hbm_to_vmem [thread:$0]  %s3, 8192, %s43, [#allocation9], 512, 512, 32
    $region17: #{lstm_seq2seq_forward.1} parent=1 // pred_fallthru
      _
    // Predicated region
    $region18: #{lstm_seq2seq_forward.1} parent=1 // pred_check
      _
    $region19: #{lstm_seq2seq_forward.1} parent=1 // pred_check_branch
      %50 = sbr.rel (0) target = $region21
    $region20: #{lstm_seq2seq_forward.1} parent=1 // pred_region
      %s52 = ssub.s32 16384, 16384
      %53 = vsyncadd [#allocation9], %s52
      %s54 = sshll.u32 [#allocation10], 4
      %s55 = int_to_ptr.vmem [resolvable:$true] %s54
      %60 = dma.hbm_to_vmem [thread:$0]  %s4, 16384, %s55, [#allocation9], 512, 512, 32
    $region21: #{lstm_seq2seq_forward.1} parent=1 // pred_fallthru
      _
    // Predicated region
    $region22: #{lstm_seq2seq_forward.1} parent=1 // pred_check
      _
    $region23: #{lstm_seq2seq_forward.1} parent=1 // pred_check_branch
      %62 = sbr.rel (0) target = $region25
    $region24: #{lstm_seq2seq_forward.1} parent=1 // pred_region
      _
    $region25: #{lstm_seq2seq_forward.1} parent=1 // pred_fallthru
      _
    // Predicated region
    $region26: #{lstm_seq2seq_forward.1} parent=1 // pred_check
      _
    $region27: #{lstm_seq2seq_forward.1} parent=1 // pred_check_branch
      %64 = sbr.rel (0) target = $region29
    $region28: #{lstm_seq2seq_forward.1} parent=1 // pred_region
      %s66 = ssub.s32 8192, 8192
      %67 = vsyncadd [#allocation12], %s66
      %s68 = sshll.u32 [#allocation11], 4
      %s69 = int_to_ptr.vmem [resolvable:$true] %s68
      %74 = dma.hbm_to_vmem [thread:$0]  %s6, 8192, %s69, [#allocation12], 512, 512, 32
    $region29: #{lstm_seq2seq_forward.1} parent=1 // pred_fallthru
      _
    // Predicated region
    $region30: #{lstm_seq2seq_forward.1} parent=1 // pred_check
      _
    $region31: #{lstm_seq2seq_forward.1} parent=1 // pred_check_branch
      %76 = sbr.rel (0) target = $region33
    $region32: #{lstm_seq2seq_forward.1} parent=1 // pred_region
      %s78 = ssub.s32 8192, 8192
      %79 = vsyncadd [#allocation12], %s78
      %s80 = sshll.u32 [#allocation13], 4
      %s81 = int_to_ptr.vmem [resolvable:$true] %s80
      %86 = dma.hbm_to_vmem [thread:$0]  %s7, 8192, %s81, [#allocation12], 512, 512, 32
    $region33: #{lstm_seq2seq_forward.1} parent=1 // pred_fallthru
      _
    // Predicated region
    $region34: #{lstm_seq2seq_forward.1} parent=1 // pred_check
      _
    $region35: #{lstm_seq2seq_forward.1} parent=1 // pred_check_branch
      %88 = sbr.rel (0) target = $region37
    $region36: #{lstm_seq2seq_forward.1} parent=1 // pred_region
      %s90 = ssub.s32 16384, 16384
      %91 = vsyncadd [#allocation15], %s90
      %s92 = sshll.u32 [#allocation14], 4
      %s93 = int_to_ptr.vmem [resolvable:$true] %s92
      %98 = dma.hbm_to_vmem [thread:$0]  %s8, 16384, %s93, [#allocation15], 512, 512, 32
    $region37: #{lstm_seq2seq_forward.1} parent=1 // pred_fallthru
      _
    // Predicated region
    $region38: #{lstm_seq2seq_forward.1} parent=1 // pred_check
      _
    $region39: #{lstm_seq2seq_forward.1} parent=1 // pred_check_branch
      %100 = sbr.rel (0) target = $region41
    $region40: #{lstm_seq2seq_forward.1} parent=1 // pred_region
      _
    $region41: #{lstm_seq2seq_forward.1} parent=1 // pred_fallthru
      _
    // Predicated region
    $region42: #{lstm_seq2seq_forward.1} parent=1 // pred_check
      _
    $region43: #{lstm_seq2seq_forward.1} parent=1 // pred_check_branch
      %102 = sbr.rel (0) target = $region45
    $region44: #{lstm_seq2seq_forward.1} parent=1 // pred_region
      _
    $region45: #{lstm_seq2seq_forward.1} parent=1 // pred_fallthru
      _
    // Predicated region
    $region46: #{lstm_seq2seq_forward.1} parent=1 // pred_check
      _
    $region47: #{lstm_seq2seq_forward.1} parent=1 // pred_check_branch
      %104 = sbr.rel (0) target = $region49
    $region48: #{lstm_seq2seq_forward.1} parent=1 // pred_region
      _
    $region49: #{lstm_seq2seq_forward.1} parent=1 // pred_fallthru
      _
    // Predicated region
    $region50: #{lstm_seq2seq_forward.1} parent=1 // pred_check
      _
    $region51: #{lstm_seq2seq_forward.1} parent=1 // pred_check_branch
      %106 = sbr.rel (0) target = $region53
    $region52: #{lstm_seq2seq_forward.1} parent=1 // pred_region
      %107 = dma.done [#allocation7], 8192
    $region53: #{lstm_seq2seq_forward.1} parent=1 // pred_fallthru
      _
    // Predicated region
    $region54: #{lstm_seq2seq_forward.1} parent=1 // pred_check
      _
    $region55: #{lstm_seq2seq_forward.1} parent=1 // pred_check_branch
      %109 = sbr.rel (0) target = $region57
    $region56: #{lstm_seq2seq_forward.1} parent=1 // pred_region
      %110 = dma.done [#allocation9], 8192
    $region57: #{lstm_seq2seq_forward.1} parent=1 // pred_fallthru
      _
    // Predicated region
    $region58: #{lstm_seq2seq_forward.1} parent=1 // pred_check
      _
    $region59: #{lstm_seq2seq_forward.1} parent=1 // pred_check_branch
      %112 = sbr.rel (0) target = $region61
    $region60: #{lstm_seq2seq_forward.1} parent=1 // pred_region
      %113 = dma.done [#allocation9], 16384
    $region61: #{lstm_seq2seq_forward.1} parent=1 // pred_fallthru
      _
    // Predicated region
    $region62: #{lstm_seq2seq_forward.1} parent=1 // pred_check
      _
    $region63: #{lstm_seq2seq_forward.1} parent=1 // pred_check_branch
      %115 = sbr.rel (0) target = $region65
    $region64: #{lstm_seq2seq_forward.1} parent=1 // pred_region
      %116 = dma.done [#allocation12], 8192
    $region65: #{lstm_seq2seq_forward.1} parent=1 // pred_fallthru
      _
    // Predicated region
    $region66: #{lstm_seq2seq_forward.1} parent=1 // pred_check
      _
    $region67: #{lstm_seq2seq_forward.1} parent=1 // pred_check_branch
      %118 = sbr.rel (0) target = $region69
    $region68: #{lstm_seq2seq_forward.1} parent=1 // pred_region
      %119 = dma.done [#allocation12], 8192
    $region69: #{lstm_seq2seq_forward.1} parent=1 // pred_fallthru
      _
    // Predicated region
    $region70: #{lstm_seq2seq_forward.1} parent=1 // pred_check
      _
    $region71: #{lstm_seq2seq_forward.1} parent=1 // pred_check_branch
      %121 = sbr.rel (0) target = $region73
    $region72: #{lstm_seq2seq_forward.1} parent=1 // pred_region
      %122 = dma.done [#allocation15], 16384
    $region73: #{lstm_seq2seq_forward.1} parent=1 // pred_fallthru
      _
    %123 = vst [vmem:[#allocation2] sm:$0xff] 0.0
    %124 = vst [vmem:[#allocation2 + $0x8] sm:$0xff] 0.0
    %125 = vst [vmem:[#allocation3] sm:$0xff] 0.0
    %126 = vst [vmem:[#allocation3 + $0x8] sm:$0xff] 0.0
    %v127 = vld [vmem:[#allocation10] sm:$0xff]
    %v128 = vld [vmem:[#allocation10 + $0x8] sm:$0xff]
    %v129 = vld [vmem:[#allocation10 + $0x10] sm:$0xff]
    %v130 = vld [vmem:[#allocation10 + $0x18] sm:$0xff]
    %v131 = vld [vmem:[#allocation10 + $0x20] sm:$0xff]
    %v132 = vld [vmem:[#allocation10 + $0x28] sm:$0xff]
    %v133 = vld [vmem:[#allocation10 + $0x30] sm:$0xff]
    %v134 = vld [vmem:[#allocation10 + $0x38] sm:$0xff]
    %v135 = vld [vmem:[#allocation10 + $0x40] sm:$0xff]
    %v136 = vld [vmem:[#allocation10 + $0x48] sm:$0xff]
    %v137 = vld [vmem:[#allocation10 + $0x50] sm:$0xff]
    %v138 = vld [vmem:[#allocation10 + $0x58] sm:$0xff]
    %v139 = vld [vmem:[#allocation10 + $0x60] sm:$0xff]
    %v140 = vld [vmem:[#allocation10 + $0x68] sm:$0xff]
    %v141 = vld [vmem:[#allocation10 + $0x70] sm:$0xff]
    %v142 = vld [vmem:[#allocation10 + $0x78] sm:$0xff]
    %v143 = vld [vmem:[#allocation10 + $0x80] sm:$0xff]
    %v144 = vld [vmem:[#allocation10 + $0x88] sm:$0xff]
    %v145 = vld [vmem:[#allocation10 + $0x90] sm:$0xff]
    %v146 = vld [vmem:[#allocation10 + $0x98] sm:$0xff]
    %v147 = vld [vmem:[#allocation10 + $0xa0] sm:$0xff]
    %v148 = vld [vmem:[#allocation10 + $0xa8] sm:$0xff]
    %v149 = vld [vmem:[#allocation10 + $0xb0] sm:$0xff]
    %v150 = vld [vmem:[#allocation10 + $0xb8] sm:$0xff]
    %v151 = vld [vmem:[#allocation10 + $0xc0] sm:$0xff]
    %v152 = vld [vmem:[#allocation10 + $0xc8] sm:$0xff]
    %v153 = vld [vmem:[#allocation10 + $0xd0] sm:$0xff]
    %v154 = vld [vmem:[#allocation10 + $0xd8] sm:$0xff]
    %v155 = vld [vmem:[#allocation10 + $0xe0] sm:$0xff]
    %v156 = vld [vmem:[#allocation10 + $0xe8] sm:$0xff]
    %v157 = vld [vmem:[#allocation10 + $0xf0] sm:$0xff]
    %v158 = vld [vmem:[#allocation10 + $0xf8] sm:$0xff]
    %v159 = vld [vmem:[#allocation10 + $0x100] sm:$0xff]
    %v160 = vld [vmem:[#allocation10 + $0x108] sm:$0xff]
    %v161 = vld [vmem:[#allocation10 + $0x110] sm:$0xff]
    %v162 = vld [vmem:[#allocation10 + $0x118] sm:$0xff]
    %v163 = vld [vmem:[#allocation10 + $0x120] sm:$0xff]
    %v164 = vld [vmem:[#allocation10 + $0x128] sm:$0xff]
    %v165 = vld [vmem:[#allocation10 + $0x130] sm:$0xff]
    %v166 = vld [vmem:[#allocation10 + $0x138] sm:$0xff]
    %v167 = vld [vmem:[#allocation10 + $0x140] sm:$0xff]
    %v168 = vld [vmem:[#allocation10 + $0x148] sm:$0xff]
    %v169 = vld [vmem:[#allocation10 + $0x150] sm:$0xff]
    %v170 = vld [vmem:[#allocation10 + $0x158] sm:$0xff]
    %v171 = vld [vmem:[#allocation10 + $0x160] sm:$0xff]
    %v172 = vld [vmem:[#allocation10 + $0x168] sm:$0xff]
    %v173 = vld [vmem:[#allocation10 + $0x170] sm:$0xff]
    %v174 = vld [vmem:[#allocation10 + $0x178] sm:$0xff]
    %v175 = vld [vmem:[#allocation10 + $0x180] sm:$0xff]
    %v176 = vld [vmem:[#allocation10 + $0x188] sm:$0xff]
    %v177 = vld [vmem:[#allocation10 + $0x190] sm:$0xff]
    %v178 = vld [vmem:[#allocation10 + $0x198] sm:$0xff]
    %v179 = vld [vmem:[#allocation10 + $0x1a0] sm:$0xff]
    %v180 = vld [vmem:[#allocation10 + $0x1a8] sm:$0xff]
    %v181 = vld [vmem:[#allocation10 + $0x1b0] sm:$0xff]
    %v182 = vld [vmem:[#allocation10 + $0x1b8] sm:$0xff]
    %v183 = vld [vmem:[#allocation10 + $0x1c0] sm:$0xff]
    %v184 = vld [vmem:[#allocation10 + $0x1c8] sm:$0xff]
    %v185 = vld [vmem:[#allocation10 + $0x1d0] sm:$0xff]
    %v186 = vld [vmem:[#allocation10 + $0x1d8] sm:$0xff]
    %v187 = vld [vmem:[#allocation10 + $0x1e0] sm:$0xff]
    %v188 = vld [vmem:[#allocation10 + $0x1e8] sm:$0xff]
    %v189 = vld [vmem:[#allocation10 + $0x1f0] sm:$0xff]
    %v190 = vld [vmem:[#allocation10 + $0x1f8] sm:$0xff]
    %v191 = vld [vmem:[%s5] sm:$0xf]
    %v192 = vld [vmem:[%s0] sm:$0xff]
    %v193 = vld [vmem:[%s0 + $0x8] sm:$0xff]
    %v194 = vld [vmem:[%s0 + $0x10] sm:$0xff]
    %v195 = vld [vmem:[%s0 + $0x18] sm:$0xff]
    %v196 = vld [vmem:[%s0 + $0x20] sm:$0xff]
    %v197 = vld [vmem:[%s0 + $0x28] sm:$0xff]
    %v198 = vld [vmem:[%s0 + $0x30] sm:$0xff]
    %v199 = vld [vmem:[%s0 + $0x38] sm:$0xff]
    %v200 = vld [vmem:[#allocation6] sm:$0xff]
    %v201 = vld [vmem:[#allocation6 + $0x8] sm:$0xff]
    %v202 = vld [vmem:[#allocation6 + $0x10] sm:$0xff]
    %v203 = vld [vmem:[#allocation6 + $0x18] sm:$0xff]
    %v204 = vld [vmem:[#allocation6 + $0x20] sm:$0xff]
    %v205 = vld [vmem:[#allocation6 + $0x28] sm:$0xff]
    %v206 = vld [vmem:[#allocation6 + $0x30] sm:$0xff]
    %v207 = vld [vmem:[#allocation6 + $0x38] sm:$0xff]
    %v208 = vld [vmem:[#allocation6 + $0x40] sm:$0xff]
    %v209 = vld [vmem:[#allocation6 + $0x48] sm:$0xff]
    %v210 = vld [vmem:[#allocation6 + $0x50] sm:$0xff]
    %v211 = vld [vmem:[#allocation6 + $0x58] sm:$0xff]
    %v212 = vld [vmem:[#allocation6 + $0x60] sm:$0xff]
    %v213 = vld [vmem:[#allocation6 + $0x68] sm:$0xff]
    %v214 = vld [vmem:[#allocation6 + $0x70] sm:$0xff]
    %v215 = vld [vmem:[#allocation6 + $0x78] sm:$0xff]
    %v216 = vld [vmem:[#allocation6 + $0x80] sm:$0xff]
    %v217 = vld [vmem:[#allocation6 + $0x88] sm:$0xff]
    %v218 = vld [vmem:[#allocation6 + $0x90] sm:$0xff]
    %v219 = vld [vmem:[#allocation6 + $0x98] sm:$0xff]
    %v220 = vld [vmem:[#allocation6 + $0xa0] sm:$0xff]
    %v221 = vld [vmem:[#allocation6 + $0xa8] sm:$0xff]
    %v222 = vld [vmem:[#allocation6 + $0xb0] sm:$0xff]
    %v223 = vld [vmem:[#allocation6 + $0xb8] sm:$0xff]
    %v224 = vld [vmem:[#allocation6 + $0xc0] sm:$0xff]
    %v225 = vld [vmem:[#allocation6 + $0xc8] sm:$0xff]
    %v226 = vld [vmem:[#allocation6 + $0xd0] sm:$0xff]
    %v227 = vld [vmem:[#allocation6 + $0xd8] sm:$0xff]
    %v228 = vld [vmem:[#allocation6 + $0xe0] sm:$0xff]
    %v229 = vld [vmem:[#allocation6 + $0xe8] sm:$0xff]
    %v230 = vld [vmem:[#allocation6 + $0xf0] sm:$0xff]
    %v231 = vld [vmem:[#allocation6 + $0xf8] sm:$0xff]
    %v232 = vld [vmem:[#allocation6 + $0x100] sm:$0xff]
    %v233 = vld [vmem:[#allocation6 + $0x108] sm:$0xff]
    %v234 = vld [vmem:[#allocation6 + $0x110] sm:$0xff]
    %v235 = vld [vmem:[#allocation6 + $0x118] sm:$0xff]
    %v236 = vld [vmem:[#allocation6 + $0x120] sm:$0xff]
    %v237 = vld [vmem:[#allocation6 + $0x128] sm:$0xff]
    %v238 = vld [vmem:[#allocation6 + $0x130] sm:$0xff]
    %v239 = vld [vmem:[#allocation6 + $0x138] sm:$0xff]
    %v240 = vld [vmem:[#allocation6 + $0x140] sm:$0xff]
    %v241 = vld [vmem:[#allocation6 + $0x148] sm:$0xff]
    %v242 = vld [vmem:[#allocation6 + $0x150] sm:$0xff]
    %v243 = vld [vmem:[#allocation6 + $0x158] sm:$0xff]
    %v244 = vld [vmem:[#allocation6 + $0x160] sm:$0xff]
    %v245 = vld [vmem:[#allocation6 + $0x168] sm:$0xff]
    %v246 = vld [vmem:[#allocation6 + $0x170] sm:$0xff]
    %v247 = vld [vmem:[#allocation6 + $0x178] sm:$0xff]
    %v248 = vld [vmem:[#allocation6 + $0x180] sm:$0xff]
    %v249 = vld [vmem:[#allocation6 + $0x188] sm:$0xff]
    %v250 = vld [vmem:[#allocation6 + $0x190] sm:$0xff]
    %v251 = vld [vmem:[#allocation6 + $0x198] sm:$0xff]
    %v252 = vld [vmem:[#allocation6 + $0x1a0] sm:$0xff]
    %v253 = vld [vmem:[#allocation6 + $0x1a8] sm:$0xff]
    %v254 = vld [vmem:[#allocation6 + $0x1b0] sm:$0xff]
    %v255 = vld [vmem:[#allocation6 + $0x1b8] sm:$0xff]
    %v256 = vld [vmem:[#allocation6 + $0x1c0] sm:$0xff]
    %v257 = vld [vmem:[#allocation6 + $0x1c8] sm:$0xff]
    %v258 = vld [vmem:[#allocation6 + $0x1d0] sm:$0xff]
    %v259 = vld [vmem:[#allocation6 + $0x1d8] sm:$0xff]
    %v260 = vld [vmem:[#allocation6 + $0x1e0] sm:$0xff]
    %v261 = vld [vmem:[#allocation6 + $0x1e8] sm:$0xff]
    %v262 = vld [vmem:[#allocation6 + $0x1f0] sm:$0xff]
    %v263 = vld [vmem:[#allocation6 + $0x1f8] sm:$0xff]
    %v265 = vlaneseq
    %v266 = vshrl.u32 %v265, 7
    %v267 = vsub.s32 0, %v266
    %v268 = vrot.slane %v191, %v267
    %v269 = vlaneseq
    %v270 = vshrl.u32 %v269, 7
    %v271 = vsub.s32 1, %v270
    %v272 = vrot.slane %v191, %v271
    %v273 = vlaneseq
    %v274 = vshrl.u32 %v273, 7
    %v275 = vsub.s32 2, %v274
    %v276 = vrot.slane %v191, %v275
    %v277 = vlaneseq
    %v278 = vshrl.u32 %v277, 7
    %v279 = vsub.s32 3, %v278
    %v280 = vrot.slane %v191, %v279
    %285 = vmatprep.subr.mxu0 %v201
    %286 = vmatpush1.msra.mxu0 %v200
    %287 = vmatprep.subr.mxu0 %v205
    %288 = vmatpush1.msra.mxu0 %v204
    %289 = vmatprep.subr.mxu0 %v209
    %290 = vmatpush1.msra.mxu0 %v208
    %291 = vmatprep.subr.mxu0 %v213
    %292 = vmatpush1.msra.mxu0 %v212
    %293 = vmatprep.subr.mxu0 %v217
    %294 = vmatpush1.msra.mxu0 %v216
    %295 = vmatprep.subr.mxu0 %v221
    %296 = vmatpush1.msra.mxu0 %v220
    %297 = vmatprep.subr.mxu0 %v225
    %298 = vmatpush1.msra.mxu0 %v224
    %299 = vmatprep.subr.mxu0 %v229
    %300 = vmatpush1.msra.mxu0 %v228
    %301 = vmatprep.subr.mxu0 %v233
    %302 = vmatpush1.msra.mxu0 %v232
    %303 = vmatprep.subr.mxu0 %v237
    %304 = vmatpush1.msra.mxu0 %v236
    %305 = vmatprep.subr.mxu0 %v241
    %306 = vmatpush1.msra.mxu0 %v240
    %307 = vmatprep.subr.mxu0 %v245
    %308 = vmatpush1.msra.mxu0 %v244
    %309 = vmatprep.subr.mxu0 %v249
    %310 = vmatpush1.msra.mxu0 %v248
    %311 = vmatprep.subr.mxu0 %v253
    %312 = vmatpush1.msra.mxu0 %v252
    %313 = vmatprep.subr.mxu0 %v257
    %314 = vmatpush1.msra.mxu0 %v256
    %315 = vmatprep.subr.mxu0 %v261
    %316 = vmatpush1.msra.mxu0 %v260
    %317 = vmatprep.subr.mxu0 0.0
    %318 = vmatpush1.msra.mxu0 0.0
    %319 = vmatprep.subr.mxu0 0.0
    %320 = vmatpush1.msra.mxu0 0.0
    %321 = vmatprep.subr.mxu0 0.0
    %322 = vmatpush1.msra.mxu0 0.0
    %323 = vmatprep.subr.mxu0 0.0
    %324 = vmatpush1.msra.mxu0 0.0
    %325 = vmatprep.subr.mxu0 0.0
    %326 = vmatpush1.msra.mxu0 0.0
    %327 = vmatprep.subr.mxu0 0.0
    %328 = vmatpush1.msra.mxu0 0.0
    %329 = vmatprep.subr.mxu0 0.0
    %330 = vmatpush1.msra.mxu0 0.0
    %331 = vmatprep.subr.mxu0 0.0
    %332 = vmatpush1.msra.mxu0 0.0
    %333 = vmatprep.subr.mxu0 0.0
    %334 = vmatpush1.msra.mxu0 0.0
    %335 = vmatprep.subr.mxu0 0.0
    %336 = vmatpush1.msra.mxu0 0.0
    %337 = vmatprep.subr.mxu0 0.0
    %338 = vmatpush1.msra.mxu0 0.0
    %339 = vmatprep.subr.mxu0 0.0
    %340 = vmatpush1.msra.mxu0 0.0
    %341 = vmatprep.subr.mxu0 0.0
    %342 = vmatpush1.msra.mxu0 0.0
    %343 = vmatprep.subr.mxu0 0.0
    %344 = vmatpush1.msra.mxu0 0.0
    %345 = vmatprep.subr.mxu0 0.0
    %346 = vmatpush1.msra.mxu0 0.0
    %347 = vmatprep.subr.mxu0 0.0
    %348 = vmatpush1.msra.mxu0 0.0
    %349 = vmatprep.mubr.f32.mxu0 0.0
    %350 = vmatmul.mubr.f32.gmra.mrb[0].mxu0 %v192
    %v351 = vpop.f32.mrb[0].mxu0
    %v352 = vadd.f32 %v268, %v351
    %v353 = vpop.f32.mrb[0].mxu0
    %v354 = vadd.f32 %v272, %v353
    %355 = vmatprep.mubr.f32.mxu0 0.0
    %356 = vmatmul.mubr.f32.gmra.mrb[0].mxu0 %v193
    %v357 = vpop.f32.mrb[0].mxu0
    %v358 = vadd.f32 %v268, %v357
    %v359 = vpop.f32.mrb[0].mxu0
    %v360 = vadd.f32 %v272, %v359
    %361 = vmatprep.mubr.f32.mxu0 0.0
    %362 = vmatmul.mubr.f32.gmra.mrb[0].mxu0 %v194
    %v363 = vpop.f32.mrb[0].mxu0
    %v364 = vadd.f32 %v268, %v363
    %v365 = vpop.f32.mrb[0].mxu0
    %v366 = vadd.f32 %v272, %v365
    %367 = vmatprep.mubr.f32.mxu0 0.0
    %368 = vmatmul.mubr.f32.gmra.mrb[0].mxu0 %v195
    %v369 = vpop.f32.mrb[0].mxu0
    %v370 = vadd.f32 %v268, %v369
    %v371 = vpop.f32.mrb[0].mxu0
    %v372 = vadd.f32 %v272, %v371
    %373 = vmatprep.mubr.f32.mxu0 0.0
    %374 = vmatmul.mubr.f32.gmra.mrb[0].mxu0 %v196
    %v375 = vpop.f32.mrb[0].mxu0
    %v376 = vadd.f32 %v268, %v375
    %v377 = vpop.f32.mrb[0].mxu0
    %v378 = vadd.f32 %v272, %v377
    %379 = vmatprep.mubr.f32.mxu0 0.0
    %380 = vmatmul.mubr.f32.gmra.mrb[0].mxu0 %v197
    %v381 = vpop.f32.mrb[0].mxu0
    %v382 = vadd.f32 %v268, %v381
    %v383 = vpop.f32.mrb[0].mxu0
    %v384 = vadd.f32 %v272, %v383
    %385 = vmatprep.mubr.f32.mxu0 0.0
    %386 = vmatmul.mubr.f32.gmra.mrb[0].mxu0 %v198
    %v387 = vpop.f32.mrb[0].mxu0
    %v388 = vadd.f32 %v268, %v387
    %v389 = vpop.f32.mrb[0].mxu0
    %v390 = vadd.f32 %v272, %v389
    %391 = vmatprep.mubr.f32.mxu0 0.0
    %392 = vmatmul.mubr.f32.gmra.mrb[0].mxu0 %v199
    %v393 = vpop.f32.mrb[0].mxu0
    %v394 = vadd.f32 %v268, %v393
    %v395 = vpop.f32.mrb[0].mxu0
    %v396 = vadd.f32 %v272, %v395
    %397 = vdwg.mxu0
    %398 = vmatprep.subr.mxu0 %v203
    %399 = vmatpush1.msra.mxu0 %v202
    %400 = vmatprep.subr.mxu0 %v207
    %401 = vmatpush1.msra.mxu0 %v206
    %402 = vmatprep.subr.mxu0 %v211
    %403 = vmatpush1.msra.mxu0 %v210
    %404 = vmatprep.subr.mxu0 %v215
    %405 = vmatpush1.msra.mxu0 %v214
    %406 = vmatprep.subr.mxu0 %v219
    %407 = vmatpush1.msra.mxu0 %v218
    %408 = vmatprep.subr.mxu0 %v223
    %409 = vmatpush1.msra.mxu0 %v222
    %410 = vmatprep.subr.mxu0 %v227
    %411 = vmatpush1.msra.mxu0 %v226
    %412 = vmatprep.subr.mxu0 %v231
    %413 = vmatpush1.msra.mxu0 %v230
    %414 = vmatprep.subr.mxu0 %v235
    %415 = vmatpush1.msra.mxu0 %v234
    %416 = vmatprep.subr.mxu0 %v239
    %417 = vmatpush1.msra.mxu0 %v238
    %418 = vmatprep.subr.mxu0 %v243
    %419 = vmatpush1.msra.mxu0 %v242
    %420 = vmatprep.subr.mxu0 %v247
    %421 = vmatpush1.msra.mxu0 %v246
    %422 = vmatprep.subr.mxu0 %v251
    %423 = vmatpush1.msra.mxu0 %v250
    %424 = vmatprep.subr.mxu0 %v255
    %425 = vmatpush1.msra.mxu0 %v254
    %426 = vmatprep.subr.mxu0 %v259
    %427 = vmatpush1.msra.mxu0 %v258
    %428 = vmatprep.subr.mxu0 %v263
    %429 = vmatpush1.msra.mxu0 %v262
    %430 = vmatprep.subr.mxu0 0.0
    %431 = vmatpush1.msra.mxu0 0.0
    %432 = vmatprep.subr.mxu0 0.0
    %433 = vmatpush1.msra.mxu0 0.0
    %434 = vmatprep.subr.mxu0 0.0
    %435 = vmatpush1.msra.mxu0 0.0
    %436 = vmatprep.subr.mxu0 0.0
    %437 = vmatpush1.msra.mxu0 0.0
    %438 = vmatprep.subr.mxu0 0.0
    %439 = vmatpush1.msra.mxu0 0.0
    %440 = vmatprep.subr.mxu0 0.0
    %441 = vmatpush1.msra.mxu0 0.0
    %442 = vmatprep.subr.mxu0 0.0
    %443 = vmatpush1.msra.mxu0 0.0
    %444 = vmatprep.subr.mxu0 0.0
    %445 = vmatpush1.msra.mxu0 0.0
    %446 = vmatprep.subr.mxu0 0.0
    %447 = vmatpush1.msra.mxu0 0.0
    %448 = vmatprep.subr.mxu0 0.0
    %449 = vmatpush1.msra.mxu0 0.0
    %450 = vmatprep.subr.mxu0 0.0
    %451 = vmatpush1.msra.mxu0 0.0
    %452 = vmatprep.subr.mxu0 0.0
    %453 = vmatpush1.msra.mxu0 0.0
    %454 = vmatprep.subr.mxu0 0.0
    %455 = vmatpush1.msra.mxu0 0.0
    %456 = vmatprep.subr.mxu0 0.0
    %457 = vmatpush1.msra.mxu0 0.0
    %458 = vmatprep.subr.mxu0 0.0
    %459 = vmatpush1.msra.mxu0 0.0
    %460 = vmatprep.subr.mxu0 0.0
    %461 = vmatpush1.msra.mxu0 0.0
    %462 = vmatprep.mubr.f32.mxu0 0.0
    %463 = vmatmul.mubr.f32.gmra.mrb[0].mxu0 %v192
    %v464 = vpop.f32.mrb[0].mxu0
    %v465 = vadd.f32 %v276, %v464
    %v466 = vpop.f32.mrb[0].mxu0
    %v467 = vadd.f32 %v280, %v466
    %468 = vmatprep.mubr.f32.mxu0 0.0
    %469 = vmatmul.mubr.f32.gmra.mrb[0].mxu0 %v193
    %v470 = vpop.f32.mrb[0].mxu0
    %v471 = vadd.f32 %v276, %v470
    %v472 = vpop.f32.mrb[0].mxu0
    %v473 = vadd.f32 %v280, %v472
    %474 = vmatprep.mubr.f32.mxu0 0.0
    %475 = vmatmul.mubr.f32.gmra.mrb[0].mxu0 %v194
    %v476 = vpop.f32.mrb[0].mxu0
    %v477 = vadd.f32 %v276, %v476
    %v478 = vpop.f32.mrb[0].mxu0
    %v479 = vadd.f32 %v280, %v478
    %480 = vmatprep.mubr.f32.mxu0 0.0
    %481 = vmatmul.mubr.f32.gmra.mrb[0].mxu0 %v195
    %v482 = vpop.f32.mrb[0].mxu0
    %v483 = vadd.f32 %v276, %v482
    %v484 = vpop.f32.mrb[0].mxu0
    %v485 = vadd.f32 %v280, %v484
    %486 = vmatprep.mubr.f32.mxu0 0.0
    %487 = vmatmul.mubr.f32.gmra.mrb[0].mxu0 %v196
    %v488 = vpop.f32.mrb[0].mxu0
    %v489 = vadd.f32 %v276, %v488
    %v490 = vpop.f32.mrb[0].mxu0
    %v491 = vadd.f32 %v280, %v490
    %492 = vmatprep.mubr.f32.mxu0 0.0
    %493 = vmatmul.mubr.f32.gmra.mrb[0].mxu0 %v197
    %v494 = vpop.f32.mrb[0].mxu0
    %v495 = vadd.f32 %v276, %v494
    %v496 = vpop.f32.mrb[0].mxu0
    %v497 = vadd.f32 %v280, %v496
    %498 = vmatprep.mubr.f32.mxu0 0.0
    %499 = vmatmul.mubr.f32.gmra.mrb[0].mxu0 %v198
    %v500 = vpop.f32.mrb[0].mxu0
    %v501 = vadd.f32 %v276, %v500
    %v502 = vpop.f32.mrb[0].mxu0
    %v503 = vadd.f32 %v280, %v502
    %504 = vmatprep.mubr.f32.mxu0 0.0
    %505 = vmatmul.mubr.f32.gmra.mrb[0].mxu0 %v199
    %v506 = vpop.f32.mrb[0].mxu0
    %v507 = vadd.f32 %v276, %v506
    %v508 = vpop.f32.mrb[0].mxu0
    %v509 = vadd.f32 %v280, %v508
    %510 = vdwg.mxu0
    %511 = vst [vmem:[#allocation5] sm:$0xff] %v352
    %512 = vst [vmem:[#allocation5 + $0x8] sm:$0xff] %v354
    %513 = vst [vmem:[#allocation5 + $0x10] sm:$0xff] %v465
    %514 = vst [vmem:[#allocation5 + $0x18] sm:$0xff] %v467
    %515 = vst [vmem:[#allocation5 + $0x20] sm:$0xff] %v358
    %516 = vst [vmem:[#allocation5 + $0x28] sm:$0xff] %v360
    %517 = vst [vmem:[#allocation5 + $0x30] sm:$0xff] %v471
    %518 = vst [vmem:[#allocation5 + $0x38] sm:$0xff] %v473
    %519 = vst [vmem:[#allocation5 + $0x40] sm:$0xff] %v364
    %520 = vst [vmem:[#allocation5 + $0x48] sm:$0xff] %v366
    %521 = vst [vmem:[#allocation5 + $0x50] sm:$0xff] %v477
    %522 = vst [vmem:[#allocation5 + $0x58] sm:$0xff] %v479
    %523 = vst [vmem:[#allocation5 + $0x60] sm:$0xff] %v370
    %524 = vst [vmem:[#allocation5 + $0x68] sm:$0xff] %v372
    %525 = vst [vmem:[#allocation5 + $0x70] sm:$0xff] %v483
    %526 = vst [vmem:[#allocation5 + $0x78] sm:$0xff] %v485
    %527 = vst [vmem:[#allocation5 + $0x80] sm:$0xff] %v376
    %528 = vst [vmem:[#allocation5 + $0x88] sm:$0xff] %v378
    %529 = vst [vmem:[#allocation5 + $0x90] sm:$0xff] %v489
    %530 = vst [vmem:[#allocation5 + $0x98] sm:$0xff] %v491
    %531 = vst [vmem:[#allocation5 + $0xa0] sm:$0xff] %v382
    %532 = vst [vmem:[#allocation5 + $0xa8] sm:$0xff] %v384
    %533 = vst [vmem:[#allocation5 + $0xb0] sm:$0xff] %v495
    %534 = vst [vmem:[#allocation5 + $0xb8] sm:$0xff] %v497
    %535 = vst [vmem:[#allocation5 + $0xc0] sm:$0xff] %v388
    %536 = vst [vmem:[#allocation5 + $0xc8] sm:$0xff] %v390
    %537 = vst [vmem:[#allocation5 + $0xd0] sm:$0xff] %v501
    %538 = vst [vmem:[#allocation5 + $0xd8] sm:$0xff] %v503
    %539 = vst [vmem:[#allocation5 + $0xe0] sm:$0xff] %v394
    %540 = vst [vmem:[#allocation5 + $0xe8] sm:$0xff] %v396
    %541 = vst [vmem:[#allocation5 + $0xf0] sm:$0xff] %v507
    %542 = vst [vmem:[#allocation5 + $0xf8] sm:$0xff] %v509
    %v543 = vld [vmem:[#allocation2] sm:$0xff]
    %v544 = vld [vmem:[#allocation3] sm:$0xff]
    %v545 = vld [vmem:[#allocation5] sm:$0xff]
    %v546 = vld [vmem:[#allocation5 + $0x8] sm:$0xff]
    %v547 = vld [vmem:[#allocation5 + $0x10] sm:$0xff]
    %v548 = vld [vmem:[#allocation5 + $0x18] sm:$0xff]
    %549 = vmatprep.subr.mxu0 %v128
    %550 = vmatpush1.msra.mxu0 %v127
    %551 = vmatprep.subr.mxu0 %v132
    %552 = vmatpush1.msra.mxu0 %v131
    %553 = vmatprep.subr.mxu0 %v136
    %554 = vmatpush1.msra.mxu0 %v135
    %555 = vmatprep.subr.mxu0 %v140
    %556 = vmatpush1.msra.mxu0 %v139
    %557 = vmatprep.subr.mxu0 %v144
    %558 = vmatpush1.msra.mxu0 %v143
    %559 = vmatprep.subr.mxu0 %v148
    %560 = vmatpush1.msra.mxu0 %v147
    %561 = vmatprep.subr.mxu0 %v152
    %562 = vmatpush1.msra.mxu0 %v151
    %563 = vmatprep.subr.mxu0 %v156
    %564 = vmatpush1.msra.mxu0 %v155
    %565 = vmatprep.subr.mxu0 %v160
    %566 = vmatpush1.msra.mxu0 %v159
    %567 = vmatprep.subr.mxu0 %v164
    %568 = vmatpush1.msra.mxu0 %v163
    %569 = vmatprep.subr.mxu0 %v168
    %570 = vmatpush1.msra.mxu0 %v167
    %571 = vmatprep.subr.mxu0 %v172
    %572 = vmatpush1.msra.mxu0 %v171
    %573 = vmatprep.subr.mxu0 %v176
    %574 = vmatpush1.msra.mxu0 %v175
    %575 = vmatprep.subr.mxu0 %v180
    %576 = vmatpush1.msra.mxu0 %v179
    %577 = vmatprep.subr.mxu0 %v184
    %578 = vmatpush1.msra.mxu0 %v183
    %579 = vmatprep.subr.mxu0 %v188
    %580 = vmatpush1.msra.mxu0 %v187
    %581 = vmatprep.subr.mxu0 0.0
    %582 = vmatpush1.msra.mxu0 0.0
    %583 = vmatprep.subr.mxu0 0.0
    %584 = vmatpush1.msra.mxu0 0.0
    %585 = vmatprep.subr.mxu0 0.0
    %586 = vmatpush1.msra.mxu0 0.0
    %587 = vmatprep.subr.mxu0 0.0
    %588 = vmatpush1.msra.mxu0 0.0
    %589 = vmatprep.subr.mxu0 0.0
    %590 = vmatpush1.msra.mxu0 0.0
    %591 = vmatprep.subr.mxu0 0.0
    %592 = vmatpush1.msra.mxu0 0.0
    %593 = vmatprep.subr.mxu0 0.0
    %594 = vmatpush1.msra.mxu0 0.0
    %595 = vmatprep.subr.mxu0 0.0
    %596 = vmatpush1.msra.mxu0 0.0
    %597 = vmatprep.subr.mxu0 0.0
    %598 = vmatpush1.msra.mxu0 0.0
    %599 = vmatprep.subr.mxu0 0.0
    %600 = vmatpush1.msra.mxu0 0.0
    %601 = vmatprep.subr.mxu0 0.0
    %602 = vmatpush1.msra.mxu0 0.0
    %603 = vmatprep.subr.mxu0 0.0
    %604 = vmatpush1.msra.mxu0 0.0
    %605 = vmatprep.subr.mxu0 0.0
    %606 = vmatpush1.msra.mxu0 0.0
    %607 = vmatprep.subr.mxu0 0.0
    %608 = vmatpush1.msra.mxu0 0.0
    %609 = vmatprep.subr.mxu0 0.0
    %610 = vmatpush1.msra.mxu0 0.0
    %611 = vmatprep.subr.mxu0 0.0
    %612 = vmatpush1.msra.mxu0 0.0
    %613 = vmatprep.mubr.f32.mxu0 0.0
    %614 = vmatmul.mubr.f32.gmra.mrb[0].mxu0 %v543
    %v615 = vpop.f32.mrb[0].mxu0
    %v616 = vadd.f32 0.0, %v615
    %v617 = vpop.f32.mrb[0].mxu0
    %v618 = vadd.f32 0.0, %v617
    %619 = vdwg.mxu0
    %620 = vmatprep.subr.mxu0 %v130
    %621 = vmatpush1.msra.mxu0 %v129
    %622 = vmatprep.subr.mxu0 %v134
    %623 = vmatpush1.msra.mxu0 %v133
    %624 = vmatprep.subr.mxu0 %v138
    %625 = vmatpush1.msra.mxu0 %v137
    %626 = vmatprep.subr.mxu0 %v142
    %627 = vmatpush1.msra.mxu0 %v141
    %628 = vmatprep.subr.mxu0 %v146
    %629 = vmatpush1.msra.mxu0 %v145
    %630 = vmatprep.subr.mxu0 %v150
    %631 = vmatpush1.msra.mxu0 %v149
    %632 = vmatprep.subr.mxu0 %v154
    %633 = vmatpush1.msra.mxu0 %v153
    %634 = vmatprep.subr.mxu0 %v158
    %635 = vmatpush1.msra.mxu0 %v157
    %636 = vmatprep.subr.mxu0 %v162
    %637 = vmatpush1.msra.mxu0 %v161
    %638 = vmatprep.subr.mxu0 %v166
    %639 = vmatpush1.msra.mxu0 %v165
    %640 = vmatprep.subr.mxu0 %v170
    %641 = vmatpush1.msra.mxu0 %v169
    %642 = vmatprep.subr.mxu0 %v174
    %643 = vmatpush1.msra.mxu0 %v173
    %644 = vmatprep.subr.mxu0 %v178
    %645 = vmatpush1.msra.mxu0 %v177
    %646 = vmatprep.subr.mxu0 %v182
    %647 = vmatpush1.msra.mxu0 %v181
    %648 = vmatprep.subr.mxu0 %v186
    %649 = vmatpush1.msra.mxu0 %v185
    %650 = vmatprep.subr.mxu0 %v190
    %651 = vmatpush1.msra.mxu0 %v189
    %652 = vmatprep.subr.mxu0 0.0
    %653 = vmatpush1.msra.mxu0 0.0
    %654 = vmatprep.subr.mxu0 0.0
    %655 = vmatpush1.msra.mxu0 0.0
    %656 = vmatprep.subr.mxu0 0.0
    %657 = vmatpush1.msra.mxu0 0.0
    %658 = vmatprep.subr.mxu0 0.0
    %659 = vmatpush1.msra.mxu0 0.0
    %660 = vmatprep.subr.mxu0 0.0
    %661 = vmatpush1.msra.mxu0 0.0
    %662 = vmatprep.subr.mxu0 0.0
    %663 = vmatpush1.msra.mxu0 0.0
    %664 = vmatprep.subr.mxu0 0.0
    %665 = vmatpush1.msra.mxu0 0.0
    %666 = vmatprep.subr.mxu0 0.0
    %667 = vmatpush1.msra.mxu0 0.0
    %668 = vmatprep.subr.mxu0 0.0
    %669 = vmatpush1.msra.mxu0 0.0
    %670 = vmatprep.subr.mxu0 0.0
    %671 = vmatpush1.msra.mxu0 0.0
    %672 = vmatprep.subr.mxu0 0.0
    %673 = vmatpush1.msra.mxu0 0.0
    %674 = vmatprep.subr.mxu0 0.0
    %675 = vmatpush1.msra.mxu0 0.0
    %676 = vmatprep.subr.mxu0 0.0
    %677 = vmatpush1.msra.mxu0 0.0
    %678 = vmatprep.subr.mxu0 0.0
    %679 = vmatpush1.msra.mxu0 0.0
    %680 = vmatprep.subr.mxu0 0.0
    %681 = vmatpush1.msra.mxu0 0.0
    %682 = vmatprep.subr.mxu0 0.0
    %683 = vmatpush1.msra.mxu0 0.0
    %684 = vmatprep.mubr.f32.mxu0 0.0
    %685 = vmatmul.mubr.f32.gmra.mrb[0].mxu0 %v543
    %v686 = vpop.f32.mrb[0].mxu0
    %v687 = vadd.f32 0.0, %v686
    %v688 = vpop.f32.mrb[0].mxu0
    %v689 = vadd.f32 0.0, %v688
    %690 = vdwg.mxu0
    %v691 = vadd.f32 %v545, %v616
    %v692 = vadd.f32 %v546, %v618
    %v693 = vadd.f32 %v547, %v687
    %v694 = vadd.f32 %v548, %v689
    %v695 = vxor.u32 %v691, 2147483648
    %v696 = vxor.u32 %v692, 2147483648
    %v697 = vxor.u32 %v693, 2147483648
    %v698 = vmul.f32 %v695, 1.442695
    %v699 = vpow.pop %v698
    %v700 = vmul.f32 %v696, 1.442695
    %v701 = vpow.pop %v700
    %v702 = vmul.f32 %v697, 1.442695
    %v703 = vpow.pop %v702
    %v704 = vadd.f32 %v699, 1.0
    %v705 = vadd.f32 %v701, 1.0
    %v706 = vadd.f32 %v703, 1.0
    %v707 = vrcp.pop %v704
    %v708 = vmul.f32 1.0, %v707
    %v709 = vrcp.pop %v705
    %v710 = vmul.f32 1.0, %v709
    %v711 = vrcp.pop %v706
    %v712 = vmul.f32 1.0, %v711
    %v713 = vtanh.pop %v694
    %v714 = vmul.f32 %v710, %v544
    %v715 = vmul.f32 %v708, %v713
    %v716 = vadd.f32 %v714, %v715
    %v717 = vtanh.pop %v716
    %v718 = vmul.f32 %v712, %v717
    %719 = vst [vmem:[#allocation4] sm:$0xff] %v718
    %s720 = scalar_lea.vmem [#allocation5], 32
    %v721 = vld [vmem:[%s720] sm:$0xff]
    %v722 = vld [vmem:[%s720 + $0x8] sm:$0xff]
    %v723 = vld [vmem:[%s720 + $0x10] sm:$0xff]
    %v724 = vld [vmem:[%s720 + $0x18] sm:$0xff]
    %725 = vmatprep.subr.mxu0 %v128
    %726 = vmatpush1.msra.mxu0 %v127
    %727 = vmatprep.subr.mxu0 %v132
    %728 = vmatpush1.msra.mxu0 %v131
    %729 = vmatprep.subr.mxu0 %v136
    %730 = vmatpush1.msra.mxu0 %v135
    %731 = vmatprep.subr.mxu0 %v140
    %732 = vmatpush1.msra.mxu0 %v139
    %733 = vmatprep.subr.mxu0 %v144
    %734 = vmatpush1.msra.mxu0 %v143
    %735 = vmatprep.subr.mxu0 %v148
    %736 = vmatpush1.msra.mxu0 %v147
    %737 = vmatprep.subr.mxu0 %v152
    %738 = vmatpush1.msra.mxu0 %v151
    %739 = vmatprep.subr.mxu0 %v156
    %740 = vmatpush1.msra.mxu0 %v155
    %741 = vmatprep.subr.mxu0 %v160
    %742 = vmatpush1.msra.mxu0 %v159
    %743 = vmatprep.subr.mxu0 %v164
    %744 = vmatpush1.msra.mxu0 %v163
    %745 = vmatprep.subr.mxu0 %v168
    %746 = vmatpush1.msra.mxu0 %v167
    %747 = vmatprep.subr.mxu0 %v172
    %748 = vmatpush1.msra.mxu0 %v171
    %749 = vmatprep.subr.mxu0 %v176
    %750 = vmatpush1.msra.mxu0 %v175
    %751 = vmatprep.subr.mxu0 %v180
    %752 = vmatpush1.msra.mxu0 %v179
    %753 = vmatprep.subr.mxu0 %v184
    %754 = vmatpush1.msra.mxu0 %v183
    %755 = vmatprep.subr.mxu0 %v188
    %756 = vmatpush1.msra.mxu0 %v187
    %757 = vmatprep.subr.mxu0 0.0
    %758 = vmatpush1.msra.mxu0 0.0
    %759 = vmatprep.subr.mxu0 0.0
    %760 = vmatpush1.msra.mxu0 0.0
    %761 = vmatprep.subr.mxu0 0.0
    %762 = vmatpush1.msra.mxu0 0.0
    %763 = vmatprep.subr.mxu0 0.0
    %764 = vmatpush1.msra.mxu0 0.0
    %765 = vmatprep.subr.mxu0 0.0
    %766 = vmatpush1.msra.mxu0 0.0
    %767 = vmatprep.subr.mxu0 0.0
    %768 = vmatpush1.msra.mxu0 0.0
    %769 = vmatprep.subr.mxu0 0.0
    %770 = vmatpush1.msra.mxu0 0.0
    %771 = vmatprep.subr.mxu0 0.0
    %772 = vmatpush1.msra.mxu0 0.0
    %773 = vmatprep.subr.mxu0 0.0
    %774 = vmatpush1.msra.mxu0 0.0
    %775 = vmatprep.subr.mxu0 0.0
    %776 = vmatpush1.msra.mxu0 0.0
    %777 = vmatprep.subr.mxu0 0.0
    %778 = vmatpush1.msra.mxu0 0.0
    %779 = vmatprep.subr.mxu0 0.0
    %780 = vmatpush1.msra.mxu0 0.0
    %781 = vmatprep.subr.mxu0 0.0
    %782 = vmatpush1.msra.mxu0 0.0
    %783 = vmatprep.subr.mxu0 0.0
    %784 = vmatpush1.msra.mxu0 0.0
    %785 = vmatprep.subr.mxu0 0.0
    %786 = vmatpush1.msra.mxu0 0.0
    %787 = vmatprep.subr.mxu0 0.0
    %788 = vmatpush1.msra.mxu0 0.0
    %789 = vmatprep.mubr.f32.mxu0 0.0
    %790 = vmatmul.mubr.f32.gmra.mrb[0].mxu0 %v718
    %v791 = vpop.f32.mrb[0].mxu0
    %v792 = vadd.f32 0.0, %v791
    %v793 = vpop.f32.mrb[0].mxu0
    %v794 = vadd.f32 0.0, %v793
    %795 = vdwg.mxu0
    %796 = vmatprep.subr.mxu0 %v130
    %797 = vmatpush1.msra.mxu0 %v129
    %798 = vmatprep.subr.mxu0 %v134
    %799 = vmatpush1.msra.mxu0 %v133
    %800 = vmatprep.subr.mxu0 %v138
    %801 = vmatpush1.msra.mxu0 %v137
    %802 = vmatprep.subr.mxu0 %v142
    %803 = vmatpush1.msra.mxu0 %v141
    %804 = vmatprep.subr.mxu0 %v146
    %805 = vmatpush1.msra.mxu0 %v145
    %806 = vmatprep.subr.mxu0 %v150
    %807 = vmatpush1.msra.mxu0 %v149
    %808 = vmatprep.subr.mxu0 %v154
    %809 = vmatpush1.msra.mxu0 %v153
    %810 = vmatprep.subr.mxu0 %v158
    %811 = vmatpush1.msra.mxu0 %v157
    %812 = vmatprep.subr.mxu0 %v162
    %813 = vmatpush1.msra.mxu0 %v161
    %814 = vmatprep.subr.mxu0 %v166
    %815 = vmatpush1.msra.mxu0 %v165
    %816 = vmatprep.subr.mxu0 %v170
    %817 = vmatpush1.msra.mxu0 %v169
    %818 = vmatprep.subr.mxu0 %v174
    %819 = vmatpush1.msra.mxu0 %v173
    %820 = vmatprep.subr.mxu0 %v178
    %821 = vmatpush1.msra.mxu0 %v177
    %822 = vmatprep.subr.mxu0 %v182
    %823 = vmatpush1.msra.mxu0 %v181
    %824 = vmatprep.subr.mxu0 %v186
    %825 = vmatpush1.msra.mxu0 %v185
    %826 = vmatprep.subr.mxu0 %v190
    %827 = vmatpush1.msra.mxu0 %v189
    %828 = vmatprep.subr.mxu0 0.0
    %829 = vmatpush1.msra.mxu0 0.0
    %830 = vmatprep.subr.mxu0 0.0
    %831 = vmatpush1.msra.mxu0 0.0
    %832 = vmatprep.subr.mxu0 0.0
    %833 = vmatpush1.msra.mxu0 0.0
    %834 = vmatprep.subr.mxu0 0.0
    %835 = vmatpush1.msra.mxu0 0.0
    %836 = vmatprep.subr.mxu0 0.0
    %837 = vmatpush1.msra.mxu0 0.0
    %838 = vmatprep.subr.mxu0 0.0
    %839 = vmatpush1.msra.mxu0 0.0
    %840 = vmatprep.subr.mxu0 0.0
    %841 = vmatpush1.msra.mxu0 0.0
    %842 = vmatprep.subr.mxu0 0.0
    %843 = vmatpush1.msra.mxu0 0.0
    %844 = vmatprep.subr.mxu0 0.0
    %845 = vmatpush1.msra.mxu0 0.0
    %846 = vmatprep.subr.mxu0 0.0
    %847 = vmatpush1.msra.mxu0 0.0
    %848 = vmatprep.subr.mxu0 0.0
    %849 = vmatpush1.msra.mxu0 0.0
    %850 = vmatprep.subr.mxu0 0.0
    %851 = vmatpush1.msra.mxu0 0.0
    %852 = vmatprep.subr.mxu0 0.0
    %853 = vmatpush1.msra.mxu0 0.0
    %854 = vmatprep.subr.mxu0 0.0
    %855 = vmatpush1.msra.mxu0 0.0
    %856 = vmatprep.subr.mxu0 0.0
    %857 = vmatpush1.msra.mxu0 0.0
    %858 = vmatprep.subr.mxu0 0.0
    %859 = vmatpush1.msra.mxu0 0.0
    %860 = vmatprep.mubr.f32.mxu0 0.0
    %861 = vmatmul.mubr.f32.gmra.mrb[0].mxu0 %v718
    %v862 = vpop.f32.mrb[0].mxu0
    %v863 = vadd.f32 0.0, %v862
    %v864 = vpop.f32.mrb[0].mxu0
    %v865 = vadd.f32 0.0, %v864
    %866 = vdwg.mxu0
    %v867 = vadd.f32 %v721, %v792
    %v868 = vadd.f32 %v722, %v794
    %v869 = vadd.f32 %v723, %v863
    %v870 = vadd.f32 %v724, %v865
    %v871 = vxor.u32 %v867, 2147483648
    %v872 = vxor.u32 %v868, 2147483648
    %v873 = vxor.u32 %v869, 2147483648
    %v874 = vmul.f32 %v871, 1.442695
    %v875 = vpow.pop %v874
    %v876 = vmul.f32 %v872, 1.442695
    %v877 = vpow.pop %v876
    %v878 = vmul.f32 %v873, 1.442695
    %v879 = vpow.pop %v878
    %v880 = vadd.f32 %v875, 1.0
    %v881 = vadd.f32 %v877, 1.0
    %v882 = vadd.f32 %v879, 1.0
    %v883 = vrcp.pop %v880
    %v884 = vmul.f32 1.0, %v883
    %v885 = vrcp.pop %v881
    %v886 = vmul.f32 1.0, %v885
    %v887 = vrcp.pop %v882
    %v888 = vmul.f32 1.0, %v887
    %v889 = vtanh.pop %v870
    %v890 = vmul.f32 %v886, %v716
    %v891 = vmul.f32 %v884, %v889
    %v892 = vadd.f32 %v890, %v891
    %v893 = vtanh.pop %v892
    %v894 = vmul.f32 %v888, %v893
    %s895 = scalar_lea.vmem [#allocation4], 8
    %896 = vst [vmem:[%s895] sm:$0xff] %v894
    %s897 = scalar_lea.vmem [#allocation5], 64
    %v898 = vld [vmem:[%s897] sm:$0xff]
    %v899 = vld [vmem:[%s897 + $0x8] sm:$0xff]
    %v900 = vld [vmem:[%s897 + $0x10] sm:$0xff]
    %v901 = vld [vmem:[%s897 + $0x18] sm:$0xff]
    %902 = vmatprep.subr.mxu0 %v128
    %903 = vmatpush1.msra.mxu0 %v127
    %904 = vmatprep.subr.mxu0 %v132
    %905 = vmatpush1.msra.mxu0 %v131
    %906 = vmatprep.subr.mxu0 %v136
    %907 = vmatpush1.msra.mxu0 %v135
    %908 = vmatprep.subr.mxu0 %v140
    %909 = vmatpush1.msra.mxu0 %v139
    %910 = vmatprep.subr.mxu0 %v144
    %911 = vmatpush1.msra.mxu0 %v143
    %912 = vmatprep.subr.mxu0 %v148
    %913 = vmatpush1.msra.mxu0 %v147
    %914 = vmatprep.subr.mxu0 %v152
    %915 = vmatpush1.msra.mxu0 %v151
    %916 = vmatprep.subr.mxu0 %v156
    %917 = vmatpush1.msra.mxu0 %v155
    %918 = vmatprep.subr.mxu0 %v160
    %919 = vmatpush1.msra.mxu0 %v159
    %920 = vmatprep.subr.mxu0 %v164
    %921 = vmatpush1.msra.mxu0 %v163
    %922 = vmatprep.subr.mxu0 %v168
    %923 = vmatpush1.msra.mxu0 %v167
    %924 = vmatprep.subr.mxu0 %v172
    %925 = vmatpush1.msra.mxu0 %v171
    %926 = vmatprep.subr.mxu0 %v176
    %927 = vmatpush1.msra.mxu0 %v175
    %928 = vmatprep.subr.mxu0 %v180
    %929 = vmatpush1.msra.mxu0 %v179
    %930 = vmatprep.subr.mxu0 %v184
    %931 = vmatpush1.msra.mxu0 %v183
    %932 = vmatprep.subr.mxu0 %v188
    %933 = vmatpush1.msra.mxu0 %v187
    %934 = vmatprep.subr.mxu0 0.0
    %935 = vmatpush1.msra.mxu0 0.0
    %936 = vmatprep.subr.mxu0 0.0
    %937 = vmatpush1.msra.mxu0 0.0
    %938 = vmatprep.subr.mxu0 0.0
    %939 = vmatpush1.msra.mxu0 0.0
    %940 = vmatprep.subr.mxu0 0.0
    %941 = vmatpush1.msra.mxu0 0.0
    %942 = vmatprep.subr.mxu0 0.0
    %943 = vmatpush1.msra.mxu0 0.0
    %944 = vmatprep.subr.mxu0 0.0
    %945 = vmatpush1.msra.mxu0 0.0
    %946 = vmatprep.subr.mxu0 0.0
    %947 = vmatpush1.msra.mxu0 0.0
    %948 = vmatprep.subr.mxu0 0.0
    %949 = vmatpush1.msra.mxu0 0.0
    %950 = vmatprep.subr.mxu0 0.0
    %951 = vmatpush1.msra.mxu0 0.0
    %952 = vmatprep.subr.mxu0 0.0
    %953 = vmatpush1.msra.mxu0 0.0
    %954 = vmatprep.subr.mxu0 0.0
    %955 = vmatpush1.msra.mxu0 0.0
    %956 = vmatprep.subr.mxu0 0.0
    %957 = vmatpush1.msra.mxu0 0.0
    %958 = vmatprep.subr.mxu0 0.0
    %959 = vmatpush1.msra.mxu0 0.0
    %960 = vmatprep.subr.mxu0 0.0
    %961 = vmatpush1.msra.mxu0 0.0
    %962 = vmatprep.subr.mxu0 0.0
    %963 = vmatpush1.msra.mxu0 0.0
    %964 = vmatprep.subr.mxu0 0.0
    %965 = vmatpush1.msra.mxu0 0.0
    %966 = vmatprep.mubr.f32.mxu0 0.0
    %967 = vmatmul.mubr.f32.gmra.mrb[0].mxu0 %v894
    %v968 = vpop.f32.mrb[0].mxu0
    %v969 = vadd.f32 0.0, %v968
    %v970 = vpop.f32.mrb[0].mxu0
    %v971 = vadd.f32 0.0, %v970
    %972 = vdwg.mxu0
    %973 = vmatprep.subr.mxu0 %v130
    %974 = vmatpush1.msra.mxu0 %v129
    %975 = vmatprep.subr.mxu0 %v134
    %976 = vmatpush1.msra.mxu0 %v133
    %977 = vmatprep.subr.mxu0 %v138
    %978 = vmatpush1.msra.mxu0 %v137
    %979 = vmatprep.subr.mxu0 %v142
    %980 = vmatpush1.msra.mxu0 %v141
    %981 = vmatprep.subr.mxu0 %v146
    %982 = vmatpush1.msra.mxu0 %v145
    %983 = vmatprep.subr.mxu0 %v150
    %984 = vmatpush1.msra.mxu0 %v149
    %985 = vmatprep.subr.mxu0 %v154
    %986 = vmatpush1.msra.mxu0 %v153
    %987 = vmatprep.subr.mxu0 %v158
    %988 = vmatpush1.msra.mxu0 %v157
    %989 = vmatprep.subr.mxu0 %v162
    %990 = vmatpush1.msra.mxu0 %v161
    %991 = vmatprep.subr.mxu0 %v166
    %992 = vmatpush1.msra.mxu0 %v165
    %993 = vmatprep.subr.mxu0 %v170
    %994 = vmatpush1.msra.mxu0 %v169
    %995 = vmatprep.subr.mxu0 %v174
    %996 = vmatpush1.msra.mxu0 %v173
    %997 = vmatprep.subr.mxu0 %v178
    %998 = vmatpush1.msra.mxu0 %v177
    %999 = vmatprep.subr.mxu0 %v182
    %1000 = vmatpush1.msra.mxu0 %v181
    %1001 = vmatprep.subr.mxu0 %v186
    %1002 = vmatpush1.msra.mxu0 %v185
    %1003 = vmatprep.subr.mxu0 %v190
    %1004 = vmatpush1.msra.mxu0 %v189
    %1005 = vmatprep.subr.mxu0 0.0
    %1006 = vmatpush1.msra.mxu0 0.0
    %1007 = vmatprep.subr.mxu0 0.0
    %1008 = vmatpush1.msra.mxu0 0.0
    %1009 = vmatprep.subr.mxu0 0.0
    %1010 = vmatpush1.msra.mxu0 0.0
    %1011 = vmatprep.subr.mxu0 0.0
    %1012 = vmatpush1.msra.mxu0 0.0
    %1013 = vmatprep.subr.mxu0 0.0
    %1014 = vmatpush1.msra.mxu0 0.0
    %1015 = vmatprep.subr.mxu0 0.0
    %1016 = vmatpush1.msra.mxu0 0.0
    %1017 = vmatprep.subr.mxu0 0.0
    %1018 = vmatpush1.msra.mxu0 0.0
    %1019 = vmatprep.subr.mxu0 0.0
    %1020 = vmatpush1.msra.mxu0 0.0
    %1021 = vmatprep.subr.mxu0 0.0
    %1022 = vmatpush1.msra.mxu0 0.0
    %1023 = vmatprep.subr.mxu0 0.0
    %1024 = vmatpush1.msra.mxu0 0.0
    %1025 = vmatprep.subr.mxu0 0.0
    %1026 = vmatpush1.msra.mxu0 0.0
    %1027 = vmatprep.subr.mxu0 0.0
    %1028 = vmatpush1.msra.mxu0 0.0
    %1029 = vmatprep.subr.mxu0 0.0
    %1030 = vmatpush1.msra.mxu0 0.0
    %1031 = vmatprep.subr.mxu0 0.0
    %1032 = vmatpush1.msra.mxu0 0.0
    %1033 = vmatprep.subr.mxu0 0.0
    %1034 = vmatpush1.msra.mxu0 0.0
    %1035 = vmatprep.subr.mxu0 0.0
    %1036 = vmatpush1.msra.mxu0 0.0
    %1037 = vmatprep.mubr.f32.mxu0 0.0
    %1038 = vmatmul.mubr.f32.gmra.mrb[0].mxu0 %v894
    %v1039 = vpop.f32.mrb[0].mxu0
    %v1040 = vadd.f32 0.0, %v1039
    %v1041 = vpop.f32.mrb[0].mxu0
    %v1042 = vadd.f32 0.0, %v1041
    %1043 = vdwg.mxu0
    %v1044 = vadd.f32 %v898, %v969
    %v1045 = vadd.f32 %v899, %v971
    %v1046 = vadd.f32 %v900, %v1040
    %v1047 = vadd.f32 %v901, %v1042
    %v1048 = vxor.u32 %v1044, 2147483648
    %v1049 = vxor.u32 %v1045, 2147483648
    %v1050 = vxor.u32 %v1046, 2147483648
    %v1051 = vmul.f32 %v1048, 1.442695
    %v1052 = vpow.pop %v1051
    %v1053 = vmul.f32 %v1049, 1.442695
    %v1054 = vpow.pop %v1053
    %v1055 = vmul.f32 %v1050, 1.442695
    %v1056 = vpow.pop %v1055
    %v1057 = vadd.f32 %v1052, 1.0
    %v1058 = vadd.f32 %v1054, 1.0
    %v1059 = vadd.f32 %v1056, 1.0
    %v1060 = vrcp.pop %v1057
    %v1061 = vmul.f32 1.0, %v1060
    %v1062 = vrcp.pop %v1058
    %v1063 = vmul.f32 1.0, %v1062
    %v1064 = vrcp.pop %v1059
    %v1065 = vmul.f32 1.0, %v1064
    %v1066 = vtanh.pop %v1047
    %v1067 = vmul.f32 %v1063, %v892
    %v1068 = vmul.f32 %v1061, %v1066
    %v1069 = vadd.f32 %v1067, %v1068
    %v1070 = vtanh.pop %v1069
    %v1071 = vmul.f32 %v1065, %v1070
    %s1072 = scalar_lea.vmem [#allocation4], 16
    %1073 = vst [vmem:[%s1072] sm:$0xff] %v1071
    %s1074 = scalar_lea.vmem [#allocation5], 96
    %v1075 = vld [vmem:[%s1074] sm:$0xff]
    %v1076 = vld [vmem:[%s1074 + $0x8] sm:$0xff]
    %v1077 = vld [vmem:[%s1074 + $0x10] sm:$0xff]
    %v1078 = vld [vmem:[%s1074 + $0x18] sm:$0xff]
    %1079 = vmatprep.subr.mxu0 %v128
    %1080 = vmatpush1.msra.mxu0 %v127
    %1081 = vmatprep.subr.mxu0 %v132
    %1082 = vmatpush1.msra.mxu0 %v131
    %1083 = vmatprep.subr.mxu0 %v136
    %1084 = vmatpush1.msra.mxu0 %v135
    %1085 = vmatprep.subr.mxu0 %v140
    %1086 = vmatpush1.msra.mxu0 %v139
    %1087 = vmatprep.subr.mxu0 %v144
    %1088 = vmatpush1.msra.mxu0 %v143
    %1089 = vmatprep.subr.mxu0 %v148
    %1090 = vmatpush1.msra.mxu0 %v147
    %1091 = vmatprep.subr.mxu0 %v152
    %1092 = vmatpush1.msra.mxu0 %v151
    %1093 = vmatprep.subr.mxu0 %v156
    %1094 = vmatpush1.msra.mxu0 %v155
    %1095 = vmatprep.subr.mxu0 %v160
    %1096 = vmatpush1.msra.mxu0 %v159
    %1097 = vmatprep.subr.mxu0 %v164
    %1098 = vmatpush1.msra.mxu0 %v163
    %1099 = vmatprep.subr.mxu0 %v168
    %1100 = vmatpush1.msra.mxu0 %v167
    %1101 = vmatprep.subr.mxu0 %v172
    %1102 = vmatpush1.msra.mxu0 %v171
    %1103 = vmatprep.subr.mxu0 %v176
    %1104 = vmatpush1.msra.mxu0 %v175
    %1105 = vmatprep.subr.mxu0 %v180
    %1106 = vmatpush1.msra.mxu0 %v179
    %1107 = vmatprep.subr.mxu0 %v184
    %1108 = vmatpush1.msra.mxu0 %v183
    %1109 = vmatprep.subr.mxu0 %v188
    %1110 = vmatpush1.msra.mxu0 %v187
    %1111 = vmatprep.subr.mxu0 0.0
    %1112 = vmatpush1.msra.mxu0 0.0
    %1113 = vmatprep.subr.mxu0 0.0
    %1114 = vmatpush1.msra.mxu0 0.0
    %1115 = vmatprep.subr.mxu0 0.0
    %1116 = vmatpush1.msra.mxu0 0.0
    %1117 = vmatprep.subr.mxu0 0.0
    %1118 = vmatpush1.msra.mxu0 0.0
    %1119 = vmatprep.subr.mxu0 0.0
    %1120 = vmatpush1.msra.mxu0 0.0
    %1121 = vmatprep.subr.mxu0 0.0
    %1122 = vmatpush1.msra.mxu0 0.0
    %1123 = vmatprep.subr.mxu0 0.0
    %1124 = vmatpush1.msra.mxu0 0.0
    %1125 = vmatprep.subr.mxu0 0.0
    %1126 = vmatpush1.msra.mxu0 0.0
    %1127 = vmatprep.subr.mxu0 0.0
    %1128 = vmatpush1.msra.mxu0 0.0
    %1129 = vmatprep.subr.mxu0 0.0
    %1130 = vmatpush1.msra.mxu0 0.0
    %1131 = vmatprep.subr.mxu0 0.0
    %1132 = vmatpush1.msra.mxu0 0.0
    %1133 = vmatprep.subr.mxu0 0.0
    %1134 = vmatpush1.msra.mxu0 0.0
    %1135 = vmatprep.subr.mxu0 0.0
    %1136 = vmatpush1.msra.mxu0 0.0
    %1137 = vmatprep.subr.mxu0 0.0
    %1138 = vmatpush1.msra.mxu0 0.0
    %1139 = vmatprep.subr.mxu0 0.0
    %1140 = vmatpush1.msra.mxu0 0.0
    %1141 = vmatprep.subr.mxu0 0.0
    %1142 = vmatpush1.msra.mxu0 0.0
    %1143 = vmatprep.mubr.f32.mxu0 0.0
    %1144 = vmatmul.mubr.f32.gmra.mrb[0].mxu0 %v1071
    %v1145 = vpop.f32.mrb[0].mxu0
    %v1146 = vadd.f32 0.0, %v1145
    %v1147 = vpop.f32.mrb[0].mxu0
    %v1148 = vadd.f32 0.0, %v1147
    %1149 = vdwg.mxu0
    %1150 = vmatprep.subr.mxu0 %v130
    %1151 = vmatpush1.msra.mxu0 %v129
    %1152 = vmatprep.subr.mxu0 %v134
    %1153 = vmatpush1.msra.mxu0 %v133
    %1154 = vmatprep.subr.mxu0 %v138
    %1155 = vmatpush1.msra.mxu0 %v137
    %1156 = vmatprep.subr.mxu0 %v142
    %1157 = vmatpush1.msra.mxu0 %v141
    %1158 = vmatprep.subr.mxu0 %v146
    %1159 = vmatpush1.msra.mxu0 %v145
    %1160 = vmatprep.subr.mxu0 %v150
    %1161 = vmatpush1.msra.mxu0 %v149
    %1162 = vmatprep.subr.mxu0 %v154
    %1163 = vmatpush1.msra.mxu0 %v153
    %1164 = vmatprep.subr.mxu0 %v158
    %1165 = vmatpush1.msra.mxu0 %v157
    %1166 = vmatprep.subr.mxu0 %v162
    %1167 = vmatpush1.msra.mxu0 %v161
    %1168 = vmatprep.subr.mxu0 %v166
    %1169 = vmatpush1.msra.mxu0 %v165
    %1170 = vmatprep.subr.mxu0 %v170
    %1171 = vmatpush1.msra.mxu0 %v169
    %1172 = vmatprep.subr.mxu0 %v174
    %1173 = vmatpush1.msra.mxu0 %v173
    %1174 = vmatprep.subr.mxu0 %v178
    %1175 = vmatpush1.msra.mxu0 %v177
    %1176 = vmatprep.subr.mxu0 %v182
    %1177 = vmatpush1.msra.mxu0 %v181
    %1178 = vmatprep.subr.mxu0 %v186
    %1179 = vmatpush1.msra.mxu0 %v185
    %1180 = vmatprep.subr.mxu0 %v190
    %1181 = vmatpush1.msra.mxu0 %v189
    %1182 = vmatprep.subr.mxu0 0.0
    %1183 = vmatpush1.msra.mxu0 0.0
    %1184 = vmatprep.subr.mxu0 0.0
    %1185 = vmatpush1.msra.mxu0 0.0
    %1186 = vmatprep.subr.mxu0 0.0
    %1187 = vmatpush1.msra.mxu0 0.0
    %1188 = vmatprep.subr.mxu0 0.0
    %1189 = vmatpush1.msra.mxu0 0.0
    %1190 = vmatprep.subr.mxu0 0.0
    %1191 = vmatpush1.msra.mxu0 0.0
    %1192 = vmatprep.subr.mxu0 0.0
    %1193 = vmatpush1.msra.mxu0 0.0
    %1194 = vmatprep.subr.mxu0 0.0
    %1195 = vmatpush1.msra.mxu0 0.0
    %1196 = vmatprep.subr.mxu0 0.0
    %1197 = vmatpush1.msra.mxu0 0.0
    %1198 = vmatprep.subr.mxu0 0.0
    %1199 = vmatpush1.msra.mxu0 0.0
    %1200 = vmatprep.subr.mxu0 0.0
    %1201 = vmatpush1.msra.mxu0 0.0
    %1202 = vmatprep.subr.mxu0 0.0
    %1203 = vmatpush1.msra.mxu0 0.0
    %1204 = vmatprep.subr.mxu0 0.0
    %1205 = vmatpush1.msra.mxu0 0.0
    %1206 = vmatprep.subr.mxu0 0.0
    %1207 = vmatpush1.msra.mxu0 0.0
    %1208 = vmatprep.subr.mxu0 0.0
    %1209 = vmatpush1.msra.mxu0 0.0
    %1210 = vmatprep.subr.mxu0 0.0
    %1211 = vmatpush1.msra.mxu0 0.0
    %1212 = vmatprep.subr.mxu0 0.0
    %1213 = vmatpush1.msra.mxu0 0.0
    %1214 = vmatprep.mubr.f32.mxu0 0.0
    %1215 = vmatmul.mubr.f32.gmra.mrb[0].mxu0 %v1071
    %v1216 = vpop.f32.mrb[0].mxu0
    %v1217 = vadd.f32 0.0, %v1216
    %v1218 = vpop.f32.mrb[0].mxu0
    %v1219 = vadd.f32 0.0, %v1218
    %1220 = vdwg.mxu0
    %v1221 = vadd.f32 %v1075, %v1146
    %v1222 = vadd.f32 %v1076, %v1148
    %v1223 = vadd.f32 %v1077, %v1217
    %v1224 = vadd.f32 %v1078, %v1219
    %v1225 = vxor.u32 %v1221, 2147483648
    %v1226 = vxor.u32 %v1222, 2147483648
    %v1227 = vxor.u32 %v1223, 2147483648
    %v1228 = vmul.f32 %v1225, 1.442695
    %v1229 = vpow.pop %v1228
    %v1230 = vmul.f32 %v1226, 1.442695
    %v1231 = vpow.pop %v1230
    %v1232 = vmul.f32 %v1227, 1.442695
    %v1233 = vpow.pop %v1232
    %v1234 = vadd.f32 %v1229, 1.0
    %v1235 = vadd.f32 %v1231, 1.0
    %v1236 = vadd.f32 %v1233, 1.0
    %v1237 = vrcp.pop %v1234
    %v1238 = vmul.f32 1.0, %v1237
    %v1239 = vrcp.pop %v1235
    %v1240 = vmul.f32 1.0, %v1239
    %v1241 = vrcp.pop %v1236
    %v1242 = vmul.f32 1.0, %v1241
    %v1243 = vtanh.pop %v1224
    %v1244 = vmul.f32 %v1240, %v1069
    %v1245 = vmul.f32 %v1238, %v1243
    %v1246 = vadd.f32 %v1244, %v1245
    %v1247 = vtanh.pop %v1246
    %v1248 = vmul.f32 %v1242, %v1247
    %s1249 = scalar_lea.vmem [#allocation4], 24
    %1250 = vst [vmem:[%s1249] sm:$0xff] %v1248
    %s1251 = scalar_lea.vmem [#allocation5], 128
    %v1252 = vld [vmem:[%s1251] sm:$0xff]
    %v1253 = vld [vmem:[%s1251 + $0x8] sm:$0xff]
    %v1254 = vld [vmem:[%s1251 + $0x10] sm:$0xff]
    %v1255 = vld [vmem:[%s1251 + $0x18] sm:$0xff]
    %1256 = vmatprep.subr.mxu0 %v128
    %1257 = vmatpush1.msra.mxu0 %v127
    %1258 = vmatprep.subr.mxu0 %v132
    %1259 = vmatpush1.msra.mxu0 %v131
    %1260 = vmatprep.subr.mxu0 %v136
    %1261 = vmatpush1.msra.mxu0 %v135
    %1262 = vmatprep.subr.mxu0 %v140
    %1263 = vmatpush1.msra.mxu0 %v139
    %1264 = vmatprep.subr.mxu0 %v144
    %1265 = vmatpush1.msra.mxu0 %v143
    %1266 = vmatprep.subr.mxu0 %v148
    %1267 = vmatpush1.msra.mxu0 %v147
    %1268 = vmatprep.subr.mxu0 %v152
    %1269 = vmatpush1.msra.mxu0 %v151
    %1270 = vmatprep.subr.mxu0 %v156
    %1271 = vmatpush1.msra.mxu0 %v155
    %1272 = vmatprep.subr.mxu0 %v160
    %1273 = vmatpush1.msra.mxu0 %v159
    %1274 = vmatprep.subr.mxu0 %v164
    %1275 = vmatpush1.msra.mxu0 %v163
    %1276 = vmatprep.subr.mxu0 %v168
    %1277 = vmatpush1.msra.mxu0 %v167
    %1278 = vmatprep.subr.mxu0 %v172
    %1279 = vmatpush1.msra.mxu0 %v171
    %1280 = vmatprep.subr.mxu0 %v176
    %1281 = vmatpush1.msra.mxu0 %v175
    %1282 = vmatprep.subr.mxu0 %v180
    %1283 = vmatpush1.msra.mxu0 %v179
    %1284 = vmatprep.subr.mxu0 %v184
    %1285 = vmatpush1.msra.mxu0 %v183
    %1286 = vmatprep.subr.mxu0 %v188
    %1287 = vmatpush1.msra.mxu0 %v187
    %1288 = vmatprep.subr.mxu0 0.0
    %1289 = vmatpush1.msra.mxu0 0.0
    %1290 = vmatprep.subr.mxu0 0.0
    %1291 = vmatpush1.msra.mxu0 0.0
    %1292 = vmatprep.subr.mxu0 0.0
    %1293 = vmatpush1.msra.mxu0 0.0
    %1294 = vmatprep.subr.mxu0 0.0
    %1295 = vmatpush1.msra.mxu0 0.0
    %1296 = vmatprep.subr.mxu0 0.0
    %1297 = vmatpush1.msra.mxu0 0.0
    %1298 = vmatprep.subr.mxu0 0.0
    %1299 = vmatpush1.msra.mxu0 0.0
    %1300 = vmatprep.subr.mxu0 0.0
    %1301 = vmatpush1.msra.mxu0 0.0
    %1302 = vmatprep.subr.mxu0 0.0
    %1303 = vmatpush1.msra.mxu0 0.0
    %1304 = vmatprep.subr.mxu0 0.0
    %1305 = vmatpush1.msra.mxu0 0.0
    %1306 = vmatprep.subr.mxu0 0.0
    %1307 = vmatpush1.msra.mxu0 0.0
    %1308 = vmatprep.subr.mxu0 0.0
    %1309 = vmatpush1.msra.mxu0 0.0
    %1310 = vmatprep.subr.mxu0 0.0
    %1311 = vmatpush1.msra.mxu0 0.0
    %1312 = vmatprep.subr.mxu0 0.0
    %1313 = vmatpush1.msra.mxu0 0.0
    %1314 = vmatprep.subr.mxu0 0.0
    %1315 = vmatpush1.msra.mxu0 0.0
    %1316 = vmatprep.subr.mxu0 0.0
    %1317 = vmatpush1.msra.mxu0 0.0
    %1318 = vmatprep.subr.mxu0 0.0
    %1319 = vmatpush1.msra.mxu0 0.0
    %1320 = vmatprep.mubr.f32.mxu0 0.0
    %1321 = vmatmul.mubr.f32.gmra.mrb[0].mxu0 %v1248
    %v1322 = vpop.f32.mrb[0].mxu0
    %v1323 = vadd.f32 0.0, %v1322
    %v1324 = vpop.f32.mrb[0].mxu0
    %v1325 = vadd.f32 0.0, %v1324
    %1326 = vdwg.mxu0
    %1327 = vmatprep.subr.mxu0 %v130
    %1328 = vmatpush1.msra.mxu0 %v129
    %1329 = vmatprep.subr.mxu0 %v134
    %1330 = vmatpush1.msra.mxu0 %v133
    %1331 = vmatprep.subr.mxu0 %v138
    %1332 = vmatpush1.msra.mxu0 %v137
    %1333 = vmatprep.subr.mxu0 %v142
    %1334 = vmatpush1.msra.mxu0 %v141
    %1335 = vmatprep.subr.mxu0 %v146
    %1336 = vmatpush1.msra.mxu0 %v145
    %1337 = vmatprep.subr.mxu0 %v150
    %1338 = vmatpush1.msra.mxu0 %v149
    %1339 = vmatprep.subr.mxu0 %v154
    %1340 = vmatpush1.msra.mxu0 %v153
    %1341 = vmatprep.subr.mxu0 %v158
    %1342 = vmatpush1.msra.mxu0 %v157
    %1343 = vmatprep.subr.mxu0 %v162
    %1344 = vmatpush1.msra.mxu0 %v161
    %1345 = vmatprep.subr.mxu0 %v166
    %1346 = vmatpush1.msra.mxu0 %v165
    %1347 = vmatprep.subr.mxu0 %v170
    %1348 = vmatpush1.msra.mxu0 %v169
    %1349 = vmatprep.subr.mxu0 %v174
    %1350 = vmatpush1.msra.mxu0 %v173
    %1351 = vmatprep.subr.mxu0 %v178
    %1352 = vmatpush1.msra.mxu0 %v177
    %1353 = vmatprep.subr.mxu0 %v182
    %1354 = vmatpush1.msra.mxu0 %v181
    %1355 = vmatprep.subr.mxu0 %v186
    %1356 = vmatpush1.msra.mxu0 %v185
    %1357 = vmatprep.subr.mxu0 %v190
    %1358 = vmatpush1.msra.mxu0 %v189
    %1359 = vmatprep.subr.mxu0 0.0
    %1360 = vmatpush1.msra.mxu0 0.0
    %1361 = vmatprep.subr.mxu0 0.0
    %1362 = vmatpush1.msra.mxu0 0.0
    %1363 = vmatprep.subr.mxu0 0.0
    %1364 = vmatpush1.msra.mxu0 0.0
    %1365 = vmatprep.subr.mxu0 0.0
    %1366 = vmatpush1.msra.mxu0 0.0
    %1367 = vmatprep.subr.mxu0 0.0
    %1368 = vmatpush1.msra.mxu0 0.0
    %1369 = vmatprep.subr.mxu0 0.0
    %1370 = vmatpush1.msra.mxu0 0.0
    %1371 = vmatprep.subr.mxu0 0.0
    %1372 = vmatpush1.msra.mxu0 0.0
    %1373 = vmatprep.subr.mxu0 0.0
    %1374 = vmatpush1.msra.mxu0 0.0
    %1375 = vmatprep.subr.mxu0 0.0
    %1376 = vmatpush1.msra.mxu0 0.0
    %1377 = vmatprep.subr.mxu0 0.0
    %1378 = vmatpush1.msra.mxu0 0.0
    %1379 = vmatprep.subr.mxu0 0.0
    %1380 = vmatpush1.msra.mxu0 0.0
    %1381 = vmatprep.subr.mxu0 0.0
    %1382 = vmatpush1.msra.mxu0 0.0
    %1383 = vmatprep.subr.mxu0 0.0
    %1384 = vmatpush1.msra.mxu0 0.0
    %1385 = vmatprep.subr.mxu0 0.0
    %1386 = vmatpush1.msra.mxu0 0.0
    %1387 = vmatprep.subr.mxu0 0.0
    %1388 = vmatpush1.msra.mxu0 0.0
    %1389 = vmatprep.subr.mxu0 0.0
    %1390 = vmatpush1.msra.mxu0 0.0
    %1391 = vmatprep.mubr.f32.mxu0 0.0
    %1392 = vmatmul.mubr.f32.gmra.mrb[0].mxu0 %v1248
    %v1393 = vpop.f32.mrb[0].mxu0
    %v1394 = vadd.f32 0.0, %v1393
    %v1395 = vpop.f32.mrb[0].mxu0
    %v1396 = vadd.f32 0.0, %v1395
    %1397 = vdwg.mxu0
    %v1398 = vadd.f32 %v1252, %v1323
    %v1399 = vadd.f32 %v1253, %v1325
    %v1400 = vadd.f32 %v1254, %v1394
    %v1401 = vadd.f32 %v1255, %v1396
    %v1402 = vxor.u32 %v1398, 2147483648
    %v1403 = vxor.u32 %v1399, 2147483648
    %v1404 = vxor.u32 %v1400, 2147483648
    %v1405 = vmul.f32 %v1402, 1.442695
    %v1406 = vpow.pop %v1405
    %v1407 = vmul.f32 %v1403, 1.442695
    %v1408 = vpow.pop %v1407
    %v1409 = vmul.f32 %v1404, 1.442695
    %v1410 = vpow.pop %v1409
    %v1411 = vadd.f32 %v1406, 1.0
    %v1412 = vadd.f32 %v1408, 1.0
    %v1413 = vadd.f32 %v1410, 1.0
    %v1414 = vrcp.pop %v1411
    %v1415 = vmul.f32 1.0, %v1414
    %v1416 = vrcp.pop %v1412
    %v1417 = vmul.f32 1.0, %v1416
    %v1418 = vrcp.pop %v1413
    %v1419 = vmul.f32 1.0, %v1418
    %v1420 = vtanh.pop %v1401
    %v1421 = vmul.f32 %v1417, %v1246
    %v1422 = vmul.f32 %v1415, %v1420
    %v1423 = vadd.f32 %v1421, %v1422
    %v1424 = vtanh.pop %v1423
    %v1425 = vmul.f32 %v1419, %v1424
    %s1426 = scalar_lea.vmem [#allocation4], 32
    %1427 = vst [vmem:[%s1426] sm:$0xff] %v1425
    %s1428 = scalar_lea.vmem [#allocation5], 160
    %v1429 = vld [vmem:[%s1428] sm:$0xff]
    %v1430 = vld [vmem:[%s1428 + $0x8] sm:$0xff]
    %v1431 = vld [vmem:[%s1428 + $0x10] sm:$0xff]
    %v1432 = vld [vmem:[%s1428 + $0x18] sm:$0xff]
    %1433 = vmatprep.subr.mxu0 %v128
    %1434 = vmatpush1.msra.mxu0 %v127
    %1435 = vmatprep.subr.mxu0 %v132
    %1436 = vmatpush1.msra.mxu0 %v131
    %1437 = vmatprep.subr.mxu0 %v136
    %1438 = vmatpush1.msra.mxu0 %v135
    %1439 = vmatprep.subr.mxu0 %v140
    %1440 = vmatpush1.msra.mxu0 %v139
    %1441 = vmatprep.subr.mxu0 %v144
    %1442 = vmatpush1.msra.mxu0 %v143
    %1443 = vmatprep.subr.mxu0 %v148
    %1444 = vmatpush1.msra.mxu0 %v147
    %1445 = vmatprep.subr.mxu0 %v152
    %1446 = vmatpush1.msra.mxu0 %v151
    %1447 = vmatprep.subr.mxu0 %v156
    %1448 = vmatpush1.msra.mxu0 %v155
    %1449 = vmatprep.subr.mxu0 %v160
    %1450 = vmatpush1.msra.mxu0 %v159
    %1451 = vmatprep.subr.mxu0 %v164
    %1452 = vmatpush1.msra.mxu0 %v163
    %1453 = vmatprep.subr.mxu0 %v168
    %1454 = vmatpush1.msra.mxu0 %v167
    %1455 = vmatprep.subr.mxu0 %v172
    %1456 = vmatpush1.msra.mxu0 %v171
    %1457 = vmatprep.subr.mxu0 %v176
    %1458 = vmatpush1.msra.mxu0 %v175
    %1459 = vmatprep.subr.mxu0 %v180
    %1460 = vmatpush1.msra.mxu0 %v179
    %1461 = vmatprep.subr.mxu0 %v184
    %1462 = vmatpush1.msra.mxu0 %v183
    %1463 = vmatprep.subr.mxu0 %v188
    %1464 = vmatpush1.msra.mxu0 %v187
    %1465 = vmatprep.subr.mxu0 0.0
    %1466 = vmatpush1.msra.mxu0 0.0
    %1467 = vmatprep.subr.mxu0 0.0
    %1468 = vmatpush1.msra.mxu0 0.0
    %1469 = vmatprep.subr.mxu0 0.0
    %1470 = vmatpush1.msra.mxu0 0.0
    %1471 = vmatprep.subr.mxu0 0.0
    %1472 = vmatpush1.msra.mxu0 0.0
    %1473 = vmatprep.subr.mxu0 0.0
    %1474 = vmatpush1.msra.mxu0 0.0
    %1475 = vmatprep.subr.mxu0 0.0
    %1476 = vmatpush1.msra.mxu0 0.0
    %1477 = vmatprep.subr.mxu0 0.0
    %1478 = vmatpush1.msra.mxu0 0.0
    %1479 = vmatprep.subr.mxu0 0.0
    %1480 = vmatpush1.msra.mxu0 0.0
    %1481 = vmatprep.subr.mxu0 0.0
    %1482 = vmatpush1.msra.mxu0 0.0
    %1483 = vmatprep.subr.mxu0 0.0
    %1484 = vmatpush1.msra.mxu0 0.0
    %1485 = vmatprep.subr.mxu0 0.0
    %1486 = vmatpush1.msra.mxu0 0.0
    %1487 = vmatprep.subr.mxu0 0.0
    %1488 = vmatpush1.msra.mxu0 0.0
    %1489 = vmatprep.subr.mxu0 0.0
    %1490 = vmatpush1.msra.mxu0 0.0
    %1491 = vmatprep.subr.mxu0 0.0
    %1492 = vmatpush1.msra.mxu0 0.0
    %1493 = vmatprep.subr.mxu0 0.0
    %1494 = vmatpush1.msra.mxu0 0.0
    %1495 = vmatprep.subr.mxu0 0.0
    %1496 = vmatpush1.msra.mxu0 0.0
    %1497 = vmatprep.mubr.f32.mxu0 0.0
    %1498 = vmatmul.mubr.f32.gmra.mrb[0].mxu0 %v1425
    %v1499 = vpop.f32.mrb[0].mxu0
    %v1500 = vadd.f32 0.0, %v1499
    %v1501 = vpop.f32.mrb[0].mxu0
    %v1502 = vadd.f32 0.0, %v1501
    %1503 = vdwg.mxu0
    %1504 = vmatprep.subr.mxu0 %v130
    %1505 = vmatpush1.msra.mxu0 %v129
    %1506 = vmatprep.subr.mxu0 %v134
    %1507 = vmatpush1.msra.mxu0 %v133
    %1508 = vmatprep.subr.mxu0 %v138
    %1509 = vmatpush1.msra.mxu0 %v137
    %1510 = vmatprep.subr.mxu0 %v142
    %1511 = vmatpush1.msra.mxu0 %v141
    %1512 = vmatprep.subr.mxu0 %v146
    %1513 = vmatpush1.msra.mxu0 %v145
    %1514 = vmatprep.subr.mxu0 %v150
    %1515 = vmatpush1.msra.mxu0 %v149
    %1516 = vmatprep.subr.mxu0 %v154
    %1517 = vmatpush1.msra.mxu0 %v153
    %1518 = vmatprep.subr.mxu0 %v158
    %1519 = vmatpush1.msra.mxu0 %v157
    %1520 = vmatprep.subr.mxu0 %v162
    %1521 = vmatpush1.msra.mxu0 %v161
    %1522 = vmatprep.subr.mxu0 %v166
    %1523 = vmatpush1.msra.mxu0 %v165
    %1524 = vmatprep.subr.mxu0 %v170
    %1525 = vmatpush1.msra.mxu0 %v169
    %1526 = vmatprep.subr.mxu0 %v174
    %1527 = vmatpush1.msra.mxu0 %v173
    %1528 = vmatprep.subr.mxu0 %v178
    %1529 = vmatpush1.msra.mxu0 %v177
    %1530 = vmatprep.subr.mxu0 %v182
    %1531 = vmatpush1.msra.mxu0 %v181
    %1532 = vmatprep.subr.mxu0 %v186
    %1533 = vmatpush1.msra.mxu0 %v185
    %1534 = vmatprep.subr.mxu0 %v190
    %1535 = vmatpush1.msra.mxu0 %v189
    %1536 = vmatprep.subr.mxu0 0.0
    %1537 = vmatpush1.msra.mxu0 0.0
    %1538 = vmatprep.subr.mxu0 0.0
    %1539 = vmatpush1.msra.mxu0 0.0
    %1540 = vmatprep.subr.mxu0 0.0
    %1541 = vmatpush1.msra.mxu0 0.0
    %1542 = vmatprep.subr.mxu0 0.0
    %1543 = vmatpush1.msra.mxu0 0.0
    %1544 = vmatprep.subr.mxu0 0.0
    %1545 = vmatpush1.msra.mxu0 0.0
    %1546 = vmatprep.subr.mxu0 0.0
    %1547 = vmatpush1.msra.mxu0 0.0
    %1548 = vmatprep.subr.mxu0 0.0
    %1549 = vmatpush1.msra.mxu0 0.0
    %1550 = vmatprep.subr.mxu0 0.0
    %1551 = vmatpush1.msra.mxu0 0.0
    %1552 = vmatprep.subr.mxu0 0.0
    %1553 = vmatpush1.msra.mxu0 0.0
    %1554 = vmatprep.subr.mxu0 0.0
    %1555 = vmatpush1.msra.mxu0 0.0
    %1556 = vmatprep.subr.mxu0 0.0
    %1557 = vmatpush1.msra.mxu0 0.0
    %1558 = vmatprep.subr.mxu0 0.0
    %1559 = vmatpush1.msra.mxu0 0.0
    %1560 = vmatprep.subr.mxu0 0.0
    %1561 = vmatpush1.msra.mxu0 0.0
    %1562 = vmatprep.subr.mxu0 0.0
    %1563 = vmatpush1.msra.mxu0 0.0
    %1564 = vmatprep.subr.mxu0 0.0
    %1565 = vmatpush1.msra.mxu0 0.0
    %1566 = vmatprep.subr.mxu0 0.0
    %1567 = vmatpush1.msra.mxu0 0.0
    %1568 = vmatprep.mubr.f32.mxu0 0.0
    %1569 = vmatmul.mubr.f32.gmra.mrb[0].mxu0 %v1425
    %v1570 = vpop.f32.mrb[0].mxu0
    %v1571 = vadd.f32 0.0, %v1570
    %v1572 = vpop.f32.mrb[0].mxu0
    %v1573 = vadd.f32 0.0, %v1572
    %1574 = vdwg.mxu0
    %v1575 = vadd.f32 %v1429, %v1500
    %v1576 = vadd.f32 %v1430, %v1502
    %v1577 = vadd.f32 %v1431, %v1571
    %v1578 = vadd.f32 %v1432, %v1573
    %v1579 = vxor.u32 %v1575, 2147483648
    %v1580 = vxor.u32 %v1576, 2147483648
    %v1581 = vxor.u32 %v1577, 2147483648
    %v1582 = vmul.f32 %v1579, 1.442695
    %v1583 = vpow.pop %v1582
    %v1584 = vmul.f32 %v1580, 1.442695
    %v1585 = vpow.pop %v1584
    %v1586 = vmul.f32 %v1581, 1.442695
    %v1587 = vpow.pop %v1586
    %v1588 = vadd.f32 %v1583, 1.0
    %v1589 = vadd.f32 %v1585, 1.0
    %v1590 = vadd.f32 %v1587, 1.0
    %v1591 = vrcp.pop %v1588
    %v1592 = vmul.f32 1.0, %v1591
    %v1593 = vrcp.pop %v1589
    %v1594 = vmul.f32 1.0, %v1593
    %v1595 = vrcp.pop %v1590
    %v1596 = vmul.f32 1.0, %v1595
    %v1597 = vtanh.pop %v1578
    %v1598 = vmul.f32 %v1594, %v1423
    %v1599 = vmul.f32 %v1592, %v1597
    %v1600 = vadd.f32 %v1598, %v1599
    %v1601 = vtanh.pop %v1600
    %v1602 = vmul.f32 %v1596, %v1601
    %s1603 = scalar_lea.vmem [#allocation4], 40
    %1604 = vst [vmem:[%s1603] sm:$0xff] %v1602
    %s1605 = scalar_lea.vmem [#allocation5], 192
    %v1606 = vld [vmem:[%s1605] sm:$0xff]
    %v1607 = vld [vmem:[%s1605 + $0x8] sm:$0xff]
    %v1608 = vld [vmem:[%s1605 + $0x10] sm:$0xff]
    %v1609 = vld [vmem:[%s1605 + $0x18] sm:$0xff]
    %1610 = vmatprep.subr.mxu0 %v128
    %1611 = vmatpush1.msra.mxu0 %v127
    %1612 = vmatprep.subr.mxu0 %v132
    %1613 = vmatpush1.msra.mxu0 %v131
    %1614 = vmatprep.subr.mxu0 %v136
    %1615 = vmatpush1.msra.mxu0 %v135
    %1616 = vmatprep.subr.mxu0 %v140
    %1617 = vmatpush1.msra.mxu0 %v139
    %1618 = vmatprep.subr.mxu0 %v144
    %1619 = vmatpush1.msra.mxu0 %v143
    %1620 = vmatprep.subr.mxu0 %v148
    %1621 = vmatpush1.msra.mxu0 %v147
    %1622 = vmatprep.subr.mxu0 %v152
    %1623 = vmatpush1.msra.mxu0 %v151
    %1624 = vmatprep.subr.mxu0 %v156
    %1625 = vmatpush1.msra.mxu0 %v155
    %1626 = vmatprep.subr.mxu0 %v160
    %1627 = vmatpush1.msra.mxu0 %v159
    %1628 = vmatprep.subr.mxu0 %v164
    %1629 = vmatpush1.msra.mxu0 %v163
    %1630 = vmatprep.subr.mxu0 %v168
    %1631 = vmatpush1.msra.mxu0 %v167
    %1632 = vmatprep.subr.mxu0 %v172
    %1633 = vmatpush1.msra.mxu0 %v171
    %1634 = vmatprep.subr.mxu0 %v176
    %1635 = vmatpush1.msra.mxu0 %v175
    %1636 = vmatprep.subr.mxu0 %v180
    %1637 = vmatpush1.msra.mxu0 %v179
    %1638 = vmatprep.subr.mxu0 %v184
    %1639 = vmatpush1.msra.mxu0 %v183
    %1640 = vmatprep.subr.mxu0 %v188
    %1641 = vmatpush1.msra.mxu0 %v187
    %1642 = vmatprep.subr.mxu0 0.0
    %1643 = vmatpush1.msra.mxu0 0.0
    %1644 = vmatprep.subr.mxu0 0.0
    %1645 = vmatpush1.msra.mxu0 0.0
    %1646 = vmatprep.subr.mxu0 0.0
    %1647 = vmatpush1.msra.mxu0 0.0
    %1648 = vmatprep.subr.mxu0 0.0
    %1649 = vmatpush1.msra.mxu0 0.0
    %1650 = vmatprep.subr.mxu0 0.0
    %1651 = vmatpush1.msra.mxu0 0.0
    %1652 = vmatprep.subr.mxu0 0.0
    %1653 = vmatpush1.msra.mxu0 0.0
    %1654 = vmatprep.subr.mxu0 0.0
    %1655 = vmatpush1.msra.mxu0 0.0
    %1656 = vmatprep.subr.mxu0 0.0
    %1657 = vmatpush1.msra.mxu0 0.0
    %1658 = vmatprep.subr.mxu0 0.0
    %1659 = vmatpush1.msra.mxu0 0.0
    %1660 = vmatprep.subr.mxu0 0.0
    %1661 = vmatpush1.msra.mxu0 0.0
    %1662 = vmatprep.subr.mxu0 0.0
    %1663 = vmatpush1.msra.mxu0 0.0
    %1664 = vmatprep.subr.mxu0 0.0
    %1665 = vmatpush1.msra.mxu0 0.0
    %1666 = vmatprep.subr.mxu0 0.0
    %1667 = vmatpush1.msra.mxu0 0.0
    %1668 = vmatprep.subr.mxu0 0.0
    %1669 = vmatpush1.msra.mxu0 0.0
    %1670 = vmatprep.subr.mxu0 0.0
    %1671 = vmatpush1.msra.mxu0 0.0
    %1672 = vmatprep.subr.mxu0 0.0
    %1673 = vmatpush1.msra.mxu0 0.0
    %1674 = vmatprep.mubr.f32.mxu0 0.0
    %1675 = vmatmul.mubr.f32.gmra.mrb[0].mxu0 %v1602
    %v1676 = vpop.f32.mrb[0].mxu0
    %v1677 = vadd.f32 0.0, %v1676
    %v1678 = vpop.f32.mrb[0].mxu0
    %v1679 = vadd.f32 0.0, %v1678
    %1680 = vdwg.mxu0
    %1681 = vmatprep.subr.mxu0 %v130
    %1682 = vmatpush1.msra.mxu0 %v129
    %1683 = vmatprep.subr.mxu0 %v134
    %1684 = vmatpush1.msra.mxu0 %v133
    %1685 = vmatprep.subr.mxu0 %v138
    %1686 = vmatpush1.msra.mxu0 %v137
    %1687 = vmatprep.subr.mxu0 %v142
    %1688 = vmatpush1.msra.mxu0 %v141
    %1689 = vmatprep.subr.mxu0 %v146
    %1690 = vmatpush1.msra.mxu0 %v145
    %1691 = vmatprep.subr.mxu0 %v150
    %1692 = vmatpush1.msra.mxu0 %v149
    %1693 = vmatprep.subr.mxu0 %v154
    %1694 = vmatpush1.msra.mxu0 %v153
    %1695 = vmatprep.subr.mxu0 %v158
    %1696 = vmatpush1.msra.mxu0 %v157
    %1697 = vmatprep.subr.mxu0 %v162
    %1698 = vmatpush1.msra.mxu0 %v161
    %1699 = vmatprep.subr.mxu0 %v166
    %1700 = vmatpush1.msra.mxu0 %v165
    %1701 = vmatprep.subr.mxu0 %v170
    %1702 = vmatpush1.msra.mxu0 %v169
    %1703 = vmatprep.subr.mxu0 %v174
    %1704 = vmatpush1.msra.mxu0 %v173
    %1705 = vmatprep.subr.mxu0 %v178
    %1706 = vmatpush1.msra.mxu0 %v177
    %1707 = vmatprep.subr.mxu0 %v182
    %1708 = vmatpush1.msra.mxu0 %v181
    %1709 = vmatprep.subr.mxu0 %v186
    %1710 = vmatpush1.msra.mxu0 %v185
    %1711 = vmatprep.subr.mxu0 %v190
    %1712 = vmatpush1.msra.mxu0 %v189
    %1713 = vmatprep.subr.mxu0 0.0
    %1714 = vmatpush1.msra.mxu0 0.0
    %1715 = vmatprep.subr.mxu0 0.0
    %1716 = vmatpush1.msra.mxu0 0.0
    %1717 = vmatprep.subr.mxu0 0.0
    %1718 = vmatpush1.msra.mxu0 0.0
    %1719 = vmatprep.subr.mxu0 0.0
    %1720 = vmatpush1.msra.mxu0 0.0
    %1721 = vmatprep.subr.mxu0 0.0
    %1722 = vmatpush1.msra.mxu0 0.0
    %1723 = vmatprep.subr.mxu0 0.0
    %1724 = vmatpush1.msra.mxu0 0.0
    %1725 = vmatprep.subr.mxu0 0.0
    %1726 = vmatpush1.msra.mxu0 0.0
    %1727 = vmatprep.subr.mxu0 0.0
    %1728 = vmatpush1.msra.mxu0 0.0
    %1729 = vmatprep.subr.mxu0 0.0
    %1730 = vmatpush1.msra.mxu0 0.0
    %1731 = vmatprep.subr.mxu0 0.0
    %1732 = vmatpush1.msra.mxu0 0.0
    %1733 = vmatprep.subr.mxu0 0.0
    %1734 = vmatpush1.msra.mxu0 0.0
    %1735 = vmatprep.subr.mxu0 0.0
    %1736 = vmatpush1.msra.mxu0 0.0
    %1737 = vmatprep.subr.mxu0 0.0
    %1738 = vmatpush1.msra.mxu0 0.0
    %1739 = vmatprep.subr.mxu0 0.0
    %1740 = vmatpush1.msra.mxu0 0.0
    %1741 = vmatprep.subr.mxu0 0.0
    %1742 = vmatpush1.msra.mxu0 0.0
    %1743 = vmatprep.subr.mxu0 0.0
    %1744 = vmatpush1.msra.mxu0 0.0
    %1745 = vmatprep.mubr.f32.mxu0 0.0
    %1746 = vmatmul.mubr.f32.gmra.mrb[0].mxu0 %v1602
    %v1747 = vpop.f32.mrb[0].mxu0
    %v1748 = vadd.f32 0.0, %v1747
    %v1749 = vpop.f32.mrb[0].mxu0
    %v1750 = vadd.f32 0.0, %v1749
    %1751 = vdwg.mxu0
    %v1752 = vadd.f32 %v1606, %v1677
    %v1753 = vadd.f32 %v1607, %v1679
    %v1754 = vadd.f32 %v1608, %v1748
    %v1755 = vadd.f32 %v1609, %v1750
    %v1756 = vxor.u32 %v1752, 2147483648
    %v1757 = vxor.u32 %v1753, 2147483648
    %v1758 = vxor.u32 %v1754, 2147483648
    %v1759 = vmul.f32 %v1756, 1.442695
    %v1760 = vpow.pop %v1759
    %v1761 = vmul.f32 %v1757, 1.442695
    %v1762 = vpow.pop %v1761
    %v1763 = vmul.f32 %v1758, 1.442695
    %v1764 = vpow.pop %v1763
    %v1765 = vadd.f32 %v1760, 1.0
    %v1766 = vadd.f32 %v1762, 1.0
    %v1767 = vadd.f32 %v1764, 1.0
    %v1768 = vrcp.pop %v1765
    %v1769 = vmul.f32 1.0, %v1768
    %v1770 = vrcp.pop %v1766
    %v1771 = vmul.f32 1.0, %v1770
    %v1772 = vrcp.pop %v1767
    %v1773 = vmul.f32 1.0, %v1772
    %v1774 = vtanh.pop %v1755
    %v1775 = vmul.f32 %v1771, %v1600
    %v1776 = vmul.f32 %v1769, %v1774
    %v1777 = vadd.f32 %v1775, %v1776
    %v1778 = vtanh.pop %v1777
    %v1779 = vmul.f32 %v1773, %v1778
    %s1780 = scalar_lea.vmem [#allocation4], 48
    %1781 = vst [vmem:[%s1780] sm:$0xff] %v1779
    %s1782 = scalar_lea.vmem [#allocation5], 224
    %v1783 = vld [vmem:[%s1782] sm:$0xff]
    %v1784 = vld [vmem:[%s1782 + $0x8] sm:$0xff]
    %v1785 = vld [vmem:[%s1782 + $0x10] sm:$0xff]
    %v1786 = vld [vmem:[%s1782 + $0x18] sm:$0xff]
    %1787 = vmatprep.subr.mxu0 %v128
    %1788 = vmatpush1.msra.mxu0 %v127
    %1789 = vmatprep.subr.mxu0 %v132
    %1790 = vmatpush1.msra.mxu0 %v131
    %1791 = vmatprep.subr.mxu0 %v136
    %1792 = vmatpush1.msra.mxu0 %v135
    %1793 = vmatprep.subr.mxu0 %v140
    %1794 = vmatpush1.msra.mxu0 %v139
    %1795 = vmatprep.subr.mxu0 %v144
    %1796 = vmatpush1.msra.mxu0 %v143
    %1797 = vmatprep.subr.mxu0 %v148
    %1798 = vmatpush1.msra.mxu0 %v147
    %1799 = vmatprep.subr.mxu0 %v152
    %1800 = vmatpush1.msra.mxu0 %v151
    %1801 = vmatprep.subr.mxu0 %v156
    %1802 = vmatpush1.msra.mxu0 %v155
    %1803 = vmatprep.subr.mxu0 %v160
    %1804 = vmatpush1.msra.mxu0 %v159
    %1805 = vmatprep.subr.mxu0 %v164
    %1806 = vmatpush1.msra.mxu0 %v163
    %1807 = vmatprep.subr.mxu0 %v168
    %1808 = vmatpush1.msra.mxu0 %v167
    %1809 = vmatprep.subr.mxu0 %v172
    %1810 = vmatpush1.msra.mxu0 %v171
    %1811 = vmatprep.subr.mxu0 %v176
    %1812 = vmatpush1.msra.mxu0 %v175
    %1813 = vmatprep.subr.mxu0 %v180
    %1814 = vmatpush1.msra.mxu0 %v179
    %1815 = vmatprep.subr.mxu0 %v184
    %1816 = vmatpush1.msra.mxu0 %v183
    %1817 = vmatprep.subr.mxu0 %v188
    %1818 = vmatpush1.msra.mxu0 %v187
    %1819 = vmatprep.subr.mxu0 0.0
    %1820 = vmatpush1.msra.mxu0 0.0
    %1821 = vmatprep.subr.mxu0 0.0
    %1822 = vmatpush1.msra.mxu0 0.0
    %1823 = vmatprep.subr.mxu0 0.0
    %1824 = vmatpush1.msra.mxu0 0.0
    %1825 = vmatprep.subr.mxu0 0.0
    %1826 = vmatpush1.msra.mxu0 0.0
    %1827 = vmatprep.subr.mxu0 0.0
    %1828 = vmatpush1.msra.mxu0 0.0
    %1829 = vmatprep.subr.mxu0 0.0
    %1830 = vmatpush1.msra.mxu0 0.0
    %1831 = vmatprep.subr.mxu0 0.0
    %1832 = vmatpush1.msra.mxu0 0.0
    %1833 = vmatprep.subr.mxu0 0.0
    %1834 = vmatpush1.msra.mxu0 0.0
    %1835 = vmatprep.subr.mxu0 0.0
    %1836 = vmatpush1.msra.mxu0 0.0
    %1837 = vmatprep.subr.mxu0 0.0
    %1838 = vmatpush1.msra.mxu0 0.0
    %1839 = vmatprep.subr.mxu0 0.0
    %1840 = vmatpush1.msra.mxu0 0.0
    %1841 = vmatprep.subr.mxu0 0.0
    %1842 = vmatpush1.msra.mxu0 0.0
    %1843 = vmatprep.subr.mxu0 0.0
    %1844 = vmatpush1.msra.mxu0 0.0
    %1845 = vmatprep.subr.mxu0 0.0
    %1846 = vmatpush1.msra.mxu0 0.0
    %1847 = vmatprep.subr.mxu0 0.0
    %1848 = vmatpush1.msra.mxu0 0.0
    %1849 = vmatprep.subr.mxu0 0.0
    %1850 = vmatpush1.msra.mxu0 0.0
    %1851 = vmatprep.mubr.f32.mxu0 0.0
    %1852 = vmatmul.mubr.f32.gmra.mrb[0].mxu0 %v1779
    %v1853 = vpop.f32.mrb[0].mxu0
    %v1854 = vadd.f32 0.0, %v1853
    %v1855 = vpop.f32.mrb[0].mxu0
    %v1856 = vadd.f32 0.0, %v1855
    %1857 = vdwg.mxu0
    %1858 = vmatprep.subr.mxu0 %v130
    %1859 = vmatpush1.msra.mxu0 %v129
    %1860 = vmatprep.subr.mxu0 %v134
    %1861 = vmatpush1.msra.mxu0 %v133
    %1862 = vmatprep.subr.mxu0 %v138
    %1863 = vmatpush1.msra.mxu0 %v137
    %1864 = vmatprep.subr.mxu0 %v142
    %1865 = vmatpush1.msra.mxu0 %v141
    %1866 = vmatprep.subr.mxu0 %v146
    %1867 = vmatpush1.msra.mxu0 %v145
    %1868 = vmatprep.subr.mxu0 %v150
    %1869 = vmatpush1.msra.mxu0 %v149
    %1870 = vmatprep.subr.mxu0 %v154
    %1871 = vmatpush1.msra.mxu0 %v153
    %1872 = vmatprep.subr.mxu0 %v158
    %1873 = vmatpush1.msra.mxu0 %v157
    %1874 = vmatprep.subr.mxu0 %v162
    %1875 = vmatpush1.msra.mxu0 %v161
    %1876 = vmatprep.subr.mxu0 %v166
    %1877 = vmatpush1.msra.mxu0 %v165
    %1878 = vmatprep.subr.mxu0 %v170
    %1879 = vmatpush1.msra.mxu0 %v169
    %1880 = vmatprep.subr.mxu0 %v174
    %1881 = vmatpush1.msra.mxu0 %v173
    %1882 = vmatprep.subr.mxu0 %v178
    %1883 = vmatpush1.msra.mxu0 %v177
    %1884 = vmatprep.subr.mxu0 %v182
    %1885 = vmatpush1.msra.mxu0 %v181
    %1886 = vmatprep.subr.mxu0 %v186
    %1887 = vmatpush1.msra.mxu0 %v185
    %1888 = vmatprep.subr.mxu0 %v190
    %1889 = vmatpush1.msra.mxu0 %v189
    %1890 = vmatprep.subr.mxu0 0.0
    %1891 = vmatpush1.msra.mxu0 0.0
    %1892 = vmatprep.subr.mxu0 0.0
    %1893 = vmatpush1.msra.mxu0 0.0
    %1894 = vmatprep.subr.mxu0 0.0
    %1895 = vmatpush1.msra.mxu0 0.0
    %1896 = vmatprep.subr.mxu0 0.0
    %1897 = vmatpush1.msra.mxu0 0.0
    %1898 = vmatprep.subr.mxu0 0.0
    %1899 = vmatpush1.msra.mxu0 0.0
    %1900 = vmatprep.subr.mxu0 0.0
    %1901 = vmatpush1.msra.mxu0 0.0
    %1902 = vmatprep.subr.mxu0 0.0
    %1903 = vmatpush1.msra.mxu0 0.0
    %1904 = vmatprep.subr.mxu0 0.0
    %1905 = vmatpush1.msra.mxu0 0.0
    %1906 = vmatprep.subr.mxu0 0.0
    %1907 = vmatpush1.msra.mxu0 0.0
    %1908 = vmatprep.subr.mxu0 0.0
    %1909 = vmatpush1.msra.mxu0 0.0
    %1910 = vmatprep.subr.mxu0 0.0
    %1911 = vmatpush1.msra.mxu0 0.0
    %1912 = vmatprep.subr.mxu0 0.0
    %1913 = vmatpush1.msra.mxu0 0.0
    %1914 = vmatprep.subr.mxu0 0.0
    %1915 = vmatpush1.msra.mxu0 0.0
    %1916 = vmatprep.subr.mxu0 0.0
    %1917 = vmatpush1.msra.mxu0 0.0
    %1918 = vmatprep.subr.mxu0 0.0
    %1919 = vmatpush1.msra.mxu0 0.0
    %1920 = vmatprep.subr.mxu0 0.0
    %1921 = vmatpush1.msra.mxu0 0.0
    %1922 = vmatprep.mubr.f32.mxu0 0.0
    %1923 = vmatmul.mubr.f32.gmra.mrb[0].mxu0 %v1779
    %v1924 = vpop.f32.mrb[0].mxu0
    %v1925 = vadd.f32 0.0, %v1924
    %v1926 = vpop.f32.mrb[0].mxu0
    %v1927 = vadd.f32 0.0, %v1926
    %1928 = vdwg.mxu0
    %v1929 = vadd.f32 %v1783, %v1854
    %v1930 = vadd.f32 %v1784, %v1856
    %v1931 = vadd.f32 %v1785, %v1925
    %v1932 = vadd.f32 %v1786, %v1927
    %v1933 = vxor.u32 %v1929, 2147483648
    %v1934 = vxor.u32 %v1930, 2147483648
    %v1935 = vxor.u32 %v1931, 2147483648
    %v1936 = vmul.f32 %v1933, 1.442695
    %v1937 = vpow.pop %v1936
    %v1938 = vmul.f32 %v1934, 1.442695
    %v1939 = vpow.pop %v1938
    %v1940 = vmul.f32 %v1935, 1.442695
    %v1941 = vpow.pop %v1940
    %v1942 = vadd.f32 %v1937, 1.0
    %v1943 = vadd.f32 %v1939, 1.0
    %v1944 = vadd.f32 %v1941, 1.0
    %v1945 = vrcp.pop %v1942
    %v1946 = vmul.f32 1.0, %v1945
    %v1947 = vrcp.pop %v1943
    %v1948 = vmul.f32 1.0, %v1947
    %v1949 = vrcp.pop %v1944
    %v1950 = vmul.f32 1.0, %v1949
    %v1951 = vtanh.pop %v1932
    %v1952 = vmul.f32 %v1948, %v1777
    %v1953 = vmul.f32 %v1946, %v1951
    %v1954 = vadd.f32 %v1952, %v1953
    %v1955 = vtanh.pop %v1954
    %v1956 = vmul.f32 %v1950, %v1955
    %s1957 = scalar_lea.vmem [#allocation4], 56
    %1958 = vst [vmem:[%s1957] sm:$0xff] %v1956
    %1959 = vst [vmem:[#allocation2] sm:$0xff] %v1956
    %1960 = vst [vmem:[#allocation3] sm:$0xff] %v1954
    %s1961 = scalar_lea.vmem [#allocation10], 512
    %v1962 = vld [vmem:[%s1961] sm:$0xff]
    %v1963 = vld [vmem:[%s1961 + $0x8] sm:$0xff]
    %v1964 = vld [vmem:[%s1961 + $0x10] sm:$0xff]
    %v1965 = vld [vmem:[%s1961 + $0x18] sm:$0xff]
    %v1966 = vld [vmem:[%s1961 + $0x20] sm:$0xff]
    %v1967 = vld [vmem:[%s1961 + $0x28] sm:$0xff]
    %v1968 = vld [vmem:[%s1961 + $0x30] sm:$0xff]
    %v1969 = vld [vmem:[%s1961 + $0x38] sm:$0xff]
    %v1970 = vld [vmem:[%s1961 + $0x40] sm:$0xff]
    %v1971 = vld [vmem:[%s1961 + $0x48] sm:$0xff]
    %v1972 = vld [vmem:[%s1961 + $0x50] sm:$0xff]
    %v1973 = vld [vmem:[%s1961 + $0x58] sm:$0xff]
    %v1974 = vld [vmem:[%s1961 + $0x60] sm:$0xff]
    %v1975 = vld [vmem:[%s1961 + $0x68] sm:$0xff]
    %v1976 = vld [vmem:[%s1961 + $0x70] sm:$0xff]
    %v1977 = vld [vmem:[%s1961 + $0x78] sm:$0xff]
    %v1978 = vld [vmem:[%s1961 + $0x80] sm:$0xff]
    %v1979 = vld [vmem:[%s1961 + $0x88] sm:$0xff]
    %v1980 = vld [vmem:[%s1961 + $0x90] sm:$0xff]
    %v1981 = vld [vmem:[%s1961 + $0x98] sm:$0xff]
    %v1982 = vld [vmem:[%s1961 + $0xa0] sm:$0xff]
    %v1983 = vld [vmem:[%s1961 + $0xa8] sm:$0xff]
    %v1984 = vld [vmem:[%s1961 + $0xb0] sm:$0xff]
    %v1985 = vld [vmem:[%s1961 + $0xb8] sm:$0xff]
    %v1986 = vld [vmem:[%s1961 + $0xc0] sm:$0xff]
    %v1987 = vld [vmem:[%s1961 + $0xc8] sm:$0xff]
    %v1988 = vld [vmem:[%s1961 + $0xd0] sm:$0xff]
    %v1989 = vld [vmem:[%s1961 + $0xd8] sm:$0xff]
    %v1990 = vld [vmem:[%s1961 + $0xe0] sm:$0xff]
    %v1991 = vld [vmem:[%s1961 + $0xe8] sm:$0xff]
    %v1992 = vld [vmem:[%s1961 + $0xf0] sm:$0xff]
    %v1993 = vld [vmem:[%s1961 + $0xf8] sm:$0xff]
    %v1994 = vld [vmem:[%s1961 + $0x100] sm:$0xff]
    %v1995 = vld [vmem:[%s1961 + $0x108] sm:$0xff]
    %v1996 = vld [vmem:[%s1961 + $0x110] sm:$0xff]
    %v1997 = vld [vmem:[%s1961 + $0x118] sm:$0xff]
    %v1998 = vld [vmem:[%s1961 + $0x120] sm:$0xff]
    %v1999 = vld [vmem:[%s1961 + $0x128] sm:$0xff]
    %v2000 = vld [vmem:[%s1961 + $0x130] sm:$0xff]
    %v2001 = vld [vmem:[%s1961 + $0x138] sm:$0xff]
    %v2002 = vld [vmem:[%s1961 + $0x140] sm:$0xff]
    %v2003 = vld [vmem:[%s1961 + $0x148] sm:$0xff]
    %v2004 = vld [vmem:[%s1961 + $0x150] sm:$0xff]
    %v2005 = vld [vmem:[%s1961 + $0x158] sm:$0xff]
    %v2006 = vld [vmem:[%s1961 + $0x160] sm:$0xff]
    %v2007 = vld [vmem:[%s1961 + $0x168] sm:$0xff]
    %v2008 = vld [vmem:[%s1961 + $0x170] sm:$0xff]
    %v2009 = vld [vmem:[%s1961 + $0x178] sm:$0xff]
    %v2010 = vld [vmem:[%s1961 + $0x180] sm:$0xff]
    %v2011 = vld [vmem:[%s1961 + $0x188] sm:$0xff]
    %v2012 = vld [vmem:[%s1961 + $0x190] sm:$0xff]
    %v2013 = vld [vmem:[%s1961 + $0x198] sm:$0xff]
    %v2014 = vld [vmem:[%s1961 + $0x1a0] sm:$0xff]
    %v2015 = vld [vmem:[%s1961 + $0x1a8] sm:$0xff]
    %v2016 = vld [vmem:[%s1961 + $0x1b0] sm:$0xff]
    %v2017 = vld [vmem:[%s1961 + $0x1b8] sm:$0xff]
    %v2018 = vld [vmem:[%s1961 + $0x1c0] sm:$0xff]
    %v2019 = vld [vmem:[%s1961 + $0x1c8] sm:$0xff]
    %v2020 = vld [vmem:[%s1961 + $0x1d0] sm:$0xff]
    %v2021 = vld [vmem:[%s1961 + $0x1d8] sm:$0xff]
    %v2022 = vld [vmem:[%s1961 + $0x1e0] sm:$0xff]
    %v2023 = vld [vmem:[%s1961 + $0x1e8] sm:$0xff]
    %v2024 = vld [vmem:[%s1961 + $0x1f0] sm:$0xff]
    %v2025 = vld [vmem:[%s1961 + $0x1f8] sm:$0xff]
    %s2026 = scalar_lea.vmem %s5, 4
    %v2027 = vld [vmem:[%s2026] sm:$0xf]
    %v2028 = vld [vmem:[#allocation4] sm:$0xff]
    %v2029 = vld [vmem:[#allocation4 + $0x8] sm:$0xff]
    %v2030 = vld [vmem:[#allocation4 + $0x10] sm:$0xff]
    %v2031 = vld [vmem:[#allocation4 + $0x18] sm:$0xff]
    %v2032 = vld [vmem:[#allocation4 + $0x20] sm:$0xff]
    %v2033 = vld [vmem:[#allocation4 + $0x28] sm:$0xff]
    %v2034 = vld [vmem:[#allocation4 + $0x30] sm:$0xff]
    %v2035 = vld [vmem:[#allocation4 + $0x38] sm:$0xff]
    %v2036 = vld [vmem:[#allocation8] sm:$0xff]
    %v2037 = vld [vmem:[#allocation8 + $0x8] sm:$0xff]
    %v2038 = vld [vmem:[#allocation8 + $0x10] sm:$0xff]
    %v2039 = vld [vmem:[#allocation8 + $0x18] sm:$0xff]
    %v2040 = vld [vmem:[#allocation8 + $0x20] sm:$0xff]
    %v2041 = vld [vmem:[#allocation8 + $0x28] sm:$0xff]
    %v2042 = vld [vmem:[#allocation8 + $0x30] sm:$0xff]
    %v2043 = vld [vmem:[#allocation8 + $0x38] sm:$0xff]
    %v2044 = vld [vmem:[#allocation8 + $0x40] sm:$0xff]
    %v2045 = vld [vmem:[#allocation8 + $0x48] sm:$0xff]
    %v2046 = vld [vmem:[#allocation8 + $0x50] sm:$0xff]
    %v2047 = vld [vmem:[#allocation8 + $0x58] sm:$0xff]
    %v2048 = vld [vmem:[#allocation8 + $0x60] sm:$0xff]
    %v2049 = vld [vmem:[#allocation8 + $0x68] sm:$0xff]
    %v2050 = vld [vmem:[#allocation8 + $0x70] sm:$0xff]
    %v2051 = vld [vmem:[#allocation8 + $0x78] sm:$0xff]
    %v2052 = vld [vmem:[#allocation8 + $0x80] sm:$0xff]
    %v2053 = vld [vmem:[#allocation8 + $0x88] sm:$0xff]
    %v2054 = vld [vmem:[#allocation8 + $0x90] sm:$0xff]
    %v2055 = vld [vmem:[#allocation8 + $0x98] sm:$0xff]
    %v2056 = vld [vmem:[#allocation8 + $0xa0] sm:$0xff]
    %v2057 = vld [vmem:[#allocation8 + $0xa8] sm:$0xff]
    %v2058 = vld [vmem:[#allocation8 + $0xb0] sm:$0xff]
    %v2059 = vld [vmem:[#allocation8 + $0xb8] sm:$0xff]
    %v2060 = vld [vmem:[#allocation8 + $0xc0] sm:$0xff]
    %v2061 = vld [vmem:[#allocation8 + $0xc8] sm:$0xff]
    %v2062 = vld [vmem:[#allocation8 + $0xd0] sm:$0xff]
    %v2063 = vld [vmem:[#allocation8 + $0xd8] sm:$0xff]
    %v2064 = vld [vmem:[#allocation8 + $0xe0] sm:$0xff]
    %v2065 = vld [vmem:[#allocation8 + $0xe8] sm:$0xff]
    %v2066 = vld [vmem:[#allocation8 + $0xf0] sm:$0xff]
    %v2067 = vld [vmem:[#allocation8 + $0xf8] sm:$0xff]
    %v2068 = vld [vmem:[#allocation8 + $0x100] sm:$0xff]
    %v2069 = vld [vmem:[#allocation8 + $0x108] sm:$0xff]
    %v2070 = vld [vmem:[#allocation8 + $0x110] sm:$0xff]
    %v2071 = vld [vmem:[#allocation8 + $0x118] sm:$0xff]
    %v2072 = vld [vmem:[#allocation8 + $0x120] sm:$0xff]
    %v2073 = vld [vmem:[#allocation8 + $0x128] sm:$0xff]
    %v2074 = vld [vmem:[#allocation8 + $0x130] sm:$0xff]
    %v2075 = vld [vmem:[#allocation8 + $0x138] sm:$0xff]
    %v2076 = vld [vmem:[#allocation8 + $0x140] sm:$0xff]
    %v2077 = vld [vmem:[#allocation8 + $0x148] sm:$0xff]
    %v2078 = vld [vmem:[#allocation8 + $0x150] sm:$0xff]
    %v2079 = vld [vmem:[#allocation8 + $0x158] sm:$0xff]
    %v2080 = vld [vmem:[#allocation8 + $0x160] sm:$0xff]
    %v2081 = vld [vmem:[#allocation8 + $0x168] sm:$0xff]
    %v2082 = vld [vmem:[#allocation8 + $0x170] sm:$0xff]
    %v2083 = vld [vmem:[#allocation8 + $0x178] sm:$0xff]
    %v2084 = vld [vmem:[#allocation8 + $0x180] sm:$0xff]
    %v2085 = vld [vmem:[#allocation8 + $0x188] sm:$0xff]
    %v2086 = vld [vmem:[#allocation8 + $0x190] sm:$0xff]
    %v2087 = vld [vmem:[#allocation8 + $0x198] sm:$0xff]
    %v2088 = vld [vmem:[#allocation8 + $0x1a0] sm:$0xff]
    %v2089 = vld [vmem:[#allocation8 + $0x1a8] sm:$0xff]
    %v2090 = vld [vmem:[#allocation8 + $0x1b0] sm:$0xff]
    %v2091 = vld [vmem:[#allocation8 + $0x1b8] sm:$0xff]
    %v2092 = vld [vmem:[#allocation8 + $0x1c0] sm:$0xff]
    %v2093 = vld [vmem:[#allocation8 + $0x1c8] sm:$0xff]
    %v2094 = vld [vmem:[#allocation8 + $0x1d0] sm:$0xff]
    %v2095 = vld [vmem:[#allocation8 + $0x1d8] sm:$0xff]
    %v2096 = vld [vmem:[#allocation8 + $0x1e0] sm:$0xff]
    %v2097 = vld [vmem:[#allocation8 + $0x1e8] sm:$0xff]
    %v2098 = vld [vmem:[#allocation8 + $0x1f0] sm:$0xff]
    %v2099 = vld [vmem:[#allocation8 + $0x1f8] sm:$0xff]
    %v2101 = vlaneseq
    %v2102 = vshrl.u32 %v2101, 7
    %v2103 = vsub.s32 0, %v2102
    %v2104 = vrot.slane %v2027, %v2103
    %v2105 = vlaneseq
    %v2106 = vshrl.u32 %v2105, 7
    %v2107 = vsub.s32 1, %v2106
    %v2108 = vrot.slane %v2027, %v2107
    %v2109 = vlaneseq
    %v2110 = vshrl.u32 %v2109, 7
    %v2111 = vsub.s32 2, %v2110
    %v2112 = vrot.slane %v2027, %v2111
    %v2113 = vlaneseq
    %v2114 = vshrl.u32 %v2113, 7
    %v2115 = vsub.s32 3, %v2114
    %v2116 = vrot.slane %v2027, %v2115
    %2121 = vmatprep.subr.mxu0 %v2037
    %2122 = vmatpush1.msra.mxu0 %v2036
    %2123 = vmatprep.subr.mxu0 %v2041
    %2124 = vmatpush1.msra.mxu0 %v2040
    %2125 = vmatprep.subr.mxu0 %v2045
    %2126 = vmatpush1.msra.mxu0 %v2044
    %2127 = vmatprep.subr.mxu0 %v2049
    %2128 = vmatpush1.msra.mxu0 %v2048
    %2129 = vmatprep.subr.mxu0 %v2053
    %2130 = vmatpush1.msra.mxu0 %v2052
    %2131 = vmatprep.subr.mxu0 %v2057
    %2132 = vmatpush1.msra.mxu0 %v2056
    %2133 = vmatprep.subr.mxu0 %v2061
    %2134 = vmatpush1.msra.mxu0 %v2060
    %2135 = vmatprep.subr.mxu0 %v2065
    %2136 = vmatpush1.msra.mxu0 %v2064
    %2137 = vmatprep.subr.mxu0 %v2069
    %2138 = vmatpush1.msra.mxu0 %v2068
    %2139 = vmatprep.subr.mxu0 %v2073
    %2140 = vmatpush1.msra.mxu0 %v2072
    %2141 = vmatprep.subr.mxu0 %v2077
    %2142 = vmatpush1.msra.mxu0 %v2076
    %2143 = vmatprep.subr.mxu0 %v2081
    %2144 = vmatpush1.msra.mxu0 %v2080
    %2145 = vmatprep.subr.mxu0 %v2085
    %2146 = vmatpush1.msra.mxu0 %v2084
    %2147 = vmatprep.subr.mxu0 %v2089
    %2148 = vmatpush1.msra.mxu0 %v2088
    %2149 = vmatprep.subr.mxu0 %v2093
    %2150 = vmatpush1.msra.mxu0 %v2092
    %2151 = vmatprep.subr.mxu0 %v2097
    %2152 = vmatpush1.msra.mxu0 %v2096
    %2153 = vmatprep.subr.mxu0 0.0
    %2154 = vmatpush1.msra.mxu0 0.0
    %2155 = vmatprep.subr.mxu0 0.0
    %2156 = vmatpush1.msra.mxu0 0.0
    %2157 = vmatprep.subr.mxu0 0.0
    %2158 = vmatpush1.msra.mxu0 0.0
    %2159 = vmatprep.subr.mxu0 0.0
    %2160 = vmatpush1.msra.mxu0 0.0
    %2161 = vmatprep.subr.mxu0 0.0
    %2162 = vmatpush1.msra.mxu0 0.0
    %2163 = vmatprep.subr.mxu0 0.0
    %2164 = vmatpush1.msra.mxu0 0.0
    %2165 = vmatprep.subr.mxu0 0.0
    %2166 = vmatpush1.msra.mxu0 0.0
    %2167 = vmatprep.subr.mxu0 0.0
    %2168 = vmatpush1.msra.mxu0 0.0
    %2169 = vmatprep.subr.mxu0 0.0
    %2170 = vmatpush1.msra.mxu0 0.0
    %2171 = vmatprep.subr.mxu0 0.0
    %2172 = vmatpush1.msra.mxu0 0.0
    %2173 = vmatprep.subr.mxu0 0.0
    %2174 = vmatpush1.msra.mxu0 0.0
    %2175 = vmatprep.subr.mxu0 0.0
    %2176 = vmatpush1.msra.mxu0 0.0
    %2177 = vmatprep.subr.mxu0 0.0
    %2178 = vmatpush1.msra.mxu0 0.0
    %2179 = vmatprep.subr.mxu0 0.0
    %2180 = vmatpush1.msra.mxu0 0.0
    %2181 = vmatprep.subr.mxu0 0.0
    %2182 = vmatpush1.msra.mxu0 0.0
    %2183 = vmatprep.subr.mxu0 0.0
    %2184 = vmatpush1.msra.mxu0 0.0
    %2185 = vmatprep.mubr.f32.mxu0 0.0
    %2186 = vmatmul.mubr.f32.gmra.mrb[0].mxu0 %v2028
    %v2187 = vpop.f32.mrb[0].mxu0
    %v2188 = vadd.f32 %v2104, %v2187
    %v2189 = vpop.f32.mrb[0].mxu0
    %v2190 = vadd.f32 %v2108, %v2189
    %2191 = vmatprep.mubr.f32.mxu0 0.0
    %2192 = vmatmul.mubr.f32.gmra.mrb[0].mxu0 %v2029
    %v2193 = vpop.f32.mrb[0].mxu0
    %v2194 = vadd.f32 %v2104, %v2193
    %v2195 = vpop.f32.mrb[0].mxu0
    %v2196 = vadd.f32 %v2108, %v2195
    %2197 = vmatprep.mubr.f32.mxu0 0.0
    %2198 = vmatmul.mubr.f32.gmra.mrb[0].mxu0 %v2030
    %v2199 = vpop.f32.mrb[0].mxu0
    %v2200 = vadd.f32 %v2104, %v2199
    %v2201 = vpop.f32.mrb[0].mxu0
    %v2202 = vadd.f32 %v2108, %v2201
    %2203 = vmatprep.mubr.f32.mxu0 0.0
    %2204 = vmatmul.mubr.f32.gmra.mrb[0].mxu0 %v2031
    %v2205 = vpop.f32.mrb[0].mxu0
    %v2206 = vadd.f32 %v2104, %v2205
    %v2207 = vpop.f32.mrb[0].mxu0
    %v2208 = vadd.f32 %v2108, %v2207
    %2209 = vmatprep.mubr.f32.mxu0 0.0
    %2210 = vmatmul.mubr.f32.gmra.mrb[0].mxu0 %v2032
    %v2211 = vpop.f32.mrb[0].mxu0
    %v2212 = vadd.f32 %v2104, %v2211
    %v2213 = vpop.f32.mrb[0].mxu0
    %v2214 = vadd.f32 %v2108, %v2213
    %2215 = vmatprep.mubr.f32.mxu0 0.0
    %2216 = vmatmul.mubr.f32.gmra.mrb[0].mxu0 %v2033
    %v2217 = vpop.f32.mrb[0].mxu0
    %v2218 = vadd.f32 %v2104, %v2217
    %v2219 = vpop.f32.mrb[0].mxu0
    %v2220 = vadd.f32 %v2108, %v2219
    %2221 = vmatprep.mubr.f32.mxu0 0.0
    %2222 = vmatmul.mubr.f32.gmra.mrb[0].mxu0 %v2034
    %v2223 = vpop.f32.mrb[0].mxu0
    %v2224 = vadd.f32 %v2104, %v2223
    %v2225 = vpop.f32.mrb[0].mxu0
    %v2226 = vadd.f32 %v2108, %v2225
    %2227 = vmatprep.mubr.f32.mxu0 0.0
    %2228 = vmatmul.mubr.f32.gmra.mrb[0].mxu0 %v2035
    %v2229 = vpop.f32.mrb[0].mxu0
    %v2230 = vadd.f32 %v2104, %v2229
    %v2231 = vpop.f32.mrb[0].mxu0
    %v2232 = vadd.f32 %v2108, %v2231
    %2233 = vdwg.mxu0
    %2234 = vmatprep.subr.mxu0 %v2039
    %2235 = vmatpush1.msra.mxu0 %v2038
    %2236 = vmatprep.subr.mxu0 %v2043
    %2237 = vmatpush1.msra.mxu0 %v2042
    %2238 = vmatprep.subr.mxu0 %v2047
    %2239 = vmatpush1.msra.mxu0 %v2046
    %2240 = vmatprep.subr.mxu0 %v2051
    %2241 = vmatpush1.msra.mxu0 %v2050
    %2242 = vmatprep.subr.mxu0 %v2055
    %2243 = vmatpush1.msra.mxu0 %v2054
    %2244 = vmatprep.subr.mxu0 %v2059
    %2245 = vmatpush1.msra.mxu0 %v2058
    %2246 = vmatprep.subr.mxu0 %v2063
    %2247 = vmatpush1.msra.mxu0 %v2062
    %2248 = vmatprep.subr.mxu0 %v2067
    %2249 = vmatpush1.msra.mxu0 %v2066
    %2250 = vmatprep.subr.mxu0 %v2071
    %2251 = vmatpush1.msra.mxu0 %v2070
    %2252 = vmatprep.subr.mxu0 %v2075
    %2253 = vmatpush1.msra.mxu0 %v2074
    %2254 = vmatprep.subr.mxu0 %v2079
    %2255 = vmatpush1.msra.mxu0 %v2078
    %2256 = vmatprep.subr.mxu0 %v2083
    %2257 = vmatpush1.msra.mxu0 %v2082
    %2258 = vmatprep.subr.mxu0 %v2087
    %2259 = vmatpush1.msra.mxu0 %v2086
    %2260 = vmatprep.subr.mxu0 %v2091
    %2261 = vmatpush1.msra.mxu0 %v2090
    %2262 = vmatprep.subr.mxu0 %v2095
    %2263 = vmatpush1.msra.mxu0 %v2094
    %2264 = vmatprep.subr.mxu0 %v2099
    %2265 = vmatpush1.msra.mxu0 %v2098
    %2266 = vmatprep.subr.mxu0 0.0
    %2267 = vmatpush1.msra.mxu0 0.0
    %2268 = vmatprep.subr.mxu0 0.0
    %2269 = vmatpush1.msra.mxu0 0.0
    %2270 = vmatprep.subr.mxu0 0.0
    %2271 = vmatpush1.msra.mxu0 0.0
    %2272 = vmatprep.subr.mxu0 0.0
    %2273 = vmatpush1.msra.mxu0 0.0
    %2274 = vmatprep.subr.mxu0 0.0
    %2275 = vmatpush1.msra.mxu0 0.0
    %2276 = vmatprep.subr.mxu0 0.0
    %2277 = vmatpush1.msra.mxu0 0.0
    %2278 = vmatprep.subr.mxu0 0.0
    %2279 = vmatpush1.msra.mxu0 0.0
    %2280 = vmatprep.subr.mxu0 0.0
    %2281 = vmatpush1.msra.mxu0 0.0
    %2282 = vmatprep.subr.mxu0 0.0
    %2283 = vmatpush1.msra.mxu0 0.0
    %2284 = vmatprep.subr.mxu0 0.0
    %2285 = vmatpush1.msra.mxu0 0.0
    %2286 = vmatprep.subr.mxu0 0.0
    %2287 = vmatpush1.msra.mxu0 0.0
    %2288 = vmatprep.subr.mxu0 0.0
    %2289 = vmatpush1.msra.mxu0 0.0
    %2290 = vmatprep.subr.mxu0 0.0
    %2291 = vmatpush1.msra.mxu0 0.0
    %2292 = vmatprep.subr.mxu0 0.0
    %2293 = vmatpush1.msra.mxu0 0.0
    %2294 = vmatprep.subr.mxu0 0.0
    %2295 = vmatpush1.msra.mxu0 0.0
    %2296 = vmatprep.subr.mxu0 0.0
    %2297 = vmatpush1.msra.mxu0 0.0
    %2298 = vmatprep.mubr.f32.mxu0 0.0
    %2299 = vmatmul.mubr.f32.gmra.mrb[0].mxu0 %v2028
    %v2300 = vpop.f32.mrb[0].mxu0
    %v2301 = vadd.f32 %v2112, %v2300
    %v2302 = vpop.f32.mrb[0].mxu0
    %v2303 = vadd.f32 %v2116, %v2302
    %2304 = vmatprep.mubr.f32.mxu0 0.0
    %2305 = vmatmul.mubr.f32.gmra.mrb[0].mxu0 %v2029
    %v2306 = vpop.f32.mrb[0].mxu0
    %v2307 = vadd.f32 %v2112, %v2306
    %v2308 = vpop.f32.mrb[0].mxu0
    %v2309 = vadd.f32 %v2116, %v2308
    %2310 = vmatprep.mubr.f32.mxu0 0.0
    %2311 = vmatmul.mubr.f32.gmra.mrb[0].mxu0 %v2030
    %v2312 = vpop.f32.mrb[0].mxu0
    %v2313 = vadd.f32 %v2112, %v2312
    %v2314 = vpop.f32.mrb[0].mxu0
    %v2315 = vadd.f32 %v2116, %v2314
    %2316 = vmatprep.mubr.f32.mxu0 0.0
    %2317 = vmatmul.mubr.f32.gmra.mrb[0].mxu0 %v2031
    %v2318 = vpop.f32.mrb[0].mxu0
    %v2319 = vadd.f32 %v2112, %v2318
    %v2320 = vpop.f32.mrb[0].mxu0
    %v2321 = vadd.f32 %v2116, %v2320
    %2322 = vmatprep.mubr.f32.mxu0 0.0
    %2323 = vmatmul.mubr.f32.gmra.mrb[0].mxu0 %v2032
    %v2324 = vpop.f32.mrb[0].mxu0
    %v2325 = vadd.f32 %v2112, %v2324
    %v2326 = vpop.f32.mrb[0].mxu0
    %v2327 = vadd.f32 %v2116, %v2326
    %2328 = vmatprep.mubr.f32.mxu0 0.0
    %2329 = vmatmul.mubr.f32.gmra.mrb[0].mxu0 %v2033
    %v2330 = vpop.f32.mrb[0].mxu0
    %v2331 = vadd.f32 %v2112, %v2330
    %v2332 = vpop.f32.mrb[0].mxu0
    %v2333 = vadd.f32 %v2116, %v2332
    %2334 = vmatprep.mubr.f32.mxu0 0.0
    %2335 = vmatmul.mubr.f32.gmra.mrb[0].mxu0 %v2034
    %v2336 = vpop.f32.mrb[0].mxu0
    %v2337 = vadd.f32 %v2112, %v2336
    %v2338 = vpop.f32.mrb[0].mxu0
    %v2339 = vadd.f32 %v2116, %v2338
    %2340 = vmatprep.mubr.f32.mxu0 0.0
    %2341 = vmatmul.mubr.f32.gmra.mrb[0].mxu0 %v2035
    %v2342 = vpop.f32.mrb[0].mxu0
    %v2343 = vadd.f32 %v2112, %v2342
    %v2344 = vpop.f32.mrb[0].mxu0
    %v2345 = vadd.f32 %v2116, %v2344
    %2346 = vdwg.mxu0
    %2347 = vst [vmem:[#allocation5] sm:$0xff] %v2188
    %2348 = vst [vmem:[#allocation5 + $0x8] sm:$0xff] %v2190
    %2349 = vst [vmem:[#allocation5 + $0x10] sm:$0xff] %v2301
    %2350 = vst [vmem:[#allocation5 + $0x18] sm:$0xff] %v2303
    %2351 = vst [vmem:[#allocation5 + $0x20] sm:$0xff] %v2194
    %2352 = vst [vmem:[#allocation5 + $0x28] sm:$0xff] %v2196
    %2353 = vst [vmem:[#allocation5 + $0x30] sm:$0xff] %v2307
    %2354 = vst [vmem:[#allocation5 + $0x38] sm:$0xff] %v2309
    %2355 = vst [vmem:[#allocation5 + $0x40] sm:$0xff] %v2200
    %2356 = vst [vmem:[#allocation5 + $0x48] sm:$0xff] %v2202
    %2357 = vst [vmem:[#allocation5 + $0x50] sm:$0xff] %v2313
    %2358 = vst [vmem:[#allocation5 + $0x58] sm:$0xff] %v2315
    %2359 = vst [vmem:[#allocation5 + $0x60] sm:$0xff] %v2206
    %2360 = vst [vmem:[#allocation5 + $0x68] sm:$0xff] %v2208
    %2361 = vst [vmem:[#allocation5 + $0x70] sm:$0xff] %v2319
    %2362 = vst [vmem:[#allocation5 + $0x78] sm:$0xff] %v2321
    %2363 = vst [vmem:[#allocation5 + $0x80] sm:$0xff] %v2212
    %2364 = vst [vmem:[#allocation5 + $0x88] sm:$0xff] %v2214
    %2365 = vst [vmem:[#allocation5 + $0x90] sm:$0xff] %v2325
    %2366 = vst [vmem:[#allocation5 + $0x98] sm:$0xff] %v2327
    %2367 = vst [vmem:[#allocation5 + $0xa0] sm:$0xff] %v2218
    %2368 = vst [vmem:[#allocation5 + $0xa8] sm:$0xff] %v2220
    %2369 = vst [vmem:[#allocation5 + $0xb0] sm:$0xff] %v2331
    %2370 = vst [vmem:[#allocation5 + $0xb8] sm:$0xff] %v2333
    %2371 = vst [vmem:[#allocation5 + $0xc0] sm:$0xff] %v2224
    %2372 = vst [vmem:[#allocation5 + $0xc8] sm:$0xff] %v2226
    %2373 = vst [vmem:[#allocation5 + $0xd0] sm:$0xff] %v2337
    %2374 = vst [vmem:[#allocation5 + $0xd8] sm:$0xff] %v2339
    %2375 = vst [vmem:[#allocation5 + $0xe0] sm:$0xff] %v2230
    %2376 = vst [vmem:[#allocation5 + $0xe8] sm:$0xff] %v2232
    %2377 = vst [vmem:[#allocation5 + $0xf0] sm:$0xff] %v2343
    %2378 = vst [vmem:[#allocation5 + $0xf8] sm:$0xff] %v2345
    %s2379 = scalar_lea.vmem [#allocation2], 8
    %v2380 = vld [vmem:[%s2379] sm:$0xff]
    %s2381 = scalar_lea.vmem [#allocation3], 8
    %v2382 = vld [vmem:[%s2381] sm:$0xff]
    %v2383 = vld [vmem:[#allocation5] sm:$0xff]
    %v2384 = vld [vmem:[#allocation5 + $0x8] sm:$0xff]
    %v2385 = vld [vmem:[#allocation5 + $0x10] sm:$0xff]
    %v2386 = vld [vmem:[#allocation5 + $0x18] sm:$0xff]
    %2387 = vmatprep.subr.mxu0 %v1963
    %2388 = vmatpush1.msra.mxu0 %v1962
    %2389 = vmatprep.subr.mxu0 %v1967
    %2390 = vmatpush1.msra.mxu0 %v1966
    %2391 = vmatprep.subr.mxu0 %v1971
    %2392 = vmatpush1.msra.mxu0 %v1970
    %2393 = vmatprep.subr.mxu0 %v1975
    %2394 = vmatpush1.msra.mxu0 %v1974
    %2395 = vmatprep.subr.mxu0 %v1979
    %2396 = vmatpush1.msra.mxu0 %v1978
    %2397 = vmatprep.subr.mxu0 %v1983
    %2398 = vmatpush1.msra.mxu0 %v1982
    %2399 = vmatprep.subr.mxu0 %v1987
    %2400 = vmatpush1.msra.mxu0 %v1986
    %2401 = vmatprep.subr.mxu0 %v1991
    %2402 = vmatpush1.msra.mxu0 %v1990
    %2403 = vmatprep.subr.mxu0 %v1995
    %2404 = vmatpush1.msra.mxu0 %v1994
    %2405 = vmatprep.subr.mxu0 %v1999
    %2406 = vmatpush1.msra.mxu0 %v1998
    %2407 = vmatprep.subr.mxu0 %v2003
    %2408 = vmatpush1.msra.mxu0 %v2002
    %2409 = vmatprep.subr.mxu0 %v2007
    %2410 = vmatpush1.msra.mxu0 %v2006
    %2411 = vmatprep.subr.mxu0 %v2011
    %2412 = vmatpush1.msra.mxu0 %v2010
    %2413 = vmatprep.subr.mxu0 %v2015
    %2414 = vmatpush1.msra.mxu0 %v2014
    %2415 = vmatprep.subr.mxu0 %v2019
    %2416 = vmatpush1.msra.mxu0 %v2018
    %2417 = vmatprep.subr.mxu0 %v2023
    %2418 = vmatpush1.msra.mxu0 %v2022
    %2419 = vmatprep.subr.mxu0 0.0
    %2420 = vmatpush1.msra.mxu0 0.0
    %2421 = vmatprep.subr.mxu0 0.0
    %2422 = vmatpush1.msra.mxu0 0.0
    %2423 = vmatprep.subr.mxu0 0.0
    %2424 = vmatpush1.msra.mxu0 0.0
    %2425 = vmatprep.subr.mxu0 0.0
    %2426 = vmatpush1.msra.mxu0 0.0
    %2427 = vmatprep.subr.mxu0 0.0
    %2428 = vmatpush1.msra.mxu0 0.0
    %2429 = vmatprep.subr.mxu0 0.0
    %2430 = vmatpush1.msra.mxu0 0.0
    %2431 = vmatprep.subr.mxu0 0.0
    %2432 = vmatpush1.msra.mxu0 0.0
    %2433 = vmatprep.subr.mxu0 0.0
    %2434 = vmatpush1.msra.mxu0 0.0
    %2435 = vmatprep.subr.mxu0 0.0
    %2436 = vmatpush1.msra.mxu0 0.0
    %2437 = vmatprep.subr.mxu0 0.0
    %2438 = vmatpush1.msra.mxu0 0.0
    %2439 = vmatprep.subr.mxu0 0.0
    %2440 = vmatpush1.msra.mxu0 0.0
    %2441 = vmatprep.subr.mxu0 0.0
    %2442 = vmatpush1.msra.mxu0 0.0
    %2443 = vmatprep.subr.mxu0 0.0
    %2444 = vmatpush1.msra.mxu0 0.0
    %2445 = vmatprep.subr.mxu0 0.0
    %2446 = vmatpush1.msra.mxu0 0.0
    %2447 = vmatprep.subr.mxu0 0.0
    %2448 = vmatpush1.msra.mxu0 0.0
    %2449 = vmatprep.subr.mxu0 0.0
    %2450 = vmatpush1.msra.mxu0 0.0
    %2451 = vmatprep.mubr.f32.mxu0 0.0
    %2452 = vmatmul.mubr.f32.gmra.mrb[0].mxu0 %v2380
    %v2453 = vpop.f32.mrb[0].mxu0
    %v2454 = vadd.f32 0.0, %v2453
    %v2455 = vpop.f32.mrb[0].mxu0
    %v2456 = vadd.f32 0.0, %v2455
    %2457 = vdwg.mxu0
    %2458 = vmatprep.subr.mxu0 %v1965
    %2459 = vmatpush1.msra.mxu0 %v1964
    %2460 = vmatprep.subr.mxu0 %v1969
    %2461 = vmatpush1.msra.mxu0 %v1968
    %2462 = vmatprep.subr.mxu0 %v1973
    %2463 = vmatpush1.msra.mxu0 %v1972
    %2464 = vmatprep.subr.mxu0 %v1977
    %2465 = vmatpush1.msra.mxu0 %v1976
    %2466 = vmatprep.subr.mxu0 %v1981
    %2467 = vmatpush1.msra.mxu0 %v1980
    %2468 = vmatprep.subr.mxu0 %v1985
    %2469 = vmatpush1.msra.mxu0 %v1984
    %2470 = vmatprep.subr.mxu0 %v1989
    %2471 = vmatpush1.msra.mxu0 %v1988
    %2472 = vmatprep.subr.mxu0 %v1993
    %2473 = vmatpush1.msra.mxu0 %v1992
    %2474 = vmatprep.subr.mxu0 %v1997
    %2475 = vmatpush1.msra.mxu0 %v1996
    %2476 = vmatprep.subr.mxu0 %v2001
    %2477 = vmatpush1.msra.mxu0 %v2000
    %2478 = vmatprep.subr.mxu0 %v2005
    %2479 = vmatpush1.msra.mxu0 %v2004
    %2480 = vmatprep.subr.mxu0 %v2009
    %2481 = vmatpush1.msra.mxu0 %v2008
    %2482 = vmatprep.subr.mxu0 %v2013
    %2483 = vmatpush1.msra.mxu0 %v2012
    %2484 = vmatprep.subr.mxu0 %v2017
    %2485 = vmatpush1.msra.mxu0 %v2016
    %2486 = vmatprep.subr.mxu0 %v2021
    %2487 = vmatpush1.msra.mxu0 %v2020
    %2488 = vmatprep.subr.mxu0 %v2025
    %2489 = vmatpush1.msra.mxu0 %v2024
    %2490 = vmatprep.subr.mxu0 0.0
    %2491 = vmatpush1.msra.mxu0 0.0
    %2492 = vmatprep.subr.mxu0 0.0
    %2493 = vmatpush1.msra.mxu0 0.0
    %2494 = vmatprep.subr.mxu0 0.0
    %2495 = vmatpush1.msra.mxu0 0.0
    %2496 = vmatprep.subr.mxu0 0.0
    %2497 = vmatpush1.msra.mxu0 0.0
    %2498 = vmatprep.subr.mxu0 0.0
    %2499 = vmatpush1.msra.mxu0 0.0
    %2500 = vmatprep.subr.mxu0 0.0
    %2501 = vmatpush1.msra.mxu0 0.0
    %2502 = vmatprep.subr.mxu0 0.0
    %2503 = vmatpush1.msra.mxu0 0.0
    %2504 = vmatprep.subr.mxu0 0.0
    %2505 = vmatpush1.msra.mxu0 0.0
    %2506 = vmatprep.subr.mxu0 0.0
    %2507 = vmatpush1.msra.mxu0 0.0
    %2508 = vmatprep.subr.mxu0 0.0
    %2509 = vmatpush1.msra.mxu0 0.0
    %2510 = vmatprep.subr.mxu0 0.0
    %2511 = vmatpush1.msra.mxu0 0.0
    %2512 = vmatprep.subr.mxu0 0.0
    %2513 = vmatpush1.msra.mxu0 0.0
    %2514 = vmatprep.subr.mxu0 0.0
    %2515 = vmatpush1.msra.mxu0 0.0
    %2516 = vmatprep.subr.mxu0 0.0
    %2517 = vmatpush1.msra.mxu0 0.0
    %2518 = vmatprep.subr.mxu0 0.0
    %2519 = vmatpush1.msra.mxu0 0.0
    %2520 = vmatprep.subr.mxu0 0.0
    %2521 = vmatpush1.msra.mxu0 0.0
    %2522 = vmatprep.mubr.f32.mxu0 0.0
    %2523 = vmatmul.mubr.f32.gmra.mrb[0].mxu0 %v2380
    %v2524 = vpop.f32.mrb[0].mxu0
    %v2525 = vadd.f32 0.0, %v2524
    %v2526 = vpop.f32.mrb[0].mxu0
    %v2527 = vadd.f32 0.0, %v2526
    %2528 = vdwg.mxu0
    %v2529 = vadd.f32 %v2383, %v2454
    %v2530 = vadd.f32 %v2384, %v2456
    %v2531 = vadd.f32 %v2385, %v2525
    %v2532 = vadd.f32 %v2386, %v2527
    %v2533 = vxor.u32 %v2529, 2147483648
    %v2534 = vxor.u32 %v2530, 2147483648
    %v2535 = vxor.u32 %v2531, 2147483648
    %v2536 = vmul.f32 %v2533, 1.442695
    %v2537 = vpow.pop %v2536
    %v2538 = vmul.f32 %v2534, 1.442695
    %v2539 = vpow.pop %v2538
    %v2540 = vmul.f32 %v2535, 1.442695
    %v2541 = vpow.pop %v2540
    %v2542 = vadd.f32 %v2537, 1.0
    %v2543 = vadd.f32 %v2539, 1.0
    %v2544 = vadd.f32 %v2541, 1.0
    %v2545 = vrcp.pop %v2542
    %v2546 = vmul.f32 1.0, %v2545
    %v2547 = vrcp.pop %v2543
    %v2548 = vmul.f32 1.0, %v2547
    %v2549 = vrcp.pop %v2544
    %v2550 = vmul.f32 1.0, %v2549
    %v2551 = vtanh.pop %v2532
    %v2552 = vmul.f32 %v2548, %v2382
    %v2553 = vmul.f32 %v2546, %v2551
    %v2554 = vadd.f32 %v2552, %v2553
    %v2555 = vtanh.pop %v2554
    %v2556 = vmul.f32 %v2550, %v2555
    %v2557 = vld [vmem:[%s720] sm:$0xff]
    %v2558 = vld [vmem:[%s720 + $0x8] sm:$0xff]
    %v2559 = vld [vmem:[%s720 + $0x10] sm:$0xff]
    %v2560 = vld [vmem:[%s720 + $0x18] sm:$0xff]
    %2561 = vmatprep.subr.mxu0 %v1963
    %2562 = vmatpush1.msra.mxu0 %v1962
    %2563 = vmatprep.subr.mxu0 %v1967
    %2564 = vmatpush1.msra.mxu0 %v1966
    %2565 = vmatprep.subr.mxu0 %v1971
    %2566 = vmatpush1.msra.mxu0 %v1970
    %2567 = vmatprep.subr.mxu0 %v1975
    %2568 = vmatpush1.msra.mxu0 %v1974
    %2569 = vmatprep.subr.mxu0 %v1979
    %2570 = vmatpush1.msra.mxu0 %v1978
    %2571 = vmatprep.subr.mxu0 %v1983
    %2572 = vmatpush1.msra.mxu0 %v1982
    %2573 = vmatprep.subr.mxu0 %v1987
    %2574 = vmatpush1.msra.mxu0 %v1986
    %2575 = vmatprep.subr.mxu0 %v1991
    %2576 = vmatpush1.msra.mxu0 %v1990
    %2577 = vmatprep.subr.mxu0 %v1995
    %2578 = vmatpush1.msra.mxu0 %v1994
    %2579 = vmatprep.subr.mxu0 %v1999
    %2580 = vmatpush1.msra.mxu0 %v1998
    %2581 = vmatprep.subr.mxu0 %v2003
    %2582 = vmatpush1.msra.mxu0 %v2002
    %2583 = vmatprep.subr.mxu0 %v2007
    %2584 = vmatpush1.msra.mxu0 %v2006
    %2585 = vmatprep.subr.mxu0 %v2011
    %2586 = vmatpush1.msra.mxu0 %v2010
    %2587 = vmatprep.subr.mxu0 %v2015
    %2588 = vmatpush1.msra.mxu0 %v2014
    %2589 = vmatprep.subr.mxu0 %v2019
    %2590 = vmatpush1.msra.mxu0 %v2018
    %2591 = vmatprep.subr.mxu0 %v2023
    %2592 = vmatpush1.msra.mxu0 %v2022
    %2593 = vmatprep.subr.mxu0 0.0
    %2594 = vmatpush1.msra.mxu0 0.0
    %2595 = vmatprep.subr.mxu0 0.0
    %2596 = vmatpush1.msra.mxu0 0.0
    %2597 = vmatprep.subr.mxu0 0.0
    %2598 = vmatpush1.msra.mxu0 0.0
    %2599 = vmatprep.subr.mxu0 0.0
    %2600 = vmatpush1.msra.mxu0 0.0
    %2601 = vmatprep.subr.mxu0 0.0
    %2602 = vmatpush1.msra.mxu0 0.0
    %2603 = vmatprep.subr.mxu0 0.0
    %2604 = vmatpush1.msra.mxu0 0.0
    %2605 = vmatprep.subr.mxu0 0.0
    %2606 = vmatpush1.msra.mxu0 0.0
    %2607 = vmatprep.subr.mxu0 0.0
    %2608 = vmatpush1.msra.mxu0 0.0
    %2609 = vmatprep.subr.mxu0 0.0
    %2610 = vmatpush1.msra.mxu0 0.0
    %2611 = vmatprep.subr.mxu0 0.0
    %2612 = vmatpush1.msra.mxu0 0.0
    %2613 = vmatprep.subr.mxu0 0.0
    %2614 = vmatpush1.msra.mxu0 0.0
    %2615 = vmatprep.subr.mxu0 0.0
    %2616 = vmatpush1.msra.mxu0 0.0
    %2617 = vmatprep.subr.mxu0 0.0
    %2618 = vmatpush1.msra.mxu0 0.0
    %2619 = vmatprep.subr.mxu0 0.0
    %2620 = vmatpush1.msra.mxu0 0.0
    %2621 = vmatprep.subr.mxu0 0.0
    %2622 = vmatpush1.msra.mxu0 0.0
    %2623 = vmatprep.subr.mxu0 0.0
    %2624 = vmatpush1.msra.mxu0 0.0
    %2625 = vmatprep.mubr.f32.mxu0 0.0
    %2626 = vmatmul.mubr.f32.gmra.mrb[0].mxu0 %v2556
    %v2627 = vpop.f32.mrb[0].mxu0
    %v2628 = vadd.f32 0.0, %v2627
    %v2629 = vpop.f32.mrb[0].mxu0
    %v2630 = vadd.f32 0.0, %v2629
    %2631 = vdwg.mxu0
    %2632 = vmatprep.subr.mxu0 %v1965
    %2633 = vmatpush1.msra.mxu0 %v1964
    %2634 = vmatprep.subr.mxu0 %v1969
    %2635 = vmatpush1.msra.mxu0 %v1968
    %2636 = vmatprep.subr.mxu0 %v1973
    %2637 = vmatpush1.msra.mxu0 %v1972
    %2638 = vmatprep.subr.mxu0 %v1977
    %2639 = vmatpush1.msra.mxu0 %v1976
    %2640 = vmatprep.subr.mxu0 %v1981
    %2641 = vmatpush1.msra.mxu0 %v1980
    %2642 = vmatprep.subr.mxu0 %v1985
    %2643 = vmatpush1.msra.mxu0 %v1984
    %2644 = vmatprep.subr.mxu0 %v1989
    %2645 = vmatpush1.msra.mxu0 %v1988
    %2646 = vmatprep.subr.mxu0 %v1993
    %2647 = vmatpush1.msra.mxu0 %v1992
    %2648 = vmatprep.subr.mxu0 %v1997
    %2649 = vmatpush1.msra.mxu0 %v1996
    %2650 = vmatprep.subr.mxu0 %v2001
    %2651 = vmatpush1.msra.mxu0 %v2000
    %2652 = vmatprep.subr.mxu0 %v2005
    %2653 = vmatpush1.msra.mxu0 %v2004
    %2654 = vmatprep.subr.mxu0 %v2009
    %2655 = vmatpush1.msra.mxu0 %v2008
    %2656 = vmatprep.subr.mxu0 %v2013
    %2657 = vmatpush1.msra.mxu0 %v2012
    %2658 = vmatprep.subr.mxu0 %v2017
    %2659 = vmatpush1.msra.mxu0 %v2016
    %2660 = vmatprep.subr.mxu0 %v2021
    %2661 = vmatpush1.msra.mxu0 %v2020
    %2662 = vmatprep.subr.mxu0 %v2025
    %2663 = vmatpush1.msra.mxu0 %v2024
    %2664 = vmatprep.subr.mxu0 0.0
    %2665 = vmatpush1.msra.mxu0 0.0
    %2666 = vmatprep.subr.mxu0 0.0
    %2667 = vmatpush1.msra.mxu0 0.0
    %2668 = vmatprep.subr.mxu0 0.0
    %2669 = vmatpush1.msra.mxu0 0.0
    %2670 = vmatprep.subr.mxu0 0.0
    %2671 = vmatpush1.msra.mxu0 0.0
    %2672 = vmatprep.subr.mxu0 0.0
    %2673 = vmatpush1.msra.mxu0 0.0
    %2674 = vmatprep.subr.mxu0 0.0
    %2675 = vmatpush1.msra.mxu0 0.0
    %2676 = vmatprep.subr.mxu0 0.0
    %2677 = vmatpush1.msra.mxu0 0.0
    %2678 = vmatprep.subr.mxu0 0.0
    %2679 = vmatpush1.msra.mxu0 0.0
    %2680 = vmatprep.subr.mxu0 0.0
    %2681 = vmatpush1.msra.mxu0 0.0
    %2682 = vmatprep.subr.mxu0 0.0
    %2683 = vmatpush1.msra.mxu0 0.0
    %2684 = vmatprep.subr.mxu0 0.0
    %2685 = vmatpush1.msra.mxu0 0.0
    %2686 = vmatprep.subr.mxu0 0.0
    %2687 = vmatpush1.msra.mxu0 0.0
    %2688 = vmatprep.subr.mxu0 0.0
    %2689 = vmatpush1.msra.mxu0 0.0
    %2690 = vmatprep.subr.mxu0 0.0
    %2691 = vmatpush1.msra.mxu0 0.0
    %2692 = vmatprep.subr.mxu0 0.0
    %2693 = vmatpush1.msra.mxu0 0.0
    %2694 = vmatprep.subr.mxu0 0.0
    %2695 = vmatpush1.msra.mxu0 0.0
    %2696 = vmatprep.mubr.f32.mxu0 0.0
    %2697 = vmatmul.mubr.f32.gmra.mrb[0].mxu0 %v2556
    %v2698 = vpop.f32.mrb[0].mxu0
    %v2699 = vadd.f32 0.0, %v2698
    %v2700 = vpop.f32.mrb[0].mxu0
    %v2701 = vadd.f32 0.0, %v2700
    %2702 = vdwg.mxu0
    %v2703 = vadd.f32 %v2557, %v2628
    %v2704 = vadd.f32 %v2558, %v2630
    %v2705 = vadd.f32 %v2559, %v2699
    %v2706 = vadd.f32 %v2560, %v2701
    %v2707 = vxor.u32 %v2703, 2147483648
    %v2708 = vxor.u32 %v2704, 2147483648
    %v2709 = vxor.u32 %v2705, 2147483648
    %v2710 = vmul.f32 %v2707, 1.442695
    %v2711 = vpow.pop %v2710
    %v2712 = vmul.f32 %v2708, 1.442695
    %v2713 = vpow.pop %v2712
    %v2714 = vmul.f32 %v2709, 1.442695
    %v2715 = vpow.pop %v2714
    %v2716 = vadd.f32 %v2711, 1.0
    %v2717 = vadd.f32 %v2713, 1.0
    %v2718 = vadd.f32 %v2715, 1.0
    %v2719 = vrcp.pop %v2716
    %v2720 = vmul.f32 1.0, %v2719
    %v2721 = vrcp.pop %v2717
    %v2722 = vmul.f32 1.0, %v2721
    %v2723 = vrcp.pop %v2718
    %v2724 = vmul.f32 1.0, %v2723
    %v2725 = vtanh.pop %v2706
    %v2726 = vmul.f32 %v2722, %v2554
    %v2727 = vmul.f32 %v2720, %v2725
    %v2728 = vadd.f32 %v2726, %v2727
    %v2729 = vtanh.pop %v2728
    %v2730 = vmul.f32 %v2724, %v2729
    %v2731 = vld [vmem:[%s897] sm:$0xff]
    %v2732 = vld [vmem:[%s897 + $0x8] sm:$0xff]
    %v2733 = vld [vmem:[%s897 + $0x10] sm:$0xff]
    %v2734 = vld [vmem:[%s897 + $0x18] sm:$0xff]
    %2735 = vmatprep.subr.mxu0 %v1963
    %2736 = vmatpush1.msra.mxu0 %v1962
    %2737 = vmatprep.subr.mxu0 %v1967
    %2738 = vmatpush1.msra.mxu0 %v1966
    %2739 = vmatprep.subr.mxu0 %v1971
    %2740 = vmatpush1.msra.mxu0 %v1970
    %2741 = vmatprep.subr.mxu0 %v1975
    %2742 = vmatpush1.msra.mxu0 %v1974
    %2743 = vmatprep.subr.mxu0 %v1979
    %2744 = vmatpush1.msra.mxu0 %v1978
    %2745 = vmatprep.subr.mxu0 %v1983
    %2746 = vmatpush1.msra.mxu0 %v1982
    %2747 = vmatprep.subr.mxu0 %v1987
    %2748 = vmatpush1.msra.mxu0 %v1986
    %2749 = vmatprep.subr.mxu0 %v1991
    %2750 = vmatpush1.msra.mxu0 %v1990
    %2751 = vmatprep.subr.mxu0 %v1995
    %2752 = vmatpush1.msra.mxu0 %v1994
    %2753 = vmatprep.subr.mxu0 %v1999
    %2754 = vmatpush1.msra.mxu0 %v1998
    %2755 = vmatprep.subr.mxu0 %v2003
    %2756 = vmatpush1.msra.mxu0 %v2002
    %2757 = vmatprep.subr.mxu0 %v2007
    %2758 = vmatpush1.msra.mxu0 %v2006
    %2759 = vmatprep.subr.mxu0 %v2011
    %2760 = vmatpush1.msra.mxu0 %v2010
    %2761 = vmatprep.subr.mxu0 %v2015
    %2762 = vmatpush1.msra.mxu0 %v2014
    %2763 = vmatprep.subr.mxu0 %v2019
    %2764 = vmatpush1.msra.mxu0 %v2018
    %2765 = vmatprep.subr.mxu0 %v2023
    %2766 = vmatpush1.msra.mxu0 %v2022
    %2767 = vmatprep.subr.mxu0 0.0
    %2768 = vmatpush1.msra.mxu0 0.0
    %2769 = vmatprep.subr.mxu0 0.0
    %2770 = vmatpush1.msra.mxu0 0.0
    %2771 = vmatprep.subr.mxu0 0.0
    %2772 = vmatpush1.msra.mxu0 0.0
    %2773 = vmatprep.subr.mxu0 0.0
    %2774 = vmatpush1.msra.mxu0 0.0
    %2775 = vmatprep.subr.mxu0 0.0
    %2776 = vmatpush1.msra.mxu0 0.0
    %2777 = vmatprep.subr.mxu0 0.0
    %2778 = vmatpush1.msra.mxu0 0.0
    %2779 = vmatprep.subr.mxu0 0.0
    %2780 = vmatpush1.msra.mxu0 0.0
    %2781 = vmatprep.subr.mxu0 0.0
    %2782 = vmatpush1.msra.mxu0 0.0
    %2783 = vmatprep.subr.mxu0 0.0
    %2784 = vmatpush1.msra.mxu0 0.0
    %2785 = vmatprep.subr.mxu0 0.0
    %2786 = vmatpush1.msra.mxu0 0.0
    %2787 = vmatprep.subr.mxu0 0.0
    %2788 = vmatpush1.msra.mxu0 0.0
    %2789 = vmatprep.subr.mxu0 0.0
    %2790 = vmatpush1.msra.mxu0 0.0
    %2791 = vmatprep.subr.mxu0 0.0
    %2792 = vmatpush1.msra.mxu0 0.0
    %2793 = vmatprep.subr.mxu0 0.0
    %2794 = vmatpush1.msra.mxu0 0.0
    %2795 = vmatprep.subr.mxu0 0.0
    %2796 = vmatpush1.msra.mxu0 0.0
    %2797 = vmatprep.subr.mxu0 0.0
    %2798 = vmatpush1.msra.mxu0 0.0
    %2799 = vmatprep.mubr.f32.mxu0 0.0
    %2800 = vmatmul.mubr.f32.gmra.mrb[0].mxu0 %v2730
    %v2801 = vpop.f32.mrb[0].mxu0
    %v2802 = vadd.f32 0.0, %v2801
    %v2803 = vpop.f32.mrb[0].mxu0
    %v2804 = vadd.f32 0.0, %v2803
    %2805 = vdwg.mxu0
    %2806 = vmatprep.subr.mxu0 %v1965
    %2807 = vmatpush1.msra.mxu0 %v1964
    %2808 = vmatprep.subr.mxu0 %v1969
    %2809 = vmatpush1.msra.mxu0 %v1968
    %2810 = vmatprep.subr.mxu0 %v1973
    %2811 = vmatpush1.msra.mxu0 %v1972
    %2812 = vmatprep.subr.mxu0 %v1977
    %2813 = vmatpush1.msra.mxu0 %v1976
    %2814 = vmatprep.subr.mxu0 %v1981
    %2815 = vmatpush1.msra.mxu0 %v1980
    %2816 = vmatprep.subr.mxu0 %v1985
    %2817 = vmatpush1.msra.mxu0 %v1984
    %2818 = vmatprep.subr.mxu0 %v1989
    %2819 = vmatpush1.msra.mxu0 %v1988
    %2820 = vmatprep.subr.mxu0 %v1993
    %2821 = vmatpush1.msra.mxu0 %v1992
    %2822 = vmatprep.subr.mxu0 %v1997
    %2823 = vmatpush1.msra.mxu0 %v1996
    %2824 = vmatprep.subr.mxu0 %v2001
    %2825 = vmatpush1.msra.mxu0 %v2000
    %2826 = vmatprep.subr.mxu0 %v2005
    %2827 = vmatpush1.msra.mxu0 %v2004
    %2828 = vmatprep.subr.mxu0 %v2009
    %2829 = vmatpush1.msra.mxu0 %v2008
    %2830 = vmatprep.subr.mxu0 %v2013
    %2831 = vmatpush1.msra.mxu0 %v2012
    %2832 = vmatprep.subr.mxu0 %v2017
    %2833 = vmatpush1.msra.mxu0 %v2016
    %2834 = vmatprep.subr.mxu0 %v2021
    %2835 = vmatpush1.msra.mxu0 %v2020
    %2836 = vmatprep.subr.mxu0 %v2025
    %2837 = vmatpush1.msra.mxu0 %v2024
    %2838 = vmatprep.subr.mxu0 0.0
    %2839 = vmatpush1.msra.mxu0 0.0
    %2840 = vmatprep.subr.mxu0 0.0
    %2841 = vmatpush1.msra.mxu0 0.0
    %2842 = vmatprep.subr.mxu0 0.0
    %2843 = vmatpush1.msra.mxu0 0.0
    %2844 = vmatprep.subr.mxu0 0.0
    %2845 = vmatpush1.msra.mxu0 0.0
    %2846 = vmatprep.subr.mxu0 0.0
    %2847 = vmatpush1.msra.mxu0 0.0
    %2848 = vmatprep.subr.mxu0 0.0
    %2849 = vmatpush1.msra.mxu0 0.0
    %2850 = vmatprep.subr.mxu0 0.0
    %2851 = vmatpush1.msra.mxu0 0.0
    %2852 = vmatprep.subr.mxu0 0.0
    %2853 = vmatpush1.msra.mxu0 0.0
    %2854 = vmatprep.subr.mxu0 0.0
    %2855 = vmatpush1.msra.mxu0 0.0
    %2856 = vmatprep.subr.mxu0 0.0
    %2857 = vmatpush1.msra.mxu0 0.0
    %2858 = vmatprep.subr.mxu0 0.0
    %2859 = vmatpush1.msra.mxu0 0.0
    %2860 = vmatprep.subr.mxu0 0.0
    %2861 = vmatpush1.msra.mxu0 0.0
    %2862 = vmatprep.subr.mxu0 0.0
    %2863 = vmatpush1.msra.mxu0 0.0
    %2864 = vmatprep.subr.mxu0 0.0
    %2865 = vmatpush1.msra.mxu0 0.0
    %2866 = vmatprep.subr.mxu0 0.0
    %2867 = vmatpush1.msra.mxu0 0.0
    %2868 = vmatprep.subr.mxu0 0.0
    %2869 = vmatpush1.msra.mxu0 0.0
    %2870 = vmatprep.mubr.f32.mxu0 0.0
    %2871 = vmatmul.mubr.f32.gmra.mrb[0].mxu0 %v2730
    %v2872 = vpop.f32.mrb[0].mxu0
    %v2873 = vadd.f32 0.0, %v2872
    %v2874 = vpop.f32.mrb[0].mxu0
    %v2875 = vadd.f32 0.0, %v2874
    %2876 = vdwg.mxu0
    %v2877 = vadd.f32 %v2731, %v2802
    %v2878 = vadd.f32 %v2732, %v2804
    %v2879 = vadd.f32 %v2733, %v2873
    %v2880 = vadd.f32 %v2734, %v2875
    %v2881 = vxor.u32 %v2877, 2147483648
    %v2882 = vxor.u32 %v2878, 2147483648
    %v2883 = vxor.u32 %v2879, 2147483648
    %v2884 = vmul.f32 %v2881, 1.442695
    %v2885 = vpow.pop %v2884
    %v2886 = vmul.f32 %v2882, 1.442695
    %v2887 = vpow.pop %v2886
    %v2888 = vmul.f32 %v2883, 1.442695
    %v2889 = vpow.pop %v2888
    %v2890 = vadd.f32 %v2885, 1.0
    %v2891 = vadd.f32 %v2887, 1.0
    %v2892 = vadd.f32 %v2889, 1.0
    %v2893 = vrcp.pop %v2890
    %v2894 = vmul.f32 1.0, %v2893
    %v2895 = vrcp.pop %v2891
    %v2896 = vmul.f32 1.0, %v2895
    %v2897 = vrcp.pop %v2892
    %v2898 = vmul.f32 1.0, %v2897
    %v2899 = vtanh.pop %v2880
    %v2900 = vmul.f32 %v2896, %v2728
    %v2901 = vmul.f32 %v2894, %v2899
    %v2902 = vadd.f32 %v2900, %v2901
    %v2903 = vtanh.pop %v2902
    %v2904 = vmul.f32 %v2898, %v2903
    %v2905 = vld [vmem:[%s1074] sm:$0xff]
    %v2906 = vld [vmem:[%s1074 + $0x8] sm:$0xff]
    %v2907 = vld [vmem:[%s1074 + $0x10] sm:$0xff]
    %v2908 = vld [vmem:[%s1074 + $0x18] sm:$0xff]
    %2909 = vmatprep.subr.mxu0 %v1963
    %2910 = vmatpush1.msra.mxu0 %v1962
    %2911 = vmatprep.subr.mxu0 %v1967
    %2912 = vmatpush1.msra.mxu0 %v1966
    %2913 = vmatprep.subr.mxu0 %v1971
    %2914 = vmatpush1.msra.mxu0 %v1970
    %2915 = vmatprep.subr.mxu0 %v1975
    %2916 = vmatpush1.msra.mxu0 %v1974
    %2917 = vmatprep.subr.mxu0 %v1979
    %2918 = vmatpush1.msra.mxu0 %v1978
    %2919 = vmatprep.subr.mxu0 %v1983
    %2920 = vmatpush1.msra.mxu0 %v1982
    %2921 = vmatprep.subr.mxu0 %v1987
    %2922 = vmatpush1.msra.mxu0 %v1986
    %2923 = vmatprep.subr.mxu0 %v1991
    %2924 = vmatpush1.msra.mxu0 %v1990
    %2925 = vmatprep.subr.mxu0 %v1995
    %2926 = vmatpush1.msra.mxu0 %v1994
    %2927 = vmatprep.subr.mxu0 %v1999
    %2928 = vmatpush1.msra.mxu0 %v1998
    %2929 = vmatprep.subr.mxu0 %v2003
    %2930 = vmatpush1.msra.mxu0 %v2002
    %2931 = vmatprep.subr.mxu0 %v2007
    %2932 = vmatpush1.msra.mxu0 %v2006
    %2933 = vmatprep.subr.mxu0 %v2011
    %2934 = vmatpush1.msra.mxu0 %v2010
    %2935 = vmatprep.subr.mxu0 %v2015
    %2936 = vmatpush1.msra.mxu0 %v2014
    %2937 = vmatprep.subr.mxu0 %v2019
    %2938 = vmatpush1.msra.mxu0 %v2018
    %2939 = vmatprep.subr.mxu0 %v2023
    %2940 = vmatpush1.msra.mxu0 %v2022
    %2941 = vmatprep.subr.mxu0 0.0
    %2942 = vmatpush1.msra.mxu0 0.0
    %2943 = vmatprep.subr.mxu0 0.0
    %2944 = vmatpush1.msra.mxu0 0.0
    %2945 = vmatprep.subr.mxu0 0.0
    %2946 = vmatpush1.msra.mxu0 0.0
    %2947 = vmatprep.subr.mxu0 0.0
    %2948 = vmatpush1.msra.mxu0 0.0
    %2949 = vmatprep.subr.mxu0 0.0
    %2950 = vmatpush1.msra.mxu0 0.0
    %2951 = vmatprep.subr.mxu0 0.0
    %2952 = vmatpush1.msra.mxu0 0.0
    %2953 = vmatprep.subr.mxu0 0.0
    %2954 = vmatpush1.msra.mxu0 0.0
    %2955 = vmatprep.subr.mxu0 0.0
    %2956 = vmatpush1.msra.mxu0 0.0
    %2957 = vmatprep.subr.mxu0 0.0
    %2958 = vmatpush1.msra.mxu0 0.0
    %2959 = vmatprep.subr.mxu0 0.0
    %2960 = vmatpush1.msra.mxu0 0.0
    %2961 = vmatprep.subr.mxu0 0.0
    %2962 = vmatpush1.msra.mxu0 0.0
    %2963 = vmatprep.subr.mxu0 0.0
    %2964 = vmatpush1.msra.mxu0 0.0
    %2965 = vmatprep.subr.mxu0 0.0
    %2966 = vmatpush1.msra.mxu0 0.0
    %2967 = vmatprep.subr.mxu0 0.0
    %2968 = vmatpush1.msra.mxu0 0.0
    %2969 = vmatprep.subr.mxu0 0.0
    %2970 = vmatpush1.msra.mxu0 0.0
    %2971 = vmatprep.subr.mxu0 0.0
    %2972 = vmatpush1.msra.mxu0 0.0
    %2973 = vmatprep.mubr.f32.mxu0 0.0
    %2974 = vmatmul.mubr.f32.gmra.mrb[0].mxu0 %v2904
    %v2975 = vpop.f32.mrb[0].mxu0
    %v2976 = vadd.f32 0.0, %v2975
    %v2977 = vpop.f32.mrb[0].mxu0
    %v2978 = vadd.f32 0.0, %v2977
    %2979 = vdwg.mxu0
    %2980 = vmatprep.subr.mxu0 %v1965
    %2981 = vmatpush1.msra.mxu0 %v1964
    %2982 = vmatprep.subr.mxu0 %v1969
    %2983 = vmatpush1.msra.mxu0 %v1968
    %2984 = vmatprep.subr.mxu0 %v1973
    %2985 = vmatpush1.msra.mxu0 %v1972
    %2986 = vmatprep.subr.mxu0 %v1977
    %2987 = vmatpush1.msra.mxu0 %v1976
    %2988 = vmatprep.subr.mxu0 %v1981
    %2989 = vmatpush1.msra.mxu0 %v1980
    %2990 = vmatprep.subr.mxu0 %v1985
    %2991 = vmatpush1.msra.mxu0 %v1984
    %2992 = vmatprep.subr.mxu0 %v1989
    %2993 = vmatpush1.msra.mxu0 %v1988
    %2994 = vmatprep.subr.mxu0 %v1993
    %2995 = vmatpush1.msra.mxu0 %v1992
    %2996 = vmatprep.subr.mxu0 %v1997
    %2997 = vmatpush1.msra.mxu0 %v1996
    %2998 = vmatprep.subr.mxu0 %v2001
    %2999 = vmatpush1.msra.mxu0 %v2000
    %3000 = vmatprep.subr.mxu0 %v2005
    %3001 = vmatpush1.msra.mxu0 %v2004
    %3002 = vmatprep.subr.mxu0 %v2009
    %3003 = vmatpush1.msra.mxu0 %v2008
    %3004 = vmatprep.subr.mxu0 %v2013
    %3005 = vmatpush1.msra.mxu0 %v2012
    %3006 = vmatprep.subr.mxu0 %v2017
    %3007 = vmatpush1.msra.mxu0 %v2016
    %3008 = vmatprep.subr.mxu0 %v2021
    %3009 = vmatpush1.msra.mxu0 %v2020
    %3010 = vmatprep.subr.mxu0 %v2025
    %3011 = vmatpush1.msra.mxu0 %v2024
    %3012 = vmatprep.subr.mxu0 0.0
    %3013 = vmatpush1.msra.mxu0 0.0
    %3014 = vmatprep.subr.mxu0 0.0
    %3015 = vmatpush1.msra.mxu0 0.0
    %3016 = vmatprep.subr.mxu0 0.0
    %3017 = vmatpush1.msra.mxu0 0.0
    %3018 = vmatprep.subr.mxu0 0.0
    %3019 = vmatpush1.msra.mxu0 0.0
    %3020 = vmatprep.subr.mxu0 0.0
    %3021 = vmatpush1.msra.mxu0 0.0
    %3022 = vmatprep.subr.mxu0 0.0
    %3023 = vmatpush1.msra.mxu0 0.0
    %3024 = vmatprep.subr.mxu0 0.0
    %3025 = vmatpush1.msra.mxu0 0.0
    %3026 = vmatprep.subr.mxu0 0.0
    %3027 = vmatpush1.msra.mxu0 0.0
    %3028 = vmatprep.subr.mxu0 0.0
    %3029 = vmatpush1.msra.mxu0 0.0
    %3030 = vmatprep.subr.mxu0 0.0
    %3031 = vmatpush1.msra.mxu0 0.0
    %3032 = vmatprep.subr.mxu0 0.0
    %3033 = vmatpush1.msra.mxu0 0.0
    %3034 = vmatprep.subr.mxu0 0.0
    %3035 = vmatpush1.msra.mxu0 0.0
    %3036 = vmatprep.subr.mxu0 0.0
    %3037 = vmatpush1.msra.mxu0 0.0
    %3038 = vmatprep.subr.mxu0 0.0
    %3039 = vmatpush1.msra.mxu0 0.0
    %3040 = vmatprep.subr.mxu0 0.0
    %3041 = vmatpush1.msra.mxu0 0.0
    %3042 = vmatprep.subr.mxu0 0.0
    %3043 = vmatpush1.msra.mxu0 0.0
    %3044 = vmatprep.mubr.f32.mxu0 0.0
    %3045 = vmatmul.mubr.f32.gmra.mrb[0].mxu0 %v2904
    %v3046 = vpop.f32.mrb[0].mxu0
    %v3047 = vadd.f32 0.0, %v3046
    %v3048 = vpop.f32.mrb[0].mxu0
    %v3049 = vadd.f32 0.0, %v3048
    %3050 = vdwg.mxu0
    %v3051 = vadd.f32 %v2905, %v2976
    %v3052 = vadd.f32 %v2906, %v2978
    %v3053 = vadd.f32 %v2907, %v3047
    %v3054 = vadd.f32 %v2908, %v3049
    %v3055 = vxor.u32 %v3051, 2147483648
    %v3056 = vxor.u32 %v3052, 2147483648
    %v3057 = vxor.u32 %v3053, 2147483648
    %v3058 = vmul.f32 %v3055, 1.442695
    %v3059 = vpow.pop %v3058
    %v3060 = vmul.f32 %v3056, 1.442695
    %v3061 = vpow.pop %v3060
    %v3062 = vmul.f32 %v3057, 1.442695
    %v3063 = vpow.pop %v3062
    %v3064 = vadd.f32 %v3059, 1.0
    %v3065 = vadd.f32 %v3061, 1.0
    %v3066 = vadd.f32 %v3063, 1.0
    %v3067 = vrcp.pop %v3064
    %v3068 = vmul.f32 1.0, %v3067
    %v3069 = vrcp.pop %v3065
    %v3070 = vmul.f32 1.0, %v3069
    %v3071 = vrcp.pop %v3066
    %v3072 = vmul.f32 1.0, %v3071
    %v3073 = vtanh.pop %v3054
    %v3074 = vmul.f32 %v3070, %v2902
    %v3075 = vmul.f32 %v3068, %v3073
    %v3076 = vadd.f32 %v3074, %v3075
    %v3077 = vtanh.pop %v3076
    %v3078 = vmul.f32 %v3072, %v3077
    %v3079 = vld [vmem:[%s1251] sm:$0xff]
    %v3080 = vld [vmem:[%s1251 + $0x8] sm:$0xff]
    %v3081 = vld [vmem:[%s1251 + $0x10] sm:$0xff]
    %v3082 = vld [vmem:[%s1251 + $0x18] sm:$0xff]
    %3083 = vmatprep.subr.mxu0 %v1963
    %3084 = vmatpush1.msra.mxu0 %v1962
    %3085 = vmatprep.subr.mxu0 %v1967
    %3086 = vmatpush1.msra.mxu0 %v1966
    %3087 = vmatprep.subr.mxu0 %v1971
    %3088 = vmatpush1.msra.mxu0 %v1970
    %3089 = vmatprep.subr.mxu0 %v1975
    %3090 = vmatpush1.msra.mxu0 %v1974
    %3091 = vmatprep.subr.mxu0 %v1979
    %3092 = vmatpush1.msra.mxu0 %v1978
    %3093 = vmatprep.subr.mxu0 %v1983
    %3094 = vmatpush1.msra.mxu0 %v1982
    %3095 = vmatprep.subr.mxu0 %v1987
    %3096 = vmatpush1.msra.mxu0 %v1986
    %3097 = vmatprep.subr.mxu0 %v1991
    %3098 = vmatpush1.msra.mxu0 %v1990
    %3099 = vmatprep.subr.mxu0 %v1995
    %3100 = vmatpush1.msra.mxu0 %v1994
    %3101 = vmatprep.subr.mxu0 %v1999
    %3102 = vmatpush1.msra.mxu0 %v1998
    %3103 = vmatprep.subr.mxu0 %v2003
    %3104 = vmatpush1.msra.mxu0 %v2002
    %3105 = vmatprep.subr.mxu0 %v2007
    %3106 = vmatpush1.msra.mxu0 %v2006
    %3107 = vmatprep.subr.mxu0 %v2011
    %3108 = vmatpush1.msra.mxu0 %v2010
    %3109 = vmatprep.subr.mxu0 %v2015
    %3110 = vmatpush1.msra.mxu0 %v2014
    %3111 = vmatprep.subr.mxu0 %v2019
    %3112 = vmatpush1.msra.mxu0 %v2018
    %3113 = vmatprep.subr.mxu0 %v2023
    %3114 = vmatpush1.msra.mxu0 %v2022
    %3115 = vmatprep.subr.mxu0 0.0
    %3116 = vmatpush1.msra.mxu0 0.0
    %3117 = vmatprep.subr.mxu0 0.0
    %3118 = vmatpush1.msra.mxu0 0.0
    %3119 = vmatprep.subr.mxu0 0.0
    %3120 = vmatpush1.msra.mxu0 0.0
    %3121 = vmatprep.subr.mxu0 0.0
    %3122 = vmatpush1.msra.mxu0 0.0
    %3123 = vmatprep.subr.mxu0 0.0
    %3124 = vmatpush1.msra.mxu0 0.0
    %3125 = vmatprep.subr.mxu0 0.0
    %3126 = vmatpush1.msra.mxu0 0.0
    %3127 = vmatprep.subr.mxu0 0.0
    %3128 = vmatpush1.msra.mxu0 0.0
    %3129 = vmatprep.subr.mxu0 0.0
    %3130 = vmatpush1.msra.mxu0 0.0
    %3131 = vmatprep.subr.mxu0 0.0
    %3132 = vmatpush1.msra.mxu0 0.0
    %3133 = vmatprep.subr.mxu0 0.0
    %3134 = vmatpush1.msra.mxu0 0.0
    %3135 = vmatprep.subr.mxu0 0.0
    %3136 = vmatpush1.msra.mxu0 0.0
    %3137 = vmatprep.subr.mxu0 0.0
    %3138 = vmatpush1.msra.mxu0 0.0
    %3139 = vmatprep.subr.mxu0 0.0
    %3140 = vmatpush1.msra.mxu0 0.0
    %3141 = vmatprep.subr.mxu0 0.0
    %3142 = vmatpush1.msra.mxu0 0.0
    %3143 = vmatprep.subr.mxu0 0.0
    %3144 = vmatpush1.msra.mxu0 0.0
    %3145 = vmatprep.subr.mxu0 0.0
    %3146 = vmatpush1.msra.mxu0 0.0
    %3147 = vmatprep.mubr.f32.mxu0 0.0
    %3148 = vmatmul.mubr.f32.gmra.mrb[0].mxu0 %v3078
    %v3149 = vpop.f32.mrb[0].mxu0
    %v3150 = vadd.f32 0.0, %v3149
    %v3151 = vpop.f32.mrb[0].mxu0
    %v3152 = vadd.f32 0.0, %v3151
    %3153 = vdwg.mxu0
    %3154 = vmatprep.subr.mxu0 %v1965
    %3155 = vmatpush1.msra.mxu0 %v1964
    %3156 = vmatprep.subr.mxu0 %v1969
    %3157 = vmatpush1.msra.mxu0 %v1968
    %3158 = vmatprep.subr.mxu0 %v1973
    %3159 = vmatpush1.msra.mxu0 %v1972
    %3160 = vmatprep.subr.mxu0 %v1977
    %3161 = vmatpush1.msra.mxu0 %v1976
    %3162 = vmatprep.subr.mxu0 %v1981
    %3163 = vmatpush1.msra.mxu0 %v1980
    %3164 = vmatprep.subr.mxu0 %v1985
    %3165 = vmatpush1.msra.mxu0 %v1984
    %3166 = vmatprep.subr.mxu0 %v1989
    %3167 = vmatpush1.msra.mxu0 %v1988
    %3168 = vmatprep.subr.mxu0 %v1993
    %3169 = vmatpush1.msra.mxu0 %v1992
    %3170 = vmatprep.subr.mxu0 %v1997
    %3171 = vmatpush1.msra.mxu0 %v1996
    %3172 = vmatprep.subr.mxu0 %v2001
    %3173 = vmatpush1.msra.mxu0 %v2000
    %3174 = vmatprep.subr.mxu0 %v2005
    %3175 = vmatpush1.msra.mxu0 %v2004
    %3176 = vmatprep.subr.mxu0 %v2009
    %3177 = vmatpush1.msra.mxu0 %v2008
    %3178 = vmatprep.subr.mxu0 %v2013
    %3179 = vmatpush1.msra.mxu0 %v2012
    %3180 = vmatprep.subr.mxu0 %v2017
    %3181 = vmatpush1.msra.mxu0 %v2016
    %3182 = vmatprep.subr.mxu0 %v2021
    %3183 = vmatpush1.msra.mxu0 %v2020
    %3184 = vmatprep.subr.mxu0 %v2025
    %3185 = vmatpush1.msra.mxu0 %v2024
    %3186 = vmatprep.subr.mxu0 0.0
    %3187 = vmatpush1.msra.mxu0 0.0
    %3188 = vmatprep.subr.mxu0 0.0
    %3189 = vmatpush1.msra.mxu0 0.0
    %3190 = vmatprep.subr.mxu0 0.0
    %3191 = vmatpush1.msra.mxu0 0.0
    %3192 = vmatprep.subr.mxu0 0.0
    %3193 = vmatpush1.msra.mxu0 0.0
    %3194 = vmatprep.subr.mxu0 0.0
    %3195 = vmatpush1.msra.mxu0 0.0
    %3196 = vmatprep.subr.mxu0 0.0
    %3197 = vmatpush1.msra.mxu0 0.0
    %3198 = vmatprep.subr.mxu0 0.0
    %3199 = vmatpush1.msra.mxu0 0.0
    %3200 = vmatprep.subr.mxu0 0.0
    %3201 = vmatpush1.msra.mxu0 0.0
    %3202 = vmatprep.subr.mxu0 0.0
    %3203 = vmatpush1.msra.mxu0 0.0
    %3204 = vmatprep.subr.mxu0 0.0
    %3205 = vmatpush1.msra.mxu0 0.0
    %3206 = vmatprep.subr.mxu0 0.0
    %3207 = vmatpush1.msra.mxu0 0.0
    %3208 = vmatprep.subr.mxu0 0.0
    %3209 = vmatpush1.msra.mxu0 0.0
    %3210 = vmatprep.subr.mxu0 0.0
    %3211 = vmatpush1.msra.mxu0 0.0
    %3212 = vmatprep.subr.mxu0 0.0
    %3213 = vmatpush1.msra.mxu0 0.0
    %3214 = vmatprep.subr.mxu0 0.0
    %3215 = vmatpush1.msra.mxu0 0.0
    %3216 = vmatprep.subr.mxu0 0.0
    %3217 = vmatpush1.msra.mxu0 0.0
    %3218 = vmatprep.mubr.f32.mxu0 0.0
    %3219 = vmatmul.mubr.f32.gmra.mrb[0].mxu0 %v3078
    %v3220 = vpop.f32.mrb[0].mxu0
    %v3221 = vadd.f32 0.0, %v3220
    %v3222 = vpop.f32.mrb[0].mxu0
    %v3223 = vadd.f32 0.0, %v3222
    %3224 = vdwg.mxu0
    %v3225 = vadd.f32 %v3079, %v3150
    %v3226 = vadd.f32 %v3080, %v3152
    %v3227 = vadd.f32 %v3081, %v3221
    %v3228 = vadd.f32 %v3082, %v3223
    %v3229 = vxor.u32 %v3225, 2147483648
    %v3230 = vxor.u32 %v3226, 2147483648
    %v3231 = vxor.u32 %v3227, 2147483648
    %v3232 = vmul.f32 %v3229, 1.442695
    %v3233 = vpow.pop %v3232
    %v3234 = vmul.f32 %v3230, 1.442695
    %v3235 = vpow.pop %v3234
    %v3236 = vmul.f32 %v3231, 1.442695
    %v3237 = vpow.pop %v3236
    %v3238 = vadd.f32 %v3233, 1.0
    %v3239 = vadd.f32 %v3235, 1.0
    %v3240 = vadd.f32 %v3237, 1.0
    %v3241 = vrcp.pop %v3238
    %v3242 = vmul.f32 1.0, %v3241
    %v3243 = vrcp.pop %v3239
    %v3244 = vmul.f32 1.0, %v3243
    %v3245 = vrcp.pop %v3240
    %v3246 = vmul.f32 1.0, %v3245
    %v3247 = vtanh.pop %v3228
    %v3248 = vmul.f32 %v3244, %v3076
    %v3249 = vmul.f32 %v3242, %v3247
    %v3250 = vadd.f32 %v3248, %v3249
    %v3251 = vtanh.pop %v3250
    %v3252 = vmul.f32 %v3246, %v3251
    %v3253 = vld [vmem:[%s1428] sm:$0xff]
    %v3254 = vld [vmem:[%s1428 + $0x8] sm:$0xff]
    %v3255 = vld [vmem:[%s1428 + $0x10] sm:$0xff]
    %v3256 = vld [vmem:[%s1428 + $0x18] sm:$0xff]
    %3257 = vmatprep.subr.mxu0 %v1963
    %3258 = vmatpush1.msra.mxu0 %v1962
    %3259 = vmatprep.subr.mxu0 %v1967
    %3260 = vmatpush1.msra.mxu0 %v1966
    %3261 = vmatprep.subr.mxu0 %v1971
    %3262 = vmatpush1.msra.mxu0 %v1970
    %3263 = vmatprep.subr.mxu0 %v1975
    %3264 = vmatpush1.msra.mxu0 %v1974
    %3265 = vmatprep.subr.mxu0 %v1979
    %3266 = vmatpush1.msra.mxu0 %v1978
    %3267 = vmatprep.subr.mxu0 %v1983
    %3268 = vmatpush1.msra.mxu0 %v1982
    %3269 = vmatprep.subr.mxu0 %v1987
    %3270 = vmatpush1.msra.mxu0 %v1986
    %3271 = vmatprep.subr.mxu0 %v1991
    %3272 = vmatpush1.msra.mxu0 %v1990
    %3273 = vmatprep.subr.mxu0 %v1995
    %3274 = vmatpush1.msra.mxu0 %v1994
    %3275 = vmatprep.subr.mxu0 %v1999
    %3276 = vmatpush1.msra.mxu0 %v1998
    %3277 = vmatprep.subr.mxu0 %v2003
    %3278 = vmatpush1.msra.mxu0 %v2002
    %3279 = vmatprep.subr.mxu0 %v2007
    %3280 = vmatpush1.msra.mxu0 %v2006
    %3281 = vmatprep.subr.mxu0 %v2011
    %3282 = vmatpush1.msra.mxu0 %v2010
    %3283 = vmatprep.subr.mxu0 %v2015
    %3284 = vmatpush1.msra.mxu0 %v2014
    %3285 = vmatprep.subr.mxu0 %v2019
    %3286 = vmatpush1.msra.mxu0 %v2018
    %3287 = vmatprep.subr.mxu0 %v2023
    %3288 = vmatpush1.msra.mxu0 %v2022
    %3289 = vmatprep.subr.mxu0 0.0
    %3290 = vmatpush1.msra.mxu0 0.0
    %3291 = vmatprep.subr.mxu0 0.0
    %3292 = vmatpush1.msra.mxu0 0.0
    %3293 = vmatprep.subr.mxu0 0.0
    %3294 = vmatpush1.msra.mxu0 0.0
    %3295 = vmatprep.subr.mxu0 0.0
    %3296 = vmatpush1.msra.mxu0 0.0
    %3297 = vmatprep.subr.mxu0 0.0
    %3298 = vmatpush1.msra.mxu0 0.0
    %3299 = vmatprep.subr.mxu0 0.0
    %3300 = vmatpush1.msra.mxu0 0.0
    %3301 = vmatprep.subr.mxu0 0.0
    %3302 = vmatpush1.msra.mxu0 0.0
    %3303 = vmatprep.subr.mxu0 0.0
    %3304 = vmatpush1.msra.mxu0 0.0
    %3305 = vmatprep.subr.mxu0 0.0
    %3306 = vmatpush1.msra.mxu0 0.0
    %3307 = vmatprep.subr.mxu0 0.0
    %3308 = vmatpush1.msra.mxu0 0.0
    %3309 = vmatprep.subr.mxu0 0.0
    %3310 = vmatpush1.msra.mxu0 0.0
    %3311 = vmatprep.subr.mxu0 0.0
    %3312 = vmatpush1.msra.mxu0 0.0
    %3313 = vmatprep.subr.mxu0 0.0
    %3314 = vmatpush1.msra.mxu0 0.0
    %3315 = vmatprep.subr.mxu0 0.0
    %3316 = vmatpush1.msra.mxu0 0.0
    %3317 = vmatprep.subr.mxu0 0.0
    %3318 = vmatpush1.msra.mxu0 0.0
    %3319 = vmatprep.subr.mxu0 0.0
    %3320 = vmatpush1.msra.mxu0 0.0
    %3321 = vmatprep.mubr.f32.mxu0 0.0
    %3322 = vmatmul.mubr.f32.gmra.mrb[0].mxu0 %v3252
    %v3323 = vpop.f32.mrb[0].mxu0
    %v3324 = vadd.f32 0.0, %v3323
    %v3325 = vpop.f32.mrb[0].mxu0
    %v3326 = vadd.f32 0.0, %v3325
    %3327 = vdwg.mxu0
    %3328 = vmatprep.subr.mxu0 %v1965
    %3329 = vmatpush1.msra.mxu0 %v1964
    %3330 = vmatprep.subr.mxu0 %v1969
    %3331 = vmatpush1.msra.mxu0 %v1968
    %3332 = vmatprep.subr.mxu0 %v1973
    %3333 = vmatpush1.msra.mxu0 %v1972
    %3334 = vmatprep.subr.mxu0 %v1977
    %3335 = vmatpush1.msra.mxu0 %v1976
    %3336 = vmatprep.subr.mxu0 %v1981
    %3337 = vmatpush1.msra.mxu0 %v1980
    %3338 = vmatprep.subr.mxu0 %v1985
    %3339 = vmatpush1.msra.mxu0 %v1984
    %3340 = vmatprep.subr.mxu0 %v1989
    %3341 = vmatpush1.msra.mxu0 %v1988
    %3342 = vmatprep.subr.mxu0 %v1993
    %3343 = vmatpush1.msra.mxu0 %v1992
    %3344 = vmatprep.subr.mxu0 %v1997
    %3345 = vmatpush1.msra.mxu0 %v1996
    %3346 = vmatprep.subr.mxu0 %v2001
    %3347 = vmatpush1.msra.mxu0 %v2000
    %3348 = vmatprep.subr.mxu0 %v2005
    %3349 = vmatpush1.msra.mxu0 %v2004
    %3350 = vmatprep.subr.mxu0 %v2009
    %3351 = vmatpush1.msra.mxu0 %v2008
    %3352 = vmatprep.subr.mxu0 %v2013
    %3353 = vmatpush1.msra.mxu0 %v2012
    %3354 = vmatprep.subr.mxu0 %v2017
    %3355 = vmatpush1.msra.mxu0 %v2016
    %3356 = vmatprep.subr.mxu0 %v2021
    %3357 = vmatpush1.msra.mxu0 %v2020
    %3358 = vmatprep.subr.mxu0 %v2025
    %3359 = vmatpush1.msra.mxu0 %v2024
    %3360 = vmatprep.subr.mxu0 0.0
    %3361 = vmatpush1.msra.mxu0 0.0
    %3362 = vmatprep.subr.mxu0 0.0
    %3363 = vmatpush1.msra.mxu0 0.0
    %3364 = vmatprep.subr.mxu0 0.0
    %3365 = vmatpush1.msra.mxu0 0.0
    %3366 = vmatprep.subr.mxu0 0.0
    %3367 = vmatpush1.msra.mxu0 0.0
    %3368 = vmatprep.subr.mxu0 0.0
    %3369 = vmatpush1.msra.mxu0 0.0
    %3370 = vmatprep.subr.mxu0 0.0
    %3371 = vmatpush1.msra.mxu0 0.0
    %3372 = vmatprep.subr.mxu0 0.0
    %3373 = vmatpush1.msra.mxu0 0.0
    %3374 = vmatprep.subr.mxu0 0.0
    %3375 = vmatpush1.msra.mxu0 0.0
    %3376 = vmatprep.subr.mxu0 0.0
    %3377 = vmatpush1.msra.mxu0 0.0
    %3378 = vmatprep.subr.mxu0 0.0
    %3379 = vmatpush1.msra.mxu0 0.0
    %3380 = vmatprep.subr.mxu0 0.0
    %3381 = vmatpush1.msra.mxu0 0.0
    %3382 = vmatprep.subr.mxu0 0.0
    %3383 = vmatpush1.msra.mxu0 0.0
    %3384 = vmatprep.subr.mxu0 0.0
    %3385 = vmatpush1.msra.mxu0 0.0
    %3386 = vmatprep.subr.mxu0 0.0
    %3387 = vmatpush1.msra.mxu0 0.0
    %3388 = vmatprep.subr.mxu0 0.0
    %3389 = vmatpush1.msra.mxu0 0.0
    %3390 = vmatprep.subr.mxu0 0.0
    %3391 = vmatpush1.msra.mxu0 0.0
    %3392 = vmatprep.mubr.f32.mxu0 0.0
    %3393 = vmatmul.mubr.f32.gmra.mrb[0].mxu0 %v3252
    %v3394 = vpop.f32.mrb[0].mxu0
    %v3395 = vadd.f32 0.0, %v3394
    %v3396 = vpop.f32.mrb[0].mxu0
    %v3397 = vadd.f32 0.0, %v3396
    %3398 = vdwg.mxu0
    %v3399 = vadd.f32 %v3253, %v3324
    %v3400 = vadd.f32 %v3254, %v3326
    %v3401 = vadd.f32 %v3255, %v3395
    %v3402 = vadd.f32 %v3256, %v3397
    %v3403 = vxor.u32 %v3399, 2147483648
    %v3404 = vxor.u32 %v3400, 2147483648
    %v3405 = vxor.u32 %v3401, 2147483648
    %v3406 = vmul.f32 %v3403, 1.442695
    %v3407 = vpow.pop %v3406
    %v3408 = vmul.f32 %v3404, 1.442695
    %v3409 = vpow.pop %v3408
    %v3410 = vmul.f32 %v3405, 1.442695
    %v3411 = vpow.pop %v3410
    %v3412 = vadd.f32 %v3407, 1.0
    %v3413 = vadd.f32 %v3409, 1.0
    %v3414 = vadd.f32 %v3411, 1.0
    %v3415 = vrcp.pop %v3412
    %v3416 = vmul.f32 1.0, %v3415
    %v3417 = vrcp.pop %v3413
    %v3418 = vmul.f32 1.0, %v3417
    %v3419 = vrcp.pop %v3414
    %v3420 = vmul.f32 1.0, %v3419
    %v3421 = vtanh.pop %v3402
    %v3422 = vmul.f32 %v3418, %v3250
    %v3423 = vmul.f32 %v3416, %v3421
    %v3424 = vadd.f32 %v3422, %v3423
    %v3425 = vtanh.pop %v3424
    %v3426 = vmul.f32 %v3420, %v3425
    %v3427 = vld [vmem:[%s1605] sm:$0xff]
    %v3428 = vld [vmem:[%s1605 + $0x8] sm:$0xff]
    %v3429 = vld [vmem:[%s1605 + $0x10] sm:$0xff]
    %v3430 = vld [vmem:[%s1605 + $0x18] sm:$0xff]
    %3431 = vmatprep.subr.mxu0 %v1963
    %3432 = vmatpush1.msra.mxu0 %v1962
    %3433 = vmatprep.subr.mxu0 %v1967
    %3434 = vmatpush1.msra.mxu0 %v1966
    %3435 = vmatprep.subr.mxu0 %v1971
    %3436 = vmatpush1.msra.mxu0 %v1970
    %3437 = vmatprep.subr.mxu0 %v1975
    %3438 = vmatpush1.msra.mxu0 %v1974
    %3439 = vmatprep.subr.mxu0 %v1979
    %3440 = vmatpush1.msra.mxu0 %v1978
    %3441 = vmatprep.subr.mxu0 %v1983
    %3442 = vmatpush1.msra.mxu0 %v1982
    %3443 = vmatprep.subr.mxu0 %v1987
    %3444 = vmatpush1.msra.mxu0 %v1986
    %3445 = vmatprep.subr.mxu0 %v1991
    %3446 = vmatpush1.msra.mxu0 %v1990
    %3447 = vmatprep.subr.mxu0 %v1995
    %3448 = vmatpush1.msra.mxu0 %v1994
    %3449 = vmatprep.subr.mxu0 %v1999
    %3450 = vmatpush1.msra.mxu0 %v1998
    %3451 = vmatprep.subr.mxu0 %v2003
    %3452 = vmatpush1.msra.mxu0 %v2002
    %3453 = vmatprep.subr.mxu0 %v2007
    %3454 = vmatpush1.msra.mxu0 %v2006
    %3455 = vmatprep.subr.mxu0 %v2011
    %3456 = vmatpush1.msra.mxu0 %v2010
    %3457 = vmatprep.subr.mxu0 %v2015
    %3458 = vmatpush1.msra.mxu0 %v2014
    %3459 = vmatprep.subr.mxu0 %v2019
    %3460 = vmatpush1.msra.mxu0 %v2018
    %3461 = vmatprep.subr.mxu0 %v2023
    %3462 = vmatpush1.msra.mxu0 %v2022
    %3463 = vmatprep.subr.mxu0 0.0
    %3464 = vmatpush1.msra.mxu0 0.0
    %3465 = vmatprep.subr.mxu0 0.0
    %3466 = vmatpush1.msra.mxu0 0.0
    %3467 = vmatprep.subr.mxu0 0.0
    %3468 = vmatpush1.msra.mxu0 0.0
    %3469 = vmatprep.subr.mxu0 0.0
    %3470 = vmatpush1.msra.mxu0 0.0
    %3471 = vmatprep.subr.mxu0 0.0
    %3472 = vmatpush1.msra.mxu0 0.0
    %3473 = vmatprep.subr.mxu0 0.0
    %3474 = vmatpush1.msra.mxu0 0.0
    %3475 = vmatprep.subr.mxu0 0.0
    %3476 = vmatpush1.msra.mxu0 0.0
    %3477 = vmatprep.subr.mxu0 0.0
    %3478 = vmatpush1.msra.mxu0 0.0
    %3479 = vmatprep.subr.mxu0 0.0
    %3480 = vmatpush1.msra.mxu0 0.0
    %3481 = vmatprep.subr.mxu0 0.0
    %3482 = vmatpush1.msra.mxu0 0.0
    %3483 = vmatprep.subr.mxu0 0.0
    %3484 = vmatpush1.msra.mxu0 0.0
    %3485 = vmatprep.subr.mxu0 0.0
    %3486 = vmatpush1.msra.mxu0 0.0
    %3487 = vmatprep.subr.mxu0 0.0
    %3488 = vmatpush1.msra.mxu0 0.0
    %3489 = vmatprep.subr.mxu0 0.0
    %3490 = vmatpush1.msra.mxu0 0.0
    %3491 = vmatprep.subr.mxu0 0.0
    %3492 = vmatpush1.msra.mxu0 0.0
    %3493 = vmatprep.subr.mxu0 0.0
    %3494 = vmatpush1.msra.mxu0 0.0
    %3495 = vmatprep.mubr.f32.mxu0 0.0
    %3496 = vmatmul.mubr.f32.gmra.mrb[0].mxu0 %v3426
    %v3497 = vpop.f32.mrb[0].mxu0
    %v3498 = vadd.f32 0.0, %v3497
    %v3499 = vpop.f32.mrb[0].mxu0
    %v3500 = vadd.f32 0.0, %v3499
    %3501 = vdwg.mxu0
    %3502 = vmatprep.subr.mxu0 %v1965
    %3503 = vmatpush1.msra.mxu0 %v1964
    %3504 = vmatprep.subr.mxu0 %v1969
    %3505 = vmatpush1.msra.mxu0 %v1968
    %3506 = vmatprep.subr.mxu0 %v1973
    %3507 = vmatpush1.msra.mxu0 %v1972
    %3508 = vmatprep.subr.mxu0 %v1977
    %3509 = vmatpush1.msra.mxu0 %v1976
    %3510 = vmatprep.subr.mxu0 %v1981
    %3511 = vmatpush1.msra.mxu0 %v1980
    %3512 = vmatprep.subr.mxu0 %v1985
    %3513 = vmatpush1.msra.mxu0 %v1984
    %3514 = vmatprep.subr.mxu0 %v1989
    %3515 = vmatpush1.msra.mxu0 %v1988
    %3516 = vmatprep.subr.mxu0 %v1993
    %3517 = vmatpush1.msra.mxu0 %v1992
    %3518 = vmatprep.subr.mxu0 %v1997
    %3519 = vmatpush1.msra.mxu0 %v1996
    %3520 = vmatprep.subr.mxu0 %v2001
    %3521 = vmatpush1.msra.mxu0 %v2000
    %3522 = vmatprep.subr.mxu0 %v2005
    %3523 = vmatpush1.msra.mxu0 %v2004
    %3524 = vmatprep.subr.mxu0 %v2009
    %3525 = vmatpush1.msra.mxu0 %v2008
    %3526 = vmatprep.subr.mxu0 %v2013
    %3527 = vmatpush1.msra.mxu0 %v2012
    %3528 = vmatprep.subr.mxu0 %v2017
    %3529 = vmatpush1.msra.mxu0 %v2016
    %3530 = vmatprep.subr.mxu0 %v2021
    %3531 = vmatpush1.msra.mxu0 %v2020
    %3532 = vmatprep.subr.mxu0 %v2025
    %3533 = vmatpush1.msra.mxu0 %v2024
    %3534 = vmatprep.subr.mxu0 0.0
    %3535 = vmatpush1.msra.mxu0 0.0
    %3536 = vmatprep.subr.mxu0 0.0
    %3537 = vmatpush1.msra.mxu0 0.0
    %3538 = vmatprep.subr.mxu0 0.0
    %3539 = vmatpush1.msra.mxu0 0.0
    %3540 = vmatprep.subr.mxu0 0.0
    %3541 = vmatpush1.msra.mxu0 0.0
    %3542 = vmatprep.subr.mxu0 0.0
    %3543 = vmatpush1.msra.mxu0 0.0
    %3544 = vmatprep.subr.mxu0 0.0
    %3545 = vmatpush1.msra.mxu0 0.0
    %3546 = vmatprep.subr.mxu0 0.0
    %3547 = vmatpush1.msra.mxu0 0.0
    %3548 = vmatprep.subr.mxu0 0.0
    %3549 = vmatpush1.msra.mxu0 0.0
    %3550 = vmatprep.subr.mxu0 0.0
    %3551 = vmatpush1.msra.mxu0 0.0
    %3552 = vmatprep.subr.mxu0 0.0
    %3553 = vmatpush1.msra.mxu0 0.0
    %3554 = vmatprep.subr.mxu0 0.0
    %3555 = vmatpush1.msra.mxu0 0.0
    %3556 = vmatprep.subr.mxu0 0.0
    %3557 = vmatpush1.msra.mxu0 0.0
    %3558 = vmatprep.subr.mxu0 0.0
    %3559 = vmatpush1.msra.mxu0 0.0
    %3560 = vmatprep.subr.mxu0 0.0
    %3561 = vmatpush1.msra.mxu0 0.0
    %3562 = vmatprep.subr.mxu0 0.0
    %3563 = vmatpush1.msra.mxu0 0.0
    %3564 = vmatprep.subr.mxu0 0.0
    %3565 = vmatpush1.msra.mxu0 0.0
    %3566 = vmatprep.mubr.f32.mxu0 0.0
    %3567 = vmatmul.mubr.f32.gmra.mrb[0].mxu0 %v3426
    %v3568 = vpop.f32.mrb[0].mxu0
    %v3569 = vadd.f32 0.0, %v3568
    %v3570 = vpop.f32.mrb[0].mxu0
    %v3571 = vadd.f32 0.0, %v3570
    %3572 = vdwg.mxu0
    %v3573 = vadd.f32 %v3427, %v3498
    %v3574 = vadd.f32 %v3428, %v3500
    %v3575 = vadd.f32 %v3429, %v3569
    %v3576 = vadd.f32 %v3430, %v3571
    %v3577 = vxor.u32 %v3573, 2147483648
    %v3578 = vxor.u32 %v3574, 2147483648
    %v3579 = vxor.u32 %v3575, 2147483648
    %v3580 = vmul.f32 %v3577, 1.442695
    %v3581 = vpow.pop %v3580
    %v3582 = vmul.f32 %v3578, 1.442695
    %v3583 = vpow.pop %v3582
    %v3584 = vmul.f32 %v3579, 1.442695
    %v3585 = vpow.pop %v3584
    %v3586 = vadd.f32 %v3581, 1.0
    %v3587 = vadd.f32 %v3583, 1.0
    %v3588 = vadd.f32 %v3585, 1.0
    %v3589 = vrcp.pop %v3586
    %v3590 = vmul.f32 1.0, %v3589
    %v3591 = vrcp.pop %v3587
    %v3592 = vmul.f32 1.0, %v3591
    %v3593 = vrcp.pop %v3588
    %v3594 = vmul.f32 1.0, %v3593
    %v3595 = vtanh.pop %v3576
    %v3596 = vmul.f32 %v3592, %v3424
    %v3597 = vmul.f32 %v3590, %v3595
    %v3598 = vadd.f32 %v3596, %v3597
    %v3599 = vtanh.pop %v3598
    %v3600 = vmul.f32 %v3594, %v3599
    %v3601 = vld [vmem:[%s1782] sm:$0xff]
    %v3602 = vld [vmem:[%s1782 + $0x8] sm:$0xff]
    %v3603 = vld [vmem:[%s1782 + $0x10] sm:$0xff]
    %v3604 = vld [vmem:[%s1782 + $0x18] sm:$0xff]
    %3605 = vmatprep.subr.mxu0 %v1963
    %3606 = vmatpush1.msra.mxu0 %v1962
    %3607 = vmatprep.subr.mxu0 %v1967
    %3608 = vmatpush1.msra.mxu0 %v1966
    %3609 = vmatprep.subr.mxu0 %v1971
    %3610 = vmatpush1.msra.mxu0 %v1970
    %3611 = vmatprep.subr.mxu0 %v1975
    %3612 = vmatpush1.msra.mxu0 %v1974
    %3613 = vmatprep.subr.mxu0 %v1979
    %3614 = vmatpush1.msra.mxu0 %v1978
    %3615 = vmatprep.subr.mxu0 %v1983
    %3616 = vmatpush1.msra.mxu0 %v1982
    %3617 = vmatprep.subr.mxu0 %v1987
    %3618 = vmatpush1.msra.mxu0 %v1986
    %3619 = vmatprep.subr.mxu0 %v1991
    %3620 = vmatpush1.msra.mxu0 %v1990
    %3621 = vmatprep.subr.mxu0 %v1995
    %3622 = vmatpush1.msra.mxu0 %v1994
    %3623 = vmatprep.subr.mxu0 %v1999
    %3624 = vmatpush1.msra.mxu0 %v1998
    %3625 = vmatprep.subr.mxu0 %v2003
    %3626 = vmatpush1.msra.mxu0 %v2002
    %3627 = vmatprep.subr.mxu0 %v2007
    %3628 = vmatpush1.msra.mxu0 %v2006
    %3629 = vmatprep.subr.mxu0 %v2011
    %3630 = vmatpush1.msra.mxu0 %v2010
    %3631 = vmatprep.subr.mxu0 %v2015
    %3632 = vmatpush1.msra.mxu0 %v2014
    %3633 = vmatprep.subr.mxu0 %v2019
    %3634 = vmatpush1.msra.mxu0 %v2018
    %3635 = vmatprep.subr.mxu0 %v2023
    %3636 = vmatpush1.msra.mxu0 %v2022
    %3637 = vmatprep.subr.mxu0 0.0
    %3638 = vmatpush1.msra.mxu0 0.0
    %3639 = vmatprep.subr.mxu0 0.0
    %3640 = vmatpush1.msra.mxu0 0.0
    %3641 = vmatprep.subr.mxu0 0.0
    %3642 = vmatpush1.msra.mxu0 0.0
    %3643 = vmatprep.subr.mxu0 0.0
    %3644 = vmatpush1.msra.mxu0 0.0
    %3645 = vmatprep.subr.mxu0 0.0
    %3646 = vmatpush1.msra.mxu0 0.0
    %3647 = vmatprep.subr.mxu0 0.0
    %3648 = vmatpush1.msra.mxu0 0.0
    %3649 = vmatprep.subr.mxu0 0.0
    %3650 = vmatpush1.msra.mxu0 0.0
    %3651 = vmatprep.subr.mxu0 0.0
    %3652 = vmatpush1.msra.mxu0 0.0
    %3653 = vmatprep.subr.mxu0 0.0
    %3654 = vmatpush1.msra.mxu0 0.0
    %3655 = vmatprep.subr.mxu0 0.0
    %3656 = vmatpush1.msra.mxu0 0.0
    %3657 = vmatprep.subr.mxu0 0.0
    %3658 = vmatpush1.msra.mxu0 0.0
    %3659 = vmatprep.subr.mxu0 0.0
    %3660 = vmatpush1.msra.mxu0 0.0
    %3661 = vmatprep.subr.mxu0 0.0
    %3662 = vmatpush1.msra.mxu0 0.0
    %3663 = vmatprep.subr.mxu0 0.0
    %3664 = vmatpush1.msra.mxu0 0.0
    %3665 = vmatprep.subr.mxu0 0.0
    %3666 = vmatpush1.msra.mxu0 0.0
    %3667 = vmatprep.subr.mxu0 0.0
    %3668 = vmatpush1.msra.mxu0 0.0
    %3669 = vmatprep.mubr.f32.mxu0 0.0
    %3670 = vmatmul.mubr.f32.gmra.mrb[0].mxu0 %v3600
    %v3671 = vpop.f32.mrb[0].mxu0
    %v3672 = vadd.f32 0.0, %v3671
    %v3673 = vpop.f32.mrb[0].mxu0
    %v3674 = vadd.f32 0.0, %v3673
    %3675 = vdwg.mxu0
    %3676 = vmatprep.subr.mxu0 %v1965
    %3677 = vmatpush1.msra.mxu0 %v1964
    %3678 = vmatprep.subr.mxu0 %v1969
    %3679 = vmatpush1.msra.mxu0 %v1968
    %3680 = vmatprep.subr.mxu0 %v1973
    %3681 = vmatpush1.msra.mxu0 %v1972
    %3682 = vmatprep.subr.mxu0 %v1977
    %3683 = vmatpush1.msra.mxu0 %v1976
    %3684 = vmatprep.subr.mxu0 %v1981
    %3685 = vmatpush1.msra.mxu0 %v1980
    %3686 = vmatprep.subr.mxu0 %v1985
    %3687 = vmatpush1.msra.mxu0 %v1984
    %3688 = vmatprep.subr.mxu0 %v1989
    %3689 = vmatpush1.msra.mxu0 %v1988
    %3690 = vmatprep.subr.mxu0 %v1993
    %3691 = vmatpush1.msra.mxu0 %v1992
    %3692 = vmatprep.subr.mxu0 %v1997
    %3693 = vmatpush1.msra.mxu0 %v1996
    %3694 = vmatprep.subr.mxu0 %v2001
    %3695 = vmatpush1.msra.mxu0 %v2000
    %3696 = vmatprep.subr.mxu0 %v2005
    %3697 = vmatpush1.msra.mxu0 %v2004
    %3698 = vmatprep.subr.mxu0 %v2009
    %3699 = vmatpush1.msra.mxu0 %v2008
    %3700 = vmatprep.subr.mxu0 %v2013
    %3701 = vmatpush1.msra.mxu0 %v2012
    %3702 = vmatprep.subr.mxu0 %v2017
    %3703 = vmatpush1.msra.mxu0 %v2016
    %3704 = vmatprep.subr.mxu0 %v2021
    %3705 = vmatpush1.msra.mxu0 %v2020
    %3706 = vmatprep.subr.mxu0 %v2025
    %3707 = vmatpush1.msra.mxu0 %v2024
    %3708 = vmatprep.subr.mxu0 0.0
    %3709 = vmatpush1.msra.mxu0 0.0
    %3710 = vmatprep.subr.mxu0 0.0
    %3711 = vmatpush1.msra.mxu0 0.0
    %3712 = vmatprep.subr.mxu0 0.0
    %3713 = vmatpush1.msra.mxu0 0.0
    %3714 = vmatprep.subr.mxu0 0.0
    %3715 = vmatpush1.msra.mxu0 0.0
    %3716 = vmatprep.subr.mxu0 0.0
    %3717 = vmatpush1.msra.mxu0 0.0
    %3718 = vmatprep.subr.mxu0 0.0
    %3719 = vmatpush1.msra.mxu0 0.0
    %3720 = vmatprep.subr.mxu0 0.0
    %3721 = vmatpush1.msra.mxu0 0.0
    %3722 = vmatprep.subr.mxu0 0.0
    %3723 = vmatpush1.msra.mxu0 0.0
    %3724 = vmatprep.subr.mxu0 0.0
    %3725 = vmatpush1.msra.mxu0 0.0
    %3726 = vmatprep.subr.mxu0 0.0
    %3727 = vmatpush1.msra.mxu0 0.0
    %3728 = vmatprep.subr.mxu0 0.0
    %3729 = vmatpush1.msra.mxu0 0.0
    %3730 = vmatprep.subr.mxu0 0.0
    %3731 = vmatpush1.msra.mxu0 0.0
    %3732 = vmatprep.subr.mxu0 0.0
    %3733 = vmatpush1.msra.mxu0 0.0
    %3734 = vmatprep.subr.mxu0 0.0
    %3735 = vmatpush1.msra.mxu0 0.0
    %3736 = vmatprep.subr.mxu0 0.0
    %3737 = vmatpush1.msra.mxu0 0.0
    %3738 = vmatprep.subr.mxu0 0.0
    %3739 = vmatpush1.msra.mxu0 0.0
    %3740 = vmatprep.mubr.f32.mxu0 0.0
    %3741 = vmatmul.mubr.f32.gmra.mrb[0].mxu0 %v3600
    %v3742 = vpop.f32.mrb[0].mxu0
    %v3743 = vadd.f32 0.0, %v3742
    %v3744 = vpop.f32.mrb[0].mxu0
    %v3745 = vadd.f32 0.0, %v3744
    %3746 = vdwg.mxu0
    %v3747 = vadd.f32 %v3601, %v3672
    %v3748 = vadd.f32 %v3602, %v3674
    %v3749 = vadd.f32 %v3603, %v3743
    %v3750 = vadd.f32 %v3604, %v3745
    %v3751 = vxor.u32 %v3747, 2147483648
    %v3752 = vxor.u32 %v3748, 2147483648
    %v3753 = vxor.u32 %v3749, 2147483648
    %v3754 = vmul.f32 %v3751, 1.442695
    %v3755 = vpow.pop %v3754
    %v3756 = vmul.f32 %v3752, 1.442695
    %v3757 = vpow.pop %v3756
    %v3758 = vmul.f32 %v3753, 1.442695
    %v3759 = vpow.pop %v3758
    %v3760 = vadd.f32 %v3755, 1.0
    %v3761 = vadd.f32 %v3757, 1.0
    %v3762 = vadd.f32 %v3759, 1.0
    %v3763 = vrcp.pop %v3760
    %v3764 = vmul.f32 1.0, %v3763
    %v3765 = vrcp.pop %v3761
    %v3766 = vmul.f32 1.0, %v3765
    %v3767 = vrcp.pop %v3762
    %v3768 = vmul.f32 1.0, %v3767
    %v3769 = vtanh.pop %v3750
    %v3770 = vmul.f32 %v3766, %v3598
    %v3771 = vmul.f32 %v3764, %v3769
    %v3772 = vadd.f32 %v3770, %v3771
    %v3773 = vtanh.pop %v3772
    %v3774 = vmul.f32 %v3768, %v3773
    %3775 = vst [vmem:[%s2379] sm:$0xff] %v3774
    %3776 = vst [vmem:[%s2381] sm:$0xff] %v3772
    %v3777 = vld [vmem:[#allocation14] sm:$0xff]
    %v3778 = vld [vmem:[#allocation14 + $0x8] sm:$0xff]
    %v3779 = vld [vmem:[#allocation14 + $0x10] sm:$0xff]
    %v3780 = vld [vmem:[#allocation14 + $0x18] sm:$0xff]
    %v3781 = vld [vmem:[#allocation14 + $0x20] sm:$0xff]
    %v3782 = vld [vmem:[#allocation14 + $0x28] sm:$0xff]
    %v3783 = vld [vmem:[#allocation14 + $0x30] sm:$0xff]
    %v3784 = vld [vmem:[#allocation14 + $0x38] sm:$0xff]
    %v3785 = vld [vmem:[#allocation14 + $0x40] sm:$0xff]
    %v3786 = vld [vmem:[#allocation14 + $0x48] sm:$0xff]
    %v3787 = vld [vmem:[#allocation14 + $0x50] sm:$0xff]
    %v3788 = vld [vmem:[#allocation14 + $0x58] sm:$0xff]
    %v3789 = vld [vmem:[#allocation14 + $0x60] sm:$0xff]
    %v3790 = vld [vmem:[#allocation14 + $0x68] sm:$0xff]
    %v3791 = vld [vmem:[#allocation14 + $0x70] sm:$0xff]
    %v3792 = vld [vmem:[#allocation14 + $0x78] sm:$0xff]
    %v3793 = vld [vmem:[#allocation14 + $0x80] sm:$0xff]
    %v3794 = vld [vmem:[#allocation14 + $0x88] sm:$0xff]
    %v3795 = vld [vmem:[#allocation14 + $0x90] sm:$0xff]
    %v3796 = vld [vmem:[#allocation14 + $0x98] sm:$0xff]
    %v3797 = vld [vmem:[#allocation14 + $0xa0] sm:$0xff]
    %v3798 = vld [vmem:[#allocation14 + $0xa8] sm:$0xff]
    %v3799 = vld [vmem:[#allocation14 + $0xb0] sm:$0xff]
    %v3800 = vld [vmem:[#allocation14 + $0xb8] sm:$0xff]
    %v3801 = vld [vmem:[#allocation14 + $0xc0] sm:$0xff]
    %v3802 = vld [vmem:[#allocation14 + $0xc8] sm:$0xff]
    %v3803 = vld [vmem:[#allocation14 + $0xd0] sm:$0xff]
    %v3804 = vld [vmem:[#allocation14 + $0xd8] sm:$0xff]
    %v3805 = vld [vmem:[#allocation14 + $0xe0] sm:$0xff]
    %v3806 = vld [vmem:[#allocation14 + $0xe8] sm:$0xff]
    %v3807 = vld [vmem:[#allocation14 + $0xf0] sm:$0xff]
    %v3808 = vld [vmem:[#allocation14 + $0xf8] sm:$0xff]
    %v3809 = vld [vmem:[#allocation14 + $0x100] sm:$0xff]
    %v3810 = vld [vmem:[#allocation14 + $0x108] sm:$0xff]
    %v3811 = vld [vmem:[#allocation14 + $0x110] sm:$0xff]
    %v3812 = vld [vmem:[#allocation14 + $0x118] sm:$0xff]
    %v3813 = vld [vmem:[#allocation14 + $0x120] sm:$0xff]
    %v3814 = vld [vmem:[#allocation14 + $0x128] sm:$0xff]
    %v3815 = vld [vmem:[#allocation14 + $0x130] sm:$0xff]
    %v3816 = vld [vmem:[#allocation14 + $0x138] sm:$0xff]
    %v3817 = vld [vmem:[#allocation14 + $0x140] sm:$0xff]
    %v3818 = vld [vmem:[#allocation14 + $0x148] sm:$0xff]
    %v3819 = vld [vmem:[#allocation14 + $0x150] sm:$0xff]
    %v3820 = vld [vmem:[#allocation14 + $0x158] sm:$0xff]
    %v3821 = vld [vmem:[#allocation14 + $0x160] sm:$0xff]
    %v3822 = vld [vmem:[#allocation14 + $0x168] sm:$0xff]
    %v3823 = vld [vmem:[#allocation14 + $0x170] sm:$0xff]
    %v3824 = vld [vmem:[#allocation14 + $0x178] sm:$0xff]
    %v3825 = vld [vmem:[#allocation14 + $0x180] sm:$0xff]
    %v3826 = vld [vmem:[#allocation14 + $0x188] sm:$0xff]
    %v3827 = vld [vmem:[#allocation14 + $0x190] sm:$0xff]
    %v3828 = vld [vmem:[#allocation14 + $0x198] sm:$0xff]
    %v3829 = vld [vmem:[#allocation14 + $0x1a0] sm:$0xff]
    %v3830 = vld [vmem:[#allocation14 + $0x1a8] sm:$0xff]
    %v3831 = vld [vmem:[#allocation14 + $0x1b0] sm:$0xff]
    %v3832 = vld [vmem:[#allocation14 + $0x1b8] sm:$0xff]
    %v3833 = vld [vmem:[#allocation14 + $0x1c0] sm:$0xff]
    %v3834 = vld [vmem:[#allocation14 + $0x1c8] sm:$0xff]
    %v3835 = vld [vmem:[#allocation14 + $0x1d0] sm:$0xff]
    %v3836 = vld [vmem:[#allocation14 + $0x1d8] sm:$0xff]
    %v3837 = vld [vmem:[#allocation14 + $0x1e0] sm:$0xff]
    %v3838 = vld [vmem:[#allocation14 + $0x1e8] sm:$0xff]
    %v3839 = vld [vmem:[#allocation14 + $0x1f0] sm:$0xff]
    %v3840 = vld [vmem:[#allocation14 + $0x1f8] sm:$0xff]
    %v3841 = vld [vmem:[%s9] sm:$0xf]
    %v3842 = vld [vmem:[%s1] sm:$0xff]
    %v3843 = vld [vmem:[%s1 + $0x8] sm:$0xff]
    %v3844 = vld [vmem:[%s1 + $0x10] sm:$0xff]
    %v3845 = vld [vmem:[%s1 + $0x18] sm:$0xff]
    %v3846 = vld [vmem:[%s1 + $0x20] sm:$0xff]
    %v3847 = vld [vmem:[%s1 + $0x28] sm:$0xff]
    %v3848 = vld [vmem:[%s1 + $0x30] sm:$0xff]
    %v3849 = vld [vmem:[%s1 + $0x38] sm:$0xff]
    %v3850 = vld [vmem:[#allocation11] sm:$0xff]
    %v3851 = vld [vmem:[#allocation11 + $0x8] sm:$0xff]
    %v3852 = vld [vmem:[#allocation11 + $0x10] sm:$0xff]
    %v3853 = vld [vmem:[#allocation11 + $0x18] sm:$0xff]
    %v3854 = vld [vmem:[#allocation11 + $0x20] sm:$0xff]
    %v3855 = vld [vmem:[#allocation11 + $0x28] sm:$0xff]
    %v3856 = vld [vmem:[#allocation11 + $0x30] sm:$0xff]
    %v3857 = vld [vmem:[#allocation11 + $0x38] sm:$0xff]
    %v3858 = vld [vmem:[#allocation11 + $0x40] sm:$0xff]
    %v3859 = vld [vmem:[#allocation11 + $0x48] sm:$0xff]
    %v3860 = vld [vmem:[#allocation11 + $0x50] sm:$0xff]
    %v3861 = vld [vmem:[#allocation11 + $0x58] sm:$0xff]
    %v3862 = vld [vmem:[#allocation11 + $0x60] sm:$0xff]
    %v3863 = vld [vmem:[#allocation11 + $0x68] sm:$0xff]
    %v3864 = vld [vmem:[#allocation11 + $0x70] sm:$0xff]
    %v3865 = vld [vmem:[#allocation11 + $0x78] sm:$0xff]
    %v3866 = vld [vmem:[#allocation11 + $0x80] sm:$0xff]
    %v3867 = vld [vmem:[#allocation11 + $0x88] sm:$0xff]
    %v3868 = vld [vmem:[#allocation11 + $0x90] sm:$0xff]
    %v3869 = vld [vmem:[#allocation11 + $0x98] sm:$0xff]
    %v3870 = vld [vmem:[#allocation11 + $0xa0] sm:$0xff]
    %v3871 = vld [vmem:[#allocation11 + $0xa8] sm:$0xff]
    %v3872 = vld [vmem:[#allocation11 + $0xb0] sm:$0xff]
    %v3873 = vld [vmem:[#allocation11 + $0xb8] sm:$0xff]
    %v3874 = vld [vmem:[#allocation11 + $0xc0] sm:$0xff]
    %v3875 = vld [vmem:[#allocation11 + $0xc8] sm:$0xff]
    %v3876 = vld [vmem:[#allocation11 + $0xd0] sm:$0xff]
    %v3877 = vld [vmem:[#allocation11 + $0xd8] sm:$0xff]
    %v3878 = vld [vmem:[#allocation11 + $0xe0] sm:$0xff]
    %v3879 = vld [vmem:[#allocation11 + $0xe8] sm:$0xff]
    %v3880 = vld [vmem:[#allocation11 + $0xf0] sm:$0xff]
    %v3881 = vld [vmem:[#allocation11 + $0xf8] sm:$0xff]
    %v3882 = vld [vmem:[#allocation11 + $0x100] sm:$0xff]
    %v3883 = vld [vmem:[#allocation11 + $0x108] sm:$0xff]
    %v3884 = vld [vmem:[#allocation11 + $0x110] sm:$0xff]
    %v3885 = vld [vmem:[#allocation11 + $0x118] sm:$0xff]
    %v3886 = vld [vmem:[#allocation11 + $0x120] sm:$0xff]
    %v3887 = vld [vmem:[#allocation11 + $0x128] sm:$0xff]
    %v3888 = vld [vmem:[#allocation11 + $0x130] sm:$0xff]
    %v3889 = vld [vmem:[#allocation11 + $0x138] sm:$0xff]
    %v3890 = vld [vmem:[#allocation11 + $0x140] sm:$0xff]
    %v3891 = vld [vmem:[#allocation11 + $0x148] sm:$0xff]
    %v3892 = vld [vmem:[#allocation11 + $0x150] sm:$0xff]
    %v3893 = vld [vmem:[#allocation11 + $0x158] sm:$0xff]
    %v3894 = vld [vmem:[#allocation11 + $0x160] sm:$0xff]
    %v3895 = vld [vmem:[#allocation11 + $0x168] sm:$0xff]
    %v3896 = vld [vmem:[#allocation11 + $0x170] sm:$0xff]
    %v3897 = vld [vmem:[#allocation11 + $0x178] sm:$0xff]
    %v3898 = vld [vmem:[#allocation11 + $0x180] sm:$0xff]
    %v3899 = vld [vmem:[#allocation11 + $0x188] sm:$0xff]
    %v3900 = vld [vmem:[#allocation11 + $0x190] sm:$0xff]
    %v3901 = vld [vmem:[#allocation11 + $0x198] sm:$0xff]
    %v3902 = vld [vmem:[#allocation11 + $0x1a0] sm:$0xff]
    %v3903 = vld [vmem:[#allocation11 + $0x1a8] sm:$0xff]
    %v3904 = vld [vmem:[#allocation11 + $0x1b0] sm:$0xff]
    %v3905 = vld [vmem:[#allocation11 + $0x1b8] sm:$0xff]
    %v3906 = vld [vmem:[#allocation11 + $0x1c0] sm:$0xff]
    %v3907 = vld [vmem:[#allocation11 + $0x1c8] sm:$0xff]
    %v3908 = vld [vmem:[#allocation11 + $0x1d0] sm:$0xff]
    %v3909 = vld [vmem:[#allocation11 + $0x1d8] sm:$0xff]
    %v3910 = vld [vmem:[#allocation11 + $0x1e0] sm:$0xff]
    %v3911 = vld [vmem:[#allocation11 + $0x1e8] sm:$0xff]
    %v3912 = vld [vmem:[#allocation11 + $0x1f0] sm:$0xff]
    %v3913 = vld [vmem:[#allocation11 + $0x1f8] sm:$0xff]
    %v3915 = vlaneseq
    %v3916 = vshrl.u32 %v3915, 7
    %v3917 = vsub.s32 0, %v3916
    %v3918 = vrot.slane %v3841, %v3917
    %v3919 = vlaneseq
    %v3920 = vshrl.u32 %v3919, 7
    %v3921 = vsub.s32 1, %v3920
    %v3922 = vrot.slane %v3841, %v3921
    %v3923 = vlaneseq
    %v3924 = vshrl.u32 %v3923, 7
    %v3925 = vsub.s32 2, %v3924
    %v3926 = vrot.slane %v3841, %v3925
    %v3927 = vlaneseq
    %v3928 = vshrl.u32 %v3927, 7
    %v3929 = vsub.s32 3, %v3928
    %v3930 = vrot.slane %v3841, %v3929
    %3935 = vmatprep.subr.mxu0 %v3851
    %3936 = vmatpush1.msra.mxu0 %v3850
    %3937 = vmatprep.subr.mxu0 %v3855
    %3938 = vmatpush1.msra.mxu0 %v3854
    %3939 = vmatprep.subr.mxu0 %v3859
    %3940 = vmatpush1.msra.mxu0 %v3858
    %3941 = vmatprep.subr.mxu0 %v3863
    %3942 = vmatpush1.msra.mxu0 %v3862
    %3943 = vmatprep.subr.mxu0 %v3867
    %3944 = vmatpush1.msra.mxu0 %v3866
    %3945 = vmatprep.subr.mxu0 %v3871
    %3946 = vmatpush1.msra.mxu0 %v3870
    %3947 = vmatprep.subr.mxu0 %v3875
    %3948 = vmatpush1.msra.mxu0 %v3874
    %3949 = vmatprep.subr.mxu0 %v3879
    %3950 = vmatpush1.msra.mxu0 %v3878
    %3951 = vmatprep.subr.mxu0 %v3883
    %3952 = vmatpush1.msra.mxu0 %v3882
    %3953 = vmatprep.subr.mxu0 %v3887
    %3954 = vmatpush1.msra.mxu0 %v3886
    %3955 = vmatprep.subr.mxu0 %v3891
    %3956 = vmatpush1.msra.mxu0 %v3890
    %3957 = vmatprep.subr.mxu0 %v3895
    %3958 = vmatpush1.msra.mxu0 %v3894
    %3959 = vmatprep.subr.mxu0 %v3899
    %3960 = vmatpush1.msra.mxu0 %v3898
    %3961 = vmatprep.subr.mxu0 %v3903
    %3962 = vmatpush1.msra.mxu0 %v3902
    %3963 = vmatprep.subr.mxu0 %v3907
    %3964 = vmatpush1.msra.mxu0 %v3906
    %3965 = vmatprep.subr.mxu0 %v3911
    %3966 = vmatpush1.msra.mxu0 %v3910
    %3967 = vmatprep.subr.mxu0 0.0
    %3968 = vmatpush1.msra.mxu0 0.0
    %3969 = vmatprep.subr.mxu0 0.0
    %3970 = vmatpush1.msra.mxu0 0.0
    %3971 = vmatprep.subr.mxu0 0.0
    %3972 = vmatpush1.msra.mxu0 0.0
    %3973 = vmatprep.subr.mxu0 0.0
    %3974 = vmatpush1.msra.mxu0 0.0
    %3975 = vmatprep.subr.mxu0 0.0
    %3976 = vmatpush1.msra.mxu0 0.0
    %3977 = vmatprep.subr.mxu0 0.0
    %3978 = vmatpush1.msra.mxu0 0.0
    %3979 = vmatprep.subr.mxu0 0.0
    %3980 = vmatpush1.msra.mxu0 0.0
    %3981 = vmatprep.subr.mxu0 0.0
    %3982 = vmatpush1.msra.mxu0 0.0
    %3983 = vmatprep.subr.mxu0 0.0
    %3984 = vmatpush1.msra.mxu0 0.0
    %3985 = vmatprep.subr.mxu0 0.0
    %3986 = vmatpush1.msra.mxu0 0.0
    %3987 = vmatprep.subr.mxu0 0.0
    %3988 = vmatpush1.msra.mxu0 0.0
    %3989 = vmatprep.subr.mxu0 0.0
    %3990 = vmatpush1.msra.mxu0 0.0
    %3991 = vmatprep.subr.mxu0 0.0
    %3992 = vmatpush1.msra.mxu0 0.0
    %3993 = vmatprep.subr.mxu0 0.0
    %3994 = vmatpush1.msra.mxu0 0.0
    %3995 = vmatprep.subr.mxu0 0.0
    %3996 = vmatpush1.msra.mxu0 0.0
    %3997 = vmatprep.subr.mxu0 0.0
    %3998 = vmatpush1.msra.mxu0 0.0
    %3999 = vmatprep.mubr.f32.mxu0 0.0
    %4000 = vmatmul.mubr.f32.gmra.mrb[0].mxu0 %v3842
    %v4001 = vpop.f32.mrb[0].mxu0
    %v4002 = vadd.f32 %v3918, %v4001
    %v4003 = vpop.f32.mrb[0].mxu0
    %v4004 = vadd.f32 %v3922, %v4003
    %4005 = vmatprep.mubr.f32.mxu0 0.0
    %4006 = vmatmul.mubr.f32.gmra.mrb[0].mxu0 %v3843
    %v4007 = vpop.f32.mrb[0].mxu0
    %v4008 = vadd.f32 %v3918, %v4007
    %v4009 = vpop.f32.mrb[0].mxu0
    %v4010 = vadd.f32 %v3922, %v4009
    %4011 = vmatprep.mubr.f32.mxu0 0.0
    %4012 = vmatmul.mubr.f32.gmra.mrb[0].mxu0 %v3844
    %v4013 = vpop.f32.mrb[0].mxu0
    %v4014 = vadd.f32 %v3918, %v4013
    %v4015 = vpop.f32.mrb[0].mxu0
    %v4016 = vadd.f32 %v3922, %v4015
    %4017 = vmatprep.mubr.f32.mxu0 0.0
    %4018 = vmatmul.mubr.f32.gmra.mrb[0].mxu0 %v3845
    %v4019 = vpop.f32.mrb[0].mxu0
    %v4020 = vadd.f32 %v3918, %v4019
    %v4021 = vpop.f32.mrb[0].mxu0
    %v4022 = vadd.f32 %v3922, %v4021
    %4023 = vmatprep.mubr.f32.mxu0 0.0
    %4024 = vmatmul.mubr.f32.gmra.mrb[0].mxu0 %v3846
    %v4025 = vpop.f32.mrb[0].mxu0
    %v4026 = vadd.f32 %v3918, %v4025
    %v4027 = vpop.f32.mrb[0].mxu0
    %v4028 = vadd.f32 %v3922, %v4027
    %4029 = vmatprep.mubr.f32.mxu0 0.0
    %4030 = vmatmul.mubr.f32.gmra.mrb[0].mxu0 %v3847
    %v4031 = vpop.f32.mrb[0].mxu0
    %v4032 = vadd.f32 %v3918, %v4031
    %v4033 = vpop.f32.mrb[0].mxu0
    %v4034 = vadd.f32 %v3922, %v4033
    %4035 = vmatprep.mubr.f32.mxu0 0.0
    %4036 = vmatmul.mubr.f32.gmra.mrb[0].mxu0 %v3848
    %v4037 = vpop.f32.mrb[0].mxu0
    %v4038 = vadd.f32 %v3918, %v4037
    %v4039 = vpop.f32.mrb[0].mxu0
    %v4040 = vadd.f32 %v3922, %v4039
    %4041 = vmatprep.mubr.f32.mxu0 0.0
    %4042 = vmatmul.mubr.f32.gmra.mrb[0].mxu0 %v3849
    %v4043 = vpop.f32.mrb[0].mxu0
    %v4044 = vadd.f32 %v3918, %v4043
    %v4045 = vpop.f32.mrb[0].mxu0
    %v4046 = vadd.f32 %v3922, %v4045
    %4047 = vdwg.mxu0
    %4048 = vmatprep.subr.mxu0 %v3853
    %4049 = vmatpush1.msra.mxu0 %v3852
    %4050 = vmatprep.subr.mxu0 %v3857
    %4051 = vmatpush1.msra.mxu0 %v3856
    %4052 = vmatprep.subr.mxu0 %v3861
    %4053 = vmatpush1.msra.mxu0 %v3860
    %4054 = vmatprep.subr.mxu0 %v3865
    %4055 = vmatpush1.msra.mxu0 %v3864
    %4056 = vmatprep.subr.mxu0 %v3869
    %4057 = vmatpush1.msra.mxu0 %v3868
    %4058 = vmatprep.subr.mxu0 %v3873
    %4059 = vmatpush1.msra.mxu0 %v3872
    %4060 = vmatprep.subr.mxu0 %v3877
    %4061 = vmatpush1.msra.mxu0 %v3876
    %4062 = vmatprep.subr.mxu0 %v3881
    %4063 = vmatpush1.msra.mxu0 %v3880
    %4064 = vmatprep.subr.mxu0 %v3885
    %4065 = vmatpush1.msra.mxu0 %v3884
    %4066 = vmatprep.subr.mxu0 %v3889
    %4067 = vmatpush1.msra.mxu0 %v3888
    %4068 = vmatprep.subr.mxu0 %v3893
    %4069 = vmatpush1.msra.mxu0 %v3892
    %4070 = vmatprep.subr.mxu0 %v3897
    %4071 = vmatpush1.msra.mxu0 %v3896
    %4072 = vmatprep.subr.mxu0 %v3901
    %4073 = vmatpush1.msra.mxu0 %v3900
    %4074 = vmatprep.subr.mxu0 %v3905
    %4075 = vmatpush1.msra.mxu0 %v3904
    %4076 = vmatprep.subr.mxu0 %v3909
    %4077 = vmatpush1.msra.mxu0 %v3908
    %4078 = vmatprep.subr.mxu0 %v3913
    %4079 = vmatpush1.msra.mxu0 %v3912
    %4080 = vmatprep.subr.mxu0 0.0
    %4081 = vmatpush1.msra.mxu0 0.0
    %4082 = vmatprep.subr.mxu0 0.0
    %4083 = vmatpush1.msra.mxu0 0.0
    %4084 = vmatprep.subr.mxu0 0.0
    %4085 = vmatpush1.msra.mxu0 0.0
    %4086 = vmatprep.subr.mxu0 0.0
    %4087 = vmatpush1.msra.mxu0 0.0
    %4088 = vmatprep.subr.mxu0 0.0
    %4089 = vmatpush1.msra.mxu0 0.0
    %4090 = vmatprep.subr.mxu0 0.0
    %4091 = vmatpush1.msra.mxu0 0.0
    %4092 = vmatprep.subr.mxu0 0.0
    %4093 = vmatpush1.msra.mxu0 0.0
    %4094 = vmatprep.subr.mxu0 0.0
    %4095 = vmatpush1.msra.mxu0 0.0
    %4096 = vmatprep.subr.mxu0 0.0
    %4097 = vmatpush1.msra.mxu0 0.0
    %4098 = vmatprep.subr.mxu0 0.0
    %4099 = vmatpush1.msra.mxu0 0.0
    %4100 = vmatprep.subr.mxu0 0.0
    %4101 = vmatpush1.msra.mxu0 0.0
    %4102 = vmatprep.subr.mxu0 0.0
    %4103 = vmatpush1.msra.mxu0 0.0
    %4104 = vmatprep.subr.mxu0 0.0
    %4105 = vmatpush1.msra.mxu0 0.0
    %4106 = vmatprep.subr.mxu0 0.0
    %4107 = vmatpush1.msra.mxu0 0.0
    %4108 = vmatprep.subr.mxu0 0.0
    %4109 = vmatpush1.msra.mxu0 0.0
    %4110 = vmatprep.subr.mxu0 0.0
    %4111 = vmatpush1.msra.mxu0 0.0
    %4112 = vmatprep.mubr.f32.mxu0 0.0
    %4113 = vmatmul.mubr.f32.gmra.mrb[0].mxu0 %v3842
    %v4114 = vpop.f32.mrb[0].mxu0
    %v4115 = vadd.f32 %v3926, %v4114
    %v4116 = vpop.f32.mrb[0].mxu0
    %v4117 = vadd.f32 %v3930, %v4116
    %4118 = vmatprep.mubr.f32.mxu0 0.0
    %4119 = vmatmul.mubr.f32.gmra.mrb[0].mxu0 %v3843
    %v4120 = vpop.f32.mrb[0].mxu0
    %v4121 = vadd.f32 %v3926, %v4120
    %v4122 = vpop.f32.mrb[0].mxu0
    %v4123 = vadd.f32 %v3930, %v4122
    %4124 = vmatprep.mubr.f32.mxu0 0.0
    %4125 = vmatmul.mubr.f32.gmra.mrb[0].mxu0 %v3844
    %v4126 = vpop.f32.mrb[0].mxu0
    %v4127 = vadd.f32 %v3926, %v4126
    %v4128 = vpop.f32.mrb[0].mxu0
    %v4129 = vadd.f32 %v3930, %v4128
    %4130 = vmatprep.mubr.f32.mxu0 0.0
    %4131 = vmatmul.mubr.f32.gmra.mrb[0].mxu0 %v3845
    %v4132 = vpop.f32.mrb[0].mxu0
    %v4133 = vadd.f32 %v3926, %v4132
    %v4134 = vpop.f32.mrb[0].mxu0
    %v4135 = vadd.f32 %v3930, %v4134
    %4136 = vmatprep.mubr.f32.mxu0 0.0
    %4137 = vmatmul.mubr.f32.gmra.mrb[0].mxu0 %v3846
    %v4138 = vpop.f32.mrb[0].mxu0
    %v4139 = vadd.f32 %v3926, %v4138
    %v4140 = vpop.f32.mrb[0].mxu0
    %v4141 = vadd.f32 %v3930, %v4140
    %4142 = vmatprep.mubr.f32.mxu0 0.0
    %4143 = vmatmul.mubr.f32.gmra.mrb[0].mxu0 %v3847
    %v4144 = vpop.f32.mrb[0].mxu0
    %v4145 = vadd.f32 %v3926, %v4144
    %v4146 = vpop.f32.mrb[0].mxu0
    %v4147 = vadd.f32 %v3930, %v4146
    %4148 = vmatprep.mubr.f32.mxu0 0.0
    %4149 = vmatmul.mubr.f32.gmra.mrb[0].mxu0 %v3848
    %v4150 = vpop.f32.mrb[0].mxu0
    %v4151 = vadd.f32 %v3926, %v4150
    %v4152 = vpop.f32.mrb[0].mxu0
    %v4153 = vadd.f32 %v3930, %v4152
    %4154 = vmatprep.mubr.f32.mxu0 0.0
    %4155 = vmatmul.mubr.f32.gmra.mrb[0].mxu0 %v3849
    %v4156 = vpop.f32.mrb[0].mxu0
    %v4157 = vadd.f32 %v3926, %v4156
    %v4158 = vpop.f32.mrb[0].mxu0
    %v4159 = vadd.f32 %v3930, %v4158
    %4160 = vdwg.mxu0
    %4161 = vst [vmem:[#allocation5] sm:$0xff] %v4002
    %4162 = vst [vmem:[#allocation5 + $0x8] sm:$0xff] %v4004
    %4163 = vst [vmem:[#allocation5 + $0x10] sm:$0xff] %v4115
    %4164 = vst [vmem:[#allocation5 + $0x18] sm:$0xff] %v4117
    %4165 = vst [vmem:[#allocation5 + $0x20] sm:$0xff] %v4008
    %4166 = vst [vmem:[#allocation5 + $0x28] sm:$0xff] %v4010
    %4167 = vst [vmem:[#allocation5 + $0x30] sm:$0xff] %v4121
    %4168 = vst [vmem:[#allocation5 + $0x38] sm:$0xff] %v4123
    %4169 = vst [vmem:[#allocation5 + $0x40] sm:$0xff] %v4014
    %4170 = vst [vmem:[#allocation5 + $0x48] sm:$0xff] %v4016
    %4171 = vst [vmem:[#allocation5 + $0x50] sm:$0xff] %v4127
    %4172 = vst [vmem:[#allocation5 + $0x58] sm:$0xff] %v4129
    %4173 = vst [vmem:[#allocation5 + $0x60] sm:$0xff] %v4020
    %4174 = vst [vmem:[#allocation5 + $0x68] sm:$0xff] %v4022
    %4175 = vst [vmem:[#allocation5 + $0x70] sm:$0xff] %v4133
    %4176 = vst [vmem:[#allocation5 + $0x78] sm:$0xff] %v4135
    %4177 = vst [vmem:[#allocation5 + $0x80] sm:$0xff] %v4026
    %4178 = vst [vmem:[#allocation5 + $0x88] sm:$0xff] %v4028
    %4179 = vst [vmem:[#allocation5 + $0x90] sm:$0xff] %v4139
    %4180 = vst [vmem:[#allocation5 + $0x98] sm:$0xff] %v4141
    %4181 = vst [vmem:[#allocation5 + $0xa0] sm:$0xff] %v4032
    %4182 = vst [vmem:[#allocation5 + $0xa8] sm:$0xff] %v4034
    %4183 = vst [vmem:[#allocation5 + $0xb0] sm:$0xff] %v4145
    %4184 = vst [vmem:[#allocation5 + $0xb8] sm:$0xff] %v4147
    %4185 = vst [vmem:[#allocation5 + $0xc0] sm:$0xff] %v4038
    %4186 = vst [vmem:[#allocation5 + $0xc8] sm:$0xff] %v4040
    %4187 = vst [vmem:[#allocation5 + $0xd0] sm:$0xff] %v4151
    %4188 = vst [vmem:[#allocation5 + $0xd8] sm:$0xff] %v4153
    %4189 = vst [vmem:[#allocation5 + $0xe0] sm:$0xff] %v4044
    %4190 = vst [vmem:[#allocation5 + $0xe8] sm:$0xff] %v4046
    %4191 = vst [vmem:[#allocation5 + $0xf0] sm:$0xff] %v4157
    %4192 = vst [vmem:[#allocation5 + $0xf8] sm:$0xff] %v4159
    %v4193 = vld [vmem:[#allocation2] sm:$0xff]
    %v4194 = vld [vmem:[#allocation3] sm:$0xff]
    %v4195 = vld [vmem:[#allocation5] sm:$0xff]
    %v4196 = vld [vmem:[#allocation5 + $0x8] sm:$0xff]
    %v4197 = vld [vmem:[#allocation5 + $0x10] sm:$0xff]
    %v4198 = vld [vmem:[#allocation5 + $0x18] sm:$0xff]
    %4199 = vmatprep.subr.mxu0 %v3778
    %4200 = vmatpush1.msra.mxu0 %v3777
    %4201 = vmatprep.subr.mxu0 %v3782
    %4202 = vmatpush1.msra.mxu0 %v3781
    %4203 = vmatprep.subr.mxu0 %v3786
    %4204 = vmatpush1.msra.mxu0 %v3785
    %4205 = vmatprep.subr.mxu0 %v3790
    %4206 = vmatpush1.msra.mxu0 %v3789
    %4207 = vmatprep.subr.mxu0 %v3794
    %4208 = vmatpush1.msra.mxu0 %v3793
    %4209 = vmatprep.subr.mxu0 %v3798
    %4210 = vmatpush1.msra.mxu0 %v3797
    %4211 = vmatprep.subr.mxu0 %v3802
    %4212 = vmatpush1.msra.mxu0 %v3801
    %4213 = vmatprep.subr.mxu0 %v3806
    %4214 = vmatpush1.msra.mxu0 %v3805
    %4215 = vmatprep.subr.mxu0 %v3810
    %4216 = vmatpush1.msra.mxu0 %v3809
    %4217 = vmatprep.subr.mxu0 %v3814
    %4218 = vmatpush1.msra.mxu0 %v3813
    %4219 = vmatprep.subr.mxu0 %v3818
    %4220 = vmatpush1.msra.mxu0 %v3817
    %4221 = vmatprep.subr.mxu0 %v3822
    %4222 = vmatpush1.msra.mxu0 %v3821
    %4223 = vmatprep.subr.mxu0 %v3826
    %4224 = vmatpush1.msra.mxu0 %v3825
    %4225 = vmatprep.subr.mxu0 %v3830
    %4226 = vmatpush1.msra.mxu0 %v3829
    %4227 = vmatprep.subr.mxu0 %v3834
    %4228 = vmatpush1.msra.mxu0 %v3833
    %4229 = vmatprep.subr.mxu0 %v3838
    %4230 = vmatpush1.msra.mxu0 %v3837
    %4231 = vmatprep.subr.mxu0 0.0
    %4232 = vmatpush1.msra.mxu0 0.0
    %4233 = vmatprep.subr.mxu0 0.0
    %4234 = vmatpush1.msra.mxu0 0.0
    %4235 = vmatprep.subr.mxu0 0.0
    %4236 = vmatpush1.msra.mxu0 0.0
    %4237 = vmatprep.subr.mxu0 0.0
    %4238 = vmatpush1.msra.mxu0 0.0
    %4239 = vmatprep.subr.mxu0 0.0
    %4240 = vmatpush1.msra.mxu0 0.0
    %4241 = vmatprep.subr.mxu0 0.0
    %4242 = vmatpush1.msra.mxu0 0.0
    %4243 = vmatprep.subr.mxu0 0.0
    %4244 = vmatpush1.msra.mxu0 0.0
    %4245 = vmatprep.subr.mxu0 0.0
    %4246 = vmatpush1.msra.mxu0 0.0
    %4247 = vmatprep.subr.mxu0 0.0
    %4248 = vmatpush1.msra.mxu0 0.0
    %4249 = vmatprep.subr.mxu0 0.0
    %4250 = vmatpush1.msra.mxu0 0.0
    %4251 = vmatprep.subr.mxu0 0.0
    %4252 = vmatpush1.msra.mxu0 0.0
    %4253 = vmatprep.subr.mxu0 0.0
    %4254 = vmatpush1.msra.mxu0 0.0
    %4255 = vmatprep.subr.mxu0 0.0
    %4256 = vmatpush1.msra.mxu0 0.0
    %4257 = vmatprep.subr.mxu0 0.0
    %4258 = vmatpush1.msra.mxu0 0.0
    %4259 = vmatprep.subr.mxu0 0.0
    %4260 = vmatpush1.msra.mxu0 0.0
    %4261 = vmatprep.subr.mxu0 0.0
    %4262 = vmatpush1.msra.mxu0 0.0
    %4263 = vmatprep.mubr.f32.mxu0 0.0
    %4264 = vmatmul.mubr.f32.gmra.mrb[0].mxu0 %v4193
    %v4265 = vpop.f32.mrb[0].mxu0
    %v4266 = vadd.f32 0.0, %v4265
    %v4267 = vpop.f32.mrb[0].mxu0
    %v4268 = vadd.f32 0.0, %v4267
    %4269 = vdwg.mxu0
    %4270 = vmatprep.subr.mxu0 %v3780
    %4271 = vmatpush1.msra.mxu0 %v3779
    %4272 = vmatprep.subr.mxu0 %v3784
    %4273 = vmatpush1.msra.mxu0 %v3783
    %4274 = vmatprep.subr.mxu0 %v3788
    %4275 = vmatpush1.msra.mxu0 %v3787
    %4276 = vmatprep.subr.mxu0 %v3792
    %4277 = vmatpush1.msra.mxu0 %v3791
    %4278 = vmatprep.subr.mxu0 %v3796
    %4279 = vmatpush1.msra.mxu0 %v3795
    %4280 = vmatprep.subr.mxu0 %v3800
    %4281 = vmatpush1.msra.mxu0 %v3799
    %4282 = vmatprep.subr.mxu0 %v3804
    %4283 = vmatpush1.msra.mxu0 %v3803
    %4284 = vmatprep.subr.mxu0 %v3808
    %4285 = vmatpush1.msra.mxu0 %v3807
    %4286 = vmatprep.subr.mxu0 %v3812
    %4287 = vmatpush1.msra.mxu0 %v3811
    %4288 = vmatprep.subr.mxu0 %v3816
    %4289 = vmatpush1.msra.mxu0 %v3815
    %4290 = vmatprep.subr.mxu0 %v3820
    %4291 = vmatpush1.msra.mxu0 %v3819
    %4292 = vmatprep.subr.mxu0 %v3824
    %4293 = vmatpush1.msra.mxu0 %v3823
    %4294 = vmatprep.subr.mxu0 %v3828
    %4295 = vmatpush1.msra.mxu0 %v3827
    %4296 = vmatprep.subr.mxu0 %v3832
    %4297 = vmatpush1.msra.mxu0 %v3831
    %4298 = vmatprep.subr.mxu0 %v3836
    %4299 = vmatpush1.msra.mxu0 %v3835
    %4300 = vmatprep.subr.mxu0 %v3840
    %4301 = vmatpush1.msra.mxu0 %v3839
    %4302 = vmatprep.subr.mxu0 0.0
    %4303 = vmatpush1.msra.mxu0 0.0
    %4304 = vmatprep.subr.mxu0 0.0
    %4305 = vmatpush1.msra.mxu0 0.0
    %4306 = vmatprep.subr.mxu0 0.0
    %4307 = vmatpush1.msra.mxu0 0.0
    %4308 = vmatprep.subr.mxu0 0.0
    %4309 = vmatpush1.msra.mxu0 0.0
    %4310 = vmatprep.subr.mxu0 0.0
    %4311 = vmatpush1.msra.mxu0 0.0
    %4312 = vmatprep.subr.mxu0 0.0
    %4313 = vmatpush1.msra.mxu0 0.0
    %4314 = vmatprep.subr.mxu0 0.0
    %4315 = vmatpush1.msra.mxu0 0.0
    %4316 = vmatprep.subr.mxu0 0.0
    %4317 = vmatpush1.msra.mxu0 0.0
    %4318 = vmatprep.subr.mxu0 0.0
    %4319 = vmatpush1.msra.mxu0 0.0
    %4320 = vmatprep.subr.mxu0 0.0
    %4321 = vmatpush1.msra.mxu0 0.0
    %4322 = vmatprep.subr.mxu0 0.0
    %4323 = vmatpush1.msra.mxu0 0.0
    %4324 = vmatprep.subr.mxu0 0.0
    %4325 = vmatpush1.msra.mxu0 0.0
    %4326 = vmatprep.subr.mxu0 0.0
    %4327 = vmatpush1.msra.mxu0 0.0
    %4328 = vmatprep.subr.mxu0 0.0
    %4329 = vmatpush1.msra.mxu0 0.0
    %4330 = vmatprep.subr.mxu0 0.0
    %4331 = vmatpush1.msra.mxu0 0.0
    %4332 = vmatprep.subr.mxu0 0.0
    %4333 = vmatpush1.msra.mxu0 0.0
    %4334 = vmatprep.mubr.f32.mxu0 0.0
    %4335 = vmatmul.mubr.f32.gmra.mrb[0].mxu0 %v4193
    %v4336 = vpop.f32.mrb[0].mxu0
    %v4337 = vadd.f32 0.0, %v4336
    %v4338 = vpop.f32.mrb[0].mxu0
    %v4339 = vadd.f32 0.0, %v4338
    %4340 = vdwg.mxu0
    %v4341 = vadd.f32 %v4195, %v4266
    %v4342 = vadd.f32 %v4196, %v4268
    %v4343 = vadd.f32 %v4197, %v4337
    %v4344 = vadd.f32 %v4198, %v4339
    %v4345 = vxor.u32 %v4341, 2147483648
    %v4346 = vxor.u32 %v4342, 2147483648
    %v4347 = vxor.u32 %v4343, 2147483648
    %v4348 = vmul.f32 %v4345, 1.442695
    %v4349 = vpow.pop %v4348
    %v4350 = vmul.f32 %v4346, 1.442695
    %v4351 = vpow.pop %v4350
    %v4352 = vmul.f32 %v4347, 1.442695
    %v4353 = vpow.pop %v4352
    %v4354 = vadd.f32 %v4349, 1.0
    %v4355 = vadd.f32 %v4351, 1.0
    %v4356 = vadd.f32 %v4353, 1.0
    %v4357 = vrcp.pop %v4354
    %v4358 = vmul.f32 1.0, %v4357
    %v4359 = vrcp.pop %v4355
    %v4360 = vmul.f32 1.0, %v4359
    %v4361 = vrcp.pop %v4356
    %v4362 = vmul.f32 1.0, %v4361
    %v4363 = vtanh.pop %v4344
    %v4364 = vmul.f32 %v4360, %v4194
    %v4365 = vmul.f32 %v4358, %v4363
    %v4366 = vadd.f32 %v4364, %v4365
    %v4367 = vtanh.pop %v4366
    %v4368 = vmul.f32 %v4362, %v4367
    %4369 = vst [vmem:[#allocation4] sm:$0xff] %v4368
    %v4370 = vld [vmem:[%s720] sm:$0xff]
    %v4371 = vld [vmem:[%s720 + $0x8] sm:$0xff]
    %v4372 = vld [vmem:[%s720 + $0x10] sm:$0xff]
    %v4373 = vld [vmem:[%s720 + $0x18] sm:$0xff]
    %4374 = vmatprep.subr.mxu0 %v3778
    %4375 = vmatpush1.msra.mxu0 %v3777
    %4376 = vmatprep.subr.mxu0 %v3782
    %4377 = vmatpush1.msra.mxu0 %v3781
    %4378 = vmatprep.subr.mxu0 %v3786
    %4379 = vmatpush1.msra.mxu0 %v3785
    %4380 = vmatprep.subr.mxu0 %v3790
    %4381 = vmatpush1.msra.mxu0 %v3789
    %4382 = vmatprep.subr.mxu0 %v3794
    %4383 = vmatpush1.msra.mxu0 %v3793
    %4384 = vmatprep.subr.mxu0 %v3798
    %4385 = vmatpush1.msra.mxu0 %v3797
    %4386 = vmatprep.subr.mxu0 %v3802
    %4387 = vmatpush1.msra.mxu0 %v3801
    %4388 = vmatprep.subr.mxu0 %v3806
    %4389 = vmatpush1.msra.mxu0 %v3805
    %4390 = vmatprep.subr.mxu0 %v3810
    %4391 = vmatpush1.msra.mxu0 %v3809
    %4392 = vmatprep.subr.mxu0 %v3814
    %4393 = vmatpush1.msra.mxu0 %v3813
    %4394 = vmatprep.subr.mxu0 %v3818
    %4395 = vmatpush1.msra.mxu0 %v3817
    %4396 = vmatprep.subr.mxu0 %v3822
    %4397 = vmatpush1.msra.mxu0 %v3821
    %4398 = vmatprep.subr.mxu0 %v3826
    %4399 = vmatpush1.msra.mxu0 %v3825
    %4400 = vmatprep.subr.mxu0 %v3830
    %4401 = vmatpush1.msra.mxu0 %v3829
    %4402 = vmatprep.subr.mxu0 %v3834
    %4403 = vmatpush1.msra.mxu0 %v3833
    %4404 = vmatprep.subr.mxu0 %v3838
    %4405 = vmatpush1.msra.mxu0 %v3837
    %4406 = vmatprep.subr.mxu0 0.0
    %4407 = vmatpush1.msra.mxu0 0.0
    %4408 = vmatprep.subr.mxu0 0.0
    %4409 = vmatpush1.msra.mxu0 0.0
    %4410 = vmatprep.subr.mxu0 0.0
    %4411 = vmatpush1.msra.mxu0 0.0
    %4412 = vmatprep.subr.mxu0 0.0
    %4413 = vmatpush1.msra.mxu0 0.0
    %4414 = vmatprep.subr.mxu0 0.0
    %4415 = vmatpush1.msra.mxu0 0.0
    %4416 = vmatprep.subr.mxu0 0.0
    %4417 = vmatpush1.msra.mxu0 0.0
    %4418 = vmatprep.subr.mxu0 0.0
    %4419 = vmatpush1.msra.mxu0 0.0
    %4420 = vmatprep.subr.mxu0 0.0
    %4421 = vmatpush1.msra.mxu0 0.0
    %4422 = vmatprep.subr.mxu0 0.0
    %4423 = vmatpush1.msra.mxu0 0.0
    %4424 = vmatprep.subr.mxu0 0.0
    %4425 = vmatpush1.msra.mxu0 0.0
    %4426 = vmatprep.subr.mxu0 0.0
    %4427 = vmatpush1.msra.mxu0 0.0
    %4428 = vmatprep.subr.mxu0 0.0
    %4429 = vmatpush1.msra.mxu0 0.0
    %4430 = vmatprep.subr.mxu0 0.0
    %4431 = vmatpush1.msra.mxu0 0.0
    %4432 = vmatprep.subr.mxu0 0.0
    %4433 = vmatpush1.msra.mxu0 0.0
    %4434 = vmatprep.subr.mxu0 0.0
    %4435 = vmatpush1.msra.mxu0 0.0
    %4436 = vmatprep.subr.mxu0 0.0
    %4437 = vmatpush1.msra.mxu0 0.0
    %4438 = vmatprep.mubr.f32.mxu0 0.0
    %4439 = vmatmul.mubr.f32.gmra.mrb[0].mxu0 %v4368
    %v4440 = vpop.f32.mrb[0].mxu0
    %v4441 = vadd.f32 0.0, %v4440
    %v4442 = vpop.f32.mrb[0].mxu0
    %v4443 = vadd.f32 0.0, %v4442
    %4444 = vdwg.mxu0
    %4445 = vmatprep.subr.mxu0 %v3780
    %4446 = vmatpush1.msra.mxu0 %v3779
    %4447 = vmatprep.subr.mxu0 %v3784
    %4448 = vmatpush1.msra.mxu0 %v3783
    %4449 = vmatprep.subr.mxu0 %v3788
    %4450 = vmatpush1.msra.mxu0 %v3787
    %4451 = vmatprep.subr.mxu0 %v3792
    %4452 = vmatpush1.msra.mxu0 %v3791
    %4453 = vmatprep.subr.mxu0 %v3796
    %4454 = vmatpush1.msra.mxu0 %v3795
    %4455 = vmatprep.subr.mxu0 %v3800
    %4456 = vmatpush1.msra.mxu0 %v3799
    %4457 = vmatprep.subr.mxu0 %v3804
    %4458 = vmatpush1.msra.mxu0 %v3803
    %4459 = vmatprep.subr.mxu0 %v3808
    %4460 = vmatpush1.msra.mxu0 %v3807
    %4461 = vmatprep.subr.mxu0 %v3812
    %4462 = vmatpush1.msra.mxu0 %v3811
    %4463 = vmatprep.subr.mxu0 %v3816
    %4464 = vmatpush1.msra.mxu0 %v3815
    %4465 = vmatprep.subr.mxu0 %v3820
    %4466 = vmatpush1.msra.mxu0 %v3819
    %4467 = vmatprep.subr.mxu0 %v3824
    %4468 = vmatpush1.msra.mxu0 %v3823
    %4469 = vmatprep.subr.mxu0 %v3828
    %4470 = vmatpush1.msra.mxu0 %v3827
    %4471 = vmatprep.subr.mxu0 %v3832
    %4472 = vmatpush1.msra.mxu0 %v3831
    %4473 = vmatprep.subr.mxu0 %v3836
    %4474 = vmatpush1.msra.mxu0 %v3835
    %4475 = vmatprep.subr.mxu0 %v3840
    %4476 = vmatpush1.msra.mxu0 %v3839
    %4477 = vmatprep.subr.mxu0 0.0
    %4478 = vmatpush1.msra.mxu0 0.0
    %4479 = vmatprep.subr.mxu0 0.0
    %4480 = vmatpush1.msra.mxu0 0.0
    %4481 = vmatprep.subr.mxu0 0.0
    %4482 = vmatpush1.msra.mxu0 0.0
    %4483 = vmatprep.subr.mxu0 0.0
    %4484 = vmatpush1.msra.mxu0 0.0
    %4485 = vmatprep.subr.mxu0 0.0
    %4486 = vmatpush1.msra.mxu0 0.0
    %4487 = vmatprep.subr.mxu0 0.0
    %4488 = vmatpush1.msra.mxu0 0.0
    %4489 = vmatprep.subr.mxu0 0.0
    %4490 = vmatpush1.msra.mxu0 0.0
    %4491 = vmatprep.subr.mxu0 0.0
    %4492 = vmatpush1.msra.mxu0 0.0
    %4493 = vmatprep.subr.mxu0 0.0
    %4494 = vmatpush1.msra.mxu0 0.0
    %4495 = vmatprep.subr.mxu0 0.0
    %4496 = vmatpush1.msra.mxu0 0.0
    %4497 = vmatprep.subr.mxu0 0.0
    %4498 = vmatpush1.msra.mxu0 0.0
    %4499 = vmatprep.subr.mxu0 0.0
    %4500 = vmatpush1.msra.mxu0 0.0
    %4501 = vmatprep.subr.mxu0 0.0
    %4502 = vmatpush1.msra.mxu0 0.0
    %4503 = vmatprep.subr.mxu0 0.0
    %4504 = vmatpush1.msra.mxu0 0.0
    %4505 = vmatprep.subr.mxu0 0.0
    %4506 = vmatpush1.msra.mxu0 0.0
    %4507 = vmatprep.subr.mxu0 0.0
    %4508 = vmatpush1.msra.mxu0 0.0
    %4509 = vmatprep.mubr.f32.mxu0 0.0
    %4510 = vmatmul.mubr.f32.gmra.mrb[0].mxu0 %v4368
    %v4511 = vpop.f32.mrb[0].mxu0
    %v4512 = vadd.f32 0.0, %v4511
    %v4513 = vpop.f32.mrb[0].mxu0
    %v4514 = vadd.f32 0.0, %v4513
    %4515 = vdwg.mxu0
    %v4516 = vadd.f32 %v4370, %v4441
    %v4517 = vadd.f32 %v4371, %v4443
    %v4518 = vadd.f32 %v4372, %v4512
    %v4519 = vadd.f32 %v4373, %v4514
    %v4520 = vxor.u32 %v4516, 2147483648
    %v4521 = vxor.u32 %v4517, 2147483648
    %v4522 = vxor.u32 %v4518, 2147483648
    %v4523 = vmul.f32 %v4520, 1.442695
    %v4524 = vpow.pop %v4523
    %v4525 = vmul.f32 %v4521, 1.442695
    %v4526 = vpow.pop %v4525
    %v4527 = vmul.f32 %v4522, 1.442695
    %v4528 = vpow.pop %v4527
    %v4529 = vadd.f32 %v4524, 1.0
    %v4530 = vadd.f32 %v4526, 1.0
    %v4531 = vadd.f32 %v4528, 1.0
    %v4532 = vrcp.pop %v4529
    %v4533 = vmul.f32 1.0, %v4532
    %v4534 = vrcp.pop %v4530
    %v4535 = vmul.f32 1.0, %v4534
    %v4536 = vrcp.pop %v4531
    %v4537 = vmul.f32 1.0, %v4536
    %v4538 = vtanh.pop %v4519
    %v4539 = vmul.f32 %v4535, %v4366
    %v4540 = vmul.f32 %v4533, %v4538
    %v4541 = vadd.f32 %v4539, %v4540
    %v4542 = vtanh.pop %v4541
    %v4543 = vmul.f32 %v4537, %v4542
    %4544 = vst [vmem:[%s895] sm:$0xff] %v4543
    %v4545 = vld [vmem:[%s897] sm:$0xff]
    %v4546 = vld [vmem:[%s897 + $0x8] sm:$0xff]
    %v4547 = vld [vmem:[%s897 + $0x10] sm:$0xff]
    %v4548 = vld [vmem:[%s897 + $0x18] sm:$0xff]
    %4549 = vmatprep.subr.mxu0 %v3778
    %4550 = vmatpush1.msra.mxu0 %v3777
    %4551 = vmatprep.subr.mxu0 %v3782
    %4552 = vmatpush1.msra.mxu0 %v3781
    %4553 = vmatprep.subr.mxu0 %v3786
    %4554 = vmatpush1.msra.mxu0 %v3785
    %4555 = vmatprep.subr.mxu0 %v3790
    %4556 = vmatpush1.msra.mxu0 %v3789
    %4557 = vmatprep.subr.mxu0 %v3794
    %4558 = vmatpush1.msra.mxu0 %v3793
    %4559 = vmatprep.subr.mxu0 %v3798
    %4560 = vmatpush1.msra.mxu0 %v3797
    %4561 = vmatprep.subr.mxu0 %v3802
    %4562 = vmatpush1.msra.mxu0 %v3801
    %4563 = vmatprep.subr.mxu0 %v3806
    %4564 = vmatpush1.msra.mxu0 %v3805
    %4565 = vmatprep.subr.mxu0 %v3810
    %4566 = vmatpush1.msra.mxu0 %v3809
    %4567 = vmatprep.subr.mxu0 %v3814
    %4568 = vmatpush1.msra.mxu0 %v3813
    %4569 = vmatprep.subr.mxu0 %v3818
    %4570 = vmatpush1.msra.mxu0 %v3817
    %4571 = vmatprep.subr.mxu0 %v3822
    %4572 = vmatpush1.msra.mxu0 %v3821
    %4573 = vmatprep.subr.mxu0 %v3826
    %4574 = vmatpush1.msra.mxu0 %v3825
    %4575 = vmatprep.subr.mxu0 %v3830
    %4576 = vmatpush1.msra.mxu0 %v3829
    %4577 = vmatprep.subr.mxu0 %v3834
    %4578 = vmatpush1.msra.mxu0 %v3833
    %4579 = vmatprep.subr.mxu0 %v3838
    %4580 = vmatpush1.msra.mxu0 %v3837
    %4581 = vmatprep.subr.mxu0 0.0
    %4582 = vmatpush1.msra.mxu0 0.0
    %4583 = vmatprep.subr.mxu0 0.0
    %4584 = vmatpush1.msra.mxu0 0.0
    %4585 = vmatprep.subr.mxu0 0.0
    %4586 = vmatpush1.msra.mxu0 0.0
    %4587 = vmatprep.subr.mxu0 0.0
    %4588 = vmatpush1.msra.mxu0 0.0
    %4589 = vmatprep.subr.mxu0 0.0
    %4590 = vmatpush1.msra.mxu0 0.0
    %4591 = vmatprep.subr.mxu0 0.0
    %4592 = vmatpush1.msra.mxu0 0.0
    %4593 = vmatprep.subr.mxu0 0.0
    %4594 = vmatpush1.msra.mxu0 0.0
    %4595 = vmatprep.subr.mxu0 0.0
    %4596 = vmatpush1.msra.mxu0 0.0
    %4597 = vmatprep.subr.mxu0 0.0
    %4598 = vmatpush1.msra.mxu0 0.0
    %4599 = vmatprep.subr.mxu0 0.0
    %4600 = vmatpush1.msra.mxu0 0.0
    %4601 = vmatprep.subr.mxu0 0.0
    %4602 = vmatpush1.msra.mxu0 0.0
    %4603 = vmatprep.subr.mxu0 0.0
    %4604 = vmatpush1.msra.mxu0 0.0
    %4605 = vmatprep.subr.mxu0 0.0
    %4606 = vmatpush1.msra.mxu0 0.0
    %4607 = vmatprep.subr.mxu0 0.0
    %4608 = vmatpush1.msra.mxu0 0.0
    %4609 = vmatprep.subr.mxu0 0.0
    %4610 = vmatpush1.msra.mxu0 0.0
    %4611 = vmatprep.subr.mxu0 0.0
    %4612 = vmatpush1.msra.mxu0 0.0
    %4613 = vmatprep.mubr.f32.mxu0 0.0
    %4614 = vmatmul.mubr.f32.gmra.mrb[0].mxu0 %v4543
    %v4615 = vpop.f32.mrb[0].mxu0
    %v4616 = vadd.f32 0.0, %v4615
    %v4617 = vpop.f32.mrb[0].mxu0
    %v4618 = vadd.f32 0.0, %v4617
    %4619 = vdwg.mxu0
    %4620 = vmatprep.subr.mxu0 %v3780
    %4621 = vmatpush1.msra.mxu0 %v3779
    %4622 = vmatprep.subr.mxu0 %v3784
    %4623 = vmatpush1.msra.mxu0 %v3783
    %4624 = vmatprep.subr.mxu0 %v3788
    %4625 = vmatpush1.msra.mxu0 %v3787
    %4626 = vmatprep.subr.mxu0 %v3792
    %4627 = vmatpush1.msra.mxu0 %v3791
    %4628 = vmatprep.subr.mxu0 %v3796
    %4629 = vmatpush1.msra.mxu0 %v3795
    %4630 = vmatprep.subr.mxu0 %v3800
    %4631 = vmatpush1.msra.mxu0 %v3799
    %4632 = vmatprep.subr.mxu0 %v3804
    %4633 = vmatpush1.msra.mxu0 %v3803
    %4634 = vmatprep.subr.mxu0 %v3808
    %4635 = vmatpush1.msra.mxu0 %v3807
    %4636 = vmatprep.subr.mxu0 %v3812
    %4637 = vmatpush1.msra.mxu0 %v3811
    %4638 = vmatprep.subr.mxu0 %v3816
    %4639 = vmatpush1.msra.mxu0 %v3815
    %4640 = vmatprep.subr.mxu0 %v3820
    %4641 = vmatpush1.msra.mxu0 %v3819
    %4642 = vmatprep.subr.mxu0 %v3824
    %4643 = vmatpush1.msra.mxu0 %v3823
    %4644 = vmatprep.subr.mxu0 %v3828
    %4645 = vmatpush1.msra.mxu0 %v3827
    %4646 = vmatprep.subr.mxu0 %v3832
    %4647 = vmatpush1.msra.mxu0 %v3831
    %4648 = vmatprep.subr.mxu0 %v3836
    %4649 = vmatpush1.msra.mxu0 %v3835
    %4650 = vmatprep.subr.mxu0 %v3840
    %4651 = vmatpush1.msra.mxu0 %v3839
    %4652 = vmatprep.subr.mxu0 0.0
    %4653 = vmatpush1.msra.mxu0 0.0
    %4654 = vmatprep.subr.mxu0 0.0
    %4655 = vmatpush1.msra.mxu0 0.0
    %4656 = vmatprep.subr.mxu0 0.0
    %4657 = vmatpush1.msra.mxu0 0.0
    %4658 = vmatprep.subr.mxu0 0.0
    %4659 = vmatpush1.msra.mxu0 0.0
    %4660 = vmatprep.subr.mxu0 0.0
    %4661 = vmatpush1.msra.mxu0 0.0
    %4662 = vmatprep.subr.mxu0 0.0
    %4663 = vmatpush1.msra.mxu0 0.0
    %4664 = vmatprep.subr.mxu0 0.0
    %4665 = vmatpush1.msra.mxu0 0.0
    %4666 = vmatprep.subr.mxu0 0.0
    %4667 = vmatpush1.msra.mxu0 0.0
    %4668 = vmatprep.subr.mxu0 0.0
    %4669 = vmatpush1.msra.mxu0 0.0
    %4670 = vmatprep.subr.mxu0 0.0
    %4671 = vmatpush1.msra.mxu0 0.0
    %4672 = vmatprep.subr.mxu0 0.0
    %4673 = vmatpush1.msra.mxu0 0.0
    %4674 = vmatprep.subr.mxu0 0.0
    %4675 = vmatpush1.msra.mxu0 0.0
    %4676 = vmatprep.subr.mxu0 0.0
    %4677 = vmatpush1.msra.mxu0 0.0
    %4678 = vmatprep.subr.mxu0 0.0
    %4679 = vmatpush1.msra.mxu0 0.0
    %4680 = vmatprep.subr.mxu0 0.0
    %4681 = vmatpush1.msra.mxu0 0.0
    %4682 = vmatprep.subr.mxu0 0.0
    %4683 = vmatpush1.msra.mxu0 0.0
    %4684 = vmatprep.mubr.f32.mxu0 0.0
    %4685 = vmatmul.mubr.f32.gmra.mrb[0].mxu0 %v4543
    %v4686 = vpop.f32.mrb[0].mxu0
    %v4687 = vadd.f32 0.0, %v4686
    %v4688 = vpop.f32.mrb[0].mxu0
    %v4689 = vadd.f32 0.0, %v4688
    %4690 = vdwg.mxu0
    %v4691 = vadd.f32 %v4545, %v4616
    %v4692 = vadd.f32 %v4546, %v4618
    %v4693 = vadd.f32 %v4547, %v4687
    %v4694 = vadd.f32 %v4548, %v4689
    %v4695 = vxor.u32 %v4691, 2147483648
    %v4696 = vxor.u32 %v4692, 2147483648
    %v4697 = vxor.u32 %v4693, 2147483648
    %v4698 = vmul.f32 %v4695, 1.442695
    %v4699 = vpow.pop %v4698
    %v4700 = vmul.f32 %v4696, 1.442695
    %v4701 = vpow.pop %v4700
    %v4702 = vmul.f32 %v4697, 1.442695
    %v4703 = vpow.pop %v4702
    %v4704 = vadd.f32 %v4699, 1.0
    %v4705 = vadd.f32 %v4701, 1.0
    %v4706 = vadd.f32 %v4703, 1.0
    %v4707 = vrcp.pop %v4704
    %v4708 = vmul.f32 1.0, %v4707
    %v4709 = vrcp.pop %v4705
    %v4710 = vmul.f32 1.0, %v4709
    %v4711 = vrcp.pop %v4706
    %v4712 = vmul.f32 1.0, %v4711
    %v4713 = vtanh.pop %v4694
    %v4714 = vmul.f32 %v4710, %v4541
    %v4715 = vmul.f32 %v4708, %v4713
    %v4716 = vadd.f32 %v4714, %v4715
    %v4717 = vtanh.pop %v4716
    %v4718 = vmul.f32 %v4712, %v4717
    %4719 = vst [vmem:[%s1072] sm:$0xff] %v4718
    %v4720 = vld [vmem:[%s1074] sm:$0xff]
    %v4721 = vld [vmem:[%s1074 + $0x8] sm:$0xff]
    %v4722 = vld [vmem:[%s1074 + $0x10] sm:$0xff]
    %v4723 = vld [vmem:[%s1074 + $0x18] sm:$0xff]
    %4724 = vmatprep.subr.mxu0 %v3778
    %4725 = vmatpush1.msra.mxu0 %v3777
    %4726 = vmatprep.subr.mxu0 %v3782
    %4727 = vmatpush1.msra.mxu0 %v3781
    %4728 = vmatprep.subr.mxu0 %v3786
    %4729 = vmatpush1.msra.mxu0 %v3785
    %4730 = vmatprep.subr.mxu0 %v3790
    %4731 = vmatpush1.msra.mxu0 %v3789
    %4732 = vmatprep.subr.mxu0 %v3794
    %4733 = vmatpush1.msra.mxu0 %v3793
    %4734 = vmatprep.subr.mxu0 %v3798
    %4735 = vmatpush1.msra.mxu0 %v3797
    %4736 = vmatprep.subr.mxu0 %v3802
    %4737 = vmatpush1.msra.mxu0 %v3801
    %4738 = vmatprep.subr.mxu0 %v3806
    %4739 = vmatpush1.msra.mxu0 %v3805
    %4740 = vmatprep.subr.mxu0 %v3810
    %4741 = vmatpush1.msra.mxu0 %v3809
    %4742 = vmatprep.subr.mxu0 %v3814
    %4743 = vmatpush1.msra.mxu0 %v3813
    %4744 = vmatprep.subr.mxu0 %v3818
    %4745 = vmatpush1.msra.mxu0 %v3817
    %4746 = vmatprep.subr.mxu0 %v3822
    %4747 = vmatpush1.msra.mxu0 %v3821
    %4748 = vmatprep.subr.mxu0 %v3826
    %4749 = vmatpush1.msra.mxu0 %v3825
    %4750 = vmatprep.subr.mxu0 %v3830
    %4751 = vmatpush1.msra.mxu0 %v3829
    %4752 = vmatprep.subr.mxu0 %v3834
    %4753 = vmatpush1.msra.mxu0 %v3833
    %4754 = vmatprep.subr.mxu0 %v3838
    %4755 = vmatpush1.msra.mxu0 %v3837
    %4756 = vmatprep.subr.mxu0 0.0
    %4757 = vmatpush1.msra.mxu0 0.0
    %4758 = vmatprep.subr.mxu0 0.0
    %4759 = vmatpush1.msra.mxu0 0.0
    %4760 = vmatprep.subr.mxu0 0.0
    %4761 = vmatpush1.msra.mxu0 0.0
    %4762 = vmatprep.subr.mxu0 0.0
    %4763 = vmatpush1.msra.mxu0 0.0
    %4764 = vmatprep.subr.mxu0 0.0
    %4765 = vmatpush1.msra.mxu0 0.0
    %4766 = vmatprep.subr.mxu0 0.0
    %4767 = vmatpush1.msra.mxu0 0.0
    %4768 = vmatprep.subr.mxu0 0.0
    %4769 = vmatpush1.msra.mxu0 0.0
    %4770 = vmatprep.subr.mxu0 0.0
    %4771 = vmatpush1.msra.mxu0 0.0
    %4772 = vmatprep.subr.mxu0 0.0
    %4773 = vmatpush1.msra.mxu0 0.0
    %4774 = vmatprep.subr.mxu0 0.0
    %4775 = vmatpush1.msra.mxu0 0.0
    %4776 = vmatprep.subr.mxu0 0.0
    %4777 = vmatpush1.msra.mxu0 0.0
    %4778 = vmatprep.subr.mxu0 0.0
    %4779 = vmatpush1.msra.mxu0 0.0
    %4780 = vmatprep.subr.mxu0 0.0
    %4781 = vmatpush1.msra.mxu0 0.0
    %4782 = vmatprep.subr.mxu0 0.0
    %4783 = vmatpush1.msra.mxu0 0.0
    %4784 = vmatprep.subr.mxu0 0.0
    %4785 = vmatpush1.msra.mxu0 0.0
    %4786 = vmatprep.subr.mxu0 0.0
    %4787 = vmatpush1.msra.mxu0 0.0
    %4788 = vmatprep.mubr.f32.mxu0 0.0
    %4789 = vmatmul.mubr.f32.gmra.mrb[0].mxu0 %v4718
    %v4790 = vpop.f32.mrb[0].mxu0
    %v4791 = vadd.f32 0.0, %v4790
    %v4792 = vpop.f32.mrb[0].mxu0
    %v4793 = vadd.f32 0.0, %v4792
    %4794 = vdwg.mxu0
    %4795 = vmatprep.subr.mxu0 %v3780
    %4796 = vmatpush1.msra.mxu0 %v3779
    %4797 = vmatprep.subr.mxu0 %v3784
    %4798 = vmatpush1.msra.mxu0 %v3783
    %4799 = vmatprep.subr.mxu0 %v3788
    %4800 = vmatpush1.msra.mxu0 %v3787
    %4801 = vmatprep.subr.mxu0 %v3792
    %4802 = vmatpush1.msra.mxu0 %v3791
    %4803 = vmatprep.subr.mxu0 %v3796
    %4804 = vmatpush1.msra.mxu0 %v3795
    %4805 = vmatprep.subr.mxu0 %v3800
    %4806 = vmatpush1.msra.mxu0 %v3799
    %4807 = vmatprep.subr.mxu0 %v3804
    %4808 = vmatpush1.msra.mxu0 %v3803
    %4809 = vmatprep.subr.mxu0 %v3808
    %4810 = vmatpush1.msra.mxu0 %v3807
    %4811 = vmatprep.subr.mxu0 %v3812
    %4812 = vmatpush1.msra.mxu0 %v3811
    %4813 = vmatprep.subr.mxu0 %v3816
    %4814 = vmatpush1.msra.mxu0 %v3815
    %4815 = vmatprep.subr.mxu0 %v3820
    %4816 = vmatpush1.msra.mxu0 %v3819
    %4817 = vmatprep.subr.mxu0 %v3824
    %4818 = vmatpush1.msra.mxu0 %v3823
    %4819 = vmatprep.subr.mxu0 %v3828
    %4820 = vmatpush1.msra.mxu0 %v3827
    %4821 = vmatprep.subr.mxu0 %v3832
    %4822 = vmatpush1.msra.mxu0 %v3831
    %4823 = vmatprep.subr.mxu0 %v3836
    %4824 = vmatpush1.msra.mxu0 %v3835
    %4825 = vmatprep.subr.mxu0 %v3840
    %4826 = vmatpush1.msra.mxu0 %v3839
    %4827 = vmatprep.subr.mxu0 0.0
    %4828 = vmatpush1.msra.mxu0 0.0
    %4829 = vmatprep.subr.mxu0 0.0
    %4830 = vmatpush1.msra.mxu0 0.0
    %4831 = vmatprep.subr.mxu0 0.0
    %4832 = vmatpush1.msra.mxu0 0.0
    %4833 = vmatprep.subr.mxu0 0.0
    %4834 = vmatpush1.msra.mxu0 0.0
    %4835 = vmatprep.subr.mxu0 0.0
    %4836 = vmatpush1.msra.mxu0 0.0
    %4837 = vmatprep.subr.mxu0 0.0
    %4838 = vmatpush1.msra.mxu0 0.0
    %4839 = vmatprep.subr.mxu0 0.0
    %4840 = vmatpush1.msra.mxu0 0.0
    %4841 = vmatprep.subr.mxu0 0.0
    %4842 = vmatpush1.msra.mxu0 0.0
    %4843 = vmatprep.subr.mxu0 0.0
    %4844 = vmatpush1.msra.mxu0 0.0
    %4845 = vmatprep.subr.mxu0 0.0
    %4846 = vmatpush1.msra.mxu0 0.0
    %4847 = vmatprep.subr.mxu0 0.0
    %4848 = vmatpush1.msra.mxu0 0.0
    %4849 = vmatprep.subr.mxu0 0.0
    %4850 = vmatpush1.msra.mxu0 0.0
    %4851 = vmatprep.subr.mxu0 0.0
    %4852 = vmatpush1.msra.mxu0 0.0
    %4853 = vmatprep.subr.mxu0 0.0
    %4854 = vmatpush1.msra.mxu0 0.0
    %4855 = vmatprep.subr.mxu0 0.0
    %4856 = vmatpush1.msra.mxu0 0.0
    %4857 = vmatprep.subr.mxu0 0.0
    %4858 = vmatpush1.msra.mxu0 0.0
    %4859 = vmatprep.mubr.f32.mxu0 0.0
    %4860 = vmatmul.mubr.f32.gmra.mrb[0].mxu0 %v4718
    %v4861 = vpop.f32.mrb[0].mxu0
    %v4862 = vadd.f32 0.0, %v4861
    %v4863 = vpop.f32.mrb[0].mxu0
    %v4864 = vadd.f32 0.0, %v4863
    %4865 = vdwg.mxu0
    %v4866 = vadd.f32 %v4720, %v4791
    %v4867 = vadd.f32 %v4721, %v4793
    %v4868 = vadd.f32 %v4722, %v4862
    %v4869 = vadd.f32 %v4723, %v4864
    %v4870 = vxor.u32 %v4866, 2147483648
    %v4871 = vxor.u32 %v4867, 2147483648
    %v4872 = vxor.u32 %v4868, 2147483648
    %v4873 = vmul.f32 %v4870, 1.442695
    %v4874 = vpow.pop %v4873
    %v4875 = vmul.f32 %v4871, 1.442695
    %v4876 = vpow.pop %v4875
    %v4877 = vmul.f32 %v4872, 1.442695
    %v4878 = vpow.pop %v4877
    %v4879 = vadd.f32 %v4874, 1.0
    %v4880 = vadd.f32 %v4876, 1.0
    %v4881 = vadd.f32 %v4878, 1.0
    %v4882 = vrcp.pop %v4879
    %v4883 = vmul.f32 1.0, %v4882
    %v4884 = vrcp.pop %v4880
    %v4885 = vmul.f32 1.0, %v4884
    %v4886 = vrcp.pop %v4881
    %v4887 = vmul.f32 1.0, %v4886
    %v4888 = vtanh.pop %v4869
    %v4889 = vmul.f32 %v4885, %v4716
    %v4890 = vmul.f32 %v4883, %v4888
    %v4891 = vadd.f32 %v4889, %v4890
    %v4892 = vtanh.pop %v4891
    %v4893 = vmul.f32 %v4887, %v4892
    %4894 = vst [vmem:[%s1249] sm:$0xff] %v4893
    %v4895 = vld [vmem:[%s1251] sm:$0xff]
    %v4896 = vld [vmem:[%s1251 + $0x8] sm:$0xff]
    %v4897 = vld [vmem:[%s1251 + $0x10] sm:$0xff]
    %v4898 = vld [vmem:[%s1251 + $0x18] sm:$0xff]
    %4899 = vmatprep.subr.mxu0 %v3778
    %4900 = vmatpush1.msra.mxu0 %v3777
    %4901 = vmatprep.subr.mxu0 %v3782
    %4902 = vmatpush1.msra.mxu0 %v3781
    %4903 = vmatprep.subr.mxu0 %v3786
    %4904 = vmatpush1.msra.mxu0 %v3785
    %4905 = vmatprep.subr.mxu0 %v3790
    %4906 = vmatpush1.msra.mxu0 %v3789
    %4907 = vmatprep.subr.mxu0 %v3794
    %4908 = vmatpush1.msra.mxu0 %v3793
    %4909 = vmatprep.subr.mxu0 %v3798
    %4910 = vmatpush1.msra.mxu0 %v3797
    %4911 = vmatprep.subr.mxu0 %v3802
    %4912 = vmatpush1.msra.mxu0 %v3801
    %4913 = vmatprep.subr.mxu0 %v3806
    %4914 = vmatpush1.msra.mxu0 %v3805
    %4915 = vmatprep.subr.mxu0 %v3810
    %4916 = vmatpush1.msra.mxu0 %v3809
    %4917 = vmatprep.subr.mxu0 %v3814
    %4918 = vmatpush1.msra.mxu0 %v3813
    %4919 = vmatprep.subr.mxu0 %v3818
    %4920 = vmatpush1.msra.mxu0 %v3817
    %4921 = vmatprep.subr.mxu0 %v3822
    %4922 = vmatpush1.msra.mxu0 %v3821
    %4923 = vmatprep.subr.mxu0 %v3826
    %4924 = vmatpush1.msra.mxu0 %v3825
    %4925 = vmatprep.subr.mxu0 %v3830
    %4926 = vmatpush1.msra.mxu0 %v3829
    %4927 = vmatprep.subr.mxu0 %v3834
    %4928 = vmatpush1.msra.mxu0 %v3833
    %4929 = vmatprep.subr.mxu0 %v3838
    %4930 = vmatpush1.msra.mxu0 %v3837
    %4931 = vmatprep.subr.mxu0 0.0
    %4932 = vmatpush1.msra.mxu0 0.0
    %4933 = vmatprep.subr.mxu0 0.0
    %4934 = vmatpush1.msra.mxu0 0.0
    %4935 = vmatprep.subr.mxu0 0.0
    %4936 = vmatpush1.msra.mxu0 0.0
    %4937 = vmatprep.subr.mxu0 0.0
    %4938 = vmatpush1.msra.mxu0 0.0
    %4939 = vmatprep.subr.mxu0 0.0
    %4940 = vmatpush1.msra.mxu0 0.0
    %4941 = vmatprep.subr.mxu0 0.0
    %4942 = vmatpush1.msra.mxu0 0.0
    %4943 = vmatprep.subr.mxu0 0.0
    %4944 = vmatpush1.msra.mxu0 0.0
    %4945 = vmatprep.subr.mxu0 0.0
    %4946 = vmatpush1.msra.mxu0 0.0
    %4947 = vmatprep.subr.mxu0 0.0
    %4948 = vmatpush1.msra.mxu0 0.0
    %4949 = vmatprep.subr.mxu0 0.0
    %4950 = vmatpush1.msra.mxu0 0.0
    %4951 = vmatprep.subr.mxu0 0.0
    %4952 = vmatpush1.msra.mxu0 0.0
    %4953 = vmatprep.subr.mxu0 0.0
    %4954 = vmatpush1.msra.mxu0 0.0
    %4955 = vmatprep.subr.mxu0 0.0
    %4956 = vmatpush1.msra.mxu0 0.0
    %4957 = vmatprep.subr.mxu0 0.0
    %4958 = vmatpush1.msra.mxu0 0.0
    %4959 = vmatprep.subr.mxu0 0.0
    %4960 = vmatpush1.msra.mxu0 0.0
    %4961 = vmatprep.subr.mxu0 0.0
    %4962 = vmatpush1.msra.mxu0 0.0
    %4963 = vmatprep.mubr.f32.mxu0 0.0
    %4964 = vmatmul.mubr.f32.gmra.mrb[0].mxu0 %v4893
    %v4965 = vpop.f32.mrb[0].mxu0
    %v4966 = vadd.f32 0.0, %v4965
    %v4967 = vpop.f32.mrb[0].mxu0
    %v4968 = vadd.f32 0.0, %v4967
    %4969 = vdwg.mxu0
    %4970 = vmatprep.subr.mxu0 %v3780
    %4971 = vmatpush1.msra.mxu0 %v3779
    %4972 = vmatprep.subr.mxu0 %v3784
    %4973 = vmatpush1.msra.mxu0 %v3783
    %4974 = vmatprep.subr.mxu0 %v3788
    %4975 = vmatpush1.msra.mxu0 %v3787
    %4976 = vmatprep.subr.mxu0 %v3792
    %4977 = vmatpush1.msra.mxu0 %v3791
    %4978 = vmatprep.subr.mxu0 %v3796
    %4979 = vmatpush1.msra.mxu0 %v3795
    %4980 = vmatprep.subr.mxu0 %v3800
    %4981 = vmatpush1.msra.mxu0 %v3799
    %4982 = vmatprep.subr.mxu0 %v3804
    %4983 = vmatpush1.msra.mxu0 %v3803
    %4984 = vmatprep.subr.mxu0 %v3808
    %4985 = vmatpush1.msra.mxu0 %v3807
    %4986 = vmatprep.subr.mxu0 %v3812
    %4987 = vmatpush1.msra.mxu0 %v3811
    %4988 = vmatprep.subr.mxu0 %v3816
    %4989 = vmatpush1.msra.mxu0 %v3815
    %4990 = vmatprep.subr.mxu0 %v3820
    %4991 = vmatpush1.msra.mxu0 %v3819
    %4992 = vmatprep.subr.mxu0 %v3824
    %4993 = vmatpush1.msra.mxu0 %v3823
    %4994 = vmatprep.subr.mxu0 %v3828
    %4995 = vmatpush1.msra.mxu0 %v3827
    %4996 = vmatprep.subr.mxu0 %v3832
    %4997 = vmatpush1.msra.mxu0 %v3831
    %4998 = vmatprep.subr.mxu0 %v3836
    %4999 = vmatpush1.msra.mxu0 %v3835
    %5000 = vmatprep.subr.mxu0 %v3840
    %5001 = vmatpush1.msra.mxu0 %v3839
    %5002 = vmatprep.subr.mxu0 0.0
    %5003 = vmatpush1.msra.mxu0 0.0
    %5004 = vmatprep.subr.mxu0 0.0
    %5005 = vmatpush1.msra.mxu0 0.0
    %5006 = vmatprep.subr.mxu0 0.0
    %5007 = vmatpush1.msra.mxu0 0.0
    %5008 = vmatprep.subr.mxu0 0.0
    %5009 = vmatpush1.msra.mxu0 0.0
    %5010 = vmatprep.subr.mxu0 0.0
    %5011 = vmatpush1.msra.mxu0 0.0
    %5012 = vmatprep.subr.mxu0 0.0
    %5013 = vmatpush1.msra.mxu0 0.0
    %5014 = vmatprep.subr.mxu0 0.0
    %5015 = vmatpush1.msra.mxu0 0.0
    %5016 = vmatprep.subr.mxu0 0.0
    %5017 = vmatpush1.msra.mxu0 0.0
    %5018 = vmatprep.subr.mxu0 0.0
    %5019 = vmatpush1.msra.mxu0 0.0
    %5020 = vmatprep.subr.mxu0 0.0
    %5021 = vmatpush1.msra.mxu0 0.0
    %5022 = vmatprep.subr.mxu0 0.0
    %5023 = vmatpush1.msra.mxu0 0.0
    %5024 = vmatprep.subr.mxu0 0.0
    %5025 = vmatpush1.msra.mxu0 0.0
    %5026 = vmatprep.subr.mxu0 0.0
    %5027 = vmatpush1.msra.mxu0 0.0
    %5028 = vmatprep.subr.mxu0 0.0
    %5029 = vmatpush1.msra.mxu0 0.0
    %5030 = vmatprep.subr.mxu0 0.0
    %5031 = vmatpush1.msra.mxu0 0.0
    %5032 = vmatprep.subr.mxu0 0.0
    %5033 = vmatpush1.msra.mxu0 0.0
    %5034 = vmatprep.mubr.f32.mxu0 0.0
    %5035 = vmatmul.mubr.f32.gmra.mrb[0].mxu0 %v4893
    %v5036 = vpop.f32.mrb[0].mxu0
    %v5037 = vadd.f32 0.0, %v5036
    %v5038 = vpop.f32.mrb[0].mxu0
    %v5039 = vadd.f32 0.0, %v5038
    %5040 = vdwg.mxu0
    %v5041 = vadd.f32 %v4895, %v4966
    %v5042 = vadd.f32 %v4896, %v4968
    %v5043 = vadd.f32 %v4897, %v5037
    %v5044 = vadd.f32 %v4898, %v5039
    %v5045 = vxor.u32 %v5041, 2147483648
    %v5046 = vxor.u32 %v5042, 2147483648
    %v5047 = vxor.u32 %v5043, 2147483648
    %v5048 = vmul.f32 %v5045, 1.442695
    %v5049 = vpow.pop %v5048
    %v5050 = vmul.f32 %v5046, 1.442695
    %v5051 = vpow.pop %v5050
    %v5052 = vmul.f32 %v5047, 1.442695
    %v5053 = vpow.pop %v5052
    %v5054 = vadd.f32 %v5049, 1.0
    %v5055 = vadd.f32 %v5051, 1.0
    %v5056 = vadd.f32 %v5053, 1.0
    %v5057 = vrcp.pop %v5054
    %v5058 = vmul.f32 1.0, %v5057
    %v5059 = vrcp.pop %v5055
    %v5060 = vmul.f32 1.0, %v5059
    %v5061 = vrcp.pop %v5056
    %v5062 = vmul.f32 1.0, %v5061
    %v5063 = vtanh.pop %v5044
    %v5064 = vmul.f32 %v5060, %v4891
    %v5065 = vmul.f32 %v5058, %v5063
    %v5066 = vadd.f32 %v5064, %v5065
    %v5067 = vtanh.pop %v5066
    %v5068 = vmul.f32 %v5062, %v5067
    %5069 = vst [vmem:[%s1426] sm:$0xff] %v5068
    %v5070 = vld [vmem:[%s1428] sm:$0xff]
    %v5071 = vld [vmem:[%s1428 + $0x8] sm:$0xff]
    %v5072 = vld [vmem:[%s1428 + $0x10] sm:$0xff]
    %v5073 = vld [vmem:[%s1428 + $0x18] sm:$0xff]
    %5074 = vmatprep.subr.mxu0 %v3778
    %5075 = vmatpush1.msra.mxu0 %v3777
    %5076 = vmatprep.subr.mxu0 %v3782
    %5077 = vmatpush1.msra.mxu0 %v3781
    %5078 = vmatprep.subr.mxu0 %v3786
    %5079 = vmatpush1.msra.mxu0 %v3785
    %5080 = vmatprep.subr.mxu0 %v3790
    %5081 = vmatpush1.msra.mxu0 %v3789
    %5082 = vmatprep.subr.mxu0 %v3794
    %5083 = vmatpush1.msra.mxu0 %v3793
    %5084 = vmatprep.subr.mxu0 %v3798
    %5085 = vmatpush1.msra.mxu0 %v3797
    %5086 = vmatprep.subr.mxu0 %v3802
    %5087 = vmatpush1.msra.mxu0 %v3801
    %5088 = vmatprep.subr.mxu0 %v3806
    %5089 = vmatpush1.msra.mxu0 %v3805
    %5090 = vmatprep.subr.mxu0 %v3810
    %5091 = vmatpush1.msra.mxu0 %v3809
    %5092 = vmatprep.subr.mxu0 %v3814
    %5093 = vmatpush1.msra.mxu0 %v3813
    %5094 = vmatprep.subr.mxu0 %v3818
    %5095 = vmatpush1.msra.mxu0 %v3817
    %5096 = vmatprep.subr.mxu0 %v3822
    %5097 = vmatpush1.msra.mxu0 %v3821
    %5098 = vmatprep.subr.mxu0 %v3826
    %5099 = vmatpush1.msra.mxu0 %v3825
    %5100 = vmatprep.subr.mxu0 %v3830
    %5101 = vmatpush1.msra.mxu0 %v3829
    %5102 = vmatprep.subr.mxu0 %v3834
    %5103 = vmatpush1.msra.mxu0 %v3833
    %5104 = vmatprep.subr.mxu0 %v3838
    %5105 = vmatpush1.msra.mxu0 %v3837
    %5106 = vmatprep.subr.mxu0 0.0
    %5107 = vmatpush1.msra.mxu0 0.0
    %5108 = vmatprep.subr.mxu0 0.0
    %5109 = vmatpush1.msra.mxu0 0.0
    %5110 = vmatprep.subr.mxu0 0.0
    %5111 = vmatpush1.msra.mxu0 0.0
    %5112 = vmatprep.subr.mxu0 0.0
    %5113 = vmatpush1.msra.mxu0 0.0
    %5114 = vmatprep.subr.mxu0 0.0
    %5115 = vmatpush1.msra.mxu0 0.0
    %5116 = vmatprep.subr.mxu0 0.0
    %5117 = vmatpush1.msra.mxu0 0.0
    %5118 = vmatprep.subr.mxu0 0.0
    %5119 = vmatpush1.msra.mxu0 0.0
    %5120 = vmatprep.subr.mxu0 0.0
    %5121 = vmatpush1.msra.mxu0 0.0
    %5122 = vmatprep.subr.mxu0 0.0
    %5123 = vmatpush1.msra.mxu0 0.0
    %5124 = vmatprep.subr.mxu0 0.0
    %5125 = vmatpush1.msra.mxu0 0.0
    %5126 = vmatprep.subr.mxu0 0.0
    %5127 = vmatpush1.msra.mxu0 0.0
    %5128 = vmatprep.subr.mxu0 0.0
    %5129 = vmatpush1.msra.mxu0 0.0
    %5130 = vmatprep.subr.mxu0 0.0
    %5131 = vmatpush1.msra.mxu0 0.0
    %5132 = vmatprep.subr.mxu0 0.0
    %5133 = vmatpush1.msra.mxu0 0.0
    %5134 = vmatprep.subr.mxu0 0.0
    %5135 = vmatpush1.msra.mxu0 0.0
    %5136 = vmatprep.subr.mxu0 0.0
    %5137 = vmatpush1.msra.mxu0 0.0
    %5138 = vmatprep.mubr.f32.mxu0 0.0
    %5139 = vmatmul.mubr.f32.gmra.mrb[0].mxu0 %v5068
    %v5140 = vpop.f32.mrb[0].mxu0
    %v5141 = vadd.f32 0.0, %v5140
    %v5142 = vpop.f32.mrb[0].mxu0
    %v5143 = vadd.f32 0.0, %v5142
    %5144 = vdwg.mxu0
    %5145 = vmatprep.subr.mxu0 %v3780
    %5146 = vmatpush1.msra.mxu0 %v3779
    %5147 = vmatprep.subr.mxu0 %v3784
    %5148 = vmatpush1.msra.mxu0 %v3783
    %5149 = vmatprep.subr.mxu0 %v3788
    %5150 = vmatpush1.msra.mxu0 %v3787
    %5151 = vmatprep.subr.mxu0 %v3792
    %5152 = vmatpush1.msra.mxu0 %v3791
    %5153 = vmatprep.subr.mxu0 %v3796
    %5154 = vmatpush1.msra.mxu0 %v3795
    %5155 = vmatprep.subr.mxu0 %v3800
    %5156 = vmatpush1.msra.mxu0 %v3799
    %5157 = vmatprep.subr.mxu0 %v3804
    %5158 = vmatpush1.msra.mxu0 %v3803
    %5159 = vmatprep.subr.mxu0 %v3808
    %5160 = vmatpush1.msra.mxu0 %v3807
    %5161 = vmatprep.subr.mxu0 %v3812
    %5162 = vmatpush1.msra.mxu0 %v3811
    %5163 = vmatprep.subr.mxu0 %v3816
    %5164 = vmatpush1.msra.mxu0 %v3815
    %5165 = vmatprep.subr.mxu0 %v3820
    %5166 = vmatpush1.msra.mxu0 %v3819
    %5167 = vmatprep.subr.mxu0 %v3824
    %5168 = vmatpush1.msra.mxu0 %v3823
    %5169 = vmatprep.subr.mxu0 %v3828
    %5170 = vmatpush1.msra.mxu0 %v3827
    %5171 = vmatprep.subr.mxu0 %v3832
    %5172 = vmatpush1.msra.mxu0 %v3831
    %5173 = vmatprep.subr.mxu0 %v3836
    %5174 = vmatpush1.msra.mxu0 %v3835
    %5175 = vmatprep.subr.mxu0 %v3840
    %5176 = vmatpush1.msra.mxu0 %v3839
    %5177 = vmatprep.subr.mxu0 0.0
    %5178 = vmatpush1.msra.mxu0 0.0
    %5179 = vmatprep.subr.mxu0 0.0
    %5180 = vmatpush1.msra.mxu0 0.0
    %5181 = vmatprep.subr.mxu0 0.0
    %5182 = vmatpush1.msra.mxu0 0.0
    %5183 = vmatprep.subr.mxu0 0.0
    %5184 = vmatpush1.msra.mxu0 0.0
    %5185 = vmatprep.subr.mxu0 0.0
    %5186 = vmatpush1.msra.mxu0 0.0
    %5187 = vmatprep.subr.mxu0 0.0
    %5188 = vmatpush1.msra.mxu0 0.0
    %5189 = vmatprep.subr.mxu0 0.0
    %5190 = vmatpush1.msra.mxu0 0.0
    %5191 = vmatprep.subr.mxu0 0.0
    %5192 = vmatpush1.msra.mxu0 0.0
    %5193 = vmatprep.subr.mxu0 0.0
    %5194 = vmatpush1.msra.mxu0 0.0
    %5195 = vmatprep.subr.mxu0 0.0
    %5196 = vmatpush1.msra.mxu0 0.0
    %5197 = vmatprep.subr.mxu0 0.0
    %5198 = vmatpush1.msra.mxu0 0.0
    %5199 = vmatprep.subr.mxu0 0.0
    %5200 = vmatpush1.msra.mxu0 0.0
    %5201 = vmatprep.subr.mxu0 0.0
    %5202 = vmatpush1.msra.mxu0 0.0
    %5203 = vmatprep.subr.mxu0 0.0
    %5204 = vmatpush1.msra.mxu0 0.0
    %5205 = vmatprep.subr.mxu0 0.0
    %5206 = vmatpush1.msra.mxu0 0.0
    %5207 = vmatprep.subr.mxu0 0.0
    %5208 = vmatpush1.msra.mxu0 0.0
    %5209 = vmatprep.mubr.f32.mxu0 0.0
    %5210 = vmatmul.mubr.f32.gmra.mrb[0].mxu0 %v5068
    %v5211 = vpop.f32.mrb[0].mxu0
    %v5212 = vadd.f32 0.0, %v5211
    %v5213 = vpop.f32.mrb[0].mxu0
    %v5214 = vadd.f32 0.0, %v5213
    %5215 = vdwg.mxu0
    %v5216 = vadd.f32 %v5070, %v5141
    %v5217 = vadd.f32 %v5071, %v5143
    %v5218 = vadd.f32 %v5072, %v5212
    %v5219 = vadd.f32 %v5073, %v5214
    %v5220 = vxor.u32 %v5216, 2147483648
    %v5221 = vxor.u32 %v5217, 2147483648
    %v5222 = vxor.u32 %v5218, 2147483648
    %v5223 = vmul.f32 %v5220, 1.442695
    %v5224 = vpow.pop %v5223
    %v5225 = vmul.f32 %v5221, 1.442695
    %v5226 = vpow.pop %v5225
    %v5227 = vmul.f32 %v5222, 1.442695
    %v5228 = vpow.pop %v5227
    %v5229 = vadd.f32 %v5224, 1.0
    %v5230 = vadd.f32 %v5226, 1.0
    %v5231 = vadd.f32 %v5228, 1.0
    %v5232 = vrcp.pop %v5229
    %v5233 = vmul.f32 1.0, %v5232
    %v5234 = vrcp.pop %v5230
    %v5235 = vmul.f32 1.0, %v5234
    %v5236 = vrcp.pop %v5231
    %v5237 = vmul.f32 1.0, %v5236
    %v5238 = vtanh.pop %v5219
    %v5239 = vmul.f32 %v5235, %v5066
    %v5240 = vmul.f32 %v5233, %v5238
    %v5241 = vadd.f32 %v5239, %v5240
    %v5242 = vtanh.pop %v5241
    %v5243 = vmul.f32 %v5237, %v5242
    %5244 = vst [vmem:[%s1603] sm:$0xff] %v5243
    %v5245 = vld [vmem:[%s1605] sm:$0xff]
    %v5246 = vld [vmem:[%s1605 + $0x8] sm:$0xff]
    %v5247 = vld [vmem:[%s1605 + $0x10] sm:$0xff]
    %v5248 = vld [vmem:[%s1605 + $0x18] sm:$0xff]
    %5249 = vmatprep.subr.mxu0 %v3778
    %5250 = vmatpush1.msra.mxu0 %v3777
    %5251 = vmatprep.subr.mxu0 %v3782
    %5252 = vmatpush1.msra.mxu0 %v3781
    %5253 = vmatprep.subr.mxu0 %v3786
    %5254 = vmatpush1.msra.mxu0 %v3785
    %5255 = vmatprep.subr.mxu0 %v3790
    %5256 = vmatpush1.msra.mxu0 %v3789
    %5257 = vmatprep.subr.mxu0 %v3794
    %5258 = vmatpush1.msra.mxu0 %v3793
    %5259 = vmatprep.subr.mxu0 %v3798
    %5260 = vmatpush1.msra.mxu0 %v3797
    %5261 = vmatprep.subr.mxu0 %v3802
    %5262 = vmatpush1.msra.mxu0 %v3801
    %5263 = vmatprep.subr.mxu0 %v3806
    %5264 = vmatpush1.msra.mxu0 %v3805
    %5265 = vmatprep.subr.mxu0 %v3810
    %5266 = vmatpush1.msra.mxu0 %v3809
    %5267 = vmatprep.subr.mxu0 %v3814
    %5268 = vmatpush1.msra.mxu0 %v3813
    %5269 = vmatprep.subr.mxu0 %v3818
    %5270 = vmatpush1.msra.mxu0 %v3817
    %5271 = vmatprep.subr.mxu0 %v3822
    %5272 = vmatpush1.msra.mxu0 %v3821
    %5273 = vmatprep.subr.mxu0 %v3826
    %5274 = vmatpush1.msra.mxu0 %v3825
    %5275 = vmatprep.subr.mxu0 %v3830
    %5276 = vmatpush1.msra.mxu0 %v3829
    %5277 = vmatprep.subr.mxu0 %v3834
    %5278 = vmatpush1.msra.mxu0 %v3833
    %5279 = vmatprep.subr.mxu0 %v3838
    %5280 = vmatpush1.msra.mxu0 %v3837
    %5281 = vmatprep.subr.mxu0 0.0
    %5282 = vmatpush1.msra.mxu0 0.0
    %5283 = vmatprep.subr.mxu0 0.0
    %5284 = vmatpush1.msra.mxu0 0.0
    %5285 = vmatprep.subr.mxu0 0.0
    %5286 = vmatpush1.msra.mxu0 0.0
    %5287 = vmatprep.subr.mxu0 0.0
    %5288 = vmatpush1.msra.mxu0 0.0
    %5289 = vmatprep.subr.mxu0 0.0
    %5290 = vmatpush1.msra.mxu0 0.0
    %5291 = vmatprep.subr.mxu0 0.0
    %5292 = vmatpush1.msra.mxu0 0.0
    %5293 = vmatprep.subr.mxu0 0.0
    %5294 = vmatpush1.msra.mxu0 0.0
    %5295 = vmatprep.subr.mxu0 0.0
    %5296 = vmatpush1.msra.mxu0 0.0
    %5297 = vmatprep.subr.mxu0 0.0
    %5298 = vmatpush1.msra.mxu0 0.0
    %5299 = vmatprep.subr.mxu0 0.0
    %5300 = vmatpush1.msra.mxu0 0.0
    %5301 = vmatprep.subr.mxu0 0.0
    %5302 = vmatpush1.msra.mxu0 0.0
    %5303 = vmatprep.subr.mxu0 0.0
    %5304 = vmatpush1.msra.mxu0 0.0
    %5305 = vmatprep.subr.mxu0 0.0
    %5306 = vmatpush1.msra.mxu0 0.0
    %5307 = vmatprep.subr.mxu0 0.0
    %5308 = vmatpush1.msra.mxu0 0.0
    %5309 = vmatprep.subr.mxu0 0.0
    %5310 = vmatpush1.msra.mxu0 0.0
    %5311 = vmatprep.subr.mxu0 0.0
    %5312 = vmatpush1.msra.mxu0 0.0
    %5313 = vmatprep.mubr.f32.mxu0 0.0
    %5314 = vmatmul.mubr.f32.gmra.mrb[0].mxu0 %v5243
    %v5315 = vpop.f32.mrb[0].mxu0
    %v5316 = vadd.f32 0.0, %v5315
    %v5317 = vpop.f32.mrb[0].mxu0
    %v5318 = vadd.f32 0.0, %v5317
    %5319 = vdwg.mxu0
    %5320 = vmatprep.subr.mxu0 %v3780
    %5321 = vmatpush1.msra.mxu0 %v3779
    %5322 = vmatprep.subr.mxu0 %v3784
    %5323 = vmatpush1.msra.mxu0 %v3783
    %5324 = vmatprep.subr.mxu0 %v3788
    %5325 = vmatpush1.msra.mxu0 %v3787
    %5326 = vmatprep.subr.mxu0 %v3792
    %5327 = vmatpush1.msra.mxu0 %v3791
    %5328 = vmatprep.subr.mxu0 %v3796
    %5329 = vmatpush1.msra.mxu0 %v3795
    %5330 = vmatprep.subr.mxu0 %v3800
    %5331 = vmatpush1.msra.mxu0 %v3799
    %5332 = vmatprep.subr.mxu0 %v3804
    %5333 = vmatpush1.msra.mxu0 %v3803
    %5334 = vmatprep.subr.mxu0 %v3808
    %5335 = vmatpush1.msra.mxu0 %v3807
    %5336 = vmatprep.subr.mxu0 %v3812
    %5337 = vmatpush1.msra.mxu0 %v3811
    %5338 = vmatprep.subr.mxu0 %v3816
    %5339 = vmatpush1.msra.mxu0 %v3815
    %5340 = vmatprep.subr.mxu0 %v3820
    %5341 = vmatpush1.msra.mxu0 %v3819
    %5342 = vmatprep.subr.mxu0 %v3824
    %5343 = vmatpush1.msra.mxu0 %v3823
    %5344 = vmatprep.subr.mxu0 %v3828
    %5345 = vmatpush1.msra.mxu0 %v3827
    %5346 = vmatprep.subr.mxu0 %v3832
    %5347 = vmatpush1.msra.mxu0 %v3831
    %5348 = vmatprep.subr.mxu0 %v3836
    %5349 = vmatpush1.msra.mxu0 %v3835
    %5350 = vmatprep.subr.mxu0 %v3840
    %5351 = vmatpush1.msra.mxu0 %v3839
    %5352 = vmatprep.subr.mxu0 0.0
    %5353 = vmatpush1.msra.mxu0 0.0
    %5354 = vmatprep.subr.mxu0 0.0
    %5355 = vmatpush1.msra.mxu0 0.0
    %5356 = vmatprep.subr.mxu0 0.0
    %5357 = vmatpush1.msra.mxu0 0.0
    %5358 = vmatprep.subr.mxu0 0.0
    %5359 = vmatpush1.msra.mxu0 0.0
    %5360 = vmatprep.subr.mxu0 0.0
    %5361 = vmatpush1.msra.mxu0 0.0
    %5362 = vmatprep.subr.mxu0 0.0
    %5363 = vmatpush1.msra.mxu0 0.0
    %5364 = vmatprep.subr.mxu0 0.0
    %5365 = vmatpush1.msra.mxu0 0.0
    %5366 = vmatprep.subr.mxu0 0.0
    %5367 = vmatpush1.msra.mxu0 0.0
    %5368 = vmatprep.subr.mxu0 0.0
    %5369 = vmatpush1.msra.mxu0 0.0
    %5370 = vmatprep.subr.mxu0 0.0
    %5371 = vmatpush1.msra.mxu0 0.0
    %5372 = vmatprep.subr.mxu0 0.0
    %5373 = vmatpush1.msra.mxu0 0.0
    %5374 = vmatprep.subr.mxu0 0.0
    %5375 = vmatpush1.msra.mxu0 0.0
    %5376 = vmatprep.subr.mxu0 0.0
    %5377 = vmatpush1.msra.mxu0 0.0
    %5378 = vmatprep.subr.mxu0 0.0
    %5379 = vmatpush1.msra.mxu0 0.0
    %5380 = vmatprep.subr.mxu0 0.0
    %5381 = vmatpush1.msra.mxu0 0.0
    %5382 = vmatprep.subr.mxu0 0.0
    %5383 = vmatpush1.msra.mxu0 0.0
    %5384 = vmatprep.mubr.f32.mxu0 0.0
    %5385 = vmatmul.mubr.f32.gmra.mrb[0].mxu0 %v5243
    %v5386 = vpop.f32.mrb[0].mxu0
    %v5387 = vadd.f32 0.0, %v5386
    %v5388 = vpop.f32.mrb[0].mxu0
    %v5389 = vadd.f32 0.0, %v5388
    %5390 = vdwg.mxu0
    %v5391 = vadd.f32 %v5245, %v5316
    %v5392 = vadd.f32 %v5246, %v5318
    %v5393 = vadd.f32 %v5247, %v5387
    %v5394 = vadd.f32 %v5248, %v5389
    %v5395 = vxor.u32 %v5391, 2147483648
    %v5396 = vxor.u32 %v5392, 2147483648
    %v5397 = vxor.u32 %v5393, 2147483648
    %v5398 = vmul.f32 %v5395, 1.442695
    %v5399 = vpow.pop %v5398
    %v5400 = vmul.f32 %v5396, 1.442695
    %v5401 = vpow.pop %v5400
    %v5402 = vmul.f32 %v5397, 1.442695
    %v5403 = vpow.pop %v5402
    %v5404 = vadd.f32 %v5399, 1.0
    %v5405 = vadd.f32 %v5401, 1.0
    %v5406 = vadd.f32 %v5403, 1.0
    %v5407 = vrcp.pop %v5404
    %v5408 = vmul.f32 1.0, %v5407
    %v5409 = vrcp.pop %v5405
    %v5410 = vmul.f32 1.0, %v5409
    %v5411 = vrcp.pop %v5406
    %v5412 = vmul.f32 1.0, %v5411
    %v5413 = vtanh.pop %v5394
    %v5414 = vmul.f32 %v5410, %v5241
    %v5415 = vmul.f32 %v5408, %v5413
    %v5416 = vadd.f32 %v5414, %v5415
    %v5417 = vtanh.pop %v5416
    %v5418 = vmul.f32 %v5412, %v5417
    %5419 = vst [vmem:[%s1780] sm:$0xff] %v5418
    %v5420 = vld [vmem:[%s1782] sm:$0xff]
    %v5421 = vld [vmem:[%s1782 + $0x8] sm:$0xff]
    %v5422 = vld [vmem:[%s1782 + $0x10] sm:$0xff]
    %v5423 = vld [vmem:[%s1782 + $0x18] sm:$0xff]
    %5424 = vmatprep.subr.mxu0 %v3778
    %5425 = vmatpush1.msra.mxu0 %v3777
    %5426 = vmatprep.subr.mxu0 %v3782
    %5427 = vmatpush1.msra.mxu0 %v3781
    %5428 = vmatprep.subr.mxu0 %v3786
    %5429 = vmatpush1.msra.mxu0 %v3785
    %5430 = vmatprep.subr.mxu0 %v3790
    %5431 = vmatpush1.msra.mxu0 %v3789
    %5432 = vmatprep.subr.mxu0 %v3794
    %5433 = vmatpush1.msra.mxu0 %v3793
    %5434 = vmatprep.subr.mxu0 %v3798
    %5435 = vmatpush1.msra.mxu0 %v3797
    %5436 = vmatprep.subr.mxu0 %v3802
    %5437 = vmatpush1.msra.mxu0 %v3801
    %5438 = vmatprep.subr.mxu0 %v3806
    %5439 = vmatpush1.msra.mxu0 %v3805
    %5440 = vmatprep.subr.mxu0 %v3810
    %5441 = vmatpush1.msra.mxu0 %v3809
    %5442 = vmatprep.subr.mxu0 %v3814
    %5443 = vmatpush1.msra.mxu0 %v3813
    %5444 = vmatprep.subr.mxu0 %v3818
    %5445 = vmatpush1.msra.mxu0 %v3817
    %5446 = vmatprep.subr.mxu0 %v3822
    %5447 = vmatpush1.msra.mxu0 %v3821
    %5448 = vmatprep.subr.mxu0 %v3826
    %5449 = vmatpush1.msra.mxu0 %v3825
    %5450 = vmatprep.subr.mxu0 %v3830
    %5451 = vmatpush1.msra.mxu0 %v3829
    %5452 = vmatprep.subr.mxu0 %v3834
    %5453 = vmatpush1.msra.mxu0 %v3833
    %5454 = vmatprep.subr.mxu0 %v3838
    %5455 = vmatpush1.msra.mxu0 %v3837
    %5456 = vmatprep.subr.mxu0 0.0
    %5457 = vmatpush1.msra.mxu0 0.0
    %5458 = vmatprep.subr.mxu0 0.0
    %5459 = vmatpush1.msra.mxu0 0.0
    %5460 = vmatprep.subr.mxu0 0.0
    %5461 = vmatpush1.msra.mxu0 0.0
    %5462 = vmatprep.subr.mxu0 0.0
    %5463 = vmatpush1.msra.mxu0 0.0
    %5464 = vmatprep.subr.mxu0 0.0
    %5465 = vmatpush1.msra.mxu0 0.0
    %5466 = vmatprep.subr.mxu0 0.0
    %5467 = vmatpush1.msra.mxu0 0.0
    %5468 = vmatprep.subr.mxu0 0.0
    %5469 = vmatpush1.msra.mxu0 0.0
    %5470 = vmatprep.subr.mxu0 0.0
    %5471 = vmatpush1.msra.mxu0 0.0
    %5472 = vmatprep.subr.mxu0 0.0
    %5473 = vmatpush1.msra.mxu0 0.0
    %5474 = vmatprep.subr.mxu0 0.0
    %5475 = vmatpush1.msra.mxu0 0.0
    %5476 = vmatprep.subr.mxu0 0.0
    %5477 = vmatpush1.msra.mxu0 0.0
    %5478 = vmatprep.subr.mxu0 0.0
    %5479 = vmatpush1.msra.mxu0 0.0
    %5480 = vmatprep.subr.mxu0 0.0
    %5481 = vmatpush1.msra.mxu0 0.0
    %5482 = vmatprep.subr.mxu0 0.0
    %5483 = vmatpush1.msra.mxu0 0.0
    %5484 = vmatprep.subr.mxu0 0.0
    %5485 = vmatpush1.msra.mxu0 0.0
    %5486 = vmatprep.subr.mxu0 0.0
    %5487 = vmatpush1.msra.mxu0 0.0
    %5488 = vmatprep.mubr.f32.mxu0 0.0
    %5489 = vmatmul.mubr.f32.gmra.mrb[0].mxu0 %v5418
    %v5490 = vpop.f32.mrb[0].mxu0
    %v5491 = vadd.f32 0.0, %v5490
    %v5492 = vpop.f32.mrb[0].mxu0
    %v5493 = vadd.f32 0.0, %v5492
    %5494 = vdwg.mxu0
    %5495 = vmatprep.subr.mxu0 %v3780
    %5496 = vmatpush1.msra.mxu0 %v3779
    %5497 = vmatprep.subr.mxu0 %v3784
    %5498 = vmatpush1.msra.mxu0 %v3783
    %5499 = vmatprep.subr.mxu0 %v3788
    %5500 = vmatpush1.msra.mxu0 %v3787
    %5501 = vmatprep.subr.mxu0 %v3792
    %5502 = vmatpush1.msra.mxu0 %v3791
    %5503 = vmatprep.subr.mxu0 %v3796
    %5504 = vmatpush1.msra.mxu0 %v3795
    %5505 = vmatprep.subr.mxu0 %v3800
    %5506 = vmatpush1.msra.mxu0 %v3799
    %5507 = vmatprep.subr.mxu0 %v3804
    %5508 = vmatpush1.msra.mxu0 %v3803
    %5509 = vmatprep.subr.mxu0 %v3808
    %5510 = vmatpush1.msra.mxu0 %v3807
    %5511 = vmatprep.subr.mxu0 %v3812
    %5512 = vmatpush1.msra.mxu0 %v3811
    %5513 = vmatprep.subr.mxu0 %v3816
    %5514 = vmatpush1.msra.mxu0 %v3815
    %5515 = vmatprep.subr.mxu0 %v3820
    %5516 = vmatpush1.msra.mxu0 %v3819
    %5517 = vmatprep.subr.mxu0 %v3824
    %5518 = vmatpush1.msra.mxu0 %v3823
    %5519 = vmatprep.subr.mxu0 %v3828
    %5520 = vmatpush1.msra.mxu0 %v3827
    %5521 = vmatprep.subr.mxu0 %v3832
    %5522 = vmatpush1.msra.mxu0 %v3831
    %5523 = vmatprep.subr.mxu0 %v3836
    %5524 = vmatpush1.msra.mxu0 %v3835
    %5525 = vmatprep.subr.mxu0 %v3840
    %5526 = vmatpush1.msra.mxu0 %v3839
    %5527 = vmatprep.subr.mxu0 0.0
    %5528 = vmatpush1.msra.mxu0 0.0
    %5529 = vmatprep.subr.mxu0 0.0
    %5530 = vmatpush1.msra.mxu0 0.0
    %5531 = vmatprep.subr.mxu0 0.0
    %5532 = vmatpush1.msra.mxu0 0.0
    %5533 = vmatprep.subr.mxu0 0.0
    %5534 = vmatpush1.msra.mxu0 0.0
    %5535 = vmatprep.subr.mxu0 0.0
    %5536 = vmatpush1.msra.mxu0 0.0
    %5537 = vmatprep.subr.mxu0 0.0
    %5538 = vmatpush1.msra.mxu0 0.0
    %5539 = vmatprep.subr.mxu0 0.0
    %5540 = vmatpush1.msra.mxu0 0.0
    %5541 = vmatprep.subr.mxu0 0.0
    %5542 = vmatpush1.msra.mxu0 0.0
    %5543 = vmatprep.subr.mxu0 0.0
    %5544 = vmatpush1.msra.mxu0 0.0
    %5545 = vmatprep.subr.mxu0 0.0
    %5546 = vmatpush1.msra.mxu0 0.0
    %5547 = vmatprep.subr.mxu0 0.0
    %5548 = vmatpush1.msra.mxu0 0.0
    %5549 = vmatprep.subr.mxu0 0.0
    %5550 = vmatpush1.msra.mxu0 0.0
    %5551 = vmatprep.subr.mxu0 0.0
    %5552 = vmatpush1.msra.mxu0 0.0
    %5553 = vmatprep.subr.mxu0 0.0
    %5554 = vmatpush1.msra.mxu0 0.0
    %5555 = vmatprep.subr.mxu0 0.0
    %5556 = vmatpush1.msra.mxu0 0.0
    %5557 = vmatprep.subr.mxu0 0.0
    %5558 = vmatpush1.msra.mxu0 0.0
    %5559 = vmatprep.mubr.f32.mxu0 0.0
    %5560 = vmatmul.mubr.f32.gmra.mrb[0].mxu0 %v5418
    %v5561 = vpop.f32.mrb[0].mxu0
    %v5562 = vadd.f32 0.0, %v5561
    %v5563 = vpop.f32.mrb[0].mxu0
    %v5564 = vadd.f32 0.0, %v5563
    %5565 = vdwg.mxu0
    %v5566 = vadd.f32 %v5420, %v5491
    %v5567 = vadd.f32 %v5421, %v5493
    %v5568 = vadd.f32 %v5422, %v5562
    %v5569 = vadd.f32 %v5423, %v5564
    %v5570 = vxor.u32 %v5566, 2147483648
    %v5571 = vxor.u32 %v5567, 2147483648
    %v5572 = vxor.u32 %v5568, 2147483648
    %v5573 = vmul.f32 %v5570, 1.442695
    %v5574 = vpow.pop %v5573
    %v5575 = vmul.f32 %v5571, 1.442695
    %v5576 = vpow.pop %v5575
    %v5577 = vmul.f32 %v5572, 1.442695
    %v5578 = vpow.pop %v5577
    %v5579 = vadd.f32 %v5574, 1.0
    %v5580 = vadd.f32 %v5576, 1.0
    %v5581 = vadd.f32 %v5578, 1.0
    %v5582 = vrcp.pop %v5579
    %v5583 = vmul.f32 1.0, %v5582
    %v5584 = vrcp.pop %v5580
    %v5585 = vmul.f32 1.0, %v5584
    %v5586 = vrcp.pop %v5581
    %v5587 = vmul.f32 1.0, %v5586
    %v5588 = vtanh.pop %v5569
    %v5589 = vmul.f32 %v5585, %v5416
    %v5590 = vmul.f32 %v5583, %v5588
    %v5591 = vadd.f32 %v5589, %v5590
    %v5592 = vtanh.pop %v5591
    %v5593 = vmul.f32 %v5587, %v5592
    %5594 = vst [vmem:[%s1957] sm:$0xff] %v5593
    %5595 = vst [vmem:[#allocation2] sm:$0xff] %v5593
    %5596 = vst [vmem:[#allocation3] sm:$0xff] %v5591
    %s5597 = scalar_lea.vmem [#allocation14], 512
    %v5598 = vld [vmem:[%s5597] sm:$0xff]
    %v5599 = vld [vmem:[%s5597 + $0x8] sm:$0xff]
    %v5600 = vld [vmem:[%s5597 + $0x10] sm:$0xff]
    %v5601 = vld [vmem:[%s5597 + $0x18] sm:$0xff]
    %v5602 = vld [vmem:[%s5597 + $0x20] sm:$0xff]
    %v5603 = vld [vmem:[%s5597 + $0x28] sm:$0xff]
    %v5604 = vld [vmem:[%s5597 + $0x30] sm:$0xff]
    %v5605 = vld [vmem:[%s5597 + $0x38] sm:$0xff]
    %v5606 = vld [vmem:[%s5597 + $0x40] sm:$0xff]
    %v5607 = vld [vmem:[%s5597 + $0x48] sm:$0xff]
    %v5608 = vld [vmem:[%s5597 + $0x50] sm:$0xff]
    %v5609 = vld [vmem:[%s5597 + $0x58] sm:$0xff]
    %v5610 = vld [vmem:[%s5597 + $0x60] sm:$0xff]
    %v5611 = vld [vmem:[%s5597 + $0x68] sm:$0xff]
    %v5612 = vld [vmem:[%s5597 + $0x70] sm:$0xff]
    %v5613 = vld [vmem:[%s5597 + $0x78] sm:$0xff]
    %v5614 = vld [vmem:[%s5597 + $0x80] sm:$0xff]
    %v5615 = vld [vmem:[%s5597 + $0x88] sm:$0xff]
    %v5616 = vld [vmem:[%s5597 + $0x90] sm:$0xff]
    %v5617 = vld [vmem:[%s5597 + $0x98] sm:$0xff]
    %v5618 = vld [vmem:[%s5597 + $0xa0] sm:$0xff]
    %v5619 = vld [vmem:[%s5597 + $0xa8] sm:$0xff]
    %v5620 = vld [vmem:[%s5597 + $0xb0] sm:$0xff]
    %v5621 = vld [vmem:[%s5597 + $0xb8] sm:$0xff]
    %v5622 = vld [vmem:[%s5597 + $0xc0] sm:$0xff]
    %v5623 = vld [vmem:[%s5597 + $0xc8] sm:$0xff]
    %v5624 = vld [vmem:[%s5597 + $0xd0] sm:$0xff]
    %v5625 = vld [vmem:[%s5597 + $0xd8] sm:$0xff]
    %v5626 = vld [vmem:[%s5597 + $0xe0] sm:$0xff]
    %v5627 = vld [vmem:[%s5597 + $0xe8] sm:$0xff]
    %v5628 = vld [vmem:[%s5597 + $0xf0] sm:$0xff]
    %v5629 = vld [vmem:[%s5597 + $0xf8] sm:$0xff]
    %v5630 = vld [vmem:[%s5597 + $0x100] sm:$0xff]
    %v5631 = vld [vmem:[%s5597 + $0x108] sm:$0xff]
    %v5632 = vld [vmem:[%s5597 + $0x110] sm:$0xff]
    %v5633 = vld [vmem:[%s5597 + $0x118] sm:$0xff]
    %v5634 = vld [vmem:[%s5597 + $0x120] sm:$0xff]
    %v5635 = vld [vmem:[%s5597 + $0x128] sm:$0xff]
    %v5636 = vld [vmem:[%s5597 + $0x130] sm:$0xff]
    %v5637 = vld [vmem:[%s5597 + $0x138] sm:$0xff]
    %v5638 = vld [vmem:[%s5597 + $0x140] sm:$0xff]
    %v5639 = vld [vmem:[%s5597 + $0x148] sm:$0xff]
    %v5640 = vld [vmem:[%s5597 + $0x150] sm:$0xff]
    %v5641 = vld [vmem:[%s5597 + $0x158] sm:$0xff]
    %v5642 = vld [vmem:[%s5597 + $0x160] sm:$0xff]
    %v5643 = vld [vmem:[%s5597 + $0x168] sm:$0xff]
    %v5644 = vld [vmem:[%s5597 + $0x170] sm:$0xff]
    %v5645 = vld [vmem:[%s5597 + $0x178] sm:$0xff]
    %v5646 = vld [vmem:[%s5597 + $0x180] sm:$0xff]
    %v5647 = vld [vmem:[%s5597 + $0x188] sm:$0xff]
    %v5648 = vld [vmem:[%s5597 + $0x190] sm:$0xff]
    %v5649 = vld [vmem:[%s5597 + $0x198] sm:$0xff]
    %v5650 = vld [vmem:[%s5597 + $0x1a0] sm:$0xff]
    %v5651 = vld [vmem:[%s5597 + $0x1a8] sm:$0xff]
    %v5652 = vld [vmem:[%s5597 + $0x1b0] sm:$0xff]
    %v5653 = vld [vmem:[%s5597 + $0x1b8] sm:$0xff]
    %v5654 = vld [vmem:[%s5597 + $0x1c0] sm:$0xff]
    %v5655 = vld [vmem:[%s5597 + $0x1c8] sm:$0xff]
    %v5656 = vld [vmem:[%s5597 + $0x1d0] sm:$0xff]
    %v5657 = vld [vmem:[%s5597 + $0x1d8] sm:$0xff]
    %v5658 = vld [vmem:[%s5597 + $0x1e0] sm:$0xff]
    %v5659 = vld [vmem:[%s5597 + $0x1e8] sm:$0xff]
    %v5660 = vld [vmem:[%s5597 + $0x1f0] sm:$0xff]
    %v5661 = vld [vmem:[%s5597 + $0x1f8] sm:$0xff]
    %s5662 = scalar_lea.vmem %s9, 4
    %v5663 = vld [vmem:[%s5662] sm:$0xf]
    %v5664 = vld [vmem:[#allocation4] sm:$0xff]
    %v5665 = vld [vmem:[#allocation4 + $0x8] sm:$0xff]
    %v5666 = vld [vmem:[#allocation4 + $0x10] sm:$0xff]
    %v5667 = vld [vmem:[#allocation4 + $0x18] sm:$0xff]
    %v5668 = vld [vmem:[#allocation4 + $0x20] sm:$0xff]
    %v5669 = vld [vmem:[#allocation4 + $0x28] sm:$0xff]
    %v5670 = vld [vmem:[#allocation4 + $0x30] sm:$0xff]
    %v5671 = vld [vmem:[#allocation4 + $0x38] sm:$0xff]
    %v5672 = vld [vmem:[#allocation13] sm:$0xff]
    %v5673 = vld [vmem:[#allocation13 + $0x8] sm:$0xff]
    %v5674 = vld [vmem:[#allocation13 + $0x10] sm:$0xff]
    %v5675 = vld [vmem:[#allocation13 + $0x18] sm:$0xff]
    %v5676 = vld [vmem:[#allocation13 + $0x20] sm:$0xff]
    %v5677 = vld [vmem:[#allocation13 + $0x28] sm:$0xff]
    %v5678 = vld [vmem:[#allocation13 + $0x30] sm:$0xff]
    %v5679 = vld [vmem:[#allocation13 + $0x38] sm:$0xff]
    %v5680 = vld [vmem:[#allocation13 + $0x40] sm:$0xff]
    %v5681 = vld [vmem:[#allocation13 + $0x48] sm:$0xff]
    %v5682 = vld [vmem:[#allocation13 + $0x50] sm:$0xff]
    %v5683 = vld [vmem:[#allocation13 + $0x58] sm:$0xff]
    %v5684 = vld [vmem:[#allocation13 + $0x60] sm:$0xff]
    %v5685 = vld [vmem:[#allocation13 + $0x68] sm:$0xff]
    %v5686 = vld [vmem:[#allocation13 + $0x70] sm:$0xff]
    %v5687 = vld [vmem:[#allocation13 + $0x78] sm:$0xff]
    %v5688 = vld [vmem:[#allocation13 + $0x80] sm:$0xff]
    %v5689 = vld [vmem:[#allocation13 + $0x88] sm:$0xff]
    %v5690 = vld [vmem:[#allocation13 + $0x90] sm:$0xff]
    %v5691 = vld [vmem:[#allocation13 + $0x98] sm:$0xff]
    %v5692 = vld [vmem:[#allocation13 + $0xa0] sm:$0xff]
    %v5693 = vld [vmem:[#allocation13 + $0xa8] sm:$0xff]
    %v5694 = vld [vmem:[#allocation13 + $0xb0] sm:$0xff]
    %v5695 = vld [vmem:[#allocation13 + $0xb8] sm:$0xff]
    %v5696 = vld [vmem:[#allocation13 + $0xc0] sm:$0xff]
    %v5697 = vld [vmem:[#allocation13 + $0xc8] sm:$0xff]
    %v5698 = vld [vmem:[#allocation13 + $0xd0] sm:$0xff]
    %v5699 = vld [vmem:[#allocation13 + $0xd8] sm:$0xff]
    %v5700 = vld [vmem:[#allocation13 + $0xe0] sm:$0xff]
    %v5701 = vld [vmem:[#allocation13 + $0xe8] sm:$0xff]
    %v5702 = vld [vmem:[#allocation13 + $0xf0] sm:$0xff]
    %v5703 = vld [vmem:[#allocation13 + $0xf8] sm:$0xff]
    %v5704 = vld [vmem:[#allocation13 + $0x100] sm:$0xff]
    %v5705 = vld [vmem:[#allocation13 + $0x108] sm:$0xff]
    %v5706 = vld [vmem:[#allocation13 + $0x110] sm:$0xff]
    %v5707 = vld [vmem:[#allocation13 + $0x118] sm:$0xff]
    %v5708 = vld [vmem:[#allocation13 + $0x120] sm:$0xff]
    %v5709 = vld [vmem:[#allocation13 + $0x128] sm:$0xff]
    %v5710 = vld [vmem:[#allocation13 + $0x130] sm:$0xff]
    %v5711 = vld [vmem:[#allocation13 + $0x138] sm:$0xff]
    %v5712 = vld [vmem:[#allocation13 + $0x140] sm:$0xff]
    %v5713 = vld [vmem:[#allocation13 + $0x148] sm:$0xff]
    %v5714 = vld [vmem:[#allocation13 + $0x150] sm:$0xff]
    %v5715 = vld [vmem:[#allocation13 + $0x158] sm:$0xff]
    %v5716 = vld [vmem:[#allocation13 + $0x160] sm:$0xff]
    %v5717 = vld [vmem:[#allocation13 + $0x168] sm:$0xff]
    %v5718 = vld [vmem:[#allocation13 + $0x170] sm:$0xff]
    %v5719 = vld [vmem:[#allocation13 + $0x178] sm:$0xff]
    %v5720 = vld [vmem:[#allocation13 + $0x180] sm:$0xff]
    %v5721 = vld [vmem:[#allocation13 + $0x188] sm:$0xff]
    %v5722 = vld [vmem:[#allocation13 + $0x190] sm:$0xff]
    %v5723 = vld [vmem:[#allocation13 + $0x198] sm:$0xff]
    %v5724 = vld [vmem:[#allocation13 + $0x1a0] sm:$0xff]
    %v5725 = vld [vmem:[#allocation13 + $0x1a8] sm:$0xff]
    %v5726 = vld [vmem:[#allocation13 + $0x1b0] sm:$0xff]
    %v5727 = vld [vmem:[#allocation13 + $0x1b8] sm:$0xff]
    %v5728 = vld [vmem:[#allocation13 + $0x1c0] sm:$0xff]
    %v5729 = vld [vmem:[#allocation13 + $0x1c8] sm:$0xff]
    %v5730 = vld [vmem:[#allocation13 + $0x1d0] sm:$0xff]
    %v5731 = vld [vmem:[#allocation13 + $0x1d8] sm:$0xff]
    %v5732 = vld [vmem:[#allocation13 + $0x1e0] sm:$0xff]
    %v5733 = vld [vmem:[#allocation13 + $0x1e8] sm:$0xff]
    %v5734 = vld [vmem:[#allocation13 + $0x1f0] sm:$0xff]
    %v5735 = vld [vmem:[#allocation13 + $0x1f8] sm:$0xff]
    %v5737 = vlaneseq
    %v5738 = vshrl.u32 %v5737, 7
    %v5739 = vsub.s32 0, %v5738
    %v5740 = vrot.slane %v5663, %v5739
    %v5741 = vlaneseq
    %v5742 = vshrl.u32 %v5741, 7
    %v5743 = vsub.s32 1, %v5742
    %v5744 = vrot.slane %v5663, %v5743
    %v5745 = vlaneseq
    %v5746 = vshrl.u32 %v5745, 7
    %v5747 = vsub.s32 2, %v5746
    %v5748 = vrot.slane %v5663, %v5747
    %v5749 = vlaneseq
    %v5750 = vshrl.u32 %v5749, 7
    %v5751 = vsub.s32 3, %v5750
    %v5752 = vrot.slane %v5663, %v5751
    %5757 = vmatprep.subr.mxu0 %v5673
    %5758 = vmatpush1.msra.mxu0 %v5672
    %5759 = vmatprep.subr.mxu0 %v5677
    %5760 = vmatpush1.msra.mxu0 %v5676
    %5761 = vmatprep.subr.mxu0 %v5681
    %5762 = vmatpush1.msra.mxu0 %v5680
    %5763 = vmatprep.subr.mxu0 %v5685
    %5764 = vmatpush1.msra.mxu0 %v5684
    %5765 = vmatprep.subr.mxu0 %v5689
    %5766 = vmatpush1.msra.mxu0 %v5688
    %5767 = vmatprep.subr.mxu0 %v5693
    %5768 = vmatpush1.msra.mxu0 %v5692
    %5769 = vmatprep.subr.mxu0 %v5697
    %5770 = vmatpush1.msra.mxu0 %v5696
    %5771 = vmatprep.subr.mxu0 %v5701
    %5772 = vmatpush1.msra.mxu0 %v5700
    %5773 = vmatprep.subr.mxu0 %v5705
    %5774 = vmatpush1.msra.mxu0 %v5704
    %5775 = vmatprep.subr.mxu0 %v5709
    %5776 = vmatpush1.msra.mxu0 %v5708
    %5777 = vmatprep.subr.mxu0 %v5713
    %5778 = vmatpush1.msra.mxu0 %v5712
    %5779 = vmatprep.subr.mxu0 %v5717
    %5780 = vmatpush1.msra.mxu0 %v5716
    %5781 = vmatprep.subr.mxu0 %v5721
    %5782 = vmatpush1.msra.mxu0 %v5720
    %5783 = vmatprep.subr.mxu0 %v5725
    %5784 = vmatpush1.msra.mxu0 %v5724
    %5785 = vmatprep.subr.mxu0 %v5729
    %5786 = vmatpush1.msra.mxu0 %v5728
    %5787 = vmatprep.subr.mxu0 %v5733
    %5788 = vmatpush1.msra.mxu0 %v5732
    %5789 = vmatprep.subr.mxu0 0.0
    %5790 = vmatpush1.msra.mxu0 0.0
    %5791 = vmatprep.subr.mxu0 0.0
    %5792 = vmatpush1.msra.mxu0 0.0
    %5793 = vmatprep.subr.mxu0 0.0
    %5794 = vmatpush1.msra.mxu0 0.0
    %5795 = vmatprep.subr.mxu0 0.0
    %5796 = vmatpush1.msra.mxu0 0.0
    %5797 = vmatprep.subr.mxu0 0.0
    %5798 = vmatpush1.msra.mxu0 0.0
    %5799 = vmatprep.subr.mxu0 0.0
    %5800 = vmatpush1.msra.mxu0 0.0
    %5801 = vmatprep.subr.mxu0 0.0
    %5802 = vmatpush1.msra.mxu0 0.0
    %5803 = vmatprep.subr.mxu0 0.0
    %5804 = vmatpush1.msra.mxu0 0.0
    %5805 = vmatprep.subr.mxu0 0.0
    %5806 = vmatpush1.msra.mxu0 0.0
    %5807 = vmatprep.subr.mxu0 0.0
    %5808 = vmatpush1.msra.mxu0 0.0
    %5809 = vmatprep.subr.mxu0 0.0
    %5810 = vmatpush1.msra.mxu0 0.0
    %5811 = vmatprep.subr.mxu0 0.0
    %5812 = vmatpush1.msra.mxu0 0.0
    %5813 = vmatprep.subr.mxu0 0.0
    %5814 = vmatpush1.msra.mxu0 0.0
    %5815 = vmatprep.subr.mxu0 0.0
    %5816 = vmatpush1.msra.mxu0 0.0
    %5817 = vmatprep.subr.mxu0 0.0
    %5818 = vmatpush1.msra.mxu0 0.0
    %5819 = vmatprep.subr.mxu0 0.0
    %5820 = vmatpush1.msra.mxu0 0.0
    %5821 = vmatprep.mubr.f32.mxu0 0.0
    %5822 = vmatmul.mubr.f32.gmra.mrb[0].mxu0 %v5664
    %v5823 = vpop.f32.mrb[0].mxu0
    %v5824 = vadd.f32 %v5740, %v5823
    %v5825 = vpop.f32.mrb[0].mxu0
    %v5826 = vadd.f32 %v5744, %v5825
    %5827 = vmatprep.mubr.f32.mxu0 0.0
    %5828 = vmatmul.mubr.f32.gmra.mrb[0].mxu0 %v5665
    %v5829 = vpop.f32.mrb[0].mxu0
    %v5830 = vadd.f32 %v5740, %v5829
    %v5831 = vpop.f32.mrb[0].mxu0
    %v5832 = vadd.f32 %v5744, %v5831
    %5833 = vmatprep.mubr.f32.mxu0 0.0
    %5834 = vmatmul.mubr.f32.gmra.mrb[0].mxu0 %v5666
    %v5835 = vpop.f32.mrb[0].mxu0
    %v5836 = vadd.f32 %v5740, %v5835
    %v5837 = vpop.f32.mrb[0].mxu0
    %v5838 = vadd.f32 %v5744, %v5837
    %5839 = vmatprep.mubr.f32.mxu0 0.0
    %5840 = vmatmul.mubr.f32.gmra.mrb[0].mxu0 %v5667
    %v5841 = vpop.f32.mrb[0].mxu0
    %v5842 = vadd.f32 %v5740, %v5841
    %v5843 = vpop.f32.mrb[0].mxu0
    %v5844 = vadd.f32 %v5744, %v5843
    %5845 = vmatprep.mubr.f32.mxu0 0.0
    %5846 = vmatmul.mubr.f32.gmra.mrb[0].mxu0 %v5668
    %v5847 = vpop.f32.mrb[0].mxu0
    %v5848 = vadd.f32 %v5740, %v5847
    %v5849 = vpop.f32.mrb[0].mxu0
    %v5850 = vadd.f32 %v5744, %v5849
    %5851 = vmatprep.mubr.f32.mxu0 0.0
    %5852 = vmatmul.mubr.f32.gmra.mrb[0].mxu0 %v5669
    %v5853 = vpop.f32.mrb[0].mxu0
    %v5854 = vadd.f32 %v5740, %v5853
    %v5855 = vpop.f32.mrb[0].mxu0
    %v5856 = vadd.f32 %v5744, %v5855
    %5857 = vmatprep.mubr.f32.mxu0 0.0
    %5858 = vmatmul.mubr.f32.gmra.mrb[0].mxu0 %v5670
    %v5859 = vpop.f32.mrb[0].mxu0
    %v5860 = vadd.f32 %v5740, %v5859
    %v5861 = vpop.f32.mrb[0].mxu0
    %v5862 = vadd.f32 %v5744, %v5861
    %5863 = vmatprep.mubr.f32.mxu0 0.0
    %5864 = vmatmul.mubr.f32.gmra.mrb[0].mxu0 %v5671
    %v5865 = vpop.f32.mrb[0].mxu0
    %v5866 = vadd.f32 %v5740, %v5865
    %v5867 = vpop.f32.mrb[0].mxu0
    %v5868 = vadd.f32 %v5744, %v5867
    %5869 = vdwg.mxu0
    %5870 = vmatprep.subr.mxu0 %v5675
    %5871 = vmatpush1.msra.mxu0 %v5674
    %5872 = vmatprep.subr.mxu0 %v5679
    %5873 = vmatpush1.msra.mxu0 %v5678
    %5874 = vmatprep.subr.mxu0 %v5683
    %5875 = vmatpush1.msra.mxu0 %v5682
    %5876 = vmatprep.subr.mxu0 %v5687
    %5877 = vmatpush1.msra.mxu0 %v5686
    %5878 = vmatprep.subr.mxu0 %v5691
    %5879 = vmatpush1.msra.mxu0 %v5690
    %5880 = vmatprep.subr.mxu0 %v5695
    %5881 = vmatpush1.msra.mxu0 %v5694
    %5882 = vmatprep.subr.mxu0 %v5699
    %5883 = vmatpush1.msra.mxu0 %v5698
    %5884 = vmatprep.subr.mxu0 %v5703
    %5885 = vmatpush1.msra.mxu0 %v5702
    %5886 = vmatprep.subr.mxu0 %v5707
    %5887 = vmatpush1.msra.mxu0 %v5706
    %5888 = vmatprep.subr.mxu0 %v5711
    %5889 = vmatpush1.msra.mxu0 %v5710
    %5890 = vmatprep.subr.mxu0 %v5715
    %5891 = vmatpush1.msra.mxu0 %v5714
    %5892 = vmatprep.subr.mxu0 %v5719
    %5893 = vmatpush1.msra.mxu0 %v5718
    %5894 = vmatprep.subr.mxu0 %v5723
    %5895 = vmatpush1.msra.mxu0 %v5722
    %5896 = vmatprep.subr.mxu0 %v5727
    %5897 = vmatpush1.msra.mxu0 %v5726
    %5898 = vmatprep.subr.mxu0 %v5731
    %5899 = vmatpush1.msra.mxu0 %v5730
    %5900 = vmatprep.subr.mxu0 %v5735
    %5901 = vmatpush1.msra.mxu0 %v5734
    %5902 = vmatprep.subr.mxu0 0.0
    %5903 = vmatpush1.msra.mxu0 0.0
    %5904 = vmatprep.subr.mxu0 0.0
    %5905 = vmatpush1.msra.mxu0 0.0
    %5906 = vmatprep.subr.mxu0 0.0
    %5907 = vmatpush1.msra.mxu0 0.0
    %5908 = vmatprep.subr.mxu0 0.0
    %5909 = vmatpush1.msra.mxu0 0.0
    %5910 = vmatprep.subr.mxu0 0.0
    %5911 = vmatpush1.msra.mxu0 0.0
    %5912 = vmatprep.subr.mxu0 0.0
    %5913 = vmatpush1.msra.mxu0 0.0
    %5914 = vmatprep.subr.mxu0 0.0
    %5915 = vmatpush1.msra.mxu0 0.0
    %5916 = vmatprep.subr.mxu0 0.0
    %5917 = vmatpush1.msra.mxu0 0.0
    %5918 = vmatprep.subr.mxu0 0.0
    %5919 = vmatpush1.msra.mxu0 0.0
    %5920 = vmatprep.subr.mxu0 0.0
    %5921 = vmatpush1.msra.mxu0 0.0
    %5922 = vmatprep.subr.mxu0 0.0
    %5923 = vmatpush1.msra.mxu0 0.0
    %5924 = vmatprep.subr.mxu0 0.0
    %5925 = vmatpush1.msra.mxu0 0.0
    %5926 = vmatprep.subr.mxu0 0.0
    %5927 = vmatpush1.msra.mxu0 0.0
    %5928 = vmatprep.subr.mxu0 0.0
    %5929 = vmatpush1.msra.mxu0 0.0
    %5930 = vmatprep.subr.mxu0 0.0
    %5931 = vmatpush1.msra.mxu0 0.0
    %5932 = vmatprep.subr.mxu0 0.0
    %5933 = vmatpush1.msra.mxu0 0.0
    %5934 = vmatprep.mubr.f32.mxu0 0.0
    %5935 = vmatmul.mubr.f32.gmra.mrb[0].mxu0 %v5664
    %v5936 = vpop.f32.mrb[0].mxu0
    %v5937 = vadd.f32 %v5748, %v5936
    %v5938 = vpop.f32.mrb[0].mxu0
    %v5939 = vadd.f32 %v5752, %v5938
    %5940 = vmatprep.mubr.f32.mxu0 0.0
    %5941 = vmatmul.mubr.f32.gmra.mrb[0].mxu0 %v5665
    %v5942 = vpop.f32.mrb[0].mxu0
    %v5943 = vadd.f32 %v5748, %v5942
    %v5944 = vpop.f32.mrb[0].mxu0
    %v5945 = vadd.f32 %v5752, %v5944
    %5946 = vmatprep.mubr.f32.mxu0 0.0
    %5947 = vmatmul.mubr.f32.gmra.mrb[0].mxu0 %v5666
    %v5948 = vpop.f32.mrb[0].mxu0
    %v5949 = vadd.f32 %v5748, %v5948
    %v5950 = vpop.f32.mrb[0].mxu0
    %v5951 = vadd.f32 %v5752, %v5950
    %5952 = vmatprep.mubr.f32.mxu0 0.0
    %5953 = vmatmul.mubr.f32.gmra.mrb[0].mxu0 %v5667
    %v5954 = vpop.f32.mrb[0].mxu0
    %v5955 = vadd.f32 %v5748, %v5954
    %v5956 = vpop.f32.mrb[0].mxu0
    %v5957 = vadd.f32 %v5752, %v5956
    %5958 = vmatprep.mubr.f32.mxu0 0.0
    %5959 = vmatmul.mubr.f32.gmra.mrb[0].mxu0 %v5668
    %v5960 = vpop.f32.mrb[0].mxu0
    %v5961 = vadd.f32 %v5748, %v5960
    %v5962 = vpop.f32.mrb[0].mxu0
    %v5963 = vadd.f32 %v5752, %v5962
    %5964 = vmatprep.mubr.f32.mxu0 0.0
    %5965 = vmatmul.mubr.f32.gmra.mrb[0].mxu0 %v5669
    %v5966 = vpop.f32.mrb[0].mxu0
    %v5967 = vadd.f32 %v5748, %v5966
    %v5968 = vpop.f32.mrb[0].mxu0
    %v5969 = vadd.f32 %v5752, %v5968
    %5970 = vmatprep.mubr.f32.mxu0 0.0
    %5971 = vmatmul.mubr.f32.gmra.mrb[0].mxu0 %v5670
    %v5972 = vpop.f32.mrb[0].mxu0
    %v5973 = vadd.f32 %v5748, %v5972
    %v5974 = vpop.f32.mrb[0].mxu0
    %v5975 = vadd.f32 %v5752, %v5974
    %5976 = vmatprep.mubr.f32.mxu0 0.0
    %5977 = vmatmul.mubr.f32.gmra.mrb[0].mxu0 %v5671
    %v5978 = vpop.f32.mrb[0].mxu0
    %v5979 = vadd.f32 %v5748, %v5978
    %v5980 = vpop.f32.mrb[0].mxu0
    %v5981 = vadd.f32 %v5752, %v5980
    %5982 = vdwg.mxu0
    %5983 = vst [vmem:[#allocation5] sm:$0xff] %v5824
    %5984 = vst [vmem:[#allocation5 + $0x8] sm:$0xff] %v5826
    %5985 = vst [vmem:[#allocation5 + $0x10] sm:$0xff] %v5937
    %5986 = vst [vmem:[#allocation5 + $0x18] sm:$0xff] %v5939
    %5987 = vst [vmem:[#allocation5 + $0x20] sm:$0xff] %v5830
    %5988 = vst [vmem:[#allocation5 + $0x28] sm:$0xff] %v5832
    %5989 = vst [vmem:[#allocation5 + $0x30] sm:$0xff] %v5943
    %5990 = vst [vmem:[#allocation5 + $0x38] sm:$0xff] %v5945
    %5991 = vst [vmem:[#allocation5 + $0x40] sm:$0xff] %v5836
    %5992 = vst [vmem:[#allocation5 + $0x48] sm:$0xff] %v5838
    %5993 = vst [vmem:[#allocation5 + $0x50] sm:$0xff] %v5949
    %5994 = vst [vmem:[#allocation5 + $0x58] sm:$0xff] %v5951
    %5995 = vst [vmem:[#allocation5 + $0x60] sm:$0xff] %v5842
    %5996 = vst [vmem:[#allocation5 + $0x68] sm:$0xff] %v5844
    %5997 = vst [vmem:[#allocation5 + $0x70] sm:$0xff] %v5955
    %5998 = vst [vmem:[#allocation5 + $0x78] sm:$0xff] %v5957
    %5999 = vst [vmem:[#allocation5 + $0x80] sm:$0xff] %v5848
    %6000 = vst [vmem:[#allocation5 + $0x88] sm:$0xff] %v5850
    %6001 = vst [vmem:[#allocation5 + $0x90] sm:$0xff] %v5961
    %6002 = vst [vmem:[#allocation5 + $0x98] sm:$0xff] %v5963
    %6003 = vst [vmem:[#allocation5 + $0xa0] sm:$0xff] %v5854
    %6004 = vst [vmem:[#allocation5 + $0xa8] sm:$0xff] %v5856
    %6005 = vst [vmem:[#allocation5 + $0xb0] sm:$0xff] %v5967
    %6006 = vst [vmem:[#allocation5 + $0xb8] sm:$0xff] %v5969
    %6007 = vst [vmem:[#allocation5 + $0xc0] sm:$0xff] %v5860
    %6008 = vst [vmem:[#allocation5 + $0xc8] sm:$0xff] %v5862
    %6009 = vst [vmem:[#allocation5 + $0xd0] sm:$0xff] %v5973
    %6010 = vst [vmem:[#allocation5 + $0xd8] sm:$0xff] %v5975
    %6011 = vst [vmem:[#allocation5 + $0xe0] sm:$0xff] %v5866
    %6012 = vst [vmem:[#allocation5 + $0xe8] sm:$0xff] %v5868
    %6013 = vst [vmem:[#allocation5 + $0xf0] sm:$0xff] %v5979
    %6014 = vst [vmem:[#allocation5 + $0xf8] sm:$0xff] %v5981
    %v6015 = vld [vmem:[%s2379] sm:$0xff]
    %v6016 = vld [vmem:[%s2381] sm:$0xff]
    %v6017 = vld [vmem:[#allocation5] sm:$0xff]
    %v6018 = vld [vmem:[#allocation5 + $0x8] sm:$0xff]
    %v6019 = vld [vmem:[#allocation5 + $0x10] sm:$0xff]
    %v6020 = vld [vmem:[#allocation5 + $0x18] sm:$0xff]
    %6021 = vmatprep.subr.mxu0 %v5599
    %6022 = vmatpush1.msra.mxu0 %v5598
    %6023 = vmatprep.subr.mxu0 %v5603
    %6024 = vmatpush1.msra.mxu0 %v5602
    %6025 = vmatprep.subr.mxu0 %v5607
    %6026 = vmatpush1.msra.mxu0 %v5606
    %6027 = vmatprep.subr.mxu0 %v5611
    %6028 = vmatpush1.msra.mxu0 %v5610
    %6029 = vmatprep.subr.mxu0 %v5615
    %6030 = vmatpush1.msra.mxu0 %v5614
    %6031 = vmatprep.subr.mxu0 %v5619
    %6032 = vmatpush1.msra.mxu0 %v5618
    %6033 = vmatprep.subr.mxu0 %v5623
    %6034 = vmatpush1.msra.mxu0 %v5622
    %6035 = vmatprep.subr.mxu0 %v5627
    %6036 = vmatpush1.msra.mxu0 %v5626
    %6037 = vmatprep.subr.mxu0 %v5631
    %6038 = vmatpush1.msra.mxu0 %v5630
    %6039 = vmatprep.subr.mxu0 %v5635
    %6040 = vmatpush1.msra.mxu0 %v5634
    %6041 = vmatprep.subr.mxu0 %v5639
    %6042 = vmatpush1.msra.mxu0 %v5638
    %6043 = vmatprep.subr.mxu0 %v5643
    %6044 = vmatpush1.msra.mxu0 %v5642
    %6045 = vmatprep.subr.mxu0 %v5647
    %6046 = vmatpush1.msra.mxu0 %v5646
    %6047 = vmatprep.subr.mxu0 %v5651
    %6048 = vmatpush1.msra.mxu0 %v5650
    %6049 = vmatprep.subr.mxu0 %v5655
    %6050 = vmatpush1.msra.mxu0 %v5654
    %6051 = vmatprep.subr.mxu0 %v5659
    %6052 = vmatpush1.msra.mxu0 %v5658
    %6053 = vmatprep.subr.mxu0 0.0
    %6054 = vmatpush1.msra.mxu0 0.0
    %6055 = vmatprep.subr.mxu0 0.0
    %6056 = vmatpush1.msra.mxu0 0.0
    %6057 = vmatprep.subr.mxu0 0.0
    %6058 = vmatpush1.msra.mxu0 0.0
    %6059 = vmatprep.subr.mxu0 0.0
    %6060 = vmatpush1.msra.mxu0 0.0
    %6061 = vmatprep.subr.mxu0 0.0
    %6062 = vmatpush1.msra.mxu0 0.0
    %6063 = vmatprep.subr.mxu0 0.0
    %6064 = vmatpush1.msra.mxu0 0.0
    %6065 = vmatprep.subr.mxu0 0.0
    %6066 = vmatpush1.msra.mxu0 0.0
    %6067 = vmatprep.subr.mxu0 0.0
    %6068 = vmatpush1.msra.mxu0 0.0
    %6069 = vmatprep.subr.mxu0 0.0
    %6070 = vmatpush1.msra.mxu0 0.0
    %6071 = vmatprep.subr.mxu0 0.0
    %6072 = vmatpush1.msra.mxu0 0.0
    %6073 = vmatprep.subr.mxu0 0.0
    %6074 = vmatpush1.msra.mxu0 0.0
    %6075 = vmatprep.subr.mxu0 0.0
    %6076 = vmatpush1.msra.mxu0 0.0
    %6077 = vmatprep.subr.mxu0 0.0
    %6078 = vmatpush1.msra.mxu0 0.0
    %6079 = vmatprep.subr.mxu0 0.0
    %6080 = vmatpush1.msra.mxu0 0.0
    %6081 = vmatprep.subr.mxu0 0.0
    %6082 = vmatpush1.msra.mxu0 0.0
    %6083 = vmatprep.subr.mxu0 0.0
    %6084 = vmatpush1.msra.mxu0 0.0
    %6085 = vmatprep.mubr.f32.mxu0 0.0
    %6086 = vmatmul.mubr.f32.gmra.mrb[0].mxu0 %v6015
    %v6087 = vpop.f32.mrb[0].mxu0
    %v6088 = vadd.f32 0.0, %v6087
    %v6089 = vpop.f32.mrb[0].mxu0
    %v6090 = vadd.f32 0.0, %v6089
    %6091 = vdwg.mxu0
    %6092 = vmatprep.subr.mxu0 %v5601
    %6093 = vmatpush1.msra.mxu0 %v5600
    %6094 = vmatprep.subr.mxu0 %v5605
    %6095 = vmatpush1.msra.mxu0 %v5604
    %6096 = vmatprep.subr.mxu0 %v5609
    %6097 = vmatpush1.msra.mxu0 %v5608
    %6098 = vmatprep.subr.mxu0 %v5613
    %6099 = vmatpush1.msra.mxu0 %v5612
    %6100 = vmatprep.subr.mxu0 %v5617
    %6101 = vmatpush1.msra.mxu0 %v5616
    %6102 = vmatprep.subr.mxu0 %v5621
    %6103 = vmatpush1.msra.mxu0 %v5620
    %6104 = vmatprep.subr.mxu0 %v5625
    %6105 = vmatpush1.msra.mxu0 %v5624
    %6106 = vmatprep.subr.mxu0 %v5629
    %6107 = vmatpush1.msra.mxu0 %v5628
    %6108 = vmatprep.subr.mxu0 %v5633
    %6109 = vmatpush1.msra.mxu0 %v5632
    %6110 = vmatprep.subr.mxu0 %v5637
    %6111 = vmatpush1.msra.mxu0 %v5636
    %6112 = vmatprep.subr.mxu0 %v5641
    %6113 = vmatpush1.msra.mxu0 %v5640
    %6114 = vmatprep.subr.mxu0 %v5645
    %6115 = vmatpush1.msra.mxu0 %v5644
    %6116 = vmatprep.subr.mxu0 %v5649
    %6117 = vmatpush1.msra.mxu0 %v5648
    %6118 = vmatprep.subr.mxu0 %v5653
    %6119 = vmatpush1.msra.mxu0 %v5652
    %6120 = vmatprep.subr.mxu0 %v5657
    %6121 = vmatpush1.msra.mxu0 %v5656
    %6122 = vmatprep.subr.mxu0 %v5661
    %6123 = vmatpush1.msra.mxu0 %v5660
    %6124 = vmatprep.subr.mxu0 0.0
    %6125 = vmatpush1.msra.mxu0 0.0
    %6126 = vmatprep.subr.mxu0 0.0
    %6127 = vmatpush1.msra.mxu0 0.0
    %6128 = vmatprep.subr.mxu0 0.0
    %6129 = vmatpush1.msra.mxu0 0.0
    %6130 = vmatprep.subr.mxu0 0.0
    %6131 = vmatpush1.msra.mxu0 0.0
    %6132 = vmatprep.subr.mxu0 0.0
    %6133 = vmatpush1.msra.mxu0 0.0
    %6134 = vmatprep.subr.mxu0 0.0
    %6135 = vmatpush1.msra.mxu0 0.0
    %6136 = vmatprep.subr.mxu0 0.0
    %6137 = vmatpush1.msra.mxu0 0.0
    %6138 = vmatprep.subr.mxu0 0.0
    %6139 = vmatpush1.msra.mxu0 0.0
    %6140 = vmatprep.subr.mxu0 0.0
    %6141 = vmatpush1.msra.mxu0 0.0
    %6142 = vmatprep.subr.mxu0 0.0
    %6143 = vmatpush1.msra.mxu0 0.0
    %6144 = vmatprep.subr.mxu0 0.0
    %6145 = vmatpush1.msra.mxu0 0.0
    %6146 = vmatprep.subr.mxu0 0.0
    %6147 = vmatpush1.msra.mxu0 0.0
    %6148 = vmatprep.subr.mxu0 0.0
    %6149 = vmatpush1.msra.mxu0 0.0
    %6150 = vmatprep.subr.mxu0 0.0
    %6151 = vmatpush1.msra.mxu0 0.0
    %6152 = vmatprep.subr.mxu0 0.0
    %6153 = vmatpush1.msra.mxu0 0.0
    %6154 = vmatprep.subr.mxu0 0.0
    %6155 = vmatpush1.msra.mxu0 0.0
    %6156 = vmatprep.mubr.f32.mxu0 0.0
    %6157 = vmatmul.mubr.f32.gmra.mrb[0].mxu0 %v6015
    %v6158 = vpop.f32.mrb[0].mxu0
    %v6159 = vadd.f32 0.0, %v6158
    %v6160 = vpop.f32.mrb[0].mxu0
    %v6161 = vadd.f32 0.0, %v6160
    %6162 = vdwg.mxu0
    %v6163 = vadd.f32 %v6017, %v6088
    %v6164 = vadd.f32 %v6018, %v6090
    %v6165 = vadd.f32 %v6019, %v6159
    %v6166 = vadd.f32 %v6020, %v6161
    %v6167 = vxor.u32 %v6163, 2147483648
    %v6168 = vxor.u32 %v6164, 2147483648
    %v6169 = vxor.u32 %v6165, 2147483648
    %v6170 = vmul.f32 %v6167, 1.442695
    %v6171 = vpow.pop %v6170
    %v6172 = vmul.f32 %v6168, 1.442695
    %v6173 = vpow.pop %v6172
    %v6174 = vmul.f32 %v6169, 1.442695
    %v6175 = vpow.pop %v6174
    %v6176 = vadd.f32 %v6171, 1.0
    %v6177 = vadd.f32 %v6173, 1.0
    %v6178 = vadd.f32 %v6175, 1.0
    %v6179 = vrcp.pop %v6176
    %v6180 = vmul.f32 1.0, %v6179
    %v6181 = vrcp.pop %v6177
    %v6182 = vmul.f32 1.0, %v6181
    %v6183 = vrcp.pop %v6178
    %v6184 = vmul.f32 1.0, %v6183
    %v6185 = vtanh.pop %v6166
    %v6186 = vmul.f32 %v6182, %v6016
    %v6187 = vmul.f32 %v6180, %v6185
    %v6188 = vadd.f32 %v6186, %v6187
    %v6189 = vtanh.pop %v6188
    %v6190 = vmul.f32 %v6184, %v6189
    %6191 = vst [vmem:[#allocation4] sm:$0xff] %v6190
    %v6192 = vld [vmem:[%s720] sm:$0xff]
    %v6193 = vld [vmem:[%s720 + $0x8] sm:$0xff]
    %v6194 = vld [vmem:[%s720 + $0x10] sm:$0xff]
    %v6195 = vld [vmem:[%s720 + $0x18] sm:$0xff]
    %6196 = vmatprep.subr.mxu0 %v5599
    %6197 = vmatpush1.msra.mxu0 %v5598
    %6198 = vmatprep.subr.mxu0 %v5603
    %6199 = vmatpush1.msra.mxu0 %v5602
    %6200 = vmatprep.subr.mxu0 %v5607
    %6201 = vmatpush1.msra.mxu0 %v5606
    %6202 = vmatprep.subr.mxu0 %v5611
    %6203 = vmatpush1.msra.mxu0 %v5610
    %6204 = vmatprep.subr.mxu0 %v5615
    %6205 = vmatpush1.msra.mxu0 %v5614
    %6206 = vmatprep.subr.mxu0 %v5619
    %6207 = vmatpush1.msra.mxu0 %v5618
    %6208 = vmatprep.subr.mxu0 %v5623
    %6209 = vmatpush1.msra.mxu0 %v5622
    %6210 = vmatprep.subr.mxu0 %v5627
    %6211 = vmatpush1.msra.mxu0 %v5626
    %6212 = vmatprep.subr.mxu0 %v5631
    %6213 = vmatpush1.msra.mxu0 %v5630
    %6214 = vmatprep.subr.mxu0 %v5635
    %6215 = vmatpush1.msra.mxu0 %v5634
    %6216 = vmatprep.subr.mxu0 %v5639
    %6217 = vmatpush1.msra.mxu0 %v5638
    %6218 = vmatprep.subr.mxu0 %v5643
    %6219 = vmatpush1.msra.mxu0 %v5642
    %6220 = vmatprep.subr.mxu0 %v5647
    %6221 = vmatpush1.msra.mxu0 %v5646
    %6222 = vmatprep.subr.mxu0 %v5651
    %6223 = vmatpush1.msra.mxu0 %v5650
    %6224 = vmatprep.subr.mxu0 %v5655
    %6225 = vmatpush1.msra.mxu0 %v5654
    %6226 = vmatprep.subr.mxu0 %v5659
    %6227 = vmatpush1.msra.mxu0 %v5658
    %6228 = vmatprep.subr.mxu0 0.0
    %6229 = vmatpush1.msra.mxu0 0.0
    %6230 = vmatprep.subr.mxu0 0.0
    %6231 = vmatpush1.msra.mxu0 0.0
    %6232 = vmatprep.subr.mxu0 0.0
    %6233 = vmatpush1.msra.mxu0 0.0
    %6234 = vmatprep.subr.mxu0 0.0
    %6235 = vmatpush1.msra.mxu0 0.0
    %6236 = vmatprep.subr.mxu0 0.0
    %6237 = vmatpush1.msra.mxu0 0.0
    %6238 = vmatprep.subr.mxu0 0.0
    %6239 = vmatpush1.msra.mxu0 0.0
    %6240 = vmatprep.subr.mxu0 0.0
    %6241 = vmatpush1.msra.mxu0 0.0
    %6242 = vmatprep.subr.mxu0 0.0
    %6243 = vmatpush1.msra.mxu0 0.0
    %6244 = vmatprep.subr.mxu0 0.0
    %6245 = vmatpush1.msra.mxu0 0.0
    %6246 = vmatprep.subr.mxu0 0.0
    %6247 = vmatpush1.msra.mxu0 0.0
    %6248 = vmatprep.subr.mxu0 0.0
    %6249 = vmatpush1.msra.mxu0 0.0
    %6250 = vmatprep.subr.mxu0 0.0
    %6251 = vmatpush1.msra.mxu0 0.0
    %6252 = vmatprep.subr.mxu0 0.0
    %6253 = vmatpush1.msra.mxu0 0.0
    %6254 = vmatprep.subr.mxu0 0.0
    %6255 = vmatpush1.msra.mxu0 0.0
    %6256 = vmatprep.subr.mxu0 0.0
    %6257 = vmatpush1.msra.mxu0 0.0
    %6258 = vmatprep.subr.mxu0 0.0
    %6259 = vmatpush1.msra.mxu0 0.0
    %6260 = vmatprep.mubr.f32.mxu0 0.0
    %6261 = vmatmul.mubr.f32.gmra.mrb[0].mxu0 %v6190
    %v6262 = vpop.f32.mrb[0].mxu0
    %v6263 = vadd.f32 0.0, %v6262
    %v6264 = vpop.f32.mrb[0].mxu0
    %v6265 = vadd.f32 0.0, %v6264
    %6266 = vdwg.mxu0
    %6267 = vmatprep.subr.mxu0 %v5601
    %6268 = vmatpush1.msra.mxu0 %v5600
    %6269 = vmatprep.subr.mxu0 %v5605
    %6270 = vmatpush1.msra.mxu0 %v5604
    %6271 = vmatprep.subr.mxu0 %v5609
    %6272 = vmatpush1.msra.mxu0 %v5608
    %6273 = vmatprep.subr.mxu0 %v5613
    %6274 = vmatpush1.msra.mxu0 %v5612
    %6275 = vmatprep.subr.mxu0 %v5617
    %6276 = vmatpush1.msra.mxu0 %v5616
    %6277 = vmatprep.subr.mxu0 %v5621
    %6278 = vmatpush1.msra.mxu0 %v5620
    %6279 = vmatprep.subr.mxu0 %v5625
    %6280 = vmatpush1.msra.mxu0 %v5624
    %6281 = vmatprep.subr.mxu0 %v5629
    %6282 = vmatpush1.msra.mxu0 %v5628
    %6283 = vmatprep.subr.mxu0 %v5633
    %6284 = vmatpush1.msra.mxu0 %v5632
    %6285 = vmatprep.subr.mxu0 %v5637
    %6286 = vmatpush1.msra.mxu0 %v5636
    %6287 = vmatprep.subr.mxu0 %v5641
    %6288 = vmatpush1.msra.mxu0 %v5640
    %6289 = vmatprep.subr.mxu0 %v5645
    %6290 = vmatpush1.msra.mxu0 %v5644
    %6291 = vmatprep.subr.mxu0 %v5649
    %6292 = vmatpush1.msra.mxu0 %v5648
    %6293 = vmatprep.subr.mxu0 %v5653
    %6294 = vmatpush1.msra.mxu0 %v5652
    %6295 = vmatprep.subr.mxu0 %v5657
    %6296 = vmatpush1.msra.mxu0 %v5656
    %6297 = vmatprep.subr.mxu0 %v5661
    %6298 = vmatpush1.msra.mxu0 %v5660
    %6299 = vmatprep.subr.mxu0 0.0
    %6300 = vmatpush1.msra.mxu0 0.0
    %6301 = vmatprep.subr.mxu0 0.0
    %6302 = vmatpush1.msra.mxu0 0.0
    %6303 = vmatprep.subr.mxu0 0.0
    %6304 = vmatpush1.msra.mxu0 0.0
    %6305 = vmatprep.subr.mxu0 0.0
    %6306 = vmatpush1.msra.mxu0 0.0
    %6307 = vmatprep.subr.mxu0 0.0
    %6308 = vmatpush1.msra.mxu0 0.0
    %6309 = vmatprep.subr.mxu0 0.0
    %6310 = vmatpush1.msra.mxu0 0.0
    %6311 = vmatprep.subr.mxu0 0.0
    %6312 = vmatpush1.msra.mxu0 0.0
    %6313 = vmatprep.subr.mxu0 0.0
    %6314 = vmatpush1.msra.mxu0 0.0
    %6315 = vmatprep.subr.mxu0 0.0
    %6316 = vmatpush1.msra.mxu0 0.0
    %6317 = vmatprep.subr.mxu0 0.0
    %6318 = vmatpush1.msra.mxu0 0.0
    %6319 = vmatprep.subr.mxu0 0.0
    %6320 = vmatpush1.msra.mxu0 0.0
    %6321 = vmatprep.subr.mxu0 0.0
    %6322 = vmatpush1.msra.mxu0 0.0
    %6323 = vmatprep.subr.mxu0 0.0
    %6324 = vmatpush1.msra.mxu0 0.0
    %6325 = vmatprep.subr.mxu0 0.0
    %6326 = vmatpush1.msra.mxu0 0.0
    %6327 = vmatprep.subr.mxu0 0.0
    %6328 = vmatpush1.msra.mxu0 0.0
    %6329 = vmatprep.subr.mxu0 0.0
    %6330 = vmatpush1.msra.mxu0 0.0
    %6331 = vmatprep.mubr.f32.mxu0 0.0
    %6332 = vmatmul.mubr.f32.gmra.mrb[0].mxu0 %v6190
    %v6333 = vpop.f32.mrb[0].mxu0
    %v6334 = vadd.f32 0.0, %v6333
    %v6335 = vpop.f32.mrb[0].mxu0
    %v6336 = vadd.f32 0.0, %v6335
    %6337 = vdwg.mxu0
    %v6338 = vadd.f32 %v6192, %v6263
    %v6339 = vadd.f32 %v6193, %v6265
    %v6340 = vadd.f32 %v6194, %v6334
    %v6341 = vadd.f32 %v6195, %v6336
    %v6342 = vxor.u32 %v6338, 2147483648
    %v6343 = vxor.u32 %v6339, 2147483648
    %v6344 = vxor.u32 %v6340, 2147483648
    %v6345 = vmul.f32 %v6342, 1.442695
    %v6346 = vpow.pop %v6345
    %v6347 = vmul.f32 %v6343, 1.442695
    %v6348 = vpow.pop %v6347
    %v6349 = vmul.f32 %v6344, 1.442695
    %v6350 = vpow.pop %v6349
    %v6351 = vadd.f32 %v6346, 1.0
    %v6352 = vadd.f32 %v6348, 1.0
    %v6353 = vadd.f32 %v6350, 1.0
    %v6354 = vrcp.pop %v6351
    %v6355 = vmul.f32 1.0, %v6354
    %v6356 = vrcp.pop %v6352
    %v6357 = vmul.f32 1.0, %v6356
    %v6358 = vrcp.pop %v6353
    %v6359 = vmul.f32 1.0, %v6358
    %v6360 = vtanh.pop %v6341
    %v6361 = vmul.f32 %v6357, %v6188
    %v6362 = vmul.f32 %v6355, %v6360
    %v6363 = vadd.f32 %v6361, %v6362
    %v6364 = vtanh.pop %v6363
    %v6365 = vmul.f32 %v6359, %v6364
    %6366 = vst [vmem:[%s895] sm:$0xff] %v6365
    %v6367 = vld [vmem:[%s897] sm:$0xff]
    %v6368 = vld [vmem:[%s897 + $0x8] sm:$0xff]
    %v6369 = vld [vmem:[%s897 + $0x10] sm:$0xff]
    %v6370 = vld [vmem:[%s897 + $0x18] sm:$0xff]
    %6371 = vmatprep.subr.mxu0 %v5599
    %6372 = vmatpush1.msra.mxu0 %v5598
    %6373 = vmatprep.subr.mxu0 %v5603
    %6374 = vmatpush1.msra.mxu0 %v5602
    %6375 = vmatprep.subr.mxu0 %v5607
    %6376 = vmatpush1.msra.mxu0 %v5606
    %6377 = vmatprep.subr.mxu0 %v5611
    %6378 = vmatpush1.msra.mxu0 %v5610
    %6379 = vmatprep.subr.mxu0 %v5615
    %6380 = vmatpush1.msra.mxu0 %v5614
    %6381 = vmatprep.subr.mxu0 %v5619
    %6382 = vmatpush1.msra.mxu0 %v5618
    %6383 = vmatprep.subr.mxu0 %v5623
    %6384 = vmatpush1.msra.mxu0 %v5622
    %6385 = vmatprep.subr.mxu0 %v5627
    %6386 = vmatpush1.msra.mxu0 %v5626
    %6387 = vmatprep.subr.mxu0 %v5631
    %6388 = vmatpush1.msra.mxu0 %v5630
    %6389 = vmatprep.subr.mxu0 %v5635
    %6390 = vmatpush1.msra.mxu0 %v5634
    %6391 = vmatprep.subr.mxu0 %v5639
    %6392 = vmatpush1.msra.mxu0 %v5638
    %6393 = vmatprep.subr.mxu0 %v5643
    %6394 = vmatpush1.msra.mxu0 %v5642
    %6395 = vmatprep.subr.mxu0 %v5647
    %6396 = vmatpush1.msra.mxu0 %v5646
    %6397 = vmatprep.subr.mxu0 %v5651
    %6398 = vmatpush1.msra.mxu0 %v5650
    %6399 = vmatprep.subr.mxu0 %v5655
    %6400 = vmatpush1.msra.mxu0 %v5654
    %6401 = vmatprep.subr.mxu0 %v5659
    %6402 = vmatpush1.msra.mxu0 %v5658
    %6403 = vmatprep.subr.mxu0 0.0
    %6404 = vmatpush1.msra.mxu0 0.0
    %6405 = vmatprep.subr.mxu0 0.0
    %6406 = vmatpush1.msra.mxu0 0.0
    %6407 = vmatprep.subr.mxu0 0.0
    %6408 = vmatpush1.msra.mxu0 0.0
    %6409 = vmatprep.subr.mxu0 0.0
    %6410 = vmatpush1.msra.mxu0 0.0
    %6411 = vmatprep.subr.mxu0 0.0
    %6412 = vmatpush1.msra.mxu0 0.0
    %6413 = vmatprep.subr.mxu0 0.0
    %6414 = vmatpush1.msra.mxu0 0.0
    %6415 = vmatprep.subr.mxu0 0.0
    %6416 = vmatpush1.msra.mxu0 0.0
    %6417 = vmatprep.subr.mxu0 0.0
    %6418 = vmatpush1.msra.mxu0 0.0
    %6419 = vmatprep.subr.mxu0 0.0
    %6420 = vmatpush1.msra.mxu0 0.0
    %6421 = vmatprep.subr.mxu0 0.0
    %6422 = vmatpush1.msra.mxu0 0.0
    %6423 = vmatprep.subr.mxu0 0.0
    %6424 = vmatpush1.msra.mxu0 0.0
    %6425 = vmatprep.subr.mxu0 0.0
    %6426 = vmatpush1.msra.mxu0 0.0
    %6427 = vmatprep.subr.mxu0 0.0
    %6428 = vmatpush1.msra.mxu0 0.0
    %6429 = vmatprep.subr.mxu0 0.0
    %6430 = vmatpush1.msra.mxu0 0.0
    %6431 = vmatprep.subr.mxu0 0.0
    %6432 = vmatpush1.msra.mxu0 0.0
    %6433 = vmatprep.subr.mxu0 0.0
    %6434 = vmatpush1.msra.mxu0 0.0
    %6435 = vmatprep.mubr.f32.mxu0 0.0
    %6436 = vmatmul.mubr.f32.gmra.mrb[0].mxu0 %v6365
    %v6437 = vpop.f32.mrb[0].mxu0
    %v6438 = vadd.f32 0.0, %v6437
    %v6439 = vpop.f32.mrb[0].mxu0
    %v6440 = vadd.f32 0.0, %v6439
    %6441 = vdwg.mxu0
    %6442 = vmatprep.subr.mxu0 %v5601
    %6443 = vmatpush1.msra.mxu0 %v5600
    %6444 = vmatprep.subr.mxu0 %v5605
    %6445 = vmatpush1.msra.mxu0 %v5604
    %6446 = vmatprep.subr.mxu0 %v5609
    %6447 = vmatpush1.msra.mxu0 %v5608
    %6448 = vmatprep.subr.mxu0 %v5613
    %6449 = vmatpush1.msra.mxu0 %v5612
    %6450 = vmatprep.subr.mxu0 %v5617
    %6451 = vmatpush1.msra.mxu0 %v5616
    %6452 = vmatprep.subr.mxu0 %v5621
    %6453 = vmatpush1.msra.mxu0 %v5620
    %6454 = vmatprep.subr.mxu0 %v5625
    %6455 = vmatpush1.msra.mxu0 %v5624
    %6456 = vmatprep.subr.mxu0 %v5629
    %6457 = vmatpush1.msra.mxu0 %v5628
    %6458 = vmatprep.subr.mxu0 %v5633
    %6459 = vmatpush1.msra.mxu0 %v5632
    %6460 = vmatprep.subr.mxu0 %v5637
    %6461 = vmatpush1.msra.mxu0 %v5636
    %6462 = vmatprep.subr.mxu0 %v5641
    %6463 = vmatpush1.msra.mxu0 %v5640
    %6464 = vmatprep.subr.mxu0 %v5645
    %6465 = vmatpush1.msra.mxu0 %v5644
    %6466 = vmatprep.subr.mxu0 %v5649
    %6467 = vmatpush1.msra.mxu0 %v5648
    %6468 = vmatprep.subr.mxu0 %v5653
    %6469 = vmatpush1.msra.mxu0 %v5652
    %6470 = vmatprep.subr.mxu0 %v5657
    %6471 = vmatpush1.msra.mxu0 %v5656
    %6472 = vmatprep.subr.mxu0 %v5661
    %6473 = vmatpush1.msra.mxu0 %v5660
    %6474 = vmatprep.subr.mxu0 0.0
    %6475 = vmatpush1.msra.mxu0 0.0
    %6476 = vmatprep.subr.mxu0 0.0
    %6477 = vmatpush1.msra.mxu0 0.0
    %6478 = vmatprep.subr.mxu0 0.0
    %6479 = vmatpush1.msra.mxu0 0.0
    %6480 = vmatprep.subr.mxu0 0.0
    %6481 = vmatpush1.msra.mxu0 0.0
    %6482 = vmatprep.subr.mxu0 0.0
    %6483 = vmatpush1.msra.mxu0 0.0
    %6484 = vmatprep.subr.mxu0 0.0
    %6485 = vmatpush1.msra.mxu0 0.0
    %6486 = vmatprep.subr.mxu0 0.0
    %6487 = vmatpush1.msra.mxu0 0.0
    %6488 = vmatprep.subr.mxu0 0.0
    %6489 = vmatpush1.msra.mxu0 0.0
    %6490 = vmatprep.subr.mxu0 0.0
    %6491 = vmatpush1.msra.mxu0 0.0
    %6492 = vmatprep.subr.mxu0 0.0
    %6493 = vmatpush1.msra.mxu0 0.0
    %6494 = vmatprep.subr.mxu0 0.0
    %6495 = vmatpush1.msra.mxu0 0.0
    %6496 = vmatprep.subr.mxu0 0.0
    %6497 = vmatpush1.msra.mxu0 0.0
    %6498 = vmatprep.subr.mxu0 0.0
    %6499 = vmatpush1.msra.mxu0 0.0
    %6500 = vmatprep.subr.mxu0 0.0
    %6501 = vmatpush1.msra.mxu0 0.0
    %6502 = vmatprep.subr.mxu0 0.0
    %6503 = vmatpush1.msra.mxu0 0.0
    %6504 = vmatprep.subr.mxu0 0.0
    %6505 = vmatpush1.msra.mxu0 0.0
    %6506 = vmatprep.mubr.f32.mxu0 0.0
    %6507 = vmatmul.mubr.f32.gmra.mrb[0].mxu0 %v6365
    %v6508 = vpop.f32.mrb[0].mxu0
    %v6509 = vadd.f32 0.0, %v6508
    %v6510 = vpop.f32.mrb[0].mxu0
    %v6511 = vadd.f32 0.0, %v6510
    %6512 = vdwg.mxu0
    %v6513 = vadd.f32 %v6367, %v6438
    %v6514 = vadd.f32 %v6368, %v6440
    %v6515 = vadd.f32 %v6369, %v6509
    %v6516 = vadd.f32 %v6370, %v6511
    %v6517 = vxor.u32 %v6513, 2147483648
    %v6518 = vxor.u32 %v6514, 2147483648
    %v6519 = vxor.u32 %v6515, 2147483648
    %v6520 = vmul.f32 %v6517, 1.442695
    %v6521 = vpow.pop %v6520
    %v6522 = vmul.f32 %v6518, 1.442695
    %v6523 = vpow.pop %v6522
    %v6524 = vmul.f32 %v6519, 1.442695
    %v6525 = vpow.pop %v6524
    %v6526 = vadd.f32 %v6521, 1.0
    %v6527 = vadd.f32 %v6523, 1.0
    %v6528 = vadd.f32 %v6525, 1.0
    %v6529 = vrcp.pop %v6526
    %v6530 = vmul.f32 1.0, %v6529
    %v6531 = vrcp.pop %v6527
    %v6532 = vmul.f32 1.0, %v6531
    %v6533 = vrcp.pop %v6528
    %v6534 = vmul.f32 1.0, %v6533
    %v6535 = vtanh.pop %v6516
    %v6536 = vmul.f32 %v6532, %v6363
    %v6537 = vmul.f32 %v6530, %v6535
    %v6538 = vadd.f32 %v6536, %v6537
    %v6539 = vtanh.pop %v6538
    %v6540 = vmul.f32 %v6534, %v6539
    %6541 = vst [vmem:[%s1072] sm:$0xff] %v6540
    %v6542 = vld [vmem:[%s1074] sm:$0xff]
    %v6543 = vld [vmem:[%s1074 + $0x8] sm:$0xff]
    %v6544 = vld [vmem:[%s1074 + $0x10] sm:$0xff]
    %v6545 = vld [vmem:[%s1074 + $0x18] sm:$0xff]
    %6546 = vmatprep.subr.mxu0 %v5599
    %6547 = vmatpush1.msra.mxu0 %v5598
    %6548 = vmatprep.subr.mxu0 %v5603
    %6549 = vmatpush1.msra.mxu0 %v5602
    %6550 = vmatprep.subr.mxu0 %v5607
    %6551 = vmatpush1.msra.mxu0 %v5606
    %6552 = vmatprep.subr.mxu0 %v5611
    %6553 = vmatpush1.msra.mxu0 %v5610
    %6554 = vmatprep.subr.mxu0 %v5615
    %6555 = vmatpush1.msra.mxu0 %v5614
    %6556 = vmatprep.subr.mxu0 %v5619
    %6557 = vmatpush1.msra.mxu0 %v5618
    %6558 = vmatprep.subr.mxu0 %v5623
    %6559 = vmatpush1.msra.mxu0 %v5622
    %6560 = vmatprep.subr.mxu0 %v5627
    %6561 = vmatpush1.msra.mxu0 %v5626
    %6562 = vmatprep.subr.mxu0 %v5631
    %6563 = vmatpush1.msra.mxu0 %v5630
    %6564 = vmatprep.subr.mxu0 %v5635
    %6565 = vmatpush1.msra.mxu0 %v5634
    %6566 = vmatprep.subr.mxu0 %v5639
    %6567 = vmatpush1.msra.mxu0 %v5638
    %6568 = vmatprep.subr.mxu0 %v5643
    %6569 = vmatpush1.msra.mxu0 %v5642
    %6570 = vmatprep.subr.mxu0 %v5647
    %6571 = vmatpush1.msra.mxu0 %v5646
    %6572 = vmatprep.subr.mxu0 %v5651
    %6573 = vmatpush1.msra.mxu0 %v5650
    %6574 = vmatprep.subr.mxu0 %v5655
    %6575 = vmatpush1.msra.mxu0 %v5654
    %6576 = vmatprep.subr.mxu0 %v5659
    %6577 = vmatpush1.msra.mxu0 %v5658
    %6578 = vmatprep.subr.mxu0 0.0
    %6579 = vmatpush1.msra.mxu0 0.0
    %6580 = vmatprep.subr.mxu0 0.0
    %6581 = vmatpush1.msra.mxu0 0.0
    %6582 = vmatprep.subr.mxu0 0.0
    %6583 = vmatpush1.msra.mxu0 0.0
    %6584 = vmatprep.subr.mxu0 0.0
    %6585 = vmatpush1.msra.mxu0 0.0
    %6586 = vmatprep.subr.mxu0 0.0
    %6587 = vmatpush1.msra.mxu0 0.0
    %6588 = vmatprep.subr.mxu0 0.0
    %6589 = vmatpush1.msra.mxu0 0.0
    %6590 = vmatprep.subr.mxu0 0.0
    %6591 = vmatpush1.msra.mxu0 0.0
    %6592 = vmatprep.subr.mxu0 0.0
    %6593 = vmatpush1.msra.mxu0 0.0
    %6594 = vmatprep.subr.mxu0 0.0
    %6595 = vmatpush1.msra.mxu0 0.0
    %6596 = vmatprep.subr.mxu0 0.0
    %6597 = vmatpush1.msra.mxu0 0.0
    %6598 = vmatprep.subr.mxu0 0.0
    %6599 = vmatpush1.msra.mxu0 0.0
    %6600 = vmatprep.subr.mxu0 0.0
    %6601 = vmatpush1.msra.mxu0 0.0
    %6602 = vmatprep.subr.mxu0 0.0
    %6603 = vmatpush1.msra.mxu0 0.0
    %6604 = vmatprep.subr.mxu0 0.0
    %6605 = vmatpush1.msra.mxu0 0.0
    %6606 = vmatprep.subr.mxu0 0.0
    %6607 = vmatpush1.msra.mxu0 0.0
    %6608 = vmatprep.subr.mxu0 0.0
    %6609 = vmatpush1.msra.mxu0 0.0
    %6610 = vmatprep.mubr.f32.mxu0 0.0
    %6611 = vmatmul.mubr.f32.gmra.mrb[0].mxu0 %v6540
    %v6612 = vpop.f32.mrb[0].mxu0
    %v6613 = vadd.f32 0.0, %v6612
    %v6614 = vpop.f32.mrb[0].mxu0
    %v6615 = vadd.f32 0.0, %v6614
    %6616 = vdwg.mxu0
    %6617 = vmatprep.subr.mxu0 %v5601
    %6618 = vmatpush1.msra.mxu0 %v5600
    %6619 = vmatprep.subr.mxu0 %v5605
    %6620 = vmatpush1.msra.mxu0 %v5604
    %6621 = vmatprep.subr.mxu0 %v5609
    %6622 = vmatpush1.msra.mxu0 %v5608
    %6623 = vmatprep.subr.mxu0 %v5613
    %6624 = vmatpush1.msra.mxu0 %v5612
    %6625 = vmatprep.subr.mxu0 %v5617
    %6626 = vmatpush1.msra.mxu0 %v5616
    %6627 = vmatprep.subr.mxu0 %v5621
    %6628 = vmatpush1.msra.mxu0 %v5620
    %6629 = vmatprep.subr.mxu0 %v5625
    %6630 = vmatpush1.msra.mxu0 %v5624
    %6631 = vmatprep.subr.mxu0 %v5629
    %6632 = vmatpush1.msra.mxu0 %v5628
    %6633 = vmatprep.subr.mxu0 %v5633
    %6634 = vmatpush1.msra.mxu0 %v5632
    %6635 = vmatprep.subr.mxu0 %v5637
    %6636 = vmatpush1.msra.mxu0 %v5636
    %6637 = vmatprep.subr.mxu0 %v5641
    %6638 = vmatpush1.msra.mxu0 %v5640
    %6639 = vmatprep.subr.mxu0 %v5645
    %6640 = vmatpush1.msra.mxu0 %v5644
    %6641 = vmatprep.subr.mxu0 %v5649
    %6642 = vmatpush1.msra.mxu0 %v5648
    %6643 = vmatprep.subr.mxu0 %v5653
    %6644 = vmatpush1.msra.mxu0 %v5652
    %6645 = vmatprep.subr.mxu0 %v5657
    %6646 = vmatpush1.msra.mxu0 %v5656
    %6647 = vmatprep.subr.mxu0 %v5661
    %6648 = vmatpush1.msra.mxu0 %v5660
    %6649 = vmatprep.subr.mxu0 0.0
    %6650 = vmatpush1.msra.mxu0 0.0
    %6651 = vmatprep.subr.mxu0 0.0
    %6652 = vmatpush1.msra.mxu0 0.0
    %6653 = vmatprep.subr.mxu0 0.0
    %6654 = vmatpush1.msra.mxu0 0.0
    %6655 = vmatprep.subr.mxu0 0.0
    %6656 = vmatpush1.msra.mxu0 0.0
    %6657 = vmatprep.subr.mxu0 0.0
    %6658 = vmatpush1.msra.mxu0 0.0
    %6659 = vmatprep.subr.mxu0 0.0
    %6660 = vmatpush1.msra.mxu0 0.0
    %6661 = vmatprep.subr.mxu0 0.0
    %6662 = vmatpush1.msra.mxu0 0.0
    %6663 = vmatprep.subr.mxu0 0.0
    %6664 = vmatpush1.msra.mxu0 0.0
    %6665 = vmatprep.subr.mxu0 0.0
    %6666 = vmatpush1.msra.mxu0 0.0
    %6667 = vmatprep.subr.mxu0 0.0
    %6668 = vmatpush1.msra.mxu0 0.0
    %6669 = vmatprep.subr.mxu0 0.0
    %6670 = vmatpush1.msra.mxu0 0.0
    %6671 = vmatprep.subr.mxu0 0.0
    %6672 = vmatpush1.msra.mxu0 0.0
    %6673 = vmatprep.subr.mxu0 0.0
    %6674 = vmatpush1.msra.mxu0 0.0
    %6675 = vmatprep.subr.mxu0 0.0
    %6676 = vmatpush1.msra.mxu0 0.0
    %6677 = vmatprep.subr.mxu0 0.0
    %6678 = vmatpush1.msra.mxu0 0.0
    %6679 = vmatprep.subr.mxu0 0.0
    %6680 = vmatpush1.msra.mxu0 0.0
    %6681 = vmatprep.mubr.f32.mxu0 0.0
    %6682 = vmatmul.mubr.f32.gmra.mrb[0].mxu0 %v6540
    %v6683 = vpop.f32.mrb[0].mxu0
    %v6684 = vadd.f32 0.0, %v6683
    %v6685 = vpop.f32.mrb[0].mxu0
    %v6686 = vadd.f32 0.0, %v6685
    %6687 = vdwg.mxu0
    %v6688 = vadd.f32 %v6542, %v6613
    %v6689 = vadd.f32 %v6543, %v6615
    %v6690 = vadd.f32 %v6544, %v6684
    %v6691 = vadd.f32 %v6545, %v6686
    %v6692 = vxor.u32 %v6688, 2147483648
    %v6693 = vxor.u32 %v6689, 2147483648
    %v6694 = vxor.u32 %v6690, 2147483648
    %v6695 = vmul.f32 %v6692, 1.442695
    %v6696 = vpow.pop %v6695
    %v6697 = vmul.f32 %v6693, 1.442695
    %v6698 = vpow.pop %v6697
    %v6699 = vmul.f32 %v6694, 1.442695
    %v6700 = vpow.pop %v6699
    %v6701 = vadd.f32 %v6696, 1.0
    %v6702 = vadd.f32 %v6698, 1.0
    %v6703 = vadd.f32 %v6700, 1.0
    %v6704 = vrcp.pop %v6701
    %v6705 = vmul.f32 1.0, %v6704
    %v6706 = vrcp.pop %v6702
    %v6707 = vmul.f32 1.0, %v6706
    %v6708 = vrcp.pop %v6703
    %v6709 = vmul.f32 1.0, %v6708
    %v6710 = vtanh.pop %v6691
    %v6711 = vmul.f32 %v6707, %v6538
    %v6712 = vmul.f32 %v6705, %v6710
    %v6713 = vadd.f32 %v6711, %v6712
    %v6714 = vtanh.pop %v6713
    %v6715 = vmul.f32 %v6709, %v6714
    %6716 = vst [vmem:[%s1249] sm:$0xff] %v6715
    %v6717 = vld [vmem:[%s1251] sm:$0xff]
    %v6718 = vld [vmem:[%s1251 + $0x8] sm:$0xff]
    %v6719 = vld [vmem:[%s1251 + $0x10] sm:$0xff]
    %v6720 = vld [vmem:[%s1251 + $0x18] sm:$0xff]
    %6721 = vmatprep.subr.mxu0 %v5599
    %6722 = vmatpush1.msra.mxu0 %v5598
    %6723 = vmatprep.subr.mxu0 %v5603
    %6724 = vmatpush1.msra.mxu0 %v5602
    %6725 = vmatprep.subr.mxu0 %v5607
    %6726 = vmatpush1.msra.mxu0 %v5606
    %6727 = vmatprep.subr.mxu0 %v5611
    %6728 = vmatpush1.msra.mxu0 %v5610
    %6729 = vmatprep.subr.mxu0 %v5615
    %6730 = vmatpush1.msra.mxu0 %v5614
    %6731 = vmatprep.subr.mxu0 %v5619
    %6732 = vmatpush1.msra.mxu0 %v5618
    %6733 = vmatprep.subr.mxu0 %v5623
    %6734 = vmatpush1.msra.mxu0 %v5622
    %6735 = vmatprep.subr.mxu0 %v5627
    %6736 = vmatpush1.msra.mxu0 %v5626
    %6737 = vmatprep.subr.mxu0 %v5631
    %6738 = vmatpush1.msra.mxu0 %v5630
    %6739 = vmatprep.subr.mxu0 %v5635
    %6740 = vmatpush1.msra.mxu0 %v5634
    %6741 = vmatprep.subr.mxu0 %v5639
    %6742 = vmatpush1.msra.mxu0 %v5638
    %6743 = vmatprep.subr.mxu0 %v5643
    %6744 = vmatpush1.msra.mxu0 %v5642
    %6745 = vmatprep.subr.mxu0 %v5647
    %6746 = vmatpush1.msra.mxu0 %v5646
    %6747 = vmatprep.subr.mxu0 %v5651
    %6748 = vmatpush1.msra.mxu0 %v5650
    %6749 = vmatprep.subr.mxu0 %v5655
    %6750 = vmatpush1.msra.mxu0 %v5654
    %6751 = vmatprep.subr.mxu0 %v5659
    %6752 = vmatpush1.msra.mxu0 %v5658
    %6753 = vmatprep.subr.mxu0 0.0
    %6754 = vmatpush1.msra.mxu0 0.0
    %6755 = vmatprep.subr.mxu0 0.0
    %6756 = vmatpush1.msra.mxu0 0.0
    %6757 = vmatprep.subr.mxu0 0.0
    %6758 = vmatpush1.msra.mxu0 0.0
    %6759 = vmatprep.subr.mxu0 0.0
    %6760 = vmatpush1.msra.mxu0 0.0
    %6761 = vmatprep.subr.mxu0 0.0
    %6762 = vmatpush1.msra.mxu0 0.0
    %6763 = vmatprep.subr.mxu0 0.0
    %6764 = vmatpush1.msra.mxu0 0.0
    %6765 = vmatprep.subr.mxu0 0.0
    %6766 = vmatpush1.msra.mxu0 0.0
    %6767 = vmatprep.subr.mxu0 0.0
    %6768 = vmatpush1.msra.mxu0 0.0
    %6769 = vmatprep.subr.mxu0 0.0
    %6770 = vmatpush1.msra.mxu0 0.0
    %6771 = vmatprep.subr.mxu0 0.0
    %6772 = vmatpush1.msra.mxu0 0.0
    %6773 = vmatprep.subr.mxu0 0.0
    %6774 = vmatpush1.msra.mxu0 0.0
    %6775 = vmatprep.subr.mxu0 0.0
    %6776 = vmatpush1.msra.mxu0 0.0
    %6777 = vmatprep.subr.mxu0 0.0
    %6778 = vmatpush1.msra.mxu0 0.0
    %6779 = vmatprep.subr.mxu0 0.0
    %6780 = vmatpush1.msra.mxu0 0.0
    %6781 = vmatprep.subr.mxu0 0.0
    %6782 = vmatpush1.msra.mxu0 0.0
    %6783 = vmatprep.subr.mxu0 0.0
    %6784 = vmatpush1.msra.mxu0 0.0
    %6785 = vmatprep.mubr.f32.mxu0 0.0
    %6786 = vmatmul.mubr.f32.gmra.mrb[0].mxu0 %v6715
    %v6787 = vpop.f32.mrb[0].mxu0
    %v6788 = vadd.f32 0.0, %v6787
    %v6789 = vpop.f32.mrb[0].mxu0
    %v6790 = vadd.f32 0.0, %v6789
    %6791 = vdwg.mxu0
    %6792 = vmatprep.subr.mxu0 %v5601
    %6793 = vmatpush1.msra.mxu0 %v5600
    %6794 = vmatprep.subr.mxu0 %v5605
    %6795 = vmatpush1.msra.mxu0 %v5604
    %6796 = vmatprep.subr.mxu0 %v5609
    %6797 = vmatpush1.msra.mxu0 %v5608
    %6798 = vmatprep.subr.mxu0 %v5613
    %6799 = vmatpush1.msra.mxu0 %v5612
    %6800 = vmatprep.subr.mxu0 %v5617
    %6801 = vmatpush1.msra.mxu0 %v5616
    %6802 = vmatprep.subr.mxu0 %v5621
    %6803 = vmatpush1.msra.mxu0 %v5620
    %6804 = vmatprep.subr.mxu0 %v5625
    %6805 = vmatpush1.msra.mxu0 %v5624
    %6806 = vmatprep.subr.mxu0 %v5629
    %6807 = vmatpush1.msra.mxu0 %v5628
    %6808 = vmatprep.subr.mxu0 %v5633
    %6809 = vmatpush1.msra.mxu0 %v5632
    %6810 = vmatprep.subr.mxu0 %v5637
    %6811 = vmatpush1.msra.mxu0 %v5636
    %6812 = vmatprep.subr.mxu0 %v5641
    %6813 = vmatpush1.msra.mxu0 %v5640
    %6814 = vmatprep.subr.mxu0 %v5645
    %6815 = vmatpush1.msra.mxu0 %v5644
    %6816 = vmatprep.subr.mxu0 %v5649
    %6817 = vmatpush1.msra.mxu0 %v5648
    %6818 = vmatprep.subr.mxu0 %v5653
    %6819 = vmatpush1.msra.mxu0 %v5652
    %6820 = vmatprep.subr.mxu0 %v5657
    %6821 = vmatpush1.msra.mxu0 %v5656
    %6822 = vmatprep.subr.mxu0 %v5661
    %6823 = vmatpush1.msra.mxu0 %v5660
    %6824 = vmatprep.subr.mxu0 0.0
    %6825 = vmatpush1.msra.mxu0 0.0
    %6826 = vmatprep.subr.mxu0 0.0
    %6827 = vmatpush1.msra.mxu0 0.0
    %6828 = vmatprep.subr.mxu0 0.0
    %6829 = vmatpush1.msra.mxu0 0.0
    %6830 = vmatprep.subr.mxu0 0.0
    %6831 = vmatpush1.msra.mxu0 0.0
    %6832 = vmatprep.subr.mxu0 0.0
    %6833 = vmatpush1.msra.mxu0 0.0
    %6834 = vmatprep.subr.mxu0 0.0
    %6835 = vmatpush1.msra.mxu0 0.0
    %6836 = vmatprep.subr.mxu0 0.0
    %6837 = vmatpush1.msra.mxu0 0.0
    %6838 = vmatprep.subr.mxu0 0.0
    %6839 = vmatpush1.msra.mxu0 0.0
    %6840 = vmatprep.subr.mxu0 0.0
    %6841 = vmatpush1.msra.mxu0 0.0
    %6842 = vmatprep.subr.mxu0 0.0
    %6843 = vmatpush1.msra.mxu0 0.0
    %6844 = vmatprep.subr.mxu0 0.0
    %6845 = vmatpush1.msra.mxu0 0.0
    %6846 = vmatprep.subr.mxu0 0.0
    %6847 = vmatpush1.msra.mxu0 0.0
    %6848 = vmatprep.subr.mxu0 0.0
    %6849 = vmatpush1.msra.mxu0 0.0
    %6850 = vmatprep.subr.mxu0 0.0
    %6851 = vmatpush1.msra.mxu0 0.0
    %6852 = vmatprep.subr.mxu0 0.0
    %6853 = vmatpush1.msra.mxu0 0.0
    %6854 = vmatprep.subr.mxu0 0.0
    %6855 = vmatpush1.msra.mxu0 0.0
    %6856 = vmatprep.mubr.f32.mxu0 0.0
    %6857 = vmatmul.mubr.f32.gmra.mrb[0].mxu0 %v6715
    %v6858 = vpop.f32.mrb[0].mxu0
    %v6859 = vadd.f32 0.0, %v6858
    %v6860 = vpop.f32.mrb[0].mxu0
    %v6861 = vadd.f32 0.0, %v6860
    %6862 = vdwg.mxu0
    %v6863 = vadd.f32 %v6717, %v6788
    %v6864 = vadd.f32 %v6718, %v6790
    %v6865 = vadd.f32 %v6719, %v6859
    %v6866 = vadd.f32 %v6720, %v6861
    %v6867 = vxor.u32 %v6863, 2147483648
    %v6868 = vxor.u32 %v6864, 2147483648
    %v6869 = vxor.u32 %v6865, 2147483648
    %v6870 = vmul.f32 %v6867, 1.442695
    %v6871 = vpow.pop %v6870
    %v6872 = vmul.f32 %v6868, 1.442695
    %v6873 = vpow.pop %v6872
    %v6874 = vmul.f32 %v6869, 1.442695
    %v6875 = vpow.pop %v6874
    %v6876 = vadd.f32 %v6871, 1.0
    %v6877 = vadd.f32 %v6873, 1.0
    %v6878 = vadd.f32 %v6875, 1.0
    %v6879 = vrcp.pop %v6876
    %v6880 = vmul.f32 1.0, %v6879
    %v6881 = vrcp.pop %v6877
    %v6882 = vmul.f32 1.0, %v6881
    %v6883 = vrcp.pop %v6878
    %v6884 = vmul.f32 1.0, %v6883
    %v6885 = vtanh.pop %v6866
    %v6886 = vmul.f32 %v6882, %v6713
    %v6887 = vmul.f32 %v6880, %v6885
    %v6888 = vadd.f32 %v6886, %v6887
    %v6889 = vtanh.pop %v6888
    %v6890 = vmul.f32 %v6884, %v6889
    %6891 = vst [vmem:[%s1426] sm:$0xff] %v6890
    %v6892 = vld [vmem:[%s1428] sm:$0xff]
    %v6893 = vld [vmem:[%s1428 + $0x8] sm:$0xff]
    %v6894 = vld [vmem:[%s1428 + $0x10] sm:$0xff]
    %v6895 = vld [vmem:[%s1428 + $0x18] sm:$0xff]
    %6896 = vmatprep.subr.mxu0 %v5599
    %6897 = vmatpush1.msra.mxu0 %v5598
    %6898 = vmatprep.subr.mxu0 %v5603
    %6899 = vmatpush1.msra.mxu0 %v5602
    %6900 = vmatprep.subr.mxu0 %v5607
    %6901 = vmatpush1.msra.mxu0 %v5606
    %6902 = vmatprep.subr.mxu0 %v5611
    %6903 = vmatpush1.msra.mxu0 %v5610
    %6904 = vmatprep.subr.mxu0 %v5615
    %6905 = vmatpush1.msra.mxu0 %v5614
    %6906 = vmatprep.subr.mxu0 %v5619
    %6907 = vmatpush1.msra.mxu0 %v5618
    %6908 = vmatprep.subr.mxu0 %v5623
    %6909 = vmatpush1.msra.mxu0 %v5622
    %6910 = vmatprep.subr.mxu0 %v5627
    %6911 = vmatpush1.msra.mxu0 %v5626
    %6912 = vmatprep.subr.mxu0 %v5631
    %6913 = vmatpush1.msra.mxu0 %v5630
    %6914 = vmatprep.subr.mxu0 %v5635
    %6915 = vmatpush1.msra.mxu0 %v5634
    %6916 = vmatprep.subr.mxu0 %v5639
    %6917 = vmatpush1.msra.mxu0 %v5638
    %6918 = vmatprep.subr.mxu0 %v5643
    %6919 = vmatpush1.msra.mxu0 %v5642
    %6920 = vmatprep.subr.mxu0 %v5647
    %6921 = vmatpush1.msra.mxu0 %v5646
    %6922 = vmatprep.subr.mxu0 %v5651
    %6923 = vmatpush1.msra.mxu0 %v5650
    %6924 = vmatprep.subr.mxu0 %v5655
    %6925 = vmatpush1.msra.mxu0 %v5654
    %6926 = vmatprep.subr.mxu0 %v5659
    %6927 = vmatpush1.msra.mxu0 %v5658
    %6928 = vmatprep.subr.mxu0 0.0
    %6929 = vmatpush1.msra.mxu0 0.0
    %6930 = vmatprep.subr.mxu0 0.0
    %6931 = vmatpush1.msra.mxu0 0.0
    %6932 = vmatprep.subr.mxu0 0.0
    %6933 = vmatpush1.msra.mxu0 0.0
    %6934 = vmatprep.subr.mxu0 0.0
    %6935 = vmatpush1.msra.mxu0 0.0
    %6936 = vmatprep.subr.mxu0 0.0
    %6937 = vmatpush1.msra.mxu0 0.0
    %6938 = vmatprep.subr.mxu0 0.0
    %6939 = vmatpush1.msra.mxu0 0.0
    %6940 = vmatprep.subr.mxu0 0.0
    %6941 = vmatpush1.msra.mxu0 0.0
    %6942 = vmatprep.subr.mxu0 0.0
    %6943 = vmatpush1.msra.mxu0 0.0
    %6944 = vmatprep.subr.mxu0 0.0
    %6945 = vmatpush1.msra.mxu0 0.0
    %6946 = vmatprep.subr.mxu0 0.0
    %6947 = vmatpush1.msra.mxu0 0.0
    %6948 = vmatprep.subr.mxu0 0.0
    %6949 = vmatpush1.msra.mxu0 0.0
    %6950 = vmatprep.subr.mxu0 0.0
    %6951 = vmatpush1.msra.mxu0 0.0
    %6952 = vmatprep.subr.mxu0 0.0
    %6953 = vmatpush1.msra.mxu0 0.0
    %6954 = vmatprep.subr.mxu0 0.0
    %6955 = vmatpush1.msra.mxu0 0.0
    %6956 = vmatprep.subr.mxu0 0.0
    %6957 = vmatpush1.msra.mxu0 0.0
    %6958 = vmatprep.subr.mxu0 0.0
    %6959 = vmatpush1.msra.mxu0 0.0
    %6960 = vmatprep.mubr.f32.mxu0 0.0
    %6961 = vmatmul.mubr.f32.gmra.mrb[0].mxu0 %v6890
    %v6962 = vpop.f32.mrb[0].mxu0
    %v6963 = vadd.f32 0.0, %v6962
    %v6964 = vpop.f32.mrb[0].mxu0
    %v6965 = vadd.f32 0.0, %v6964
    %6966 = vdwg.mxu0
    %6967 = vmatprep.subr.mxu0 %v5601
    %6968 = vmatpush1.msra.mxu0 %v5600
    %6969 = vmatprep.subr.mxu0 %v5605
    %6970 = vmatpush1.msra.mxu0 %v5604
    %6971 = vmatprep.subr.mxu0 %v5609
    %6972 = vmatpush1.msra.mxu0 %v5608
    %6973 = vmatprep.subr.mxu0 %v5613
    %6974 = vmatpush1.msra.mxu0 %v5612
    %6975 = vmatprep.subr.mxu0 %v5617
    %6976 = vmatpush1.msra.mxu0 %v5616
    %6977 = vmatprep.subr.mxu0 %v5621
    %6978 = vmatpush1.msra.mxu0 %v5620
    %6979 = vmatprep.subr.mxu0 %v5625
    %6980 = vmatpush1.msra.mxu0 %v5624
    %6981 = vmatprep.subr.mxu0 %v5629
    %6982 = vmatpush1.msra.mxu0 %v5628
    %6983 = vmatprep.subr.mxu0 %v5633
    %6984 = vmatpush1.msra.mxu0 %v5632
    %6985 = vmatprep.subr.mxu0 %v5637
    %6986 = vmatpush1.msra.mxu0 %v5636
    %6987 = vmatprep.subr.mxu0 %v5641
    %6988 = vmatpush1.msra.mxu0 %v5640
    %6989 = vmatprep.subr.mxu0 %v5645
    %6990 = vmatpush1.msra.mxu0 %v5644
    %6991 = vmatprep.subr.mxu0 %v5649
    %6992 = vmatpush1.msra.mxu0 %v5648
    %6993 = vmatprep.subr.mxu0 %v5653
    %6994 = vmatpush1.msra.mxu0 %v5652
    %6995 = vmatprep.subr.mxu0 %v5657
    %6996 = vmatpush1.msra.mxu0 %v5656
    %6997 = vmatprep.subr.mxu0 %v5661
    %6998 = vmatpush1.msra.mxu0 %v5660
    %6999 = vmatprep.subr.mxu0 0.0
    %7000 = vmatpush1.msra.mxu0 0.0
    %7001 = vmatprep.subr.mxu0 0.0
    %7002 = vmatpush1.msra.mxu0 0.0
    %7003 = vmatprep.subr.mxu0 0.0
    %7004 = vmatpush1.msra.mxu0 0.0
    %7005 = vmatprep.subr.mxu0 0.0
    %7006 = vmatpush1.msra.mxu0 0.0
    %7007 = vmatprep.subr.mxu0 0.0
    %7008 = vmatpush1.msra.mxu0 0.0
    %7009 = vmatprep.subr.mxu0 0.0
    %7010 = vmatpush1.msra.mxu0 0.0
    %7011 = vmatprep.subr.mxu0 0.0
    %7012 = vmatpush1.msra.mxu0 0.0
    %7013 = vmatprep.subr.mxu0 0.0
    %7014 = vmatpush1.msra.mxu0 0.0
    %7015 = vmatprep.subr.mxu0 0.0
    %7016 = vmatpush1.msra.mxu0 0.0
    %7017 = vmatprep.subr.mxu0 0.0
    %7018 = vmatpush1.msra.mxu0 0.0
    %7019 = vmatprep.subr.mxu0 0.0
    %7020 = vmatpush1.msra.mxu0 0.0
    %7021 = vmatprep.subr.mxu0 0.0
    %7022 = vmatpush1.msra.mxu0 0.0
    %7023 = vmatprep.subr.mxu0 0.0
    %7024 = vmatpush1.msra.mxu0 0.0
    %7025 = vmatprep.subr.mxu0 0.0
    %7026 = vmatpush1.msra.mxu0 0.0
    %7027 = vmatprep.subr.mxu0 0.0
    %7028 = vmatpush1.msra.mxu0 0.0
    %7029 = vmatprep.subr.mxu0 0.0
    %7030 = vmatpush1.msra.mxu0 0.0
    %7031 = vmatprep.mubr.f32.mxu0 0.0
    %7032 = vmatmul.mubr.f32.gmra.mrb[0].mxu0 %v6890
    %v7033 = vpop.f32.mrb[0].mxu0
    %v7034 = vadd.f32 0.0, %v7033
    %v7035 = vpop.f32.mrb[0].mxu0
    %v7036 = vadd.f32 0.0, %v7035
    %7037 = vdwg.mxu0
    %v7038 = vadd.f32 %v6892, %v6963
    %v7039 = vadd.f32 %v6893, %v6965
    %v7040 = vadd.f32 %v6894, %v7034
    %v7041 = vadd.f32 %v6895, %v7036
    %v7042 = vxor.u32 %v7038, 2147483648
    %v7043 = vxor.u32 %v7039, 2147483648
    %v7044 = vxor.u32 %v7040, 2147483648
    %v7045 = vmul.f32 %v7042, 1.442695
    %v7046 = vpow.pop %v7045
    %v7047 = vmul.f32 %v7043, 1.442695
    %v7048 = vpow.pop %v7047
    %v7049 = vmul.f32 %v7044, 1.442695
    %v7050 = vpow.pop %v7049
    %v7051 = vadd.f32 %v7046, 1.0
    %v7052 = vadd.f32 %v7048, 1.0
    %v7053 = vadd.f32 %v7050, 1.0
    %v7054 = vrcp.pop %v7051
    %v7055 = vmul.f32 1.0, %v7054
    %v7056 = vrcp.pop %v7052
    %v7057 = vmul.f32 1.0, %v7056
    %v7058 = vrcp.pop %v7053
    %v7059 = vmul.f32 1.0, %v7058
    %v7060 = vtanh.pop %v7041
    %v7061 = vmul.f32 %v7057, %v6888
    %v7062 = vmul.f32 %v7055, %v7060
    %v7063 = vadd.f32 %v7061, %v7062
    %v7064 = vtanh.pop %v7063
    %v7065 = vmul.f32 %v7059, %v7064
    %7066 = vst [vmem:[%s1603] sm:$0xff] %v7065
    %v7067 = vld [vmem:[%s1605] sm:$0xff]
    %v7068 = vld [vmem:[%s1605 + $0x8] sm:$0xff]
    %v7069 = vld [vmem:[%s1605 + $0x10] sm:$0xff]
    %v7070 = vld [vmem:[%s1605 + $0x18] sm:$0xff]
    %7071 = vmatprep.subr.mxu0 %v5599
    %7072 = vmatpush1.msra.mxu0 %v5598
    %7073 = vmatprep.subr.mxu0 %v5603
    %7074 = vmatpush1.msra.mxu0 %v5602
    %7075 = vmatprep.subr.mxu0 %v5607
    %7076 = vmatpush1.msra.mxu0 %v5606
    %7077 = vmatprep.subr.mxu0 %v5611
    %7078 = vmatpush1.msra.mxu0 %v5610
    %7079 = vmatprep.subr.mxu0 %v5615
    %7080 = vmatpush1.msra.mxu0 %v5614
    %7081 = vmatprep.subr.mxu0 %v5619
    %7082 = vmatpush1.msra.mxu0 %v5618
    %7083 = vmatprep.subr.mxu0 %v5623
    %7084 = vmatpush1.msra.mxu0 %v5622
    %7085 = vmatprep.subr.mxu0 %v5627
    %7086 = vmatpush1.msra.mxu0 %v5626
    %7087 = vmatprep.subr.mxu0 %v5631
    %7088 = vmatpush1.msra.mxu0 %v5630
    %7089 = vmatprep.subr.mxu0 %v5635
    %7090 = vmatpush1.msra.mxu0 %v5634
    %7091 = vmatprep.subr.mxu0 %v5639
    %7092 = vmatpush1.msra.mxu0 %v5638
    %7093 = vmatprep.subr.mxu0 %v5643
    %7094 = vmatpush1.msra.mxu0 %v5642
    %7095 = vmatprep.subr.mxu0 %v5647
    %7096 = vmatpush1.msra.mxu0 %v5646
    %7097 = vmatprep.subr.mxu0 %v5651
    %7098 = vmatpush1.msra.mxu0 %v5650
    %7099 = vmatprep.subr.mxu0 %v5655
    %7100 = vmatpush1.msra.mxu0 %v5654
    %7101 = vmatprep.subr.mxu0 %v5659
    %7102 = vmatpush1.msra.mxu0 %v5658
    %7103 = vmatprep.subr.mxu0 0.0
    %7104 = vmatpush1.msra.mxu0 0.0
    %7105 = vmatprep.subr.mxu0 0.0
    %7106 = vmatpush1.msra.mxu0 0.0
    %7107 = vmatprep.subr.mxu0 0.0
    %7108 = vmatpush1.msra.mxu0 0.0
    %7109 = vmatprep.subr.mxu0 0.0
    %7110 = vmatpush1.msra.mxu0 0.0
    %7111 = vmatprep.subr.mxu0 0.0
    %7112 = vmatpush1.msra.mxu0 0.0
    %7113 = vmatprep.subr.mxu0 0.0
    %7114 = vmatpush1.msra.mxu0 0.0
    %7115 = vmatprep.subr.mxu0 0.0
    %7116 = vmatpush1.msra.mxu0 0.0
    %7117 = vmatprep.subr.mxu0 0.0
    %7118 = vmatpush1.msra.mxu0 0.0
    %7119 = vmatprep.subr.mxu0 0.0
    %7120 = vmatpush1.msra.mxu0 0.0
    %7121 = vmatprep.subr.mxu0 0.0
    %7122 = vmatpush1.msra.mxu0 0.0
    %7123 = vmatprep.subr.mxu0 0.0
    %7124 = vmatpush1.msra.mxu0 0.0
    %7125 = vmatprep.subr.mxu0 0.0
    %7126 = vmatpush1.msra.mxu0 0.0
    %7127 = vmatprep.subr.mxu0 0.0
    %7128 = vmatpush1.msra.mxu0 0.0
    %7129 = vmatprep.subr.mxu0 0.0
    %7130 = vmatpush1.msra.mxu0 0.0
    %7131 = vmatprep.subr.mxu0 0.0
    %7132 = vmatpush1.msra.mxu0 0.0
    %7133 = vmatprep.subr.mxu0 0.0
    %7134 = vmatpush1.msra.mxu0 0.0
    %7135 = vmatprep.mubr.f32.mxu0 0.0
    %7136 = vmatmul.mubr.f32.gmra.mrb[0].mxu0 %v7065
    %v7137 = vpop.f32.mrb[0].mxu0
    %v7138 = vadd.f32 0.0, %v7137
    %v7139 = vpop.f32.mrb[0].mxu0
    %v7140 = vadd.f32 0.0, %v7139
    %7141 = vdwg.mxu0
    %7142 = vmatprep.subr.mxu0 %v5601
    %7143 = vmatpush1.msra.mxu0 %v5600
    %7144 = vmatprep.subr.mxu0 %v5605
    %7145 = vmatpush1.msra.mxu0 %v5604
    %7146 = vmatprep.subr.mxu0 %v5609
    %7147 = vmatpush1.msra.mxu0 %v5608
    %7148 = vmatprep.subr.mxu0 %v5613
    %7149 = vmatpush1.msra.mxu0 %v5612
    %7150 = vmatprep.subr.mxu0 %v5617
    %7151 = vmatpush1.msra.mxu0 %v5616
    %7152 = vmatprep.subr.mxu0 %v5621
    %7153 = vmatpush1.msra.mxu0 %v5620
    %7154 = vmatprep.subr.mxu0 %v5625
    %7155 = vmatpush1.msra.mxu0 %v5624
    %7156 = vmatprep.subr.mxu0 %v5629
    %7157 = vmatpush1.msra.mxu0 %v5628
    %7158 = vmatprep.subr.mxu0 %v5633
    %7159 = vmatpush1.msra.mxu0 %v5632
    %7160 = vmatprep.subr.mxu0 %v5637
    %7161 = vmatpush1.msra.mxu0 %v5636
    %7162 = vmatprep.subr.mxu0 %v5641
    %7163 = vmatpush1.msra.mxu0 %v5640
    %7164 = vmatprep.subr.mxu0 %v5645
    %7165 = vmatpush1.msra.mxu0 %v5644
    %7166 = vmatprep.subr.mxu0 %v5649
    %7167 = vmatpush1.msra.mxu0 %v5648
    %7168 = vmatprep.subr.mxu0 %v5653
    %7169 = vmatpush1.msra.mxu0 %v5652
    %7170 = vmatprep.subr.mxu0 %v5657
    %7171 = vmatpush1.msra.mxu0 %v5656
    %7172 = vmatprep.subr.mxu0 %v5661
    %7173 = vmatpush1.msra.mxu0 %v5660
    %7174 = vmatprep.subr.mxu0 0.0
    %7175 = vmatpush1.msra.mxu0 0.0
    %7176 = vmatprep.subr.mxu0 0.0
    %7177 = vmatpush1.msra.mxu0 0.0
    %7178 = vmatprep.subr.mxu0 0.0
    %7179 = vmatpush1.msra.mxu0 0.0
    %7180 = vmatprep.subr.mxu0 0.0
    %7181 = vmatpush1.msra.mxu0 0.0
    %7182 = vmatprep.subr.mxu0 0.0
    %7183 = vmatpush1.msra.mxu0 0.0
    %7184 = vmatprep.subr.mxu0 0.0
    %7185 = vmatpush1.msra.mxu0 0.0
    %7186 = vmatprep.subr.mxu0 0.0
    %7187 = vmatpush1.msra.mxu0 0.0
    %7188 = vmatprep.subr.mxu0 0.0
    %7189 = vmatpush1.msra.mxu0 0.0
    %7190 = vmatprep.subr.mxu0 0.0
    %7191 = vmatpush1.msra.mxu0 0.0
    %7192 = vmatprep.subr.mxu0 0.0
    %7193 = vmatpush1.msra.mxu0 0.0
    %7194 = vmatprep.subr.mxu0 0.0
    %7195 = vmatpush1.msra.mxu0 0.0
    %7196 = vmatprep.subr.mxu0 0.0
    %7197 = vmatpush1.msra.mxu0 0.0
    %7198 = vmatprep.subr.mxu0 0.0
    %7199 = vmatpush1.msra.mxu0 0.0
    %7200 = vmatprep.subr.mxu0 0.0
    %7201 = vmatpush1.msra.mxu0 0.0
    %7202 = vmatprep.subr.mxu0 0.0
    %7203 = vmatpush1.msra.mxu0 0.0
    %7204 = vmatprep.subr.mxu0 0.0
    %7205 = vmatpush1.msra.mxu0 0.0
    %7206 = vmatprep.mubr.f32.mxu0 0.0
    %7207 = vmatmul.mubr.f32.gmra.mrb[0].mxu0 %v7065
    %v7208 = vpop.f32.mrb[0].mxu0
    %v7209 = vadd.f32 0.0, %v7208
    %v7210 = vpop.f32.mrb[0].mxu0
    %v7211 = vadd.f32 0.0, %v7210
    %7212 = vdwg.mxu0
    %v7213 = vadd.f32 %v7067, %v7138
    %v7214 = vadd.f32 %v7068, %v7140
    %v7215 = vadd.f32 %v7069, %v7209
    %v7216 = vadd.f32 %v7070, %v7211
    %v7217 = vxor.u32 %v7213, 2147483648
    %v7218 = vxor.u32 %v7214, 2147483648
    %v7219 = vxor.u32 %v7215, 2147483648
    %v7220 = vmul.f32 %v7217, 1.442695
    %v7221 = vpow.pop %v7220
    %v7222 = vmul.f32 %v7218, 1.442695
    %v7223 = vpow.pop %v7222
    %v7224 = vmul.f32 %v7219, 1.442695
    %v7225 = vpow.pop %v7224
    %v7226 = vadd.f32 %v7221, 1.0
    %v7227 = vadd.f32 %v7223, 1.0
    %v7228 = vadd.f32 %v7225, 1.0
    %v7229 = vrcp.pop %v7226
    %v7230 = vmul.f32 1.0, %v7229
    %v7231 = vrcp.pop %v7227
    %v7232 = vmul.f32 1.0, %v7231
    %v7233 = vrcp.pop %v7228
    %v7234 = vmul.f32 1.0, %v7233
    %v7235 = vtanh.pop %v7216
    %v7236 = vmul.f32 %v7232, %v7063
    %v7237 = vmul.f32 %v7230, %v7235
    %v7238 = vadd.f32 %v7236, %v7237
    %v7239 = vtanh.pop %v7238
    %v7240 = vmul.f32 %v7234, %v7239
    %7241 = vst [vmem:[%s1780] sm:$0xff] %v7240
    %v7242 = vld [vmem:[%s1782] sm:$0xff]
    %v7243 = vld [vmem:[%s1782 + $0x8] sm:$0xff]
    %v7244 = vld [vmem:[%s1782 + $0x10] sm:$0xff]
    %v7245 = vld [vmem:[%s1782 + $0x18] sm:$0xff]
    %7246 = vmatprep.subr.mxu0 %v5599
    %7247 = vmatpush1.msra.mxu0 %v5598
    %7248 = vmatprep.subr.mxu0 %v5603
    %7249 = vmatpush1.msra.mxu0 %v5602
    %7250 = vmatprep.subr.mxu0 %v5607
    %7251 = vmatpush1.msra.mxu0 %v5606
    %7252 = vmatprep.subr.mxu0 %v5611
    %7253 = vmatpush1.msra.mxu0 %v5610
    %7254 = vmatprep.subr.mxu0 %v5615
    %7255 = vmatpush1.msra.mxu0 %v5614
    %7256 = vmatprep.subr.mxu0 %v5619
    %7257 = vmatpush1.msra.mxu0 %v5618
    %7258 = vmatprep.subr.mxu0 %v5623
    %7259 = vmatpush1.msra.mxu0 %v5622
    %7260 = vmatprep.subr.mxu0 %v5627
    %7261 = vmatpush1.msra.mxu0 %v5626
    %7262 = vmatprep.subr.mxu0 %v5631
    %7263 = vmatpush1.msra.mxu0 %v5630
    %7264 = vmatprep.subr.mxu0 %v5635
    %7265 = vmatpush1.msra.mxu0 %v5634
    %7266 = vmatprep.subr.mxu0 %v5639
    %7267 = vmatpush1.msra.mxu0 %v5638
    %7268 = vmatprep.subr.mxu0 %v5643
    %7269 = vmatpush1.msra.mxu0 %v5642
    %7270 = vmatprep.subr.mxu0 %v5647
    %7271 = vmatpush1.msra.mxu0 %v5646
    %7272 = vmatprep.subr.mxu0 %v5651
    %7273 = vmatpush1.msra.mxu0 %v5650
    %7274 = vmatprep.subr.mxu0 %v5655
    %7275 = vmatpush1.msra.mxu0 %v5654
    %7276 = vmatprep.subr.mxu0 %v5659
    %7277 = vmatpush1.msra.mxu0 %v5658
    %7278 = vmatprep.subr.mxu0 0.0
    %7279 = vmatpush1.msra.mxu0 0.0
    %7280 = vmatprep.subr.mxu0 0.0
    %7281 = vmatpush1.msra.mxu0 0.0
    %7282 = vmatprep.subr.mxu0 0.0
    %7283 = vmatpush1.msra.mxu0 0.0
    %7284 = vmatprep.subr.mxu0 0.0
    %7285 = vmatpush1.msra.mxu0 0.0
    %7286 = vmatprep.subr.mxu0 0.0
    %7287 = vmatpush1.msra.mxu0 0.0
    %7288 = vmatprep.subr.mxu0 0.0
    %7289 = vmatpush1.msra.mxu0 0.0
    %7290 = vmatprep.subr.mxu0 0.0
    %7291 = vmatpush1.msra.mxu0 0.0
    %7292 = vmatprep.subr.mxu0 0.0
    %7293 = vmatpush1.msra.mxu0 0.0
    %7294 = vmatprep.subr.mxu0 0.0
    %7295 = vmatpush1.msra.mxu0 0.0
    %7296 = vmatprep.subr.mxu0 0.0
    %7297 = vmatpush1.msra.mxu0 0.0
    %7298 = vmatprep.subr.mxu0 0.0
    %7299 = vmatpush1.msra.mxu0 0.0
    %7300 = vmatprep.subr.mxu0 0.0
    %7301 = vmatpush1.msra.mxu0 0.0
    %7302 = vmatprep.subr.mxu0 0.0
    %7303 = vmatpush1.msra.mxu0 0.0
    %7304 = vmatprep.subr.mxu0 0.0
    %7305 = vmatpush1.msra.mxu0 0.0
    %7306 = vmatprep.subr.mxu0 0.0
    %7307 = vmatpush1.msra.mxu0 0.0
    %7308 = vmatprep.subr.mxu0 0.0
    %7309 = vmatpush1.msra.mxu0 0.0
    %7310 = vmatprep.mubr.f32.mxu0 0.0
    %7311 = vmatmul.mubr.f32.gmra.mrb[0].mxu0 %v7240
    %v7312 = vpop.f32.mrb[0].mxu0
    %v7313 = vadd.f32 0.0, %v7312
    %v7314 = vpop.f32.mrb[0].mxu0
    %v7315 = vadd.f32 0.0, %v7314
    %7316 = vdwg.mxu0
    %7317 = vmatprep.subr.mxu0 %v5601
    %7318 = vmatpush1.msra.mxu0 %v5600
    %7319 = vmatprep.subr.mxu0 %v5605
    %7320 = vmatpush1.msra.mxu0 %v5604
    %7321 = vmatprep.subr.mxu0 %v5609
    %7322 = vmatpush1.msra.mxu0 %v5608
    %7323 = vmatprep.subr.mxu0 %v5613
    %7324 = vmatpush1.msra.mxu0 %v5612
    %7325 = vmatprep.subr.mxu0 %v5617
    %7326 = vmatpush1.msra.mxu0 %v5616
    %7327 = vmatprep.subr.mxu0 %v5621
    %7328 = vmatpush1.msra.mxu0 %v5620
    %7329 = vmatprep.subr.mxu0 %v5625
    %7330 = vmatpush1.msra.mxu0 %v5624
    %7331 = vmatprep.subr.mxu0 %v5629
    %7332 = vmatpush1.msra.mxu0 %v5628
    %7333 = vmatprep.subr.mxu0 %v5633
    %7334 = vmatpush1.msra.mxu0 %v5632
    %7335 = vmatprep.subr.mxu0 %v5637
    %7336 = vmatpush1.msra.mxu0 %v5636
    %7337 = vmatprep.subr.mxu0 %v5641
    %7338 = vmatpush1.msra.mxu0 %v5640
    %7339 = vmatprep.subr.mxu0 %v5645
    %7340 = vmatpush1.msra.mxu0 %v5644
    %7341 = vmatprep.subr.mxu0 %v5649
    %7342 = vmatpush1.msra.mxu0 %v5648
    %7343 = vmatprep.subr.mxu0 %v5653
    %7344 = vmatpush1.msra.mxu0 %v5652
    %7345 = vmatprep.subr.mxu0 %v5657
    %7346 = vmatpush1.msra.mxu0 %v5656
    %7347 = vmatprep.subr.mxu0 %v5661
    %7348 = vmatpush1.msra.mxu0 %v5660
    %7349 = vmatprep.subr.mxu0 0.0
    %7350 = vmatpush1.msra.mxu0 0.0
    %7351 = vmatprep.subr.mxu0 0.0
    %7352 = vmatpush1.msra.mxu0 0.0
    %7353 = vmatprep.subr.mxu0 0.0
    %7354 = vmatpush1.msra.mxu0 0.0
    %7355 = vmatprep.subr.mxu0 0.0
    %7356 = vmatpush1.msra.mxu0 0.0
    %7357 = vmatprep.subr.mxu0 0.0
    %7358 = vmatpush1.msra.mxu0 0.0
    %7359 = vmatprep.subr.mxu0 0.0
    %7360 = vmatpush1.msra.mxu0 0.0
    %7361 = vmatprep.subr.mxu0 0.0
    %7362 = vmatpush1.msra.mxu0 0.0
    %7363 = vmatprep.subr.mxu0 0.0
    %7364 = vmatpush1.msra.mxu0 0.0
    %7365 = vmatprep.subr.mxu0 0.0
    %7366 = vmatpush1.msra.mxu0 0.0
    %7367 = vmatprep.subr.mxu0 0.0
    %7368 = vmatpush1.msra.mxu0 0.0
    %7369 = vmatprep.subr.mxu0 0.0
    %7370 = vmatpush1.msra.mxu0 0.0
    %7371 = vmatprep.subr.mxu0 0.0
    %7372 = vmatpush1.msra.mxu0 0.0
    %7373 = vmatprep.subr.mxu0 0.0
    %7374 = vmatpush1.msra.mxu0 0.0
    %7375 = vmatprep.subr.mxu0 0.0
    %7376 = vmatpush1.msra.mxu0 0.0
    %7377 = vmatprep.subr.mxu0 0.0
    %7378 = vmatpush1.msra.mxu0 0.0
    %7379 = vmatprep.subr.mxu0 0.0
    %7380 = vmatpush1.msra.mxu0 0.0
    %7381 = vmatprep.mubr.f32.mxu0 0.0
    %7382 = vmatmul.mubr.f32.gmra.mrb[0].mxu0 %v7240
    %v7383 = vpop.f32.mrb[0].mxu0
    %v7384 = vadd.f32 0.0, %v7383
    %v7385 = vpop.f32.mrb[0].mxu0
    %v7386 = vadd.f32 0.0, %v7385
    %7387 = vdwg.mxu0
    %v7388 = vadd.f32 %v7242, %v7313
    %v7389 = vadd.f32 %v7243, %v7315
    %v7390 = vadd.f32 %v7244, %v7384
    %v7391 = vadd.f32 %v7245, %v7386
    %v7392 = vxor.u32 %v7388, 2147483648
    %v7393 = vxor.u32 %v7389, 2147483648
    %v7394 = vxor.u32 %v7390, 2147483648
    %v7395 = vmul.f32 %v7392, 1.442695
    %v7396 = vpow.pop %v7395
    %v7397 = vmul.f32 %v7393, 1.442695
    %v7398 = vpow.pop %v7397
    %v7399 = vmul.f32 %v7394, 1.442695
    %v7400 = vpow.pop %v7399
    %v7401 = vadd.f32 %v7396, 1.0
    %v7402 = vadd.f32 %v7398, 1.0
    %v7403 = vadd.f32 %v7400, 1.0
    %v7404 = vrcp.pop %v7401
    %v7405 = vmul.f32 1.0, %v7404
    %v7406 = vrcp.pop %v7402
    %v7407 = vmul.f32 1.0, %v7406
    %v7408 = vrcp.pop %v7403
    %v7409 = vmul.f32 1.0, %v7408
    %v7410 = vtanh.pop %v7391
    %v7411 = vmul.f32 %v7407, %v7238
    %v7412 = vmul.f32 %v7405, %v7410
    %v7413 = vadd.f32 %v7411, %v7412
    %v7414 = vtanh.pop %v7413
    %v7415 = vmul.f32 %v7409, %v7414
    %7416 = vst [vmem:[%s1957] sm:$0xff] %v7415
    %7417 = vst [vmem:[%s2379] sm:$0xff] %v7415
    %7418 = vst [vmem:[%s2381] sm:$0xff] %v7413
    %v7419 = vld [vmem:[#allocation4] sm:$0xff]
    %v7420 = vld [vmem:[#allocation4 + $0x8] sm:$0xff]
    %v7421 = vld [vmem:[#allocation4 + $0x10] sm:$0xff]
    %v7422 = vld [vmem:[#allocation4 + $0x18] sm:$0xff]
    %v7423 = vld [vmem:[#allocation4 + $0x20] sm:$0xff]
    %v7424 = vld [vmem:[#allocation4 + $0x28] sm:$0xff]
    %v7425 = vld [vmem:[#allocation4 + $0x30] sm:$0xff]
    %v7426 = vld [vmem:[#allocation4 + $0x38] sm:$0xff]
    %v7427 = vld [vmem:[%s10] sm:$0xff]
    %v7428 = vld [vmem:[%s10 + $0x8] sm:$0xff]
    %v7429 = vld [vmem:[%s10 + $0x10] sm:$0xff]
    %v7430 = vld [vmem:[%s10 + $0x18] sm:$0xff]
    %v7431 = vld [vmem:[%s10 + $0x20] sm:$0xff]
    %v7432 = vld [vmem:[%s10 + $0x28] sm:$0xff]
    %v7433 = vld [vmem:[%s10 + $0x30] sm:$0xff]
    %v7434 = vld [vmem:[%s10 + $0x38] sm:$0xff]
    %v7435 = vld [vmem:[%s10 + $0x40] sm:$0xff]
    %v7436 = vld [vmem:[%s10 + $0x48] sm:$0xff]
    %v7437 = vld [vmem:[%s10 + $0x50] sm:$0xff]
    %v7438 = vld [vmem:[%s10 + $0x58] sm:$0xff]
    %v7439 = vld [vmem:[%s10 + $0x60] sm:$0xff]
    %v7440 = vld [vmem:[%s10 + $0x68] sm:$0xff]
    %v7441 = vld [vmem:[%s10 + $0x70] sm:$0xff]
    %v7442 = vld [vmem:[%s10 + $0x78] sm:$0xff]
    %v7443 = vld [vmem:[%s11] sm:$0x1]
    %v7445 = vlaneseq
    %v7446 = vshrl.u32 %v7445, 7
    %v7447 = vsub.s32 0, %v7446
    %v7448 = vrot.slane %v7443, %v7447
    %7450 = vmatprep.subr.mxu0 0.0
    %7451 = vmatpush1.msra.mxu0 %v7427
    %7452 = vmatprep.subr.mxu0 0.0
    %7453 = vmatpush1.msra.mxu0 %v7428
    %7454 = vmatprep.subr.mxu0 0.0
    %7455 = vmatpush1.msra.mxu0 %v7429
    %7456 = vmatprep.subr.mxu0 0.0
    %7457 = vmatpush1.msra.mxu0 %v7430
    %7458 = vmatprep.subr.mxu0 0.0
    %7459 = vmatpush1.msra.mxu0 %v7431
    %7460 = vmatprep.subr.mxu0 0.0
    %7461 = vmatpush1.msra.mxu0 %v7432
    %7462 = vmatprep.subr.mxu0 0.0
    %7463 = vmatpush1.msra.mxu0 %v7433
    %7464 = vmatprep.subr.mxu0 0.0
    %7465 = vmatpush1.msra.mxu0 %v7434
    %7466 = vmatprep.subr.mxu0 0.0
    %7467 = vmatpush1.msra.mxu0 %v7435
    %7468 = vmatprep.subr.mxu0 0.0
    %7469 = vmatpush1.msra.mxu0 %v7436
    %7470 = vmatprep.subr.mxu0 0.0
    %7471 = vmatpush1.msra.mxu0 %v7437
    %7472 = vmatprep.subr.mxu0 0.0
    %7473 = vmatpush1.msra.mxu0 %v7438
    %7474 = vmatprep.subr.mxu0 0.0
    %7475 = vmatpush1.msra.mxu0 %v7439
    %7476 = vmatprep.subr.mxu0 0.0
    %7477 = vmatpush1.msra.mxu0 %v7440
    %7478 = vmatprep.subr.mxu0 0.0
    %7479 = vmatpush1.msra.mxu0 %v7441
    %7480 = vmatprep.subr.mxu0 0.0
    %7481 = vmatpush1.msra.mxu0 %v7442
    %7482 = vmatprep.subr.mxu0 0.0
    %7483 = vmatpush1.msra.mxu0 0.0
    %7484 = vmatprep.subr.mxu0 0.0
    %7485 = vmatpush1.msra.mxu0 0.0
    %7486 = vmatprep.subr.mxu0 0.0
    %7487 = vmatpush1.msra.mxu0 0.0
    %7488 = vmatprep.subr.mxu0 0.0
    %7489 = vmatpush1.msra.mxu0 0.0
    %7490 = vmatprep.subr.mxu0 0.0
    %7491 = vmatpush1.msra.mxu0 0.0
    %7492 = vmatprep.subr.mxu0 0.0
    %7493 = vmatpush1.msra.mxu0 0.0
    %7494 = vmatprep.subr.mxu0 0.0
    %7495 = vmatpush1.msra.mxu0 0.0
    %7496 = vmatprep.subr.mxu0 0.0
    %7497 = vmatpush1.msra.mxu0 0.0
    %7498 = vmatprep.subr.mxu0 0.0
    %7499 = vmatpush1.msra.mxu0 0.0
    %7500 = vmatprep.subr.mxu0 0.0
    %7501 = vmatpush1.msra.mxu0 0.0
    %7502 = vmatprep.subr.mxu0 0.0
    %7503 = vmatpush1.msra.mxu0 0.0
    %7504 = vmatprep.subr.mxu0 0.0
    %7505 = vmatpush1.msra.mxu0 0.0
    %7506 = vmatprep.subr.mxu0 0.0
    %7507 = vmatpush1.msra.mxu0 0.0
    %7508 = vmatprep.subr.mxu0 0.0
    %7509 = vmatpush1.msra.mxu0 0.0
    %7510 = vmatprep.subr.mxu0 0.0
    %7511 = vmatpush1.msra.mxu0 0.0
    %7512 = vmatprep.subr.mxu0 0.0
    %7513 = vmatpush1.msra.mxu0 0.0
    %7514 = vmatprep.mubr.f32.mxu0 0.0
    %7515 = vmatmul.mubr.f32.gmra.mrb[0].mxu0 %v7419
    %v7516 = vpop.f32.mrb[0].mxu0
    %v7517 = vadd.f32 %v7448, %v7516
    %v7518 = vpop.f32.mrb[0].mxu0
    %7519 = vmatprep.mubr.f32.mxu0 0.0
    %7520 = vmatmul.mubr.f32.gmra.mrb[0].mxu0 %v7420
    %v7521 = vpop.f32.mrb[0].mxu0
    %v7522 = vadd.f32 %v7448, %v7521
    %v7523 = vpop.f32.mrb[0].mxu0
    %7524 = vmatprep.mubr.f32.mxu0 0.0
    %7525 = vmatmul.mubr.f32.gmra.mrb[0].mxu0 %v7421
    %v7526 = vpop.f32.mrb[0].mxu0
    %v7527 = vadd.f32 %v7448, %v7526
    %v7528 = vpop.f32.mrb[0].mxu0
    %7529 = vmatprep.mubr.f32.mxu0 0.0
    %7530 = vmatmul.mubr.f32.gmra.mrb[0].mxu0 %v7422
    %v7531 = vpop.f32.mrb[0].mxu0
    %v7532 = vadd.f32 %v7448, %v7531
    %v7533 = vpop.f32.mrb[0].mxu0
    %7534 = vmatprep.mubr.f32.mxu0 0.0
    %7535 = vmatmul.mubr.f32.gmra.mrb[0].mxu0 %v7423
    %v7536 = vpop.f32.mrb[0].mxu0
    %v7537 = vadd.f32 %v7448, %v7536
    %v7538 = vpop.f32.mrb[0].mxu0
    %7539 = vmatprep.mubr.f32.mxu0 0.0
    %7540 = vmatmul.mubr.f32.gmra.mrb[0].mxu0 %v7424
    %v7541 = vpop.f32.mrb[0].mxu0
    %v7542 = vadd.f32 %v7448, %v7541
    %v7543 = vpop.f32.mrb[0].mxu0
    %7544 = vmatprep.mubr.f32.mxu0 0.0
    %7545 = vmatmul.mubr.f32.gmra.mrb[0].mxu0 %v7425
    %v7546 = vpop.f32.mrb[0].mxu0
    %v7547 = vadd.f32 %v7448, %v7546
    %v7548 = vpop.f32.mrb[0].mxu0
    %7549 = vmatprep.mubr.f32.mxu0 0.0
    %7550 = vmatmul.mubr.f32.gmra.mrb[0].mxu0 %v7426
    %v7551 = vpop.f32.mrb[0].mxu0
    %v7552 = vadd.f32 %v7448, %v7551
    %v7553 = vpop.f32.mrb[0].mxu0
    %7554 = vdwg.mxu0
    %7555 = vst [vmem:[%s12] sm:$0xff] %v7517
    %7556 = vst [vmem:[%s12 + $0x8] sm:$0xff] %v7522
    %7557 = vst [vmem:[%s12 + $0x10] sm:$0xff] %v7527
    %7558 = vst [vmem:[%s12 + $0x18] sm:$0xff] %v7532
    %7559 = vst [vmem:[%s12 + $0x20] sm:$0xff] %v7537
    %7560 = vst [vmem:[%s12 + $0x28] sm:$0xff] %v7542
    %7561 = vst [vmem:[%s12 + $0x30] sm:$0xff] %v7547
    %7562 = vst [vmem:[%s12 + $0x38] sm:$0xff] %v7552
    // Predicated region
    $region74: #{lstm_seq2seq_forward.1} parent=1 // pred_check
      _
    $region75: #{lstm_seq2seq_forward.1} parent=1 // pred_check_branch
      %7564 = sbr.rel (0) target = $region77
    $region76: #{lstm_seq2seq_forward.1} parent=1 // pred_region
      _
    $region77: #{lstm_seq2seq_forward.1} parent=1 // pred_fallthru
      _
    // Predicated region
    $region78: #{lstm_seq2seq_forward.1} parent=1 // pred_check
      _
    $region79: #{lstm_seq2seq_forward.1} parent=1 // pred_check_branch
      %7566 = sbr.rel (0) target = $region81
    $region80: #{lstm_seq2seq_forward.1} parent=1 // pred_region
      _
    $region81: #{lstm_seq2seq_forward.1} parent=1 // pred_fallthru
      _
    %7567 = vsyncpa [#allocation7], 1
    %7568 = vsyncpa [#allocation9], 1
    %7569 = vsyncpa [#allocation12], 1
    %7570 = vsyncpa [#allocation15], 1

</llo_original>
